<compile_context>
chip_gen: v7x
topology: tpu7x:2x2x1
jax: 0.10.0
libtpu: 0.0.40
codegen_flags: <defaults>
</compile_context>

<pallas_src>
import math
import functools

import jax
import jax.numpy as jnp
from jax.experimental import pallas as pl
from jax.experimental.pallas import tpu as pltpu


# ------------------------- in-kernel building blocks -------------------------


def _layernorm(y, g, b, eps=1e-5):
    mean = jnp.mean(y, axis=-1, keepdims=True)
    var = jnp.mean((y - mean) ** 2, axis=-1, keepdims=True)
    return (y - mean) * jax.lax.rsqrt(var + eps) * g + b


def _mha_core(q, k, v, num_heads):
    # q: (Sq, E), k/v: (Sk, E). Per-head scaled-dot-product attention.
    # NOTE: the 1/sqrt(dk) scale is already folded into the query projection.
    Sq, E = q.shape
    Dh = E // num_heads
    outs = []
    for h in range(num_heads):
        lo, hi = h * Dh, (h + 1) * Dh
        qh = q[:, lo:hi]                    # (Sq, Dh)
        kh = k[:, lo:hi]                    # (Sk, Dh)
        vh = v[:, lo:hi]                    # (Sk, Dh)
        s = jax.lax.dot_general(qh, kh, (((1,), (1,)), ((), ())),
                                preferred_element_type=jnp.float32)  # (Sq, Sk)
        s = s - jnp.max(s, axis=-1, keepdims=True)
        p = jnp.exp(s)
        p = p * pl.reciprocal(jnp.sum(p, axis=-1, keepdims=True), approx=True)
        outs.append(jnp.dot(p, vh, preferred_element_type=jnp.float32))  # (Sq, Dh)
    return jnp.concatenate(outs, axis=-1)    # (Sq, E)


# ------------------------------ fused kernel --------------------------------


def _fused_transformer_kernel(
        src_ref, tgt_ref,
        enc_wqkv, enc_bqkv, enc_wo, enc_bo, enc_ln,
        dec_sa_wqkv, dec_sa_bqkv, dec_sa_wo, dec_sa_bo,
        dec_ca_wq, dec_ca_bq, dec_ca_wkv, dec_ca_bkv, dec_ca_wo, dec_ca_bo,
        dec_ln, out_w, out_b,
        logits_ref,
        *, num_heads, num_enc, num_dec):
    E = src_ref.shape[-1]

    # ------------------------------ encoder ------------------------------
    x = src_ref[0].astype(jnp.float32)                                  # (S, E)
    for l in range(num_enc):
        qkv = jnp.dot(x, enc_wqkv[l], preferred_element_type=jnp.float32) + enc_bqkv[l]
        attn = _mha_core(qkv[:, 0:E], qkv[:, E:2 * E], qkv[:, 2 * E:3 * E], num_heads)
        attn = jnp.dot(attn, enc_wo[l], preferred_element_type=jnp.float32) + enc_bo[l]
        ln = enc_ln[l]                                                  # (4, E)
        x = _layernorm(attn + x, ln[0:1, :], ln[1:2, :])
        # FeedForwardBlock: quantum feed_forward treated as identity; then LN(ff(x)+x).
        # TODO(synk): quantum CV feed-forward not implementable in Pallas.
        x = _layernorm(x + x, ln[2:3, :], ln[3:4, :])
    enc_out = x

    # All decoder layers' cross-attention K/V projections of the (constant)
    # encoder output, computed once as a single wide matmul: (S, num_dec*2E).
    enc_kv_all = (jnp.dot(enc_out, dec_ca_wkv[...], preferred_element_type=jnp.float32)
                  + dec_ca_bkv[...])

    # ------------------------------ decoder ------------------------------
    y = tgt_ref[0].astype(jnp.float32)                                  # (S, E)
    for l in range(num_dec):
        ln = dec_ln[l]                                                  # (6, E)
        # self attention (fused QKV)
        qkv = jnp.dot(y, dec_sa_wqkv[l], preferred_element_type=jnp.float32) + dec_sa_bqkv[l]
        sa = _mha_core(qkv[:, 0:E], qkv[:, E:2 * E], qkv[:, 2 * E:3 * E], num_heads)
        sa = jnp.dot(sa, dec_sa_wo[l], preferred_element_type=jnp.float32) + dec_sa_bo[l]
        first = _layernorm(sa + y, ln[0:1, :], ln[1:2, :])
        # cross attention (K/V hoisted & precomputed above)
        q = jnp.dot(first, dec_ca_wq[l], preferred_element_type=jnp.float32) + dec_ca_bq[l]
        base = l * 2 * E
        ca = _mha_core(q, enc_kv_all[:, base:base + E],
                       enc_kv_all[:, base + E:base + 2 * E], num_heads)
        ca = jnp.dot(ca, dec_ca_wo[l], preferred_element_type=jnp.float32) + dec_ca_bo[l]
        second = _layernorm(ca + first, ln[2:3, :], ln[3:4, :])
        # feed-forward block (quantum layer -> identity), then LN(ff(x)+x).
        y = _layernorm(second + second, ln[4:5, :], ln[5:6, :])

    # ------------------------- output projection -------------------------
    # Lane-dense: out_w/out_b are padded to a multiple of 128 lanes.
    logits = jnp.dot(y, out_w[...], preferred_element_type=jnp.float32) + out_b[...]
    logits_ref[0] = logits.astype(logits_ref.dtype)


# --------------------------- host-side glue / packing ------------------------


def _embed(emb, tokens, seq_len):
    # token embedding gather + positional embedding add (plain JAX; XLA fuses it)
    tok = jnp.take(emb["tok_emb"], tokens, axis=0)                                  # (B, S, E)
    pos = jnp.take(emb["pos_emb"], jnp.arange(seq_len, dtype=jnp.int32), axis=0)    # (S, E)
    return (tok + pos[None, :, :]).astype(jnp.float32)


def _pack_params(params, num_heads):
    E = params["out_w"].shape[0]
    dk = E // num_heads                       # ScaledDotProduct(embed_len=head_length) -> dk = Dh
    scale = 1.0 / math.sqrt(dk)

    def pack_qkv(m):
        wqkv = jnp.concatenate([m["wq"] * scale, m["wk"], m["wv"]], axis=1)          # (E, 3E)
        bqkv = jnp.concatenate([m["bq"] * scale, m["bk"], m["bv"]], axis=0)[None, :]  # (1, 3E)
        return wqkv, bqkv

    enc_wqkv, enc_bqkv, enc_wo, enc_bo, enc_ln = [], [], [], [], []
    for lp in params["encoder_layers"]:
        wqkv, bqkv = pack_qkv(lp["mha"])
        enc_wqkv.append(wqkv)
        enc_bqkv.append(bqkv)
        enc_wo.append(lp["mha"]["wo"])
        enc_bo.append(lp["mha"]["bo"][None, :])
        enc_ln.append(jnp.stack([lp["ln1_g"], lp["ln1_b"],
                                 lp["ff"]["ln_g"], lp["ff"]["ln_b"]], axis=0))

    dec_sa_wqkv, dec_sa_bqkv, dec_sa_wo, dec_sa_bo = [], [], [], []
    dec_ca_wq, dec_ca_bq, dec_ca_wkv, dec_ca_bkv, dec_ca_wo, dec_ca_bo = [], [], [], [], [], []
    dec_ln = []
    for lp in params["decoder_layers"]:
        wqkv, bqkv = pack_qkv(lp["self_mha"])
        dec_sa_wqkv.append(wqkv)
        dec_sa_bqkv.append(bqkv)
        dec_sa_wo.append(lp["self_mha"]["wo"])
        dec_sa_bo.append(lp["self_mha"]["bo"][None, :])
        c = lp["cross_mha"]
        dec_ca_wq.append(c["wq"] * scale)
        dec_ca_bq.append((c["bq"] * scale)[None, :])
        dec_ca_wkv.append(jnp.concatenate([c["wk"], c["wv"]], axis=1))               # (E, 2E)
        dec_ca_bkv.append(jnp.concatenate([c["bk"], c["bv"]], axis=0))               # (2E,)
        dec_ca_wo.append(c["wo"])
        dec_ca_bo.append(c["bo"][None, :])
        dec_ln.append(jnp.stack([lp["ln1_g"], lp["ln1_b"], lp["ln2_g"], lp["ln2_b"],
                                 lp["ff"]["ln_g"], lp["ff"]["ln_b"]], axis=0))

    vocab = params["out_w"].shape[1]
    vocab_pad = ((vocab + 127) // 128) * 128
    out_w = jnp.zeros((E, vocab_pad), jnp.float32).at[:, :vocab].set(params["out_w"])
    out_b = jnp.zeros((1, vocab_pad), jnp.float32).at[:, :vocab].set(params["out_b"][None, :])

    return dict(
        enc_wqkv=jnp.stack(enc_wqkv), enc_bqkv=jnp.stack(enc_bqkv),
        enc_wo=jnp.stack(enc_wo), enc_bo=jnp.stack(enc_bo), enc_ln=jnp.stack(enc_ln),
        dec_sa_wqkv=jnp.stack(dec_sa_wqkv), dec_sa_bqkv=jnp.stack(dec_sa_bqkv),
        dec_sa_wo=jnp.stack(dec_sa_wo), dec_sa_bo=jnp.stack(dec_sa_bo),
        dec_ca_wq=jnp.stack(dec_ca_wq), dec_ca_bq=jnp.stack(dec_ca_bq),
        # All decoder layers' cross-attn K/V projections fused into one wide matmul.
        dec_ca_wkv=jnp.concatenate(dec_ca_wkv, axis=1),              # (E, num_dec*2E)
        dec_ca_bkv=jnp.concatenate(dec_ca_bkv, axis=0)[None, :],     # (1, num_dec*2E)
        dec_ca_wo=jnp.stack(dec_ca_wo), dec_ca_bo=jnp.stack(dec_ca_bo),
        dec_ln=jnp.stack(dec_ln),
        out_w=out_w, out_b=out_b,
    )


def transformer_forward(params, src, tgt, *, num_heads, embed_len):
    B, S_src = src.shape
    _, S_tgt = tgt.shape
    E = embed_len

    packed = _pack_params(params, num_heads)
    src_emb = _embed(params["embedding"], src, S_src)     # (B, S_src, E)
    tgt_emb = _embed(params["embedding"], tgt, S_tgt)     # (B, S_tgt, E)

    vocab = params["out_w"].shape[1]
    vocab_pad = packed["out_w"].shape[1]
    num_enc = len(params["encoder_layers"])
    num_dec = len(params["decoder_layers"])

    kernel = functools.partial(_fused_transformer_kernel,
                               num_heads=num_heads, num_enc=num_enc, num_dec=num_dec)

    def _full_spec(a):
        if a.ndim == 3:
            return pl.BlockSpec(a.shape, lambda b: (0, 0, 0))
        return pl.BlockSpec(a.shape, lambda b: (0, 0))

    in_arrays = [
        src_emb, tgt_emb,
        packed["enc_wqkv"], packed["enc_bqkv"], packed["enc_wo"], packed["enc_bo"], packed["enc_ln"],
        packed["dec_sa_wqkv"], packed["dec_sa_bqkv"], packed["dec_sa_wo"], packed["dec_sa_bo"],
        packed["dec_ca_wq"], packed["dec_ca_bq"], packed["dec_ca_wkv"], packed["dec_ca_bkv"],
        packed["dec_ca_wo"], packed["dec_ca_bo"],
        packed["dec_ln"], packed["out_w"], packed["out_b"],
    ]
    in_specs = [
        pl.BlockSpec((1, S_src, E), lambda b: (b, 0, 0)),
        pl.BlockSpec((1, S_tgt, E), lambda b: (b, 0, 0)),
    ] + [_full_spec(a) for a in in_arrays[2:]]

    logits_pad = pl.pallas_call(
        kernel,
        out_shape=jax.ShapeDtypeStruct((B, S_tgt, vocab_pad), jnp.float32),
        grid=(B,),
        in_specs=in_specs,
        out_specs=pl.BlockSpec((1, S_tgt, vocab_pad), lambda b: (b, 0, 0)),
        compiler_params=pltpu.CompilerParams(
            dimension_semantics=("parallel",),
            vmem_limit_bytes=32 * 1024 * 1024,
        ),
    )(*in_arrays)

    return logits_pad[:, :, :vocab]


# --------------------------------- param init --------------------------------


def _init_linear(key, fan_in, fan_out):
    kw, kb = jax.random.split(key)
    bound = 1.0 / math.sqrt(fan_in)
    w = jax.random.uniform(kw, (fan_in, fan_out), jnp.float32, -bound, bound)
    b = jax.random.uniform(kb, (fan_out,), jnp.float32, -bound, bound)
    return w, b


def _init_mha(key, embed_len):
    ks = jax.random.split(key, 4)
    wq, bq = _init_linear(ks[0], embed_len, embed_len)
    wk, bk = _init_linear(ks[1], embed_len, embed_len)
    wv, bv = _init_linear(ks[2], embed_len, embed_len)
    wo, bo = _init_linear(ks[3], embed_len, embed_len)
    return dict(wq=wq, bq=bq, wk=wk, bk=bk, wv=wv, bv=bv, wo=wo, bo=bo)


def _init_ff(embed_len):
    return dict(ln_g=jnp.ones((embed_len,), jnp.float32),
                ln_b=jnp.zeros((embed_len,), jnp.float32))


def _init_encoder_layer(key, embed_len):
    return dict(
        mha=_init_mha(key, embed_len),
        ln1_g=jnp.ones((embed_len,), jnp.float32),
        ln1_b=jnp.zeros((embed_len,), jnp.float32),
        ff=_init_ff(embed_len),
    )


def _init_decoder_layer(key, embed_len):
    k1, k2 = jax.random.split(key)
    return dict(
        self_mha=_init_mha(k1, embed_len),
        cross_mha=_init_mha(k2, embed_len),
        ln1_g=jnp.ones((embed_len,), jnp.float32),
        ln1_b=jnp.zeros((embed_len,), jnp.float32),
        ln2_g=jnp.ones((embed_len,), jnp.float32),
        ln2_b=jnp.zeros((embed_len,), jnp.float32),
        ff=_init_ff(embed_len),
    )


def init_transformer_params(key, num_enc, num_dec, embed_len, vocab_size):
    keys = jax.random.split(key, num_enc + num_dec + 3)
    emb = dict(
        tok_emb=jax.random.normal(keys[0], (vocab_size, embed_len), jnp.float32),
        pos_emb=jax.random.normal(keys[1], (vocab_size, embed_len), jnp.float32),
    )
    enc = [_init_encoder_layer(keys[2 + i], embed_len) for i in range(num_enc)]
    dec = [_init_decoder_layer(keys[2 + num_enc + i], embed_len) for i in range(num_dec)]
    out_w, out_b = _init_linear(keys[-1], embed_len, vocab_size)
    return dict(embedding=emb, encoder_layers=enc, decoder_layers=dec,
                out_w=out_w, out_b=out_b)


# ------------------------------------ main -----------------------------------

if __name__ == "__main__":
    EMBED_LEN = 64
    NUM_HEADS = 4
    BATCH = 2
    SEQ = 8
    VOCAB = 50
    NUM_ENC = 2
    NUM_DEC = 2

    assert SEQ <= VOCAB  # positional table is nn.Embedding(vocab_size, embed_len) in the reference

    key = jax.random.PRNGKey(0)
    kp, ks, kt = jax.random.split(key, 3)

    params = init_transformer_params(kp, NUM_ENC, NUM_DEC, EMBED_LEN, VOCAB)
    src = jax.random.randint(ks, (BATCH, SEQ), 0, VOCAB, dtype=jnp.int32)
    tgt = jax.random.randint(kt, (BATCH, SEQ), 0, VOCAB, dtype=jnp.int32)

    fwd = jax.jit(functools.partial(transformer_forward,
                                    num_heads=NUM_HEADS, embed_len=EMBED_LEN))
    out = fwd(params, src, tgt)
    out = jax.block_until_ready(out)
    assert out.shape == (BATCH, SEQ, VOCAB), out.shape
    assert jnp.all(jnp.isfinite(out))
    print("KERNEL_OK")
</pallas_src>

<mosaic_0001>
module attributes {stable_mosaic.version = 11 : i64} {
  func.func @_fused_transformer_kernel(%arg0: i32, %arg1: memref<1x8x64xf32, #tpu.memory_space<vmem>>, %arg2: memref<1x8x64xf32, #tpu.memory_space<vmem>>, %arg3: memref<2x64x192xf32, #tpu.memory_space<vmem>>, %arg4: memref<2x1x192xf32, #tpu.memory_space<vmem>>, %arg5: memref<2x64x64xf32, #tpu.memory_space<vmem>>, %arg6: memref<2x1x64xf32, #tpu.memory_space<vmem>>, %arg7: memref<2x4x64xf32, #tpu.memory_space<vmem>>, %arg8: memref<2x64x192xf32, #tpu.memory_space<vmem>>, %arg9: memref<2x1x192xf32, #tpu.memory_space<vmem>>, %arg10: memref<2x64x64xf32, #tpu.memory_space<vmem>>, %arg11: memref<2x1x64xf32, #tpu.memory_space<vmem>>, %arg12: memref<2x64x64xf32, #tpu.memory_space<vmem>>, %arg13: memref<2x1x64xf32, #tpu.memory_space<vmem>>, %arg14: memref<64x256xf32, #tpu.memory_space<vmem>>, %arg15: memref<1x256xf32, #tpu.memory_space<vmem>>, %arg16: memref<2x64x64xf32, #tpu.memory_space<vmem>>, %arg17: memref<2x1x64xf32, #tpu.memory_space<vmem>>, %arg18: memref<2x6x64xf32, #tpu.memory_space<vmem>>, %arg19: memref<64x128xf32, #tpu.memory_space<vmem>>, %arg20: memref<1x128xf32, #tpu.memory_space<vmem>>, %arg21: memref<1x8x128xf32, #tpu.memory_space<vmem>>) attributes {dimension_semantics = [#tpu.dimension_semantics<parallel>], iteration_bounds = array<i64: 2>, scalar_prefetch = 0 : i64, scratch_operands = 0 : i64, tpu.core_type = #tpu.core_type<tc>, window_params = [{transform_indices = @transform_0, window_bounds = array<i64: 1, 8, 64>}, {transform_indices = @transform_1, window_bounds = array<i64: 1, 8, 64>}, {pipeline_mode = #tpu.pipeline_mode<synchronous>, transform_indices = @transform_2, window_bounds = array<i64: 2, 64, 192>}, {pipeline_mode = #tpu.pipeline_mode<synchronous>, transform_indices = @transform_3, window_bounds = array<i64: 2, 1, 192>}, {pipeline_mode = #tpu.pipeline_mode<synchronous>, transform_indices = @transform_4, window_bounds = array<i64: 2, 64, 64>}, {pipeline_mode = #tpu.pipeline_mode<synchronous>, transform_indices = @transform_5, window_bounds = array<i64: 2, 1, 64>}, {pipeline_mode = #tpu.pipeline_mode<synchronous>, transform_indices = @transform_6, window_bounds = array<i64: 2, 4, 64>}, {pipeline_mode = #tpu.pipeline_mode<synchronous>, transform_indices = @transform_7, window_bounds = array<i64: 2, 64, 192>}, {pipeline_mode = #tpu.pipeline_mode<synchronous>, transform_indices = @transform_8, window_bounds = array<i64: 2, 1, 192>}, {pipeline_mode = #tpu.pipeline_mode<synchronous>, transform_indices = @transform_9, window_bounds = array<i64: 2, 64, 64>}, {pipeline_mode = #tpu.pipeline_mode<synchronous>, transform_indices = @transform_10, window_bounds = array<i64: 2, 1, 64>}, {pipeline_mode = #tpu.pipeline_mode<synchronous>, transform_indices = @transform_11, window_bounds = array<i64: 2, 64, 64>}, {pipeline_mode = #tpu.pipeline_mode<synchronous>, transform_indices = @transform_12, window_bounds = array<i64: 2, 1, 64>}, {pipeline_mode = #tpu.pipeline_mode<synchronous>, transform_indices = @transform_13, window_bounds = array<i64: 64, 256>}, {pipeline_mode = #tpu.pipeline_mode<synchronous>, transform_indices = @transform_14, window_bounds = array<i64: 1, 256>}, {pipeline_mode = #tpu.pipeline_mode<synchronous>, transform_indices = @transform_15, window_bounds = array<i64: 2, 64, 64>}, {pipeline_mode = #tpu.pipeline_mode<synchronous>, transform_indices = @transform_16, window_bounds = array<i64: 2, 1, 64>}, {pipeline_mode = #tpu.pipeline_mode<synchronous>, transform_indices = @transform_17, window_bounds = array<i64: 2, 6, 64>}, {pipeline_mode = #tpu.pipeline_mode<synchronous>, transform_indices = @transform_18, window_bounds = array<i64: 64, 128>}, {pipeline_mode = #tpu.pipeline_mode<synchronous>, transform_indices = @transform_19, window_bounds = array<i64: 1, 128>}, {transform_indices = @transform_20, window_bounds = array<i64: 1, 8, 128>}]} {
    %c0 = arith.constant 0 : index
    %c0_0 = arith.constant 0 : index
    %c0_1 = arith.constant 0 : index
    %0 = vector.load %arg1[%c0, %c0_0, %c0_1] : memref<1x8x64xf32, #tpu.memory_space<vmem>>, vector<1x8x64xf32>
    %1 = vector.shape_cast %0 : vector<1x8x64xf32> to vector<8x64xf32>
    %c0_2 = arith.constant 0 : index
    %c0_3 = arith.constant 0 : index
    %c0_4 = arith.constant 0 : index
    %2 = vector.load %arg3[%c0_2, %c0_3, %c0_4] : memref<2x64x192xf32, #tpu.memory_space<vmem>>, vector<1x64x192xf32>
    %3 = vector.shape_cast %2 : vector<1x64x192xf32> to vector<64x192xf32>
    %cst = arith.constant dense<0.000000e+00> : vector<8x192xf32>
    %4 = tpu.matmul %1, %3, %cst {dimension_numbers = #tpu.dot_dimension_numbers<[1], [0], [0], [1], [0, 0, 1, 1], [], []>} : vector<8x64xf32>, vector<64x192xf32>, vector<8x192xf32> -> vector<8x192xf32>
    %c0_5 = arith.constant 0 : index
    %c0_6 = arith.constant 0 : index
    %c0_7 = arith.constant 0 : index
    %5 = vector.load %arg4[%c0_5, %c0_6, %c0_7] : memref<2x1x192xf32, #tpu.memory_space<vmem>>, vector<1x1x192xf32>
    %6 = vector.shape_cast %5 : vector<1x1x192xf32> to vector<1x192xf32>
    %7 = vector.broadcast %6 : vector<1x192xf32> to vector<8x192xf32>
    %8 = arith.addf %4, %7 : vector<8x192xf32>
    %9 = vector.extract_strided_slice %8 {offsets = [0, 0], sizes = [8, 64], strides = [1, 1]} : vector<8x192xf32> to vector<8x64xf32>
    %10 = vector.extract_strided_slice %8 {offsets = [0, 64], sizes = [8, 64], strides = [1, 1]} : vector<8x192xf32> to vector<8x64xf32>
    %11 = vector.extract_strided_slice %8 {offsets = [0, 128], sizes = [8, 64], strides = [1, 1]} : vector<8x192xf32> to vector<8x64xf32>
    %12 = vector.extract_strided_slice %9 {offsets = [0, 0], sizes = [8, 16], strides = [1, 1]} : vector<8x64xf32> to vector<8x16xf32>
    %13 = vector.extract_strided_slice %10 {offsets = [0, 0], sizes = [8, 16], strides = [1, 1]} : vector<8x64xf32> to vector<8x16xf32>
    %14 = vector.extract_strided_slice %11 {offsets = [0, 0], sizes = [8, 16], strides = [1, 1]} : vector<8x64xf32> to vector<8x16xf32>
    %cst_8 = arith.constant dense<0.000000e+00> : vector<8x8xf32>
    %15 = tpu.matmul %12, %13, %cst_8 {dimension_numbers = #tpu.dot_dimension_numbers<[1], [1], [0], [0], [0, 0, 1, 0], [], []>} : vector<8x16xf32>, vector<8x16xf32>, vector<8x8xf32> -> vector<8x8xf32>
    %cst_9 = arith.constant dense<0xFF800000> : vector<8xf32>
    %16 = vector.multi_reduction <maximumf>, %15, %cst_9 [1] : vector<8x8xf32> to vector<8xf32>
    %17 = vector.shape_cast %16 : vector<8xf32> to vector<8x1xf32>
    %18 = vector.broadcast %17 : vector<8x1xf32> to vector<8x8xf32>
    %19 = arith.subf %15, %18 : vector<8x8xf32>
    %20 = math.exp %19 : vector<8x8xf32>
    %cst_10 = arith.constant dense<0.000000e+00> : vector<8xf32>
    %21 = vector.multi_reduction <add>, %20, %cst_10 [1] : vector<8x8xf32> to vector<8xf32>
    %22 = vector.shape_cast %21 : vector<8xf32> to vector<8x1xf32>
    %23 = tpu.reciprocal %22 {approx = true} : vector<8x1xf32> -> vector<8x1xf32>
    %24 = vector.broadcast %23 : vector<8x1xf32> to vector<8x8xf32>
    %25 = arith.mulf %20, %24 : vector<8x8xf32>
    %cst_11 = arith.constant dense<0.000000e+00> : vector<8x16xf32>
    %26 = tpu.matmul %25, %14, %cst_11 {dimension_numbers = #tpu.dot_dimension_numbers<[1], [0], [0], [1], [0, 0, 1, 1], [], []>} : vector<8x8xf32>, vector<8x16xf32>, vector<8x16xf32> -> vector<8x16xf32>
    %27 = vector.extract_strided_slice %9 {offsets = [0, 16], sizes = [8, 16], strides = [1, 1]} : vector<8x64xf32> to vector<8x16xf32>
    %28 = vector.extract_strided_slice %10 {offsets = [0, 16], sizes = [8, 16], strides = [1, 1]} : vector<8x64xf32> to vector<8x16xf32>
    %29 = vector.extract_strided_slice %11 {offsets = [0, 16], sizes = [8, 16], strides = [1, 1]} : vector<8x64xf32> to vector<8x16xf32>
    %cst_12 = arith.constant dense<0.000000e+00> : vector<8x8xf32>
    %30 = tpu.matmul %27, %28, %cst_12 {dimension_numbers = #tpu.dot_dimension_numbers<[1], [1], [0], [0], [0, 0, 1, 0], [], []>} : vector<8x16xf32>, vector<8x16xf32>, vector<8x8xf32> -> vector<8x8xf32>
    %cst_13 = arith.constant dense<0xFF800000> : vector<8xf32>
    %31 = vector.multi_reduction <maximumf>, %30, %cst_13 [1] : vector<8x8xf32> to vector<8xf32>
    %32 = vector.shape_cast %31 : vector<8xf32> to vector<8x1xf32>
    %33 = vector.broadcast %32 : vector<8x1xf32> to vector<8x8xf32>
    %34 = arith.subf %30, %33 : vector<8x8xf32>
    %35 = math.exp %34 : vector<8x8xf32>
    %cst_14 = arith.constant dense<0.000000e+00> : vector<8xf32>
    %36 = vector.multi_reduction <add>, %35, %cst_14 [1] : vector<8x8xf32> to vector<8xf32>
    %37 = vector.shape_cast %36 : vector<8xf32> to vector<8x1xf32>
    %38 = tpu.reciprocal %37 {approx = true} : vector<8x1xf32> -> vector<8x1xf32>
    %39 = vector.broadcast %38 : vector<8x1xf32> to vector<8x8xf32>
    %40 = arith.mulf %35, %39 : vector<8x8xf32>
    %cst_15 = arith.constant dense<0.000000e+00> : vector<8x16xf32>
    %41 = tpu.matmul %40, %29, %cst_15 {dimension_numbers = #tpu.dot_dimension_numbers<[1], [0], [0], [1], [0, 0, 1, 1], [], []>} : vector<8x8xf32>, vector<8x16xf32>, vector<8x16xf32> -> vector<8x16xf32>
    %42 = vector.extract_strided_slice %9 {offsets = [0, 32], sizes = [8, 16], strides = [1, 1]} : vector<8x64xf32> to vector<8x16xf32>
    %43 = vector.extract_strided_slice %10 {offsets = [0, 32], sizes = [8, 16], strides = [1, 1]} : vector<8x64xf32> to vector<8x16xf32>
    %44 = vector.extract_strided_slice %11 {offsets = [0, 32], sizes = [8, 16], strides = [1, 1]} : vector<8x64xf32> to vector<8x16xf32>
    %cst_16 = arith.constant dense<0.000000e+00> : vector<8x8xf32>
    %45 = tpu.matmul %42, %43, %cst_16 {dimension_numbers = #tpu.dot_dimension_numbers<[1], [1], [0], [0], [0, 0, 1, 0], [], []>} : vector<8x16xf32>, vector<8x16xf32>, vector<8x8xf32> -> vector<8x8xf32>
    %cst_17 = arith.constant dense<0xFF800000> : vector<8xf32>
    %46 = vector.multi_reduction <maximumf>, %45, %cst_17 [1] : vector<8x8xf32> to vector<8xf32>
    %47 = vector.shape_cast %46 : vector<8xf32> to vector<8x1xf32>
    %48 = vector.broadcast %47 : vector<8x1xf32> to vector<8x8xf32>
    %49 = arith.subf %45, %48 : vector<8x8xf32>
    %50 = math.exp %49 : vector<8x8xf32>
    %cst_18 = arith.constant dense<0.000000e+00> : vector<8xf32>
    %51 = vector.multi_reduction <add>, %50, %cst_18 [1] : vector<8x8xf32> to vector<8xf32>
    %52 = vector.shape_cast %51 : vector<8xf32> to vector<8x1xf32>
    %53 = tpu.reciprocal %52 {approx = true} : vector<8x1xf32> -> vector<8x1xf32>
    %54 = vector.broadcast %53 : vector<8x1xf32> to vector<8x8xf32>
    %55 = arith.mulf %50, %54 : vector<8x8xf32>
    %cst_19 = arith.constant dense<0.000000e+00> : vector<8x16xf32>
    %56 = tpu.matmul %55, %44, %cst_19 {dimension_numbers = #tpu.dot_dimension_numbers<[1], [0], [0], [1], [0, 0, 1, 1], [], []>} : vector<8x8xf32>, vector<8x16xf32>, vector<8x16xf32> -> vector<8x16xf32>
    %57 = vector.extract_strided_slice %9 {offsets = [0, 48], sizes = [8, 16], strides = [1, 1]} : vector<8x64xf32> to vector<8x16xf32>
    %58 = vector.extract_strided_slice %10 {offsets = [0, 48], sizes = [8, 16], strides = [1, 1]} : vector<8x64xf32> to vector<8x16xf32>
    %59 = vector.extract_strided_slice %11 {offsets = [0, 48], sizes = [8, 16], strides = [1, 1]} : vector<8x64xf32> to vector<8x16xf32>
    %cst_20 = arith.constant dense<0.000000e+00> : vector<8x8xf32>
    %60 = tpu.matmul %57, %58, %cst_20 {dimension_numbers = #tpu.dot_dimension_numbers<[1], [1], [0], [0], [0, 0, 1, 0], [], []>} : vector<8x16xf32>, vector<8x16xf32>, vector<8x8xf32> -> vector<8x8xf32>
    %cst_21 = arith.constant dense<0xFF800000> : vector<8xf32>
    %61 = vector.multi_reduction <maximumf>, %60, %cst_21 [1] : vector<8x8xf32> to vector<8xf32>
    %62 = vector.shape_cast %61 : vector<8xf32> to vector<8x1xf32>
    %63 = vector.broadcast %62 : vector<8x1xf32> to vector<8x8xf32>
    %64 = arith.subf %60, %63 : vector<8x8xf32>
    %65 = math.exp %64 : vector<8x8xf32>
    %cst_22 = arith.constant dense<0.000000e+00> : vector<8xf32>
    %66 = vector.multi_reduction <add>, %65, %cst_22 [1] : vector<8x8xf32> to vector<8xf32>
    %67 = vector.shape_cast %66 : vector<8xf32> to vector<8x1xf32>
    %68 = tpu.reciprocal %67 {approx = true} : vector<8x1xf32> -> vector<8x1xf32>
    %69 = vector.broadcast %68 : vector<8x1xf32> to vector<8x8xf32>
    %70 = arith.mulf %65, %69 : vector<8x8xf32>
    %cst_23 = arith.constant dense<0.000000e+00> : vector<8x16xf32>
    %71 = tpu.matmul %70, %59, %cst_23 {dimension_numbers = #tpu.dot_dimension_numbers<[1], [0], [0], [1], [0, 0, 1, 1], [], []>} : vector<8x8xf32>, vector<8x16xf32>, vector<8x16xf32> -> vector<8x16xf32>
    %72 = tpu.concatenate %26, %41, %56, %71 in 1 : vector<8x16xf32>, vector<8x16xf32>, vector<8x16xf32>, vector<8x16xf32> -> vector<8x64xf32>
    %c0_24 = arith.constant 0 : index
    %c0_25 = arith.constant 0 : index
    %c0_26 = arith.constant 0 : index
    %73 = vector.load %arg5[%c0_24, %c0_25, %c0_26] : memref<2x64x64xf32, #tpu.memory_space<vmem>>, vector<1x64x64xf32>
    %74 = vector.shape_cast %73 : vector<1x64x64xf32> to vector<64x64xf32>
    %cst_27 = arith.constant dense<0.000000e+00> : vector<8x64xf32>
    %75 = tpu.matmul %72, %74, %cst_27 {dimension_numbers = #tpu.dot_dimension_numbers<[1], [0], [0], [1], [0, 0, 1, 1], [], []>} : vector<8x64xf32>, vector<64x64xf32>, vector<8x64xf32> -> vector<8x64xf32>
    %c0_28 = arith.constant 0 : index
    %c0_29 = arith.constant 0 : index
    %c0_30 = arith.constant 0 : index
    %76 = vector.load %arg6[%c0_28, %c0_29, %c0_30] : memref<2x1x64xf32, #tpu.memory_space<vmem>>, vector<1x1x64xf32>
    %77 = vector.shape_cast %76 : vector<1x1x64xf32> to vector<1x64xf32>
    %78 = vector.broadcast %77 : vector<1x64xf32> to vector<8x64xf32>
    %79 = arith.addf %75, %78 : vector<8x64xf32>
    %c0_31 = arith.constant 0 : index
    %c0_32 = arith.constant 0 : index
    %c0_33 = arith.constant 0 : index
    %80 = vector.load %arg7[%c0_31, %c0_32, %c0_33] : memref<2x4x64xf32, #tpu.memory_space<vmem>>, vector<1x4x64xf32>
    %81 = vector.shape_cast %80 : vector<1x4x64xf32> to vector<4x64xf32>
    %82 = arith.addf %79, %1 : vector<8x64xf32>
    %83 = vector.extract_strided_slice %81 {offsets = [0, 0], sizes = [1, 64], strides = [1, 1]} : vector<4x64xf32> to vector<1x64xf32>
    %84 = vector.extract_strided_slice %81 {offsets = [1, 0], sizes = [1, 64], strides = [1, 1]} : vector<4x64xf32> to vector<1x64xf32>
    %cst_34 = arith.constant dense<0.000000e+00> : vector<8xf32>
    %85 = vector.multi_reduction <add>, %82, %cst_34 [1] : vector<8x64xf32> to vector<8xf32>
    %86 = vector.shape_cast %85 : vector<8xf32> to vector<8x1xf32>
    %cst_35 = arith.constant 6.400000e+01 : f32
    %87 = vector.broadcast %cst_35 : f32 to vector<8x1xf32>
    %88 = arith.divf %86, %87 : vector<8x1xf32>
    %89 = vector.broadcast %88 : vector<8x1xf32> to vector<8x64xf32>
    %90 = arith.subf %82, %89 : vector<8x64xf32>
    %91 = arith.mulf %90, %90 : vector<8x64xf32>
    %cst_36 = arith.constant dense<0.000000e+00> : vector<8xf32>
    %92 = vector.multi_reduction <add>, %91, %cst_36 [1] : vector<8x64xf32> to vector<8xf32>
    %93 = vector.shape_cast %92 : vector<8xf32> to vector<8x1xf32>
    %cst_37 = arith.constant 6.400000e+01 : f32
    %94 = vector.broadcast %cst_37 : f32 to vector<8x1xf32>
    %95 = arith.divf %93, %94 : vector<8x1xf32>
    %96 = vector.broadcast %88 : vector<8x1xf32> to vector<8x64xf32>
    %97 = arith.subf %82, %96 : vector<8x64xf32>
    %cst_38 = arith.constant 9.99999974E-6 : f32
    %98 = vector.broadcast %cst_38 : f32 to vector<8x1xf32>
    %99 = arith.addf %95, %98 : vector<8x1xf32>
    %100 = math.rsqrt %99 : vector<8x1xf32>
    %101 = vector.broadcast %100 : vector<8x1xf32> to vector<8x64xf32>
    %102 = arith.mulf %97, %101 : vector<8x64xf32>
    %103 = vector.broadcast %83 : vector<1x64xf32> to vector<8x64xf32>
    %104 = arith.mulf %102, %103 : vector<8x64xf32>
    %105 = vector.broadcast %84 : vector<1x64xf32> to vector<8x64xf32>
    %106 = arith.addf %104, %105 : vector<8x64xf32>
    %107 = arith.addf %106, %106 : vector<8x64xf32>
    %108 = vector.extract_strided_slice %81 {offsets = [2, 0], sizes = [1, 64], strides = [1, 1]} : vector<4x64xf32> to vector<1x64xf32>
    %109 = vector.extract_strided_slice %81 {offsets = [3, 0], sizes = [1, 64], strides = [1, 1]} : vector<4x64xf32> to vector<1x64xf32>
    %cst_39 = arith.constant dense<0.000000e+00> : vector<8xf32>
    %110 = vector.multi_reduction <add>, %107, %cst_39 [1] : vector<8x64xf32> to vector<8xf32>
    %111 = vector.shape_cast %110 : vector<8xf32> to vector<8x1xf32>
    %cst_40 = arith.constant 6.400000e+01 : f32
    %112 = vector.broadcast %cst_40 : f32 to vector<8x1xf32>
    %113 = arith.divf %111, %112 : vector<8x1xf32>
    %114 = vector.broadcast %113 : vector<8x1xf32> to vector<8x64xf32>
    %115 = arith.subf %107, %114 : vector<8x64xf32>
    %116 = arith.mulf %115, %115 : vector<8x64xf32>
    %cst_41 = arith.constant dense<0.000000e+00> : vector<8xf32>
    %117 = vector.multi_reduction <add>, %116, %cst_41 [1] : vector<8x64xf32> to vector<8xf32>
    %118 = vector.shape_cast %117 : vector<8xf32> to vector<8x1xf32>
    %cst_42 = arith.constant 6.400000e+01 : f32
    %119 = vector.broadcast %cst_42 : f32 to vector<8x1xf32>
    %120 = arith.divf %118, %119 : vector<8x1xf32>
    %121 = vector.broadcast %113 : vector<8x1xf32> to vector<8x64xf32>
    %122 = arith.subf %107, %121 : vector<8x64xf32>
    %cst_43 = arith.constant 9.99999974E-6 : f32
    %123 = vector.broadcast %cst_43 : f32 to vector<8x1xf32>
    %124 = arith.addf %120, %123 : vector<8x1xf32>
    %125 = math.rsqrt %124 : vector<8x1xf32>
    %126 = vector.broadcast %125 : vector<8x1xf32> to vector<8x64xf32>
    %127 = arith.mulf %122, %126 : vector<8x64xf32>
    %128 = vector.broadcast %108 : vector<1x64xf32> to vector<8x64xf32>
    %129 = arith.mulf %127, %128 : vector<8x64xf32>
    %130 = vector.broadcast %109 : vector<1x64xf32> to vector<8x64xf32>
    %131 = arith.addf %129, %130 : vector<8x64xf32>
    %c1 = arith.constant 1 : index
    %c0_44 = arith.constant 0 : index
    %c0_45 = arith.constant 0 : index
    %132 = vector.load %arg3[%c1, %c0_44, %c0_45] : memref<2x64x192xf32, #tpu.memory_space<vmem>>, vector<1x64x192xf32>
    %133 = vector.shape_cast %132 : vector<1x64x192xf32> to vector<64x192xf32>
    %cst_46 = arith.constant dense<0.000000e+00> : vector<8x192xf32>
    %134 = tpu.matmul %131, %133, %cst_46 {dimension_numbers = #tpu.dot_dimension_numbers<[1], [0], [0], [1], [0, 0, 1, 1], [], []>} : vector<8x64xf32>, vector<64x192xf32>, vector<8x192xf32> -> vector<8x192xf32>
    %c1_47 = arith.constant 1 : index
    %c0_48 = arith.constant 0 : index
    %c0_49 = arith.constant 0 : index
    %135 = vector.load %arg4[%c1_47, %c0_48, %c0_49] : memref<2x1x192xf32, #tpu.memory_space<vmem>>, vector<1x1x192xf32>
    %136 = vector.shape_cast %135 : vector<1x1x192xf32> to vector<1x192xf32>
    %137 = vector.broadcast %136 : vector<1x192xf32> to vector<8x192xf32>
    %138 = arith.addf %134, %137 : vector<8x192xf32>
    %139 = vector.extract_strided_slice %138 {offsets = [0, 0], sizes = [8, 64], strides = [1, 1]} : vector<8x192xf32> to vector<8x64xf32>
    %140 = vector.extract_strided_slice %138 {offsets = [0, 64], sizes = [8, 64], strides = [1, 1]} : vector<8x192xf32> to vector<8x64xf32>
    %141 = vector.extract_strided_slice %138 {offsets = [0, 128], sizes = [8, 64], strides = [1, 1]} : vector<8x192xf32> to vector<8x64xf32>
    %142 = vector.extract_strided_slice %139 {offsets = [0, 0], sizes = [8, 16], strides = [1, 1]} : vector<8x64xf32> to vector<8x16xf32>
    %143 = vector.extract_strided_slice %140 {offsets = [0, 0], sizes = [8, 16], strides = [1, 1]} : vector<8x64xf32> to vector<8x16xf32>
    %144 = vector.extract_strided_slice %141 {offsets = [0, 0], sizes = [8, 16], strides = [1, 1]} : vector<8x64xf32> to vector<8x16xf32>
    %cst_50 = arith.constant dense<0.000000e+00> : vector<8x8xf32>
    %145 = tpu.matmul %142, %143, %cst_50 {dimension_numbers = #tpu.dot_dimension_numbers<[1], [1], [0], [0], [0, 0, 1, 0], [], []>} : vector<8x16xf32>, vector<8x16xf32>, vector<8x8xf32> -> vector<8x8xf32>
    %cst_51 = arith.constant dense<0xFF800000> : vector<8xf32>
    %146 = vector.multi_reduction <maximumf>, %145, %cst_51 [1] : vector<8x8xf32> to vector<8xf32>
    %147 = vector.shape_cast %146 : vector<8xf32> to vector<8x1xf32>
    %148 = vector.broadcast %147 : vector<8x1xf32> to vector<8x8xf32>
    %149 = arith.subf %145, %148 : vector<8x8xf32>
    %150 = math.exp %149 : vector<8x8xf32>
    %cst_52 = arith.constant dense<0.000000e+00> : vector<8xf32>
    %151 = vector.multi_reduction <add>, %150, %cst_52 [1] : vector<8x8xf32> to vector<8xf32>
    %152 = vector.shape_cast %151 : vector<8xf32> to vector<8x1xf32>
    %153 = tpu.reciprocal %152 {approx = true} : vector<8x1xf32> -> vector<8x1xf32>
    %154 = vector.broadcast %153 : vector<8x1xf32> to vector<8x8xf32>
    %155 = arith.mulf %150, %154 : vector<8x8xf32>
    %cst_53 = arith.constant dense<0.000000e+00> : vector<8x16xf32>
    %156 = tpu.matmul %155, %144, %cst_53 {dimension_numbers = #tpu.dot_dimension_numbers<[1], [0], [0], [1], [0, 0, 1, 1], [], []>} : vector<8x8xf32>, vector<8x16xf32>, vector<8x16xf32> -> vector<8x16xf32>
    %157 = vector.extract_strided_slice %139 {offsets = [0, 16], sizes = [8, 16], strides = [1, 1]} : vector<8x64xf32> to vector<8x16xf32>
    %158 = vector.extract_strided_slice %140 {offsets = [0, 16], sizes = [8, 16], strides = [1, 1]} : vector<8x64xf32> to vector<8x16xf32>
    %159 = vector.extract_strided_slice %141 {offsets = [0, 16], sizes = [8, 16], strides = [1, 1]} : vector<8x64xf32> to vector<8x16xf32>
    %cst_54 = arith.constant dense<0.000000e+00> : vector<8x8xf32>
    %160 = tpu.matmul %157, %158, %cst_54 {dimension_numbers = #tpu.dot_dimension_numbers<[1], [1], [0], [0], [0, 0, 1, 0], [], []>} : vector<8x16xf32>, vector<8x16xf32>, vector<8x8xf32> -> vector<8x8xf32>
    %cst_55 = arith.constant dense<0xFF800000> : vector<8xf32>
    %161 = vector.multi_reduction <maximumf>, %160, %cst_55 [1] : vector<8x8xf32> to vector<8xf32>
    %162 = vector.shape_cast %161 : vector<8xf32> to vector<8x1xf32>
    %163 = vector.broadcast %162 : vector<8x1xf32> to vector<8x8xf32>
    %164 = arith.subf %160, %163 : vector<8x8xf32>
    %165 = math.exp %164 : vector<8x8xf32>
    %cst_56 = arith.constant dense<0.000000e+00> : vector<8xf32>
    %166 = vector.multi_reduction <add>, %165, %cst_56 [1] : vector<8x8xf32> to vector<8xf32>
    %167 = vector.shape_cast %166 : vector<8xf32> to vector<8x1xf32>
    %168 = tpu.reciprocal %167 {approx = true} : vector<8x1xf32> -> vector<8x1xf32>
    %169 = vector.broadcast %168 : vector<8x1xf32> to vector<8x8xf32>
    %170 = arith.mulf %165, %169 : vector<8x8xf32>
    %cst_57 = arith.constant dense<0.000000e+00> : vector<8x16xf32>
    %171 = tpu.matmul %170, %159, %cst_57 {dimension_numbers = #tpu.dot_dimension_numbers<[1], [0], [0], [1], [0, 0, 1, 1], [], []>} : vector<8x8xf32>, vector<8x16xf32>, vector<8x16xf32> -> vector<8x16xf32>
    %172 = vector.extract_strided_slice %139 {offsets = [0, 32], sizes = [8, 16], strides = [1, 1]} : vector<8x64xf32> to vector<8x16xf32>
    %173 = vector.extract_strided_slice %140 {offsets = [0, 32], sizes = [8, 16], strides = [1, 1]} : vector<8x64xf32> to vector<8x16xf32>
    %174 = vector.extract_strided_slice %141 {offsets = [0, 32], sizes = [8, 16], strides = [1, 1]} : vector<8x64xf32> to vector<8x16xf32>
    %cst_58 = arith.constant dense<0.000000e+00> : vector<8x8xf32>
    %175 = tpu.matmul %172, %173, %cst_58 {dimension_numbers = #tpu.dot_dimension_numbers<[1], [1], [0], [0], [0, 0, 1, 0], [], []>} : vector<8x16xf32>, vector<8x16xf32>, vector<8x8xf32> -> vector<8x8xf32>
    %cst_59 = arith.constant dense<0xFF800000> : vector<8xf32>
    %176 = vector.multi_reduction <maximumf>, %175, %cst_59 [1] : vector<8x8xf32> to vector<8xf32>
    %177 = vector.shape_cast %176 : vector<8xf32> to vector<8x1xf32>
    %178 = vector.broadcast %177 : vector<8x1xf32> to vector<8x8xf32>
    %179 = arith.subf %175, %178 : vector<8x8xf32>
    %180 = math.exp %179 : vector<8x8xf32>
    %cst_60 = arith.constant dense<0.000000e+00> : vector<8xf32>
    %181 = vector.multi_reduction <add>, %180, %cst_60 [1] : vector<8x8xf32> to vector<8xf32>
    %182 = vector.shape_cast %181 : vector<8xf32> to vector<8x1xf32>
    %183 = tpu.reciprocal %182 {approx = true} : vector<8x1xf32> -> vector<8x1xf32>
    %184 = vector.broadcast %183 : vector<8x1xf32> to vector<8x8xf32>
    %185 = arith.mulf %180, %184 : vector<8x8xf32>
    %cst_61 = arith.constant dense<0.000000e+00> : vector<8x16xf32>
    %186 = tpu.matmul %185, %174, %cst_61 {dimension_numbers = #tpu.dot_dimension_numbers<[1], [0], [0], [1], [0, 0, 1, 1], [], []>} : vector<8x8xf32>, vector<8x16xf32>, vector<8x16xf32> -> vector<8x16xf32>
    %187 = vector.extract_strided_slice %139 {offsets = [0, 48], sizes = [8, 16], strides = [1, 1]} : vector<8x64xf32> to vector<8x16xf32>
    %188 = vector.extract_strided_slice %140 {offsets = [0, 48], sizes = [8, 16], strides = [1, 1]} : vector<8x64xf32> to vector<8x16xf32>
    %189 = vector.extract_strided_slice %141 {offsets = [0, 48], sizes = [8, 16], strides = [1, 1]} : vector<8x64xf32> to vector<8x16xf32>
    %cst_62 = arith.constant dense<0.000000e+00> : vector<8x8xf32>
    %190 = tpu.matmul %187, %188, %cst_62 {dimension_numbers = #tpu.dot_dimension_numbers<[1], [1], [0], [0], [0, 0, 1, 0], [], []>} : vector<8x16xf32>, vector<8x16xf32>, vector<8x8xf32> -> vector<8x8xf32>
    %cst_63 = arith.constant dense<0xFF800000> : vector<8xf32>
    %191 = vector.multi_reduction <maximumf>, %190, %cst_63 [1] : vector<8x8xf32> to vector<8xf32>
    %192 = vector.shape_cast %191 : vector<8xf32> to vector<8x1xf32>
    %193 = vector.broadcast %192 : vector<8x1xf32> to vector<8x8xf32>
    %194 = arith.subf %190, %193 : vector<8x8xf32>
    %195 = math.exp %194 : vector<8x8xf32>
    %cst_64 = arith.constant dense<0.000000e+00> : vector<8xf32>
    %196 = vector.multi_reduction <add>, %195, %cst_64 [1] : vector<8x8xf32> to vector<8xf32>
    %197 = vector.shape_cast %196 : vector<8xf32> to vector<8x1xf32>
    %198 = tpu.reciprocal %197 {approx = true} : vector<8x1xf32> -> vector<8x1xf32>
    %199 = vector.broadcast %198 : vector<8x1xf32> to vector<8x8xf32>
    %200 = arith.mulf %195, %199 : vector<8x8xf32>
    %cst_65 = arith.constant dense<0.000000e+00> : vector<8x16xf32>
    %201 = tpu.matmul %200, %189, %cst_65 {dimension_numbers = #tpu.dot_dimension_numbers<[1], [0], [0], [1], [0, 0, 1, 1], [], []>} : vector<8x8xf32>, vector<8x16xf32>, vector<8x16xf32> -> vector<8x16xf32>
    %202 = tpu.concatenate %156, %171, %186, %201 in 1 : vector<8x16xf32>, vector<8x16xf32>, vector<8x16xf32>, vector<8x16xf32> -> vector<8x64xf32>
    %c1_66 = arith.constant 1 : index
    %c0_67 = arith.constant 0 : index
    %c0_68 = arith.constant 0 : index
    %203 = vector.load %arg5[%c1_66, %c0_67, %c0_68] : memref<2x64x64xf32, #tpu.memory_space<vmem>>, vector<1x64x64xf32>
    %204 = vector.shape_cast %203 : vector<1x64x64xf32> to vector<64x64xf32>
    %cst_69 = arith.constant dense<0.000000e+00> : vector<8x64xf32>
    %205 = tpu.matmul %202, %204, %cst_69 {dimension_numbers = #tpu.dot_dimension_numbers<[1], [0], [0], [1], [0, 0, 1, 1], [], []>} : vector<8x64xf32>, vector<64x64xf32>, vector<8x64xf32> -> vector<8x64xf32>
    %c1_70 = arith.constant 1 : index
    %c0_71 = arith.constant 0 : index
    %c0_72 = arith.constant 0 : index
    %206 = vector.load %arg6[%c1_70, %c0_71, %c0_72] : memref<2x1x64xf32, #tpu.memory_space<vmem>>, vector<1x1x64xf32>
    %207 = vector.shape_cast %206 : vector<1x1x64xf32> to vector<1x64xf32>
    %208 = vector.broadcast %207 : vector<1x64xf32> to vector<8x64xf32>
    %209 = arith.addf %205, %208 : vector<8x64xf32>
    %c1_73 = arith.constant 1 : index
    %c0_74 = arith.constant 0 : index
    %c0_75 = arith.constant 0 : index
    %210 = vector.load %arg7[%c1_73, %c0_74, %c0_75] : memref<2x4x64xf32, #tpu.memory_space<vmem>>, vector<1x4x64xf32>
    %211 = vector.shape_cast %210 : vector<1x4x64xf32> to vector<4x64xf32>
    %212 = arith.addf %209, %131 : vector<8x64xf32>
    %213 = vector.extract_strided_slice %211 {offsets = [0, 0], sizes = [1, 64], strides = [1, 1]} : vector<4x64xf32> to vector<1x64xf32>
    %214 = vector.extract_strided_slice %211 {offsets = [1, 0], sizes = [1, 64], strides = [1, 1]} : vector<4x64xf32> to vector<1x64xf32>
    %cst_76 = arith.constant dense<0.000000e+00> : vector<8xf32>
    %215 = vector.multi_reduction <add>, %212, %cst_76 [1] : vector<8x64xf32> to vector<8xf32>
    %216 = vector.shape_cast %215 : vector<8xf32> to vector<8x1xf32>
    %cst_77 = arith.constant 6.400000e+01 : f32
    %217 = vector.broadcast %cst_77 : f32 to vector<8x1xf32>
    %218 = arith.divf %216, %217 : vector<8x1xf32>
    %219 = vector.broadcast %218 : vector<8x1xf32> to vector<8x64xf32>
    %220 = arith.subf %212, %219 : vector<8x64xf32>
    %221 = arith.mulf %220, %220 : vector<8x64xf32>
    %cst_78 = arith.constant dense<0.000000e+00> : vector<8xf32>
    %222 = vector.multi_reduction <add>, %221, %cst_78 [1] : vector<8x64xf32> to vector<8xf32>
    %223 = vector.shape_cast %222 : vector<8xf32> to vector<8x1xf32>
    %cst_79 = arith.constant 6.400000e+01 : f32
    %224 = vector.broadcast %cst_79 : f32 to vector<8x1xf32>
    %225 = arith.divf %223, %224 : vector<8x1xf32>
    %226 = vector.broadcast %218 : vector<8x1xf32> to vector<8x64xf32>
    %227 = arith.subf %212, %226 : vector<8x64xf32>
    %cst_80 = arith.constant 9.99999974E-6 : f32
    %228 = vector.broadcast %cst_80 : f32 to vector<8x1xf32>
    %229 = arith.addf %225, %228 : vector<8x1xf32>
    %230 = math.rsqrt %229 : vector<8x1xf32>
    %231 = vector.broadcast %230 : vector<8x1xf32> to vector<8x64xf32>
    %232 = arith.mulf %227, %231 : vector<8x64xf32>
    %233 = vector.broadcast %213 : vector<1x64xf32> to vector<8x64xf32>
    %234 = arith.mulf %232, %233 : vector<8x64xf32>
    %235 = vector.broadcast %214 : vector<1x64xf32> to vector<8x64xf32>
    %236 = arith.addf %234, %235 : vector<8x64xf32>
    %237 = arith.addf %236, %236 : vector<8x64xf32>
    %238 = vector.extract_strided_slice %211 {offsets = [2, 0], sizes = [1, 64], strides = [1, 1]} : vector<4x64xf32> to vector<1x64xf32>
    %239 = vector.extract_strided_slice %211 {offsets = [3, 0], sizes = [1, 64], strides = [1, 1]} : vector<4x64xf32> to vector<1x64xf32>
    %cst_81 = arith.constant dense<0.000000e+00> : vector<8xf32>
    %240 = vector.multi_reduction <add>, %237, %cst_81 [1] : vector<8x64xf32> to vector<8xf32>
    %241 = vector.shape_cast %240 : vector<8xf32> to vector<8x1xf32>
    %cst_82 = arith.constant 6.400000e+01 : f32
    %242 = vector.broadcast %cst_82 : f32 to vector<8x1xf32>
    %243 = arith.divf %241, %242 : vector<8x1xf32>
    %244 = vector.broadcast %243 : vector<8x1xf32> to vector<8x64xf32>
    %245 = arith.subf %237, %244 : vector<8x64xf32>
    %246 = arith.mulf %245, %245 : vector<8x64xf32>
    %cst_83 = arith.constant dense<0.000000e+00> : vector<8xf32>
    %247 = vector.multi_reduction <add>, %246, %cst_83 [1] : vector<8x64xf32> to vector<8xf32>
    %248 = vector.shape_cast %247 : vector<8xf32> to vector<8x1xf32>
    %cst_84 = arith.constant 6.400000e+01 : f32
    %249 = vector.broadcast %cst_84 : f32 to vector<8x1xf32>
    %250 = arith.divf %248, %249 : vector<8x1xf32>
    %251 = vector.broadcast %243 : vector<8x1xf32> to vector<8x64xf32>
    %252 = arith.subf %237, %251 : vector<8x64xf32>
    %cst_85 = arith.constant 9.99999974E-6 : f32
    %253 = vector.broadcast %cst_85 : f32 to vector<8x1xf32>
    %254 = arith.addf %250, %253 : vector<8x1xf32>
    %255 = math.rsqrt %254 : vector<8x1xf32>
    %256 = vector.broadcast %255 : vector<8x1xf32> to vector<8x64xf32>
    %257 = arith.mulf %252, %256 : vector<8x64xf32>
    %258 = vector.broadcast %238 : vector<1x64xf32> to vector<8x64xf32>
    %259 = arith.mulf %257, %258 : vector<8x64xf32>
    %260 = vector.broadcast %239 : vector<1x64xf32> to vector<8x64xf32>
    %261 = arith.addf %259, %260 : vector<8x64xf32>
    %c0_86 = arith.constant 0 : index
    %c0_87 = arith.constant 0 : index
    %262 = vector.load %arg14[%c0_86, %c0_87] : memref<64x256xf32, #tpu.memory_space<vmem>>, vector<64x256xf32>
    %cst_88 = arith.constant dense<0.000000e+00> : vector<8x256xf32>
    %263 = tpu.matmul %261, %262, %cst_88 {dimension_numbers = #tpu.dot_dimension_numbers<[1], [0], [0], [1], [0, 0, 1, 1], [], []>} : vector<8x64xf32>, vector<64x256xf32>, vector<8x256xf32> -> vector<8x256xf32>
    %c0_89 = arith.constant 0 : index
    %c0_90 = arith.constant 0 : index
    %264 = vector.load %arg15[%c0_89, %c0_90] : memref<1x256xf32, #tpu.memory_space<vmem>>, vector<1x256xf32>
    %265 = vector.broadcast %264 : vector<1x256xf32> to vector<8x256xf32>
    %266 = arith.addf %263, %265 : vector<8x256xf32>
    %c0_91 = arith.constant 0 : index
    %c0_92 = arith.constant 0 : index
    %c0_93 = arith.constant 0 : index
    %267 = vector.load %arg2[%c0_91, %c0_92, %c0_93] : memref<1x8x64xf32, #tpu.memory_space<vmem>>, vector<1x8x64xf32>
    %268 = vector.shape_cast %267 : vector<1x8x64xf32> to vector<8x64xf32>
    %c0_94 = arith.constant 0 : index
    %c0_95 = arith.constant 0 : index
    %c0_96 = arith.constant 0 : index
    %269 = vector.load %arg18[%c0_94, %c0_95, %c0_96] : memref<2x6x64xf32, #tpu.memory_space<vmem>>, vector<1x6x64xf32>
    %270 = vector.shape_cast %269 : vector<1x6x64xf32> to vector<6x64xf32>
    %c0_97 = arith.constant 0 : index
    %c0_98 = arith.constant 0 : index
    %c0_99 = arith.constant 0 : index
    %271 = vector.load %arg8[%c0_97, %c0_98, %c0_99] : memref<2x64x192xf32, #tpu.memory_space<vmem>>, vector<1x64x192xf32>
    %272 = vector.shape_cast %271 : vector<1x64x192xf32> to vector<64x192xf32>
    %cst_100 = arith.constant dense<0.000000e+00> : vector<8x192xf32>
    %273 = tpu.matmul %268, %272, %cst_100 {dimension_numbers = #tpu.dot_dimension_numbers<[1], [0], [0], [1], [0, 0, 1, 1], [], []>} : vector<8x64xf32>, vector<64x192xf32>, vector<8x192xf32> -> vector<8x192xf32>
    %c0_101 = arith.constant 0 : index
    %c0_102 = arith.constant 0 : index
    %c0_103 = arith.constant 0 : index
    %274 = vector.load %arg9[%c0_101, %c0_102, %c0_103] : memref<2x1x192xf32, #tpu.memory_space<vmem>>, vector<1x1x192xf32>
    %275 = vector.shape_cast %274 : vector<1x1x192xf32> to vector<1x192xf32>
    %276 = vector.broadcast %275 : vector<1x192xf32> to vector<8x192xf32>
    %277 = arith.addf %273, %276 : vector<8x192xf32>
    %278 = vector.extract_strided_slice %277 {offsets = [0, 0], sizes = [8, 64], strides = [1, 1]} : vector<8x192xf32> to vector<8x64xf32>
    %279 = vector.extract_strided_slice %277 {offsets = [0, 64], sizes = [8, 64], strides = [1, 1]} : vector<8x192xf32> to vector<8x64xf32>
    %280 = vector.extract_strided_slice %277 {offsets = [0, 128], sizes = [8, 64], strides = [1, 1]} : vector<8x192xf32> to vector<8x64xf32>
    %281 = vector.extract_strided_slice %278 {offsets = [0, 0], sizes = [8, 16], strides = [1, 1]} : vector<8x64xf32> to vector<8x16xf32>
    %282 = vector.extract_strided_slice %279 {offsets = [0, 0], sizes = [8, 16], strides = [1, 1]} : vector<8x64xf32> to vector<8x16xf32>
    %283 = vector.extract_strided_slice %280 {offsets = [0, 0], sizes = [8, 16], strides = [1, 1]} : vector<8x64xf32> to vector<8x16xf32>
    %cst_104 = arith.constant dense<0.000000e+00> : vector<8x8xf32>
    %284 = tpu.matmul %281, %282, %cst_104 {dimension_numbers = #tpu.dot_dimension_numbers<[1], [1], [0], [0], [0, 0, 1, 0], [], []>} : vector<8x16xf32>, vector<8x16xf32>, vector<8x8xf32> -> vector<8x8xf32>
    %cst_105 = arith.constant dense<0xFF800000> : vector<8xf32>
    %285 = vector.multi_reduction <maximumf>, %284, %cst_105 [1] : vector<8x8xf32> to vector<8xf32>
    %286 = vector.shape_cast %285 : vector<8xf32> to vector<8x1xf32>
    %287 = vector.broadcast %286 : vector<8x1xf32> to vector<8x8xf32>
    %288 = arith.subf %284, %287 : vector<8x8xf32>
    %289 = math.exp %288 : vector<8x8xf32>
    %cst_106 = arith.constant dense<0.000000e+00> : vector<8xf32>
    %290 = vector.multi_reduction <add>, %289, %cst_106 [1] : vector<8x8xf32> to vector<8xf32>
    %291 = vector.shape_cast %290 : vector<8xf32> to vector<8x1xf32>
    %292 = tpu.reciprocal %291 {approx = true} : vector<8x1xf32> -> vector<8x1xf32>
    %293 = vector.broadcast %292 : vector<8x1xf32> to vector<8x8xf32>
    %294 = arith.mulf %289, %293 : vector<8x8xf32>
    %cst_107 = arith.constant dense<0.000000e+00> : vector<8x16xf32>
    %295 = tpu.matmul %294, %283, %cst_107 {dimension_numbers = #tpu.dot_dimension_numbers<[1], [0], [0], [1], [0, 0, 1, 1], [], []>} : vector<8x8xf32>, vector<8x16xf32>, vector<8x16xf32> -> vector<8x16xf32>
    %296 = vector.extract_strided_slice %278 {offsets = [0, 16], sizes = [8, 16], strides = [1, 1]} : vector<8x64xf32> to vector<8x16xf32>
    %297 = vector.extract_strided_slice %279 {offsets = [0, 16], sizes = [8, 16], strides = [1, 1]} : vector<8x64xf32> to vector<8x16xf32>
    %298 = vector.extract_strided_slice %280 {offsets = [0, 16], sizes = [8, 16], strides = [1, 1]} : vector<8x64xf32> to vector<8x16xf32>
    %cst_108 = arith.constant dense<0.000000e+00> : vector<8x8xf32>
    %299 = tpu.matmul %296, %297, %cst_108 {dimension_numbers = #tpu.dot_dimension_numbers<[1], [1], [0], [0], [0, 0, 1, 0], [], []>} : vector<8x16xf32>, vector<8x16xf32>, vector<8x8xf32> -> vector<8x8xf32>
    %cst_109 = arith.constant dense<0xFF800000> : vector<8xf32>
    %300 = vector.multi_reduction <maximumf>, %299, %cst_109 [1] : vector<8x8xf32> to vector<8xf32>
    %301 = vector.shape_cast %300 : vector<8xf32> to vector<8x1xf32>
    %302 = vector.broadcast %301 : vector<8x1xf32> to vector<8x8xf32>
    %303 = arith.subf %299, %302 : vector<8x8xf32>
    %304 = math.exp %303 : vector<8x8xf32>
    %cst_110 = arith.constant dense<0.000000e+00> : vector<8xf32>
    %305 = vector.multi_reduction <add>, %304, %cst_110 [1] : vector<8x8xf32> to vector<8xf32>
    %306 = vector.shape_cast %305 : vector<8xf32> to vector<8x1xf32>
    %307 = tpu.reciprocal %306 {approx = true} : vector<8x1xf32> -> vector<8x1xf32>
    %308 = vector.broadcast %307 : vector<8x1xf32> to vector<8x8xf32>
    %309 = arith.mulf %304, %308 : vector<8x8xf32>
    %cst_111 = arith.constant dense<0.000000e+00> : vector<8x16xf32>
    %310 = tpu.matmul %309, %298, %cst_111 {dimension_numbers = #tpu.dot_dimension_numbers<[1], [0], [0], [1], [0, 0, 1, 1], [], []>} : vector<8x8xf32>, vector<8x16xf32>, vector<8x16xf32> -> vector<8x16xf32>
    %311 = vector.extract_strided_slice %278 {offsets = [0, 32], sizes = [8, 16], strides = [1, 1]} : vector<8x64xf32> to vector<8x16xf32>
    %312 = vector.extract_strided_slice %279 {offsets = [0, 32], sizes = [8, 16], strides = [1, 1]} : vector<8x64xf32> to vector<8x16xf32>
    %313 = vector.extract_strided_slice %280 {offsets = [0, 32], sizes = [8, 16], strides = [1, 1]} : vector<8x64xf32> to vector<8x16xf32>
    %cst_112 = arith.constant dense<0.000000e+00> : vector<8x8xf32>
    %314 = tpu.matmul %311, %312, %cst_112 {dimension_numbers = #tpu.dot_dimension_numbers<[1], [1], [0], [0], [0, 0, 1, 0], [], []>} : vector<8x16xf32>, vector<8x16xf32>, vector<8x8xf32> -> vector<8x8xf32>
    %cst_113 = arith.constant dense<0xFF800000> : vector<8xf32>
    %315 = vector.multi_reduction <maximumf>, %314, %cst_113 [1] : vector<8x8xf32> to vector<8xf32>
    %316 = vector.shape_cast %315 : vector<8xf32> to vector<8x1xf32>
    %317 = vector.broadcast %316 : vector<8x1xf32> to vector<8x8xf32>
    %318 = arith.subf %314, %317 : vector<8x8xf32>
    %319 = math.exp %318 : vector<8x8xf32>
    %cst_114 = arith.constant dense<0.000000e+00> : vector<8xf32>
    %320 = vector.multi_reduction <add>, %319, %cst_114 [1] : vector<8x8xf32> to vector<8xf32>
    %321 = vector.shape_cast %320 : vector<8xf32> to vector<8x1xf32>
    %322 = tpu.reciprocal %321 {approx = true} : vector<8x1xf32> -> vector<8x1xf32>
    %323 = vector.broadcast %322 : vector<8x1xf32> to vector<8x8xf32>
    %324 = arith.mulf %319, %323 : vector<8x8xf32>
    %cst_115 = arith.constant dense<0.000000e+00> : vector<8x16xf32>
    %325 = tpu.matmul %324, %313, %cst_115 {dimension_numbers = #tpu.dot_dimension_numbers<[1], [0], [0], [1], [0, 0, 1, 1], [], []>} : vector<8x8xf32>, vector<8x16xf32>, vector<8x16xf32> -> vector<8x16xf32>
    %326 = vector.extract_strided_slice %278 {offsets = [0, 48], sizes = [8, 16], strides = [1, 1]} : vector<8x64xf32> to vector<8x16xf32>
    %327 = vector.extract_strided_slice %279 {offsets = [0, 48], sizes = [8, 16], strides = [1, 1]} : vector<8x64xf32> to vector<8x16xf32>
    %328 = vector.extract_strided_slice %280 {offsets = [0, 48], sizes = [8, 16], strides = [1, 1]} : vector<8x64xf32> to vector<8x16xf32>
    %cst_116 = arith.constant dense<0.000000e+00> : vector<8x8xf32>
    %329 = tpu.matmul %326, %327, %cst_116 {dimension_numbers = #tpu.dot_dimension_numbers<[1], [1], [0], [0], [0, 0, 1, 0], [], []>} : vector<8x16xf32>, vector<8x16xf32>, vector<8x8xf32> -> vector<8x8xf32>
    %cst_117 = arith.constant dense<0xFF800000> : vector<8xf32>
    %330 = vector.multi_reduction <maximumf>, %329, %cst_117 [1] : vector<8x8xf32> to vector<8xf32>
    %331 = vector.shape_cast %330 : vector<8xf32> to vector<8x1xf32>
    %332 = vector.broadcast %331 : vector<8x1xf32> to vector<8x8xf32>
    %333 = arith.subf %329, %332 : vector<8x8xf32>
    %334 = math.exp %333 : vector<8x8xf32>
    %cst_118 = arith.constant dense<0.000000e+00> : vector<8xf32>
    %335 = vector.multi_reduction <add>, %334, %cst_118 [1] : vector<8x8xf32> to vector<8xf32>
    %336 = vector.shape_cast %335 : vector<8xf32> to vector<8x1xf32>
    %337 = tpu.reciprocal %336 {approx = true} : vector<8x1xf32> -> vector<8x1xf32>
    %338 = vector.broadcast %337 : vector<8x1xf32> to vector<8x8xf32>
    %339 = arith.mulf %334, %338 : vector<8x8xf32>
    %cst_119 = arith.constant dense<0.000000e+00> : vector<8x16xf32>
    %340 = tpu.matmul %339, %328, %cst_119 {dimension_numbers = #tpu.dot_dimension_numbers<[1], [0], [0], [1], [0, 0, 1, 1], [], []>} : vector<8x8xf32>, vector<8x16xf32>, vector<8x16xf32> -> vector<8x16xf32>
    %341 = tpu.concatenate %295, %310, %325, %340 in 1 : vector<8x16xf32>, vector<8x16xf32>, vector<8x16xf32>, vector<8x16xf32> -> vector<8x64xf32>
    %c0_120 = arith.constant 0 : index
    %c0_121 = arith.constant 0 : index
    %c0_122 = arith.constant 0 : index
    %342 = vector.load %arg10[%c0_120, %c0_121, %c0_122] : memref<2x64x64xf32, #tpu.memory_space<vmem>>, vector<1x64x64xf32>
    %343 = vector.shape_cast %342 : vector<1x64x64xf32> to vector<64x64xf32>
    %cst_123 = arith.constant dense<0.000000e+00> : vector<8x64xf32>
    %344 = tpu.matmul %341, %343, %cst_123 {dimension_numbers = #tpu.dot_dimension_numbers<[1], [0], [0], [1], [0, 0, 1, 1], [], []>} : vector<8x64xf32>, vector<64x64xf32>, vector<8x64xf32> -> vector<8x64xf32>
    %c0_124 = arith.constant 0 : index
    %c0_125 = arith.constant 0 : index
    %c0_126 = arith.constant 0 : index
    %345 = vector.load %arg11[%c0_124, %c0_125, %c0_126] : memref<2x1x64xf32, #tpu.memory_space<vmem>>, vector<1x1x64xf32>
    %346 = vector.shape_cast %345 : vector<1x1x64xf32> to vector<1x64xf32>
    %347 = vector.broadcast %346 : vector<1x64xf32> to vector<8x64xf32>
    %348 = arith.addf %344, %347 : vector<8x64xf32>
    %349 = arith.addf %348, %268 : vector<8x64xf32>
    %350 = vector.extract_strided_slice %270 {offsets = [0, 0], sizes = [1, 64], strides = [1, 1]} : vector<6x64xf32> to vector<1x64xf32>
    %351 = vector.extract_strided_slice %270 {offsets = [1, 0], sizes = [1, 64], strides = [1, 1]} : vector<6x64xf32> to vector<1x64xf32>
    %cst_127 = arith.constant dense<0.000000e+00> : vector<8xf32>
    %352 = vector.multi_reduction <add>, %349, %cst_127 [1] : vector<8x64xf32> to vector<8xf32>
    %353 = vector.shape_cast %352 : vector<8xf32> to vector<8x1xf32>
    %cst_128 = arith.constant 6.400000e+01 : f32
    %354 = vector.broadcast %cst_128 : f32 to vector<8x1xf32>
    %355 = arith.divf %353, %354 : vector<8x1xf32>
    %356 = vector.broadcast %355 : vector<8x1xf32> to vector<8x64xf32>
    %357 = arith.subf %349, %356 : vector<8x64xf32>
    %358 = arith.mulf %357, %357 : vector<8x64xf32>
    %cst_129 = arith.constant dense<0.000000e+00> : vector<8xf32>
    %359 = vector.multi_reduction <add>, %358, %cst_129 [1] : vector<8x64xf32> to vector<8xf32>
    %360 = vector.shape_cast %359 : vector<8xf32> to vector<8x1xf32>
    %cst_130 = arith.constant 6.400000e+01 : f32
    %361 = vector.broadcast %cst_130 : f32 to vector<8x1xf32>
    %362 = arith.divf %360, %361 : vector<8x1xf32>
    %363 = vector.broadcast %355 : vector<8x1xf32> to vector<8x64xf32>
    %364 = arith.subf %349, %363 : vector<8x64xf32>
    %cst_131 = arith.constant 9.99999974E-6 : f32
    %365 = vector.broadcast %cst_131 : f32 to vector<8x1xf32>
    %366 = arith.addf %362, %365 : vector<8x1xf32>
    %367 = math.rsqrt %366 : vector<8x1xf32>
    %368 = vector.broadcast %367 : vector<8x1xf32> to vector<8x64xf32>
    %369 = arith.mulf %364, %368 : vector<8x64xf32>
    %370 = vector.broadcast %350 : vector<1x64xf32> to vector<8x64xf32>
    %371 = arith.mulf %369, %370 : vector<8x64xf32>
    %372 = vector.broadcast %351 : vector<1x64xf32> to vector<8x64xf32>
    %373 = arith.addf %371, %372 : vector<8x64xf32>
    %c0_132 = arith.constant 0 : index
    %c0_133 = arith.constant 0 : index
    %c0_134 = arith.constant 0 : index
    %374 = vector.load %arg12[%c0_132, %c0_133, %c0_134] : memref<2x64x64xf32, #tpu.memory_space<vmem>>, vector<1x64x64xf32>
    %375 = vector.shape_cast %374 : vector<1x64x64xf32> to vector<64x64xf32>
    %cst_135 = arith.constant dense<0.000000e+00> : vector<8x64xf32>
    %376 = tpu.matmul %373, %375, %cst_135 {dimension_numbers = #tpu.dot_dimension_numbers<[1], [0], [0], [1], [0, 0, 1, 1], [], []>} : vector<8x64xf32>, vector<64x64xf32>, vector<8x64xf32> -> vector<8x64xf32>
    %c0_136 = arith.constant 0 : index
    %c0_137 = arith.constant 0 : index
    %c0_138 = arith.constant 0 : index
    %377 = vector.load %arg13[%c0_136, %c0_137, %c0_138] : memref<2x1x64xf32, #tpu.memory_space<vmem>>, vector<1x1x64xf32>
    %378 = vector.shape_cast %377 : vector<1x1x64xf32> to vector<1x64xf32>
    %379 = vector.broadcast %378 : vector<1x64xf32> to vector<8x64xf32>
    %380 = arith.addf %376, %379 : vector<8x64xf32>
    %381 = vector.extract_strided_slice %266 {offsets = [0, 0], sizes = [8, 64], strides = [1, 1]} : vector<8x256xf32> to vector<8x64xf32>
    %382 = vector.extract_strided_slice %266 {offsets = [0, 64], sizes = [8, 64], strides = [1, 1]} : vector<8x256xf32> to vector<8x64xf32>
    %383 = vector.extract_strided_slice %380 {offsets = [0, 0], sizes = [8, 16], strides = [1, 1]} : vector<8x64xf32> to vector<8x16xf32>
    %384 = vector.extract_strided_slice %381 {offsets = [0, 0], sizes = [8, 16], strides = [1, 1]} : vector<8x64xf32> to vector<8x16xf32>
    %385 = vector.extract_strided_slice %382 {offsets = [0, 0], sizes = [8, 16], strides = [1, 1]} : vector<8x64xf32> to vector<8x16xf32>
    %cst_139 = arith.constant dense<0.000000e+00> : vector<8x8xf32>
    %386 = tpu.matmul %383, %384, %cst_139 {dimension_numbers = #tpu.dot_dimension_numbers<[1], [1], [0], [0], [0, 0, 1, 0], [], []>} : vector<8x16xf32>, vector<8x16xf32>, vector<8x8xf32> -> vector<8x8xf32>
    %cst_140 = arith.constant dense<0xFF800000> : vector<8xf32>
    %387 = vector.multi_reduction <maximumf>, %386, %cst_140 [1] : vector<8x8xf32> to vector<8xf32>
    %388 = vector.shape_cast %387 : vector<8xf32> to vector<8x1xf32>
    %389 = vector.broadcast %388 : vector<8x1xf32> to vector<8x8xf32>
    %390 = arith.subf %386, %389 : vector<8x8xf32>
    %391 = math.exp %390 : vector<8x8xf32>
    %cst_141 = arith.constant dense<0.000000e+00> : vector<8xf32>
    %392 = vector.multi_reduction <add>, %391, %cst_141 [1] : vector<8x8xf32> to vector<8xf32>
    %393 = vector.shape_cast %392 : vector<8xf32> to vector<8x1xf32>
    %394 = tpu.reciprocal %393 {approx = true} : vector<8x1xf32> -> vector<8x1xf32>
    %395 = vector.broadcast %394 : vector<8x1xf32> to vector<8x8xf32>
    %396 = arith.mulf %391, %395 : vector<8x8xf32>
    %cst_142 = arith.constant dense<0.000000e+00> : vector<8x16xf32>
    %397 = tpu.matmul %396, %385, %cst_142 {dimension_numbers = #tpu.dot_dimension_numbers<[1], [0], [0], [1], [0, 0, 1, 1], [], []>} : vector<8x8xf32>, vector<8x16xf32>, vector<8x16xf32> -> vector<8x16xf32>
    %398 = vector.extract_strided_slice %380 {offsets = [0, 16], sizes = [8, 16], strides = [1, 1]} : vector<8x64xf32> to vector<8x16xf32>
    %399 = vector.extract_strided_slice %381 {offsets = [0, 16], sizes = [8, 16], strides = [1, 1]} : vector<8x64xf32> to vector<8x16xf32>
    %400 = vector.extract_strided_slice %382 {offsets = [0, 16], sizes = [8, 16], strides = [1, 1]} : vector<8x64xf32> to vector<8x16xf32>
    %cst_143 = arith.constant dense<0.000000e+00> : vector<8x8xf32>
    %401 = tpu.matmul %398, %399, %cst_143 {dimension_numbers = #tpu.dot_dimension_numbers<[1], [1], [0], [0], [0, 0, 1, 0], [], []>} : vector<8x16xf32>, vector<8x16xf32>, vector<8x8xf32> -> vector<8x8xf32>
    %cst_144 = arith.constant dense<0xFF800000> : vector<8xf32>
    %402 = vector.multi_reduction <maximumf>, %401, %cst_144 [1] : vector<8x8xf32> to vector<8xf32>
    %403 = vector.shape_cast %402 : vector<8xf32> to vector<8x1xf32>
    %404 = vector.broadcast %403 : vector<8x1xf32> to vector<8x8xf32>
    %405 = arith.subf %401, %404 : vector<8x8xf32>
    %406 = math.exp %405 : vector<8x8xf32>
    %cst_145 = arith.constant dense<0.000000e+00> : vector<8xf32>
    %407 = vector.multi_reduction <add>, %406, %cst_145 [1] : vector<8x8xf32> to vector<8xf32>
    %408 = vector.shape_cast %407 : vector<8xf32> to vector<8x1xf32>
    %409 = tpu.reciprocal %408 {approx = true} : vector<8x1xf32> -> vector<8x1xf32>
    %410 = vector.broadcast %409 : vector<8x1xf32> to vector<8x8xf32>
    %411 = arith.mulf %406, %410 : vector<8x8xf32>
    %cst_146 = arith.constant dense<0.000000e+00> : vector<8x16xf32>
    %412 = tpu.matmul %411, %400, %cst_146 {dimension_numbers = #tpu.dot_dimension_numbers<[1], [0], [0], [1], [0, 0, 1, 1], [], []>} : vector<8x8xf32>, vector<8x16xf32>, vector<8x16xf32> -> vector<8x16xf32>
    %413 = vector.extract_strided_slice %380 {offsets = [0, 32], sizes = [8, 16], strides = [1, 1]} : vector<8x64xf32> to vector<8x16xf32>
    %414 = vector.extract_strided_slice %381 {offsets = [0, 32], sizes = [8, 16], strides = [1, 1]} : vector<8x64xf32> to vector<8x16xf32>
    %415 = vector.extract_strided_slice %382 {offsets = [0, 32], sizes = [8, 16], strides = [1, 1]} : vector<8x64xf32> to vector<8x16xf32>
    %cst_147 = arith.constant dense<0.000000e+00> : vector<8x8xf32>
    %416 = tpu.matmul %413, %414, %cst_147 {dimension_numbers = #tpu.dot_dimension_numbers<[1], [1], [0], [0], [0, 0, 1, 0], [], []>} : vector<8x16xf32>, vector<8x16xf32>, vector<8x8xf32> -> vector<8x8xf32>
    %cst_148 = arith.constant dense<0xFF800000> : vector<8xf32>
    %417 = vector.multi_reduction <maximumf>, %416, %cst_148 [1] : vector<8x8xf32> to vector<8xf32>
    %418 = vector.shape_cast %417 : vector<8xf32> to vector<8x1xf32>
    %419 = vector.broadcast %418 : vector<8x1xf32> to vector<8x8xf32>
    %420 = arith.subf %416, %419 : vector<8x8xf32>
    %421 = math.exp %420 : vector<8x8xf32>
    %cst_149 = arith.constant dense<0.000000e+00> : vector<8xf32>
    %422 = vector.multi_reduction <add>, %421, %cst_149 [1] : vector<8x8xf32> to vector<8xf32>
    %423 = vector.shape_cast %422 : vector<8xf32> to vector<8x1xf32>
    %424 = tpu.reciprocal %423 {approx = true} : vector<8x1xf32> -> vector<8x1xf32>
    %425 = vector.broadcast %424 : vector<8x1xf32> to vector<8x8xf32>
    %426 = arith.mulf %421, %425 : vector<8x8xf32>
    %cst_150 = arith.constant dense<0.000000e+00> : vector<8x16xf32>
    %427 = tpu.matmul %426, %415, %cst_150 {dimension_numbers = #tpu.dot_dimension_numbers<[1], [0], [0], [1], [0, 0, 1, 1], [], []>} : vector<8x8xf32>, vector<8x16xf32>, vector<8x16xf32> -> vector<8x16xf32>
    %428 = vector.extract_strided_slice %380 {offsets = [0, 48], sizes = [8, 16], strides = [1, 1]} : vector<8x64xf32> to vector<8x16xf32>
    %429 = vector.extract_strided_slice %381 {offsets = [0, 48], sizes = [8, 16], strides = [1, 1]} : vector<8x64xf32> to vector<8x16xf32>
    %430 = vector.extract_strided_slice %382 {offsets = [0, 48], sizes = [8, 16], strides = [1, 1]} : vector<8x64xf32> to vector<8x16xf32>
    %cst_151 = arith.constant dense<0.000000e+00> : vector<8x8xf32>
    %431 = tpu.matmul %428, %429, %cst_151 {dimension_numbers = #tpu.dot_dimension_numbers<[1], [1], [0], [0], [0, 0, 1, 0], [], []>} : vector<8x16xf32>, vector<8x16xf32>, vector<8x8xf32> -> vector<8x8xf32>
    %cst_152 = arith.constant dense<0xFF800000> : vector<8xf32>
    %432 = vector.multi_reduction <maximumf>, %431, %cst_152 [1] : vector<8x8xf32> to vector<8xf32>
    %433 = vector.shape_cast %432 : vector<8xf32> to vector<8x1xf32>
    %434 = vector.broadcast %433 : vector<8x1xf32> to vector<8x8xf32>
    %435 = arith.subf %431, %434 : vector<8x8xf32>
    %436 = math.exp %435 : vector<8x8xf32>
    %cst_153 = arith.constant dense<0.000000e+00> : vector<8xf32>
    %437 = vector.multi_reduction <add>, %436, %cst_153 [1] : vector<8x8xf32> to vector<8xf32>
    %438 = vector.shape_cast %437 : vector<8xf32> to vector<8x1xf32>
    %439 = tpu.reciprocal %438 {approx = true} : vector<8x1xf32> -> vector<8x1xf32>
    %440 = vector.broadcast %439 : vector<8x1xf32> to vector<8x8xf32>
    %441 = arith.mulf %436, %440 : vector<8x8xf32>
    %cst_154 = arith.constant dense<0.000000e+00> : vector<8x16xf32>
    %442 = tpu.matmul %441, %430, %cst_154 {dimension_numbers = #tpu.dot_dimension_numbers<[1], [0], [0], [1], [0, 0, 1, 1], [], []>} : vector<8x8xf32>, vector<8x16xf32>, vector<8x16xf32> -> vector<8x16xf32>
    %443 = tpu.concatenate %397, %412, %427, %442 in 1 : vector<8x16xf32>, vector<8x16xf32>, vector<8x16xf32>, vector<8x16xf32> -> vector<8x64xf32>
    %c0_155 = arith.constant 0 : index
    %c0_156 = arith.constant 0 : index
    %c0_157 = arith.constant 0 : index
    %444 = vector.load %arg16[%c0_155, %c0_156, %c0_157] : memref<2x64x64xf32, #tpu.memory_space<vmem>>, vector<1x64x64xf32>
    %445 = vector.shape_cast %444 : vector<1x64x64xf32> to vector<64x64xf32>
    %cst_158 = arith.constant dense<0.000000e+00> : vector<8x64xf32>
    %446 = tpu.matmul %443, %445, %cst_158 {dimension_numbers = #tpu.dot_dimension_numbers<[1], [0], [0], [1], [0, 0, 1, 1], [], []>} : vector<8x64xf32>, vector<64x64xf32>, vector<8x64xf32> -> vector<8x64xf32>
    %c0_159 = arith.constant 0 : index
    %c0_160 = arith.constant 0 : index
    %c0_161 = arith.constant 0 : index
    %447 = vector.load %arg17[%c0_159, %c0_160, %c0_161] : memref<2x1x64xf32, #tpu.memory_space<vmem>>, vector<1x1x64xf32>
    %448 = vector.shape_cast %447 : vector<1x1x64xf32> to vector<1x64xf32>
    %449 = vector.broadcast %448 : vector<1x64xf32> to vector<8x64xf32>
    %450 = arith.addf %446, %449 : vector<8x64xf32>
    %451 = arith.addf %450, %373 : vector<8x64xf32>
    %452 = vector.extract_strided_slice %270 {offsets = [2, 0], sizes = [1, 64], strides = [1, 1]} : vector<6x64xf32> to vector<1x64xf32>
    %453 = vector.extract_strided_slice %270 {offsets = [3, 0], sizes = [1, 64], strides = [1, 1]} : vector<6x64xf32> to vector<1x64xf32>
    %cst_162 = arith.constant dense<0.000000e+00> : vector<8xf32>
    %454 = vector.multi_reduction <add>, %451, %cst_162 [1] : vector<8x64xf32> to vector<8xf32>
    %455 = vector.shape_cast %454 : vector<8xf32> to vector<8x1xf32>
    %cst_163 = arith.constant 6.400000e+01 : f32
    %456 = vector.broadcast %cst_163 : f32 to vector<8x1xf32>
    %457 = arith.divf %455, %456 : vector<8x1xf32>
    %458 = vector.broadcast %457 : vector<8x1xf32> to vector<8x64xf32>
    %459 = arith.subf %451, %458 : vector<8x64xf32>
    %460 = arith.mulf %459, %459 : vector<8x64xf32>
    %cst_164 = arith.constant dense<0.000000e+00> : vector<8xf32>
    %461 = vector.multi_reduction <add>, %460, %cst_164 [1] : vector<8x64xf32> to vector<8xf32>
    %462 = vector.shape_cast %461 : vector<8xf32> to vector<8x1xf32>
    %cst_165 = arith.constant 6.400000e+01 : f32
    %463 = vector.broadcast %cst_165 : f32 to vector<8x1xf32>
    %464 = arith.divf %462, %463 : vector<8x1xf32>
    %465 = vector.broadcast %457 : vector<8x1xf32> to vector<8x64xf32>
    %466 = arith.subf %451, %465 : vector<8x64xf32>
    %cst_166 = arith.constant 9.99999974E-6 : f32
    %467 = vector.broadcast %cst_166 : f32 to vector<8x1xf32>
    %468 = arith.addf %464, %467 : vector<8x1xf32>
    %469 = math.rsqrt %468 : vector<8x1xf32>
    %470 = vector.broadcast %469 : vector<8x1xf32> to vector<8x64xf32>
    %471 = arith.mulf %466, %470 : vector<8x64xf32>
    %472 = vector.broadcast %452 : vector<1x64xf32> to vector<8x64xf32>
    %473 = arith.mulf %471, %472 : vector<8x64xf32>
    %474 = vector.broadcast %453 : vector<1x64xf32> to vector<8x64xf32>
    %475 = arith.addf %473, %474 : vector<8x64xf32>
    %476 = arith.addf %475, %475 : vector<8x64xf32>
    %477 = vector.extract_strided_slice %270 {offsets = [4, 0], sizes = [1, 64], strides = [1, 1]} : vector<6x64xf32> to vector<1x64xf32>
    %478 = vector.extract_strided_slice %270 {offsets = [5, 0], sizes = [1, 64], strides = [1, 1]} : vector<6x64xf32> to vector<1x64xf32>
    %cst_167 = arith.constant dense<0.000000e+00> : vector<8xf32>
    %479 = vector.multi_reduction <add>, %476, %cst_167 [1] : vector<8x64xf32> to vector<8xf32>
    %480 = vector.shape_cast %479 : vector<8xf32> to vector<8x1xf32>
    %cst_168 = arith.constant 6.400000e+01 : f32
    %481 = vector.broadcast %cst_168 : f32 to vector<8x1xf32>
    %482 = arith.divf %480, %481 : vector<8x1xf32>
    %483 = vector.broadcast %482 : vector<8x1xf32> to vector<8x64xf32>
    %484 = arith.subf %476, %483 : vector<8x64xf32>
    %485 = arith.mulf %484, %484 : vector<8x64xf32>
    %cst_169 = arith.constant dense<0.000000e+00> : vector<8xf32>
    %486 = vector.multi_reduction <add>, %485, %cst_169 [1] : vector<8x64xf32> to vector<8xf32>
    %487 = vector.shape_cast %486 : vector<8xf32> to vector<8x1xf32>
    %cst_170 = arith.constant 6.400000e+01 : f32
    %488 = vector.broadcast %cst_170 : f32 to vector<8x1xf32>
    %489 = arith.divf %487, %488 : vector<8x1xf32>
    %490 = vector.broadcast %482 : vector<8x1xf32> to vector<8x64xf32>
    %491 = arith.subf %476, %490 : vector<8x64xf32>
    %cst_171 = arith.constant 9.99999974E-6 : f32
    %492 = vector.broadcast %cst_171 : f32 to vector<8x1xf32>
    %493 = arith.addf %489, %492 : vector<8x1xf32>
    %494 = math.rsqrt %493 : vector<8x1xf32>
    %495 = vector.broadcast %494 : vector<8x1xf32> to vector<8x64xf32>
    %496 = arith.mulf %491, %495 : vector<8x64xf32>
    %497 = vector.broadcast %477 : vector<1x64xf32> to vector<8x64xf32>
    %498 = arith.mulf %496, %497 : vector<8x64xf32>
    %499 = vector.broadcast %478 : vector<1x64xf32> to vector<8x64xf32>
    %500 = arith.addf %498, %499 : vector<8x64xf32>
    %c1_172 = arith.constant 1 : index
    %c0_173 = arith.constant 0 : index
    %c0_174 = arith.constant 0 : index
    %501 = vector.load %arg18[%c1_172, %c0_173, %c0_174] : memref<2x6x64xf32, #tpu.memory_space<vmem>>, vector<1x6x64xf32>
    %502 = vector.shape_cast %501 : vector<1x6x64xf32> to vector<6x64xf32>
    %c1_175 = arith.constant 1 : index
    %c0_176 = arith.constant 0 : index
    %c0_177 = arith.constant 0 : index
    %503 = vector.load %arg8[%c1_175, %c0_176, %c0_177] : memref<2x64x192xf32, #tpu.memory_space<vmem>>, vector<1x64x192xf32>
    %504 = vector.shape_cast %503 : vector<1x64x192xf32> to vector<64x192xf32>
    %cst_178 = arith.constant dense<0.000000e+00> : vector<8x192xf32>
    %505 = tpu.matmul %500, %504, %cst_178 {dimension_numbers = #tpu.dot_dimension_numbers<[1], [0], [0], [1], [0, 0, 1, 1], [], []>} : vector<8x64xf32>, vector<64x192xf32>, vector<8x192xf32> -> vector<8x192xf32>
    %c1_179 = arith.constant 1 : index
    %c0_180 = arith.constant 0 : index
    %c0_181 = arith.constant 0 : index
    %506 = vector.load %arg9[%c1_179, %c0_180, %c0_181] : memref<2x1x192xf32, #tpu.memory_space<vmem>>, vector<1x1x192xf32>
    %507 = vector.shape_cast %506 : vector<1x1x192xf32> to vector<1x192xf32>
    %508 = vector.broadcast %507 : vector<1x192xf32> to vector<8x192xf32>
    %509 = arith.addf %505, %508 : vector<8x192xf32>
    %510 = vector.extract_strided_slice %509 {offsets = [0, 0], sizes = [8, 64], strides = [1, 1]} : vector<8x192xf32> to vector<8x64xf32>
    %511 = vector.extract_strided_slice %509 {offsets = [0, 64], sizes = [8, 64], strides = [1, 1]} : vector<8x192xf32> to vector<8x64xf32>
    %512 = vector.extract_strided_slice %509 {offsets = [0, 128], sizes = [8, 64], strides = [1, 1]} : vector<8x192xf32> to vector<8x64xf32>
    %513 = vector.extract_strided_slice %510 {offsets = [0, 0], sizes = [8, 16], strides = [1, 1]} : vector<8x64xf32> to vector<8x16xf32>
    %514 = vector.extract_strided_slice %511 {offsets = [0, 0], sizes = [8, 16], strides = [1, 1]} : vector<8x64xf32> to vector<8x16xf32>
    %515 = vector.extract_strided_slice %512 {offsets = [0, 0], sizes = [8, 16], strides = [1, 1]} : vector<8x64xf32> to vector<8x16xf32>
    %cst_182 = arith.constant dense<0.000000e+00> : vector<8x8xf32>
    %516 = tpu.matmul %513, %514, %cst_182 {dimension_numbers = #tpu.dot_dimension_numbers<[1], [1], [0], [0], [0, 0, 1, 0], [], []>} : vector<8x16xf32>, vector<8x16xf32>, vector<8x8xf32> -> vector<8x8xf32>
    %cst_183 = arith.constant dense<0xFF800000> : vector<8xf32>
    %517 = vector.multi_reduction <maximumf>, %516, %cst_183 [1] : vector<8x8xf32> to vector<8xf32>
    %518 = vector.shape_cast %517 : vector<8xf32> to vector<8x1xf32>
    %519 = vector.broadcast %518 : vector<8x1xf32> to vector<8x8xf32>
    %520 = arith.subf %516, %519 : vector<8x8xf32>
    %521 = math.exp %520 : vector<8x8xf32>
    %cst_184 = arith.constant dense<0.000000e+00> : vector<8xf32>
    %522 = vector.multi_reduction <add>, %521, %cst_184 [1] : vector<8x8xf32> to vector<8xf32>
    %523 = vector.shape_cast %522 : vector<8xf32> to vector<8x1xf32>
    %524 = tpu.reciprocal %523 {approx = true} : vector<8x1xf32> -> vector<8x1xf32>
    %525 = vector.broadcast %524 : vector<8x1xf32> to vector<8x8xf32>
    %526 = arith.mulf %521, %525 : vector<8x8xf32>
    %cst_185 = arith.constant dense<0.000000e+00> : vector<8x16xf32>
    %527 = tpu.matmul %526, %515, %cst_185 {dimension_numbers = #tpu.dot_dimension_numbers<[1], [0], [0], [1], [0, 0, 1, 1], [], []>} : vector<8x8xf32>, vector<8x16xf32>, vector<8x16xf32> -> vector<8x16xf32>
    %528 = vector.extract_strided_slice %510 {offsets = [0, 16], sizes = [8, 16], strides = [1, 1]} : vector<8x64xf32> to vector<8x16xf32>
    %529 = vector.extract_strided_slice %511 {offsets = [0, 16], sizes = [8, 16], strides = [1, 1]} : vector<8x64xf32> to vector<8x16xf32>
    %530 = vector.extract_strided_slice %512 {offsets = [0, 16], sizes = [8, 16], strides = [1, 1]} : vector<8x64xf32> to vector<8x16xf32>
    %cst_186 = arith.constant dense<0.000000e+00> : vector<8x8xf32>
    %531 = tpu.matmul %528, %529, %cst_186 {dimension_numbers = #tpu.dot_dimension_numbers<[1], [1], [0], [0], [0, 0, 1, 0], [], []>} : vector<8x16xf32>, vector<8x16xf32>, vector<8x8xf32> -> vector<8x8xf32>
    %cst_187 = arith.constant dense<0xFF800000> : vector<8xf32>
    %532 = vector.multi_reduction <maximumf>, %531, %cst_187 [1] : vector<8x8xf32> to vector<8xf32>
    %533 = vector.shape_cast %532 : vector<8xf32> to vector<8x1xf32>
    %534 = vector.broadcast %533 : vector<8x1xf32> to vector<8x8xf32>
    %535 = arith.subf %531, %534 : vector<8x8xf32>
    %536 = math.exp %535 : vector<8x8xf32>
    %cst_188 = arith.constant dense<0.000000e+00> : vector<8xf32>
    %537 = vector.multi_reduction <add>, %536, %cst_188 [1] : vector<8x8xf32> to vector<8xf32>
    %538 = vector.shape_cast %537 : vector<8xf32> to vector<8x1xf32>
    %539 = tpu.reciprocal %538 {approx = true} : vector<8x1xf32> -> vector<8x1xf32>
    %540 = vector.broadcast %539 : vector<8x1xf32> to vector<8x8xf32>
    %541 = arith.mulf %536, %540 : vector<8x8xf32>
    %cst_189 = arith.constant dense<0.000000e+00> : vector<8x16xf32>
    %542 = tpu.matmul %541, %530, %cst_189 {dimension_numbers = #tpu.dot_dimension_numbers<[1], [0], [0], [1], [0, 0, 1, 1], [], []>} : vector<8x8xf32>, vector<8x16xf32>, vector<8x16xf32> -> vector<8x16xf32>
    %543 = vector.extract_strided_slice %510 {offsets = [0, 32], sizes = [8, 16], strides = [1, 1]} : vector<8x64xf32> to vector<8x16xf32>
    %544 = vector.extract_strided_slice %511 {offsets = [0, 32], sizes = [8, 16], strides = [1, 1]} : vector<8x64xf32> to vector<8x16xf32>
    %545 = vector.extract_strided_slice %512 {offsets = [0, 32], sizes = [8, 16], strides = [1, 1]} : vector<8x64xf32> to vector<8x16xf32>
    %cst_190 = arith.constant dense<0.000000e+00> : vector<8x8xf32>
    %546 = tpu.matmul %543, %544, %cst_190 {dimension_numbers = #tpu.dot_dimension_numbers<[1], [1], [0], [0], [0, 0, 1, 0], [], []>} : vector<8x16xf32>, vector<8x16xf32>, vector<8x8xf32> -> vector<8x8xf32>
    %cst_191 = arith.constant dense<0xFF800000> : vector<8xf32>
    %547 = vector.multi_reduction <maximumf>, %546, %cst_191 [1] : vector<8x8xf32> to vector<8xf32>
    %548 = vector.shape_cast %547 : vector<8xf32> to vector<8x1xf32>
    %549 = vector.broadcast %548 : vector<8x1xf32> to vector<8x8xf32>
    %550 = arith.subf %546, %549 : vector<8x8xf32>
    %551 = math.exp %550 : vector<8x8xf32>
    %cst_192 = arith.constant dense<0.000000e+00> : vector<8xf32>
    %552 = vector.multi_reduction <add>, %551, %cst_192 [1] : vector<8x8xf32> to vector<8xf32>
    %553 = vector.shape_cast %552 : vector<8xf32> to vector<8x1xf32>
    %554 = tpu.reciprocal %553 {approx = true} : vector<8x1xf32> -> vector<8x1xf32>
    %555 = vector.broadcast %554 : vector<8x1xf32> to vector<8x8xf32>
    %556 = arith.mulf %551, %555 : vector<8x8xf32>
    %cst_193 = arith.constant dense<0.000000e+00> : vector<8x16xf32>
    %557 = tpu.matmul %556, %545, %cst_193 {dimension_numbers = #tpu.dot_dimension_numbers<[1], [0], [0], [1], [0, 0, 1, 1], [], []>} : vector<8x8xf32>, vector<8x16xf32>, vector<8x16xf32> -> vector<8x16xf32>
    %558 = vector.extract_strided_slice %510 {offsets = [0, 48], sizes = [8, 16], strides = [1, 1]} : vector<8x64xf32> to vector<8x16xf32>
    %559 = vector.extract_strided_slice %511 {offsets = [0, 48], sizes = [8, 16], strides = [1, 1]} : vector<8x64xf32> to vector<8x16xf32>
    %560 = vector.extract_strided_slice %512 {offsets = [0, 48], sizes = [8, 16], strides = [1, 1]} : vector<8x64xf32> to vector<8x16xf32>
    %cst_194 = arith.constant dense<0.000000e+00> : vector<8x8xf32>
    %561 = tpu.matmul %558, %559, %cst_194 {dimension_numbers = #tpu.dot_dimension_numbers<[1], [1], [0], [0], [0, 0, 1, 0], [], []>} : vector<8x16xf32>, vector<8x16xf32>, vector<8x8xf32> -> vector<8x8xf32>
    %cst_195 = arith.constant dense<0xFF800000> : vector<8xf32>
    %562 = vector.multi_reduction <maximumf>, %561, %cst_195 [1] : vector<8x8xf32> to vector<8xf32>
    %563 = vector.shape_cast %562 : vector<8xf32> to vector<8x1xf32>
    %564 = vector.broadcast %563 : vector<8x1xf32> to vector<8x8xf32>
    %565 = arith.subf %561, %564 : vector<8x8xf32>
    %566 = math.exp %565 : vector<8x8xf32>
    %cst_196 = arith.constant dense<0.000000e+00> : vector<8xf32>
    %567 = vector.multi_reduction <add>, %566, %cst_196 [1] : vector<8x8xf32> to vector<8xf32>
    %568 = vector.shape_cast %567 : vector<8xf32> to vector<8x1xf32>
    %569 = tpu.reciprocal %568 {approx = true} : vector<8x1xf32> -> vector<8x1xf32>
    %570 = vector.broadcast %569 : vector<8x1xf32> to vector<8x8xf32>
    %571 = arith.mulf %566, %570 : vector<8x8xf32>
    %cst_197 = arith.constant dense<0.000000e+00> : vector<8x16xf32>
    %572 = tpu.matmul %571, %560, %cst_197 {dimension_numbers = #tpu.dot_dimension_numbers<[1], [0], [0], [1], [0, 0, 1, 1], [], []>} : vector<8x8xf32>, vector<8x16xf32>, vector<8x16xf32> -> vector<8x16xf32>
    %573 = tpu.concatenate %527, %542, %557, %572 in 1 : vector<8x16xf32>, vector<8x16xf32>, vector<8x16xf32>, vector<8x16xf32> -> vector<8x64xf32>
    %c1_198 = arith.constant 1 : index
    %c0_199 = arith.constant 0 : index
    %c0_200 = arith.constant 0 : index
    %574 = vector.load %arg10[%c1_198, %c0_199, %c0_200] : memref<2x64x64xf32, #tpu.memory_space<vmem>>, vector<1x64x64xf32>
    %575 = vector.shape_cast %574 : vector<1x64x64xf32> to vector<64x64xf32>
    %cst_201 = arith.constant dense<0.000000e+00> : vector<8x64xf32>
    %576 = tpu.matmul %573, %575, %cst_201 {dimension_numbers = #tpu.dot_dimension_numbers<[1], [0], [0], [1], [0, 0, 1, 1], [], []>} : vector<8x64xf32>, vector<64x64xf32>, vector<8x64xf32> -> vector<8x64xf32>
    %c1_202 = arith.constant 1 : index
    %c0_203 = arith.constant 0 : index
    %c0_204 = arith.constant 0 : index
    %577 = vector.load %arg11[%c1_202, %c0_203, %c0_204] : memref<2x1x64xf32, #tpu.memory_space<vmem>>, vector<1x1x64xf32>
    %578 = vector.shape_cast %577 : vector<1x1x64xf32> to vector<1x64xf32>
    %579 = vector.broadcast %578 : vector<1x64xf32> to vector<8x64xf32>
    %580 = arith.addf %576, %579 : vector<8x64xf32>
    %581 = arith.addf %580, %500 : vector<8x64xf32>
    %582 = vector.extract_strided_slice %502 {offsets = [0, 0], sizes = [1, 64], strides = [1, 1]} : vector<6x64xf32> to vector<1x64xf32>
    %583 = vector.extract_strided_slice %502 {offsets = [1, 0], sizes = [1, 64], strides = [1, 1]} : vector<6x64xf32> to vector<1x64xf32>
    %cst_205 = arith.constant dense<0.000000e+00> : vector<8xf32>
    %584 = vector.multi_reduction <add>, %581, %cst_205 [1] : vector<8x64xf32> to vector<8xf32>
    %585 = vector.shape_cast %584 : vector<8xf32> to vector<8x1xf32>
    %cst_206 = arith.constant 6.400000e+01 : f32
    %586 = vector.broadcast %cst_206 : f32 to vector<8x1xf32>
    %587 = arith.divf %585, %586 : vector<8x1xf32>
    %588 = vector.broadcast %587 : vector<8x1xf32> to vector<8x64xf32>
    %589 = arith.subf %581, %588 : vector<8x64xf32>
    %590 = arith.mulf %589, %589 : vector<8x64xf32>
    %cst_207 = arith.constant dense<0.000000e+00> : vector<8xf32>
    %591 = vector.multi_reduction <add>, %590, %cst_207 [1] : vector<8x64xf32> to vector<8xf32>
    %592 = vector.shape_cast %591 : vector<8xf32> to vector<8x1xf32>
    %cst_208 = arith.constant 6.400000e+01 : f32
    %593 = vector.broadcast %cst_208 : f32 to vector<8x1xf32>
    %594 = arith.divf %592, %593 : vector<8x1xf32>
    %595 = vector.broadcast %587 : vector<8x1xf32> to vector<8x64xf32>
    %596 = arith.subf %581, %595 : vector<8x64xf32>
    %cst_209 = arith.constant 9.99999974E-6 : f32
    %597 = vector.broadcast %cst_209 : f32 to vector<8x1xf32>
    %598 = arith.addf %594, %597 : vector<8x1xf32>
    %599 = math.rsqrt %598 : vector<8x1xf32>
    %600 = vector.broadcast %599 : vector<8x1xf32> to vector<8x64xf32>
    %601 = arith.mulf %596, %600 : vector<8x64xf32>
    %602 = vector.broadcast %582 : vector<1x64xf32> to vector<8x64xf32>
    %603 = arith.mulf %601, %602 : vector<8x64xf32>
    %604 = vector.broadcast %583 : vector<1x64xf32> to vector<8x64xf32>
    %605 = arith.addf %603, %604 : vector<8x64xf32>
    %c1_210 = arith.constant 1 : index
    %c0_211 = arith.constant 0 : index
    %c0_212 = arith.constant 0 : index
    %606 = vector.load %arg12[%c1_210, %c0_211, %c0_212] : memref<2x64x64xf32, #tpu.memory_space<vmem>>, vector<1x64x64xf32>
    %607 = vector.shape_cast %606 : vector<1x64x64xf32> to vector<64x64xf32>
    %cst_213 = arith.constant dense<0.000000e+00> : vector<8x64xf32>
    %608 = tpu.matmul %605, %607, %cst_213 {dimension_numbers = #tpu.dot_dimension_numbers<[1], [0], [0], [1], [0, 0, 1, 1], [], []>} : vector<8x64xf32>, vector<64x64xf32>, vector<8x64xf32> -> vector<8x64xf32>
    %c1_214 = arith.constant 1 : index
    %c0_215 = arith.constant 0 : index
    %c0_216 = arith.constant 0 : index
    %609 = vector.load %arg13[%c1_214, %c0_215, %c0_216] : memref<2x1x64xf32, #tpu.memory_space<vmem>>, vector<1x1x64xf32>
    %610 = vector.shape_cast %609 : vector<1x1x64xf32> to vector<1x64xf32>
    %611 = vector.broadcast %610 : vector<1x64xf32> to vector<8x64xf32>
    %612 = arith.addf %608, %611 : vector<8x64xf32>
    %613 = vector.extract_strided_slice %266 {offsets = [0, 128], sizes = [8, 64], strides = [1, 1]} : vector<8x256xf32> to vector<8x64xf32>
    %614 = vector.extract_strided_slice %266 {offsets = [0, 192], sizes = [8, 64], strides = [1, 1]} : vector<8x256xf32> to vector<8x64xf32>
    %615 = vector.extract_strided_slice %612 {offsets = [0, 0], sizes = [8, 16], strides = [1, 1]} : vector<8x64xf32> to vector<8x16xf32>
    %616 = vector.extract_strided_slice %613 {offsets = [0, 0], sizes = [8, 16], strides = [1, 1]} : vector<8x64xf32> to vector<8x16xf32>
    %617 = vector.extract_strided_slice %614 {offsets = [0, 0], sizes = [8, 16], strides = [1, 1]} : vector<8x64xf32> to vector<8x16xf32>
    %cst_217 = arith.constant dense<0.000000e+00> : vector<8x8xf32>
    %618 = tpu.matmul %615, %616, %cst_217 {dimension_numbers = #tpu.dot_dimension_numbers<[1], [1], [0], [0], [0, 0, 1, 0], [], []>} : vector<8x16xf32>, vector<8x16xf32>, vector<8x8xf32> -> vector<8x8xf32>
    %cst_218 = arith.constant dense<0xFF800000> : vector<8xf32>
    %619 = vector.multi_reduction <maximumf>, %618, %cst_218 [1] : vector<8x8xf32> to vector<8xf32>
    %620 = vector.shape_cast %619 : vector<8xf32> to vector<8x1xf32>
    %621 = vector.broadcast %620 : vector<8x1xf32> to vector<8x8xf32>
    %622 = arith.subf %618, %621 : vector<8x8xf32>
    %623 = math.exp %622 : vector<8x8xf32>
    %cst_219 = arith.constant dense<0.000000e+00> : vector<8xf32>
    %624 = vector.multi_reduction <add>, %623, %cst_219 [1] : vector<8x8xf32> to vector<8xf32>
    %625 = vector.shape_cast %624 : vector<8xf32> to vector<8x1xf32>
    %626 = tpu.reciprocal %625 {approx = true} : vector<8x1xf32> -> vector<8x1xf32>
    %627 = vector.broadcast %626 : vector<8x1xf32> to vector<8x8xf32>
    %628 = arith.mulf %623, %627 : vector<8x8xf32>
    %cst_220 = arith.constant dense<0.000000e+00> : vector<8x16xf32>
    %629 = tpu.matmul %628, %617, %cst_220 {dimension_numbers = #tpu.dot_dimension_numbers<[1], [0], [0], [1], [0, 0, 1, 1], [], []>} : vector<8x8xf32>, vector<8x16xf32>, vector<8x16xf32> -> vector<8x16xf32>
    %630 = vector.extract_strided_slice %612 {offsets = [0, 16], sizes = [8, 16], strides = [1, 1]} : vector<8x64xf32> to vector<8x16xf32>
    %631 = vector.extract_strided_slice %613 {offsets = [0, 16], sizes = [8, 16], strides = [1, 1]} : vector<8x64xf32> to vector<8x16xf32>
    %632 = vector.extract_strided_slice %614 {offsets = [0, 16], sizes = [8, 16], strides = [1, 1]} : vector<8x64xf32> to vector<8x16xf32>
    %cst_221 = arith.constant dense<0.000000e+00> : vector<8x8xf32>
    %633 = tpu.matmul %630, %631, %cst_221 {dimension_numbers = #tpu.dot_dimension_numbers<[1], [1], [0], [0], [0, 0, 1, 0], [], []>} : vector<8x16xf32>, vector<8x16xf32>, vector<8x8xf32> -> vector<8x8xf32>
    %cst_222 = arith.constant dense<0xFF800000> : vector<8xf32>
    %634 = vector.multi_reduction <maximumf>, %633, %cst_222 [1] : vector<8x8xf32> to vector<8xf32>
    %635 = vector.shape_cast %634 : vector<8xf32> to vector<8x1xf32>
    %636 = vector.broadcast %635 : vector<8x1xf32> to vector<8x8xf32>
    %637 = arith.subf %633, %636 : vector<8x8xf32>
    %638 = math.exp %637 : vector<8x8xf32>
    %cst_223 = arith.constant dense<0.000000e+00> : vector<8xf32>
    %639 = vector.multi_reduction <add>, %638, %cst_223 [1] : vector<8x8xf32> to vector<8xf32>
    %640 = vector.shape_cast %639 : vector<8xf32> to vector<8x1xf32>
    %641 = tpu.reciprocal %640 {approx = true} : vector<8x1xf32> -> vector<8x1xf32>
    %642 = vector.broadcast %641 : vector<8x1xf32> to vector<8x8xf32>
    %643 = arith.mulf %638, %642 : vector<8x8xf32>
    %cst_224 = arith.constant dense<0.000000e+00> : vector<8x16xf32>
    %644 = tpu.matmul %643, %632, %cst_224 {dimension_numbers = #tpu.dot_dimension_numbers<[1], [0], [0], [1], [0, 0, 1, 1], [], []>} : vector<8x8xf32>, vector<8x16xf32>, vector<8x16xf32> -> vector<8x16xf32>
    %645 = vector.extract_strided_slice %612 {offsets = [0, 32], sizes = [8, 16], strides = [1, 1]} : vector<8x64xf32> to vector<8x16xf32>
    %646 = vector.extract_strided_slice %613 {offsets = [0, 32], sizes = [8, 16], strides = [1, 1]} : vector<8x64xf32> to vector<8x16xf32>
    %647 = vector.extract_strided_slice %614 {offsets = [0, 32], sizes = [8, 16], strides = [1, 1]} : vector<8x64xf32> to vector<8x16xf32>
    %cst_225 = arith.constant dense<0.000000e+00> : vector<8x8xf32>
    %648 = tpu.matmul %645, %646, %cst_225 {dimension_numbers = #tpu.dot_dimension_numbers<[1], [1], [0], [0], [0, 0, 1, 0], [], []>} : vector<8x16xf32>, vector<8x16xf32>, vector<8x8xf32> -> vector<8x8xf32>
    %cst_226 = arith.constant dense<0xFF800000> : vector<8xf32>
    %649 = vector.multi_reduction <maximumf>, %648, %cst_226 [1] : vector<8x8xf32> to vector<8xf32>
    %650 = vector.shape_cast %649 : vector<8xf32> to vector<8x1xf32>
    %651 = vector.broadcast %650 : vector<8x1xf32> to vector<8x8xf32>
    %652 = arith.subf %648, %651 : vector<8x8xf32>
    %653 = math.exp %652 : vector<8x8xf32>
    %cst_227 = arith.constant dense<0.000000e+00> : vector<8xf32>
    %654 = vector.multi_reduction <add>, %653, %cst_227 [1] : vector<8x8xf32> to vector<8xf32>
    %655 = vector.shape_cast %654 : vector<8xf32> to vector<8x1xf32>
    %656 = tpu.reciprocal %655 {approx = true} : vector<8x1xf32> -> vector<8x1xf32>
    %657 = vector.broadcast %656 : vector<8x1xf32> to vector<8x8xf32>
    %658 = arith.mulf %653, %657 : vector<8x8xf32>
    %cst_228 = arith.constant dense<0.000000e+00> : vector<8x16xf32>
    %659 = tpu.matmul %658, %647, %cst_228 {dimension_numbers = #tpu.dot_dimension_numbers<[1], [0], [0], [1], [0, 0, 1, 1], [], []>} : vector<8x8xf32>, vector<8x16xf32>, vector<8x16xf32> -> vector<8x16xf32>
    %660 = vector.extract_strided_slice %612 {offsets = [0, 48], sizes = [8, 16], strides = [1, 1]} : vector<8x64xf32> to vector<8x16xf32>
    %661 = vector.extract_strided_slice %613 {offsets = [0, 48], sizes = [8, 16], strides = [1, 1]} : vector<8x64xf32> to vector<8x16xf32>
    %662 = vector.extract_strided_slice %614 {offsets = [0, 48], sizes = [8, 16], strides = [1, 1]} : vector<8x64xf32> to vector<8x16xf32>
    %cst_229 = arith.constant dense<0.000000e+00> : vector<8x8xf32>
    %663 = tpu.matmul %660, %661, %cst_229 {dimension_numbers = #tpu.dot_dimension_numbers<[1], [1], [0], [0], [0, 0, 1, 0], [], []>} : vector<8x16xf32>, vector<8x16xf32>, vector<8x8xf32> -> vector<8x8xf32>
    %cst_230 = arith.constant dense<0xFF800000> : vector<8xf32>
    %664 = vector.multi_reduction <maximumf>, %663, %cst_230 [1] : vector<8x8xf32> to vector<8xf32>
    %665 = vector.shape_cast %664 : vector<8xf32> to vector<8x1xf32>
    %666 = vector.broadcast %665 : vector<8x1xf32> to vector<8x8xf32>
    %667 = arith.subf %663, %666 : vector<8x8xf32>
    %668 = math.exp %667 : vector<8x8xf32>
    %cst_231 = arith.constant dense<0.000000e+00> : vector<8xf32>
    %669 = vector.multi_reduction <add>, %668, %cst_231 [1] : vector<8x8xf32> to vector<8xf32>
    %670 = vector.shape_cast %669 : vector<8xf32> to vector<8x1xf32>
    %671 = tpu.reciprocal %670 {approx = true} : vector<8x1xf32> -> vector<8x1xf32>
    %672 = vector.broadcast %671 : vector<8x1xf32> to vector<8x8xf32>
    %673 = arith.mulf %668, %672 : vector<8x8xf32>
    %cst_232 = arith.constant dense<0.000000e+00> : vector<8x16xf32>
    %674 = tpu.matmul %673, %662, %cst_232 {dimension_numbers = #tpu.dot_dimension_numbers<[1], [0], [0], [1], [0, 0, 1, 1], [], []>} : vector<8x8xf32>, vector<8x16xf32>, vector<8x16xf32> -> vector<8x16xf32>
    %675 = tpu.concatenate %629, %644, %659, %674 in 1 : vector<8x16xf32>, vector<8x16xf32>, vector<8x16xf32>, vector<8x16xf32> -> vector<8x64xf32>
    %c1_233 = arith.constant 1 : index
    %c0_234 = arith.constant 0 : index
    %c0_235 = arith.constant 0 : index
    %676 = vector.load %arg16[%c1_233, %c0_234, %c0_235] : memref<2x64x64xf32, #tpu.memory_space<vmem>>, vector<1x64x64xf32>
    %677 = vector.shape_cast %676 : vector<1x64x64xf32> to vector<64x64xf32>
    %cst_236 = arith.constant dense<0.000000e+00> : vector<8x64xf32>
    %678 = tpu.matmul %675, %677, %cst_236 {dimension_numbers = #tpu.dot_dimension_numbers<[1], [0], [0], [1], [0, 0, 1, 1], [], []>} : vector<8x64xf32>, vector<64x64xf32>, vector<8x64xf32> -> vector<8x64xf32>
    %c1_237 = arith.constant 1 : index
    %c0_238 = arith.constant 0 : index
    %c0_239 = arith.constant 0 : index
    %679 = vector.load %arg17[%c1_237, %c0_238, %c0_239] : memref<2x1x64xf32, #tpu.memory_space<vmem>>, vector<1x1x64xf32>
    %680 = vector.shape_cast %679 : vector<1x1x64xf32> to vector<1x64xf32>
    %681 = vector.broadcast %680 : vector<1x64xf32> to vector<8x64xf32>
    %682 = arith.addf %678, %681 : vector<8x64xf32>
    %683 = arith.addf %682, %605 : vector<8x64xf32>
    %684 = vector.extract_strided_slice %502 {offsets = [2, 0], sizes = [1, 64], strides = [1, 1]} : vector<6x64xf32> to vector<1x64xf32>
    %685 = vector.extract_strided_slice %502 {offsets = [3, 0], sizes = [1, 64], strides = [1, 1]} : vector<6x64xf32> to vector<1x64xf32>
    %cst_240 = arith.constant dense<0.000000e+00> : vector<8xf32>
    %686 = vector.multi_reduction <add>, %683, %cst_240 [1] : vector<8x64xf32> to vector<8xf32>
    %687 = vector.shape_cast %686 : vector<8xf32> to vector<8x1xf32>
    %cst_241 = arith.constant 6.400000e+01 : f32
    %688 = vector.broadcast %cst_241 : f32 to vector<8x1xf32>
    %689 = arith.divf %687, %688 : vector<8x1xf32>
    %690 = vector.broadcast %689 : vector<8x1xf32> to vector<8x64xf32>
    %691 = arith.subf %683, %690 : vector<8x64xf32>
    %692 = arith.mulf %691, %691 : vector<8x64xf32>
    %cst_242 = arith.constant dense<0.000000e+00> : vector<8xf32>
    %693 = vector.multi_reduction <add>, %692, %cst_242 [1] : vector<8x64xf32> to vector<8xf32>
    %694 = vector.shape_cast %693 : vector<8xf32> to vector<8x1xf32>
    %cst_243 = arith.constant 6.400000e+01 : f32
    %695 = vector.broadcast %cst_243 : f32 to vector<8x1xf32>
    %696 = arith.divf %694, %695 : vector<8x1xf32>
    %697 = vector.broadcast %689 : vector<8x1xf32> to vector<8x64xf32>
    %698 = arith.subf %683, %697 : vector<8x64xf32>
    %cst_244 = arith.constant 9.99999974E-6 : f32
    %699 = vector.broadcast %cst_244 : f32 to vector<8x1xf32>
    %700 = arith.addf %696, %699 : vector<8x1xf32>
    %701 = math.rsqrt %700 : vector<8x1xf32>
    %702 = vector.broadcast %701 : vector<8x1xf32> to vector<8x64xf32>
    %703 = arith.mulf %698, %702 : vector<8x64xf32>
    %704 = vector.broadcast %684 : vector<1x64xf32> to vector<8x64xf32>
    %705 = arith.mulf %703, %704 : vector<8x64xf32>
    %706 = vector.broadcast %685 : vector<1x64xf32> to vector<8x64xf32>
    %707 = arith.addf %705, %706 : vector<8x64xf32>
    %708 = arith.addf %707, %707 : vector<8x64xf32>
    %709 = vector.extract_strided_slice %502 {offsets = [4, 0], sizes = [1, 64], strides = [1, 1]} : vector<6x64xf32> to vector<1x64xf32>
    %710 = vector.extract_strided_slice %502 {offsets = [5, 0], sizes = [1, 64], strides = [1, 1]} : vector<6x64xf32> to vector<1x64xf32>
    %cst_245 = arith.constant dense<0.000000e+00> : vector<8xf32>
    %711 = vector.multi_reduction <add>, %708, %cst_245 [1] : vector<8x64xf32> to vector<8xf32>
    %712 = vector.shape_cast %711 : vector<8xf32> to vector<8x1xf32>
    %cst_246 = arith.constant 6.400000e+01 : f32
    %713 = vector.broadcast %cst_246 : f32 to vector<8x1xf32>
    %714 = arith.divf %712, %713 : vector<8x1xf32>
    %715 = vector.broadcast %714 : vector<8x1xf32> to vector<8x64xf32>
    %716 = arith.subf %708, %715 : vector<8x64xf32>
    %717 = arith.mulf %716, %716 : vector<8x64xf32>
    %cst_247 = arith.constant dense<0.000000e+00> : vector<8xf32>
    %718 = vector.multi_reduction <add>, %717, %cst_247 [1] : vector<8x64xf32> to vector<8xf32>
    %719 = vector.shape_cast %718 : vector<8xf32> to vector<8x1xf32>
    %cst_248 = arith.constant 6.400000e+01 : f32
    %720 = vector.broadcast %cst_248 : f32 to vector<8x1xf32>
    %721 = arith.divf %719, %720 : vector<8x1xf32>
    %722 = vector.broadcast %714 : vector<8x1xf32> to vector<8x64xf32>
    %723 = arith.subf %708, %722 : vector<8x64xf32>
    %cst_249 = arith.constant 9.99999974E-6 : f32
    %724 = vector.broadcast %cst_249 : f32 to vector<8x1xf32>
    %725 = arith.addf %721, %724 : vector<8x1xf32>
    %726 = math.rsqrt %725 : vector<8x1xf32>
    %727 = vector.broadcast %726 : vector<8x1xf32> to vector<8x64xf32>
    %728 = arith.mulf %723, %727 : vector<8x64xf32>
    %729 = vector.broadcast %709 : vector<1x64xf32> to vector<8x64xf32>
    %730 = arith.mulf %728, %729 : vector<8x64xf32>
    %731 = vector.broadcast %710 : vector<1x64xf32> to vector<8x64xf32>
    %732 = arith.addf %730, %731 : vector<8x64xf32>
    %c0_250 = arith.constant 0 : index
    %c0_251 = arith.constant 0 : index
    %733 = vector.load %arg19[%c0_250, %c0_251] : memref<64x128xf32, #tpu.memory_space<vmem>>, vector<64x128xf32>
    %cst_252 = arith.constant dense<0.000000e+00> : vector<8x128xf32>
    %734 = tpu.matmul %732, %733, %cst_252 {dimension_numbers = #tpu.dot_dimension_numbers<[1], [0], [0], [1], [0, 0, 1, 1], [], []>} : vector<8x64xf32>, vector<64x128xf32>, vector<8x128xf32> -> vector<8x128xf32>
    %c0_253 = arith.constant 0 : index
    %c0_254 = arith.constant 0 : index
    %735 = vector.load %arg20[%c0_253, %c0_254] : memref<1x128xf32, #tpu.memory_space<vmem>>, vector<1x128xf32>
    %736 = vector.broadcast %735 : vector<1x128xf32> to vector<8x128xf32>
    %737 = arith.addf %734, %736 : vector<8x128xf32>
    %c0_255 = arith.constant 0 : index
    %c0_256 = arith.constant 0 : index
    %c0_257 = arith.constant 0 : index
    %738 = vector.load %arg21[%c0_255, %c0_256, %c0_257] : memref<1x8x128xf32, #tpu.memory_space<vmem>>, vector<1x8x128xf32>
    %739 = vector.shape_cast %738 : vector<1x8x128xf32> to vector<8x128xf32>
    %740 = vector.shape_cast %737 : vector<8x128xf32> to vector<1x8x128xf32>
    tpu.vector_store %arg21[%c0_255, %c0_256, %c0_257], %740 {strides = array<i32>} : memref<1x8x128xf32, #tpu.memory_space<vmem>>, vector<1x8x128xf32>,
    return
  }
  func.func @transform_0(%arg0: i32) -> (i32, i32, i32) {
    %c0_i32 = arith.constant 0 : i32
    %c0_i32_0 = arith.constant 0 : i32
    %c0_i32_1 = arith.constant 0 : i32
    return %arg0, %c0_i32, %c0_i32_0 : i32, i32, i32
  }
  func.func @transform_1(%arg0: i32) -> (i32, i32, i32) {
    %c0_i32 = arith.constant 0 : i32
    %c0_i32_0 = arith.constant 0 : i32
    %c0_i32_1 = arith.constant 0 : i32
    return %arg0, %c0_i32, %c0_i32_0 : i32, i32, i32
  }
  func.func @transform_2(%arg0: i32) -> (i32, i32, i32) {
    %c0_i32 = arith.constant 0 : i32
    %c0_i32_0 = arith.constant 0 : i32
    %c0_i32_1 = arith.constant 0 : i32
    %c0_i32_2 = arith.constant 0 : i32
    return %c0_i32, %c0_i32_0, %c0_i32_1 : i32, i32, i32
  }
  func.func @transform_3(%arg0: i32) -> (i32, i32, i32) {
    %c0_i32 = arith.constant 0 : i32
    %c0_i32_0 = arith.constant 0 : i32
    %c0_i32_1 = arith.constant 0 : i32
    %c0_i32_2 = arith.constant 0 : i32
    return %c0_i32, %c0_i32_0, %c0_i32_1 : i32, i32, i32
  }
  func.func @transform_4(%arg0: i32) -> (i32, i32, i32) {
    %c0_i32 = arith.constant 0 : i32
    %c0_i32_0 = arith.constant 0 : i32
    %c0_i32_1 = arith.constant 0 : i32
    %c0_i32_2 = arith.constant 0 : i32
    return %c0_i32, %c0_i32_0, %c0_i32_1 : i32, i32, i32
  }
  func.func @transform_5(%arg0: i32) -> (i32, i32, i32) {
    %c0_i32 = arith.constant 0 : i32
    %c0_i32_0 = arith.constant 0 : i32
    %c0_i32_1 = arith.constant 0 : i32
    %c0_i32_2 = arith.constant 0 : i32
    return %c0_i32, %c0_i32_0, %c0_i32_1 : i32, i32, i32
  }
  func.func @transform_6(%arg0: i32) -> (i32, i32, i32) {
    %c0_i32 = arith.constant 0 : i32
    %c0_i32_0 = arith.constant 0 : i32
    %c0_i32_1 = arith.constant 0 : i32
    %c0_i32_2 = arith.constant 0 : i32
    return %c0_i32, %c0_i32_0, %c0_i32_1 : i32, i32, i32
  }
  func.func @transform_7(%arg0: i32) -> (i32, i32, i32) {
    %c0_i32 = arith.constant 0 : i32
    %c0_i32_0 = arith.constant 0 : i32
    %c0_i32_1 = arith.constant 0 : i32
    %c0_i32_2 = arith.constant 0 : i32
    return %c0_i32, %c0_i32_0, %c0_i32_1 : i32, i32, i32
  }
  func.func @transform_8(%arg0: i32) -> (i32, i32, i32) {
    %c0_i32 = arith.constant 0 : i32
    %c0_i32_0 = arith.constant 0 : i32
    %c0_i32_1 = arith.constant 0 : i32
    %c0_i32_2 = arith.constant 0 : i32
    return %c0_i32, %c0_i32_0, %c0_i32_1 : i32, i32, i32
  }
  func.func @transform_9(%arg0: i32) -> (i32, i32, i32) {
    %c0_i32 = arith.constant 0 : i32
    %c0_i32_0 = arith.constant 0 : i32
    %c0_i32_1 = arith.constant 0 : i32
    %c0_i32_2 = arith.constant 0 : i32
    return %c0_i32, %c0_i32_0, %c0_i32_1 : i32, i32, i32
  }
  func.func @transform_10(%arg0: i32) -> (i32, i32, i32) {
    %c0_i32 = arith.constant 0 : i32
    %c0_i32_0 = arith.constant 0 : i32
    %c0_i32_1 = arith.constant 0 : i32
    %c0_i32_2 = arith.constant 0 : i32
    return %c0_i32, %c0_i32_0, %c0_i32_1 : i32, i32, i32
  }
  func.func @transform_11(%arg0: i32) -> (i32, i32, i32) {
    %c0_i32 = arith.constant 0 : i32
    %c0_i32_0 = arith.constant 0 : i32
    %c0_i32_1 = arith.constant 0 : i32
    %c0_i32_2 = arith.constant 0 : i32
    return %c0_i32, %c0_i32_0, %c0_i32_1 : i32, i32, i32
  }
  func.func @transform_12(%arg0: i32) -> (i32, i32, i32) {
    %c0_i32 = arith.constant 0 : i32
    %c0_i32_0 = arith.constant 0 : i32
    %c0_i32_1 = arith.constant 0 : i32
    %c0_i32_2 = arith.constant 0 : i32
    return %c0_i32, %c0_i32_0, %c0_i32_1 : i32, i32, i32
  }
  func.func @transform_13(%arg0: i32) -> (i32, i32) {
    %c0_i32 = arith.constant 0 : i32
    %c0_i32_0 = arith.constant 0 : i32
    %c0_i32_1 = arith.constant 0 : i32
    return %c0_i32, %c0_i32_0 : i32, i32
  }
  func.func @transform_14(%arg0: i32) -> (i32, i32) {
    %c0_i32 = arith.constant 0 : i32
    %c0_i32_0 = arith.constant 0 : i32
    %c0_i32_1 = arith.constant 0 : i32
    return %c0_i32, %c0_i32_0 : i32, i32
  }
  func.func @transform_15(%arg0: i32) -> (i32, i32, i32) {
    %c0_i32 = arith.constant 0 : i32
    %c0_i32_0 = arith.constant 0 : i32
    %c0_i32_1 = arith.constant 0 : i32
    %c0_i32_2 = arith.constant 0 : i32
    return %c0_i32, %c0_i32_0, %c0_i32_1 : i32, i32, i32
  }
  func.func @transform_16(%arg0: i32) -> (i32, i32, i32) {
    %c0_i32 = arith.constant 0 : i32
    %c0_i32_0 = arith.constant 0 : i32
    %c0_i32_1 = arith.constant 0 : i32
    %c0_i32_2 = arith.constant 0 : i32
    return %c0_i32, %c0_i32_0, %c0_i32_1 : i32, i32, i32
  }
  func.func @transform_17(%arg0: i32) -> (i32, i32, i32) {
    %c0_i32 = arith.constant 0 : i32
    %c0_i32_0 = arith.constant 0 : i32
    %c0_i32_1 = arith.constant 0 : i32
    %c0_i32_2 = arith.constant 0 : i32
    return %c0_i32, %c0_i32_0, %c0_i32_1 : i32, i32, i32
  }
  func.func @transform_18(%arg0: i32) -> (i32, i32) {
    %c0_i32 = arith.constant 0 : i32
    %c0_i32_0 = arith.constant 0 : i32
    %c0_i32_1 = arith.constant 0 : i32
    return %c0_i32, %c0_i32_0 : i32, i32
  }
  func.func @transform_19(%arg0: i32) -> (i32, i32) {
    %c0_i32 = arith.constant 0 : i32
    %c0_i32_0 = arith.constant 0 : i32
    %c0_i32_1 = arith.constant 0 : i32
    return %c0_i32, %c0_i32_0 : i32, i32
  }
  func.func @transform_20(%arg0: i32) -> (i32, i32, i32) {
    %c0_i32 = arith.constant 0 : i32
    %c0_i32_0 = arith.constant 0 : i32
    %c0_i32_1 = arith.constant 0 : i32
    return %arg0, %c0_i32, %c0_i32_0 : i32, i32, i32
  }
}

</mosaic_0001>

<llo_original>
// kernel: transformer_forward.1
$region0: #{transformer_forward.1}
  #allocation0 [shape = 'u32[]', space=smem, size = 0x4, offset = 0x4, fixed_abs, tag = 'smem constant byte address 0x4 - core index']
  #allocation1 [shape = 'u32[144,128]{1,0:T(1,128)}', space=vmem, size = 0x12000, scoped, tag = 'internal scratch']
  %s0 = inlined_call_operand.vmem [shape: f32[2,8,64], index: 0, kind: input, shape index: {}]
  %s1 = inlined_call_operand.vmem [shape: f32[2,8,64], index: 1, kind: input, shape index: {}]
  %s2 = inlined_call_operand.vmem [shape: f32[2,64,192], index: 2, kind: input, shape index: {}]
  %s3 = inlined_call_operand.vmem [shape: f32[2,1,192], index: 3, kind: input, shape index: {}]
  %s4 = inlined_call_operand.vmem [shape: f32[2,64,64], index: 4, kind: input, shape index: {}]
  %s5 = inlined_call_operand.vmem [shape: f32[2,1,64], index: 5, kind: input, shape index: {}]
  %s6 = inlined_call_operand.vmem [shape: f32[2,4,64], index: 6, kind: input, shape index: {}]
  %s7 = inlined_call_operand.vmem [shape: f32[2,64,192], index: 7, kind: input, shape index: {}]
  %s8 = inlined_call_operand.vmem [shape: f32[2,1,192], index: 8, kind: input, shape index: {}]
  %s9 = inlined_call_operand.vmem [shape: f32[2,64,64], index: 9, kind: input, shape index: {}]
  %s10 = inlined_call_operand.vmem [shape: f32[2,1,64], index: 10, kind: input, shape index: {}]
  %s11 = inlined_call_operand.vmem [shape: f32[2,64,64], index: 11, kind: input, shape index: {}]
  %s12 = inlined_call_operand.vmem [shape: f32[2,1,64], index: 12, kind: input, shape index: {}]
  %s13 = inlined_call_operand.vmem [shape: f32[64,256], index: 13, kind: input, shape index: {}]
  %s14 = inlined_call_operand.vmem [shape: f32[1,256], index: 14, kind: input, shape index: {}]
  %s15 = inlined_call_operand.vmem [shape: f32[2,64,64], index: 15, kind: input, shape index: {}]
  %s16 = inlined_call_operand.vmem [shape: f32[2,1,64], index: 16, kind: input, shape index: {}]
  %s17 = inlined_call_operand.vmem [shape: f32[2,6,64], index: 17, kind: input, shape index: {}]
  %s18 = inlined_call_operand.vmem [shape: f32[64,128], index: 18, kind: input, shape index: {}]
  %s19 = inlined_call_operand.vmem [shape: f32[1,128], index: 19, kind: input, shape index: {}]
  %s20 = inlined_call_operand.hbm [shape: f32[2,8,128], index: 20, kind: output, shape index: {}]
  %s21 = sld [smem:[#allocation0]]
  $region113: #{transformer_forward.1} parent=0
    _
  %s23 = ssub.s32 1, %s21
  %s24 = scalar_select 0, %s23, %s21
  $region1: #{transformer_forward.1} parent=0
    #allocation2 [shape = 'u8[8192]{0}', space=vmem, size = 0x2000, scoped, tag = 'output window, operand 0']
    #allocation3 [shape = 's32[2]{0}', space=sflag, size = 0x8, scoped, tag = 'scoped memory for transformer_forward.1']
    %25 = vsyncpa [#allocation3], 0
    %s26 = scalar_lea.sflag [#allocation3], 1
    %27 = vsyncpa %s26, 0
    loop: start=0, step=1, limit=4
    $region2: #{transformer_forward.1} parent=1 // loop_pre_header
      _
    $region3: #{transformer_forward.1} parent=1 // loop_header
      %s29 = sphi 0, %s33
      %p30 = scmp.ge.s32.totalorder %s29, 4
      %s39 = sphi 0, %s41
      %s42 = sphi 0, %s39
      %s43 = sphi 0, %s42
      %s59 = sphi 0, %s43
      %s65 = sphi 0, %s67
      %s68 = sphi 0, %s65
      %s69 = sphi 0, %s68
      %s85 = sphi 0, %s69
      %s89 = sphi 0, %s89
      %s91 = sphi 0, %s89
      %s92 = sphi 0, %s91
      %s106 = sphi 0, %s92
      %s110 = sphi 0, %s110
      %s112 = sphi 0, %s110
      %s113 = sphi 0, %s112
      %s127 = sphi 0, %s113
      %s131 = sphi 0, %s131
      %s133 = sphi 0, %s131
      %s134 = sphi 0, %s133
      %s148 = sphi 0, %s134
      %s152 = sphi 0, %s152
      %s154 = sphi 0, %s152
      %s155 = sphi 0, %s154
      %s169 = sphi 0, %s155
      %s173 = sphi 0, %s173
      %s175 = sphi 0, %s173
      %s176 = sphi 0, %s175
      %s190 = sphi 0, %s176
      %s194 = sphi 0, %s194
      %s196 = sphi 0, %s194
      %s197 = sphi 0, %s196
      %s211 = sphi 0, %s197
      %s215 = sphi 0, %s215
      %s217 = sphi 0, %s215
      %s218 = sphi 0, %s217
      %s232 = sphi 0, %s218
      %s236 = sphi 0, %s236
      %s238 = sphi 0, %s236
      %s239 = sphi 0, %s238
      %s253 = sphi 0, %s239
      %s257 = sphi 0, %s257
      %s259 = sphi 0, %s257
      %s260 = sphi 0, %s259
      %s274 = sphi 0, %s260
      %s278 = sphi 0, %s278
      %s280 = sphi 0, %s278
      %s281 = sphi 0, %s280
      %s295 = sphi 0, %s281
      %s299 = sphi 0, %s299
      %s301 = sphi 0, %s299
      %s302 = sphi 0, %s301
      %s316 = sphi 0, %s302
      %s320 = sphi 0, %s320
      %s322 = sphi 0, %s320
      %s323 = sphi 0, %s322
      %s337 = sphi 0, %s323
      %s341 = sphi 0, %s341
      %s343 = sphi 0, %s341
      %s344 = sphi 0, %s343
      %s358 = sphi 0, %s344
      %s362 = sphi 0, %s362
      %s364 = sphi 0, %s362
      %s365 = sphi 0, %s364
      %s379 = sphi 0, %s365
      %s383 = sphi 0, %s383
      %s385 = sphi 0, %s383
      %s386 = sphi 0, %s385
      %s400 = sphi 0, %s386
      %s404 = sphi 0, %s404
      %s406 = sphi 0, %s404
      %s407 = sphi 0, %s406
      %s421 = sphi 0, %s407
      %s425 = sphi 0, %s425
      %s427 = sphi 0, %s425
      %s428 = sphi 0, %s427
      %s442 = sphi 0, %s428
      %s446 = sphi 0, %s446
      %s448 = sphi 0, %s446
      %s449 = sphi 0, %s448
      %s463 = sphi 0, %s449
      %s469 = sphi 0, %s471
      %s472 = sphi 0, %s469
      %s473 = sphi 0, %s472
      %s489 = sphi 0, %s473
    $region4: #{transformer_forward.1} parent=1 // loop_header_branch
      %32 = sbr.rel (%p30) target = $region8
    $region5: #{transformer_forward.1} parent=1 // loop_body
      %s34 = ssub.s32 %s29, 1
      %s35 = ssub.s32 %s29, 2
      %s36 = sadd.s32 %s29, 1
      %s37 = ssub.s32 %s29, %s36
      %p38 = scmp.eq.s32.totalorder %s37, 0
      %s40 = sadd.s32 %s39, 1
      %s41 = scalar_select %p38, %s39, %s40
      %p44 = pneg %p38
      %p45 = scmp.eq.s32.totalorder %s29, 1
      %p46 = por %p44, %p45
      %p47 = scmp.ne.s32.totalorder %s39, %s42
      %p48 = scmp.eq.s32.totalorder %s29, 0
      %p49 = por %p47, %p48
      %p50 = scmp.ne.s32.totalorder %s39, %s42
      %p51 = scmp.eq.s32.totalorder %s34, 1
      %p52 = por %p50, %p51
      %p53 = scmp.ne.s32.totalorder %s42, %s43
      %p54 = scmp.eq.s32.totalorder %s34, 0
      %p55 = por %p53, %p54
      %p56 = scmp.ne.s32.totalorder %s42, %s43
      %p57 = scmp.eq.s32.totalorder %s35, 1
      %p58 = por %p56, %p57
      %p60 = scmp.ne.s32.totalorder %s43, %s59
      %p61 = scmp.eq.s32.totalorder %s35, 0
      %p62 = por %p60, %p61
      %s63 = ssub.s32 %s29, %s36
      %p64 = scmp.eq.s32.totalorder %s63, 0
      %s66 = sadd.s32 %s65, 1
      %s67 = scalar_select %p64, %s65, %s66
      %p70 = pneg %p64
      %p71 = scmp.eq.s32.totalorder %s29, 1
      %p72 = por %p70, %p71
      %p73 = scmp.ne.s32.totalorder %s65, %s68
      %p74 = scmp.eq.s32.totalorder %s29, 0
      %p75 = por %p73, %p74
      %p76 = scmp.ne.s32.totalorder %s65, %s68
      %p77 = scmp.eq.s32.totalorder %s34, 1
      %p78 = por %p76, %p77
      %p79 = scmp.ne.s32.totalorder %s68, %s69
      %p80 = scmp.eq.s32.totalorder %s34, 0
      %p81 = por %p79, %p80
      %p82 = scmp.ne.s32.totalorder %s68, %s69
      %p83 = scmp.eq.s32.totalorder %s35, 1
      %p84 = por %p82, %p83
      %p86 = scmp.ne.s32.totalorder %s69, %s85
      %p87 = scmp.eq.s32.totalorder %s35, 0
      %p88 = por %p86, %p87
      %s90 = sadd.s32 %s89, 1
      %p93 = scmp.eq.s32.totalorder %s29, 1
      %p94 = scmp.ne.s32.totalorder %s89, %s91
      %p95 = scmp.eq.s32.totalorder %s29, 0
      %p96 = por %p94, %p95
      %p97 = scmp.ne.s32.totalorder %s89, %s91
      %p98 = scmp.eq.s32.totalorder %s34, 1
      %p99 = por %p97, %p98
      %p100 = scmp.ne.s32.totalorder %s91, %s92
      %p101 = scmp.eq.s32.totalorder %s34, 0
      %p102 = por %p100, %p101
      %p103 = scmp.ne.s32.totalorder %s91, %s92
      %p104 = scmp.eq.s32.totalorder %s35, 1
      %p105 = por %p103, %p104
      %p107 = scmp.ne.s32.totalorder %s92, %s106
      %p108 = scmp.eq.s32.totalorder %s35, 0
      %p109 = por %p107, %p108
      %s111 = sadd.s32 %s110, 1
      %p114 = scmp.eq.s32.totalorder %s29, 1
      %p115 = scmp.ne.s32.totalorder %s110, %s112
      %p116 = scmp.eq.s32.totalorder %s29, 0
      %p117 = por %p115, %p116
      %p118 = scmp.ne.s32.totalorder %s110, %s112
      %p119 = scmp.eq.s32.totalorder %s34, 1
      %p120 = por %p118, %p119
      %p121 = scmp.ne.s32.totalorder %s112, %s113
      %p122 = scmp.eq.s32.totalorder %s34, 0
      %p123 = por %p121, %p122
      %p124 = scmp.ne.s32.totalorder %s112, %s113
      %p125 = scmp.eq.s32.totalorder %s35, 1
      %p126 = por %p124, %p125
      %p128 = scmp.ne.s32.totalorder %s113, %s127
      %p129 = scmp.eq.s32.totalorder %s35, 0
      %p130 = por %p128, %p129
      %s132 = sadd.s32 %s131, 1
      %p135 = scmp.eq.s32.totalorder %s29, 1
      %p136 = scmp.ne.s32.totalorder %s131, %s133
      %p137 = scmp.eq.s32.totalorder %s29, 0
      %p138 = por %p136, %p137
      %p139 = scmp.ne.s32.totalorder %s131, %s133
      %p140 = scmp.eq.s32.totalorder %s34, 1
      %p141 = por %p139, %p140
      %p142 = scmp.ne.s32.totalorder %s133, %s134
      %p143 = scmp.eq.s32.totalorder %s34, 0
      %p144 = por %p142, %p143
      %p145 = scmp.ne.s32.totalorder %s133, %s134
      %p146 = scmp.eq.s32.totalorder %s35, 1
      %p147 = por %p145, %p146
      %p149 = scmp.ne.s32.totalorder %s134, %s148
      %p150 = scmp.eq.s32.totalorder %s35, 0
      %p151 = por %p149, %p150
      %s153 = sadd.s32 %s152, 1
      %p156 = scmp.eq.s32.totalorder %s29, 1
      %p157 = scmp.ne.s32.totalorder %s152, %s154
      %p158 = scmp.eq.s32.totalorder %s29, 0
      %p159 = por %p157, %p158
      %p160 = scmp.ne.s32.totalorder %s152, %s154
      %p161 = scmp.eq.s32.totalorder %s34, 1
      %p162 = por %p160, %p161
      %p163 = scmp.ne.s32.totalorder %s154, %s155
      %p164 = scmp.eq.s32.totalorder %s34, 0
      %p165 = por %p163, %p164
      %p166 = scmp.ne.s32.totalorder %s154, %s155
      %p167 = scmp.eq.s32.totalorder %s35, 1
      %p168 = por %p166, %p167
      %p170 = scmp.ne.s32.totalorder %s155, %s169
      %p171 = scmp.eq.s32.totalorder %s35, 0
      %p172 = por %p170, %p171
      %s174 = sadd.s32 %s173, 1
      %p177 = scmp.eq.s32.totalorder %s29, 1
      %p178 = scmp.ne.s32.totalorder %s173, %s175
      %p179 = scmp.eq.s32.totalorder %s29, 0
      %p180 = por %p178, %p179
      %p181 = scmp.ne.s32.totalorder %s173, %s175
      %p182 = scmp.eq.s32.totalorder %s34, 1
      %p183 = por %p181, %p182
      %p184 = scmp.ne.s32.totalorder %s175, %s176
      %p185 = scmp.eq.s32.totalorder %s34, 0
      %p186 = por %p184, %p185
      %p187 = scmp.ne.s32.totalorder %s175, %s176
      %p188 = scmp.eq.s32.totalorder %s35, 1
      %p189 = por %p187, %p188
      %p191 = scmp.ne.s32.totalorder %s176, %s190
      %p192 = scmp.eq.s32.totalorder %s35, 0
      %p193 = por %p191, %p192
      %s195 = sadd.s32 %s194, 1
      %p198 = scmp.eq.s32.totalorder %s29, 1
      %p199 = scmp.ne.s32.totalorder %s194, %s196
      %p200 = scmp.eq.s32.totalorder %s29, 0
      %p201 = por %p199, %p200
      %p202 = scmp.ne.s32.totalorder %s194, %s196
      %p203 = scmp.eq.s32.totalorder %s34, 1
      %p204 = por %p202, %p203
      %p205 = scmp.ne.s32.totalorder %s196, %s197
      %p206 = scmp.eq.s32.totalorder %s34, 0
      %p207 = por %p205, %p206
      %p208 = scmp.ne.s32.totalorder %s196, %s197
      %p209 = scmp.eq.s32.totalorder %s35, 1
      %p210 = por %p208, %p209
      %p212 = scmp.ne.s32.totalorder %s197, %s211
      %p213 = scmp.eq.s32.totalorder %s35, 0
      %p214 = por %p212, %p213
      %s216 = sadd.s32 %s215, 1
      %p219 = scmp.eq.s32.totalorder %s29, 1
      %p220 = scmp.ne.s32.totalorder %s215, %s217
      %p221 = scmp.eq.s32.totalorder %s29, 0
      %p222 = por %p220, %p221
      %p223 = scmp.ne.s32.totalorder %s215, %s217
      %p224 = scmp.eq.s32.totalorder %s34, 1
      %p225 = por %p223, %p224
      %p226 = scmp.ne.s32.totalorder %s217, %s218
      %p227 = scmp.eq.s32.totalorder %s34, 0
      %p228 = por %p226, %p227
      %p229 = scmp.ne.s32.totalorder %s217, %s218
      %p230 = scmp.eq.s32.totalorder %s35, 1
      %p231 = por %p229, %p230
      %p233 = scmp.ne.s32.totalorder %s218, %s232
      %p234 = scmp.eq.s32.totalorder %s35, 0
      %p235 = por %p233, %p234
      %s237 = sadd.s32 %s236, 1
      %p240 = scmp.eq.s32.totalorder %s29, 1
      %p241 = scmp.ne.s32.totalorder %s236, %s238
      %p242 = scmp.eq.s32.totalorder %s29, 0
      %p243 = por %p241, %p242
      %p244 = scmp.ne.s32.totalorder %s236, %s238
      %p245 = scmp.eq.s32.totalorder %s34, 1
      %p246 = por %p244, %p245
      %p247 = scmp.ne.s32.totalorder %s238, %s239
      %p248 = scmp.eq.s32.totalorder %s34, 0
      %p249 = por %p247, %p248
      %p250 = scmp.ne.s32.totalorder %s238, %s239
      %p251 = scmp.eq.s32.totalorder %s35, 1
      %p252 = por %p250, %p251
      %p254 = scmp.ne.s32.totalorder %s239, %s253
      %p255 = scmp.eq.s32.totalorder %s35, 0
      %p256 = por %p254, %p255
      %s258 = sadd.s32 %s257, 1
      %p261 = scmp.eq.s32.totalorder %s29, 1
      %p262 = scmp.ne.s32.totalorder %s257, %s259
      %p263 = scmp.eq.s32.totalorder %s29, 0
      %p264 = por %p262, %p263
      %p265 = scmp.ne.s32.totalorder %s257, %s259
      %p266 = scmp.eq.s32.totalorder %s34, 1
      %p267 = por %p265, %p266
      %p268 = scmp.ne.s32.totalorder %s259, %s260
      %p269 = scmp.eq.s32.totalorder %s34, 0
      %p270 = por %p268, %p269
      %p271 = scmp.ne.s32.totalorder %s259, %s260
      %p272 = scmp.eq.s32.totalorder %s35, 1
      %p273 = por %p271, %p272
      %p275 = scmp.ne.s32.totalorder %s260, %s274
      %p276 = scmp.eq.s32.totalorder %s35, 0
      %p277 = por %p275, %p276
      %s279 = sadd.s32 %s278, 1
      %p282 = scmp.eq.s32.totalorder %s29, 1
      %p283 = scmp.ne.s32.totalorder %s278, %s280
      %p284 = scmp.eq.s32.totalorder %s29, 0
      %p285 = por %p283, %p284
      %p286 = scmp.ne.s32.totalorder %s278, %s280
      %p287 = scmp.eq.s32.totalorder %s34, 1
      %p288 = por %p286, %p287
      %p289 = scmp.ne.s32.totalorder %s280, %s281
      %p290 = scmp.eq.s32.totalorder %s34, 0
      %p291 = por %p289, %p290
      %p292 = scmp.ne.s32.totalorder %s280, %s281
      %p293 = scmp.eq.s32.totalorder %s35, 1
      %p294 = por %p292, %p293
      %p296 = scmp.ne.s32.totalorder %s281, %s295
      %p297 = scmp.eq.s32.totalorder %s35, 0
      %p298 = por %p296, %p297
      %s300 = sadd.s32 %s299, 1
      %p303 = scmp.eq.s32.totalorder %s29, 1
      %p304 = scmp.ne.s32.totalorder %s299, %s301
      %p305 = scmp.eq.s32.totalorder %s29, 0
      %p306 = por %p304, %p305
      %p307 = scmp.ne.s32.totalorder %s299, %s301
      %p308 = scmp.eq.s32.totalorder %s34, 1
      %p309 = por %p307, %p308
      %p310 = scmp.ne.s32.totalorder %s301, %s302
      %p311 = scmp.eq.s32.totalorder %s34, 0
      %p312 = por %p310, %p311
      %p313 = scmp.ne.s32.totalorder %s301, %s302
      %p314 = scmp.eq.s32.totalorder %s35, 1
      %p315 = por %p313, %p314
      %p317 = scmp.ne.s32.totalorder %s302, %s316
      %p318 = scmp.eq.s32.totalorder %s35, 0
      %p319 = por %p317, %p318
      %s321 = sadd.s32 %s320, 1
      %p324 = scmp.eq.s32.totalorder %s29, 1
      %p325 = scmp.ne.s32.totalorder %s320, %s322
      %p326 = scmp.eq.s32.totalorder %s29, 0
      %p327 = por %p325, %p326
      %p328 = scmp.ne.s32.totalorder %s320, %s322
      %p329 = scmp.eq.s32.totalorder %s34, 1
      %p330 = por %p328, %p329
      %p331 = scmp.ne.s32.totalorder %s322, %s323
      %p332 = scmp.eq.s32.totalorder %s34, 0
      %p333 = por %p331, %p332
      %p334 = scmp.ne.s32.totalorder %s322, %s323
      %p335 = scmp.eq.s32.totalorder %s35, 1
      %p336 = por %p334, %p335
      %p338 = scmp.ne.s32.totalorder %s323, %s337
      %p339 = scmp.eq.s32.totalorder %s35, 0
      %p340 = por %p338, %p339
      %s342 = sadd.s32 %s341, 1
      %p345 = scmp.eq.s32.totalorder %s29, 1
      %p346 = scmp.ne.s32.totalorder %s341, %s343
      %p347 = scmp.eq.s32.totalorder %s29, 0
      %p348 = por %p346, %p347
      %p349 = scmp.ne.s32.totalorder %s341, %s343
      %p350 = scmp.eq.s32.totalorder %s34, 1
      %p351 = por %p349, %p350
      %p352 = scmp.ne.s32.totalorder %s343, %s344
      %p353 = scmp.eq.s32.totalorder %s34, 0
      %p354 = por %p352, %p353
      %p355 = scmp.ne.s32.totalorder %s343, %s344
      %p356 = scmp.eq.s32.totalorder %s35, 1
      %p357 = por %p355, %p356
      %p359 = scmp.ne.s32.totalorder %s344, %s358
      %p360 = scmp.eq.s32.totalorder %s35, 0
      %p361 = por %p359, %p360
      %s363 = sadd.s32 %s362, 1
      %p366 = scmp.eq.s32.totalorder %s29, 1
      %p367 = scmp.ne.s32.totalorder %s362, %s364
      %p368 = scmp.eq.s32.totalorder %s29, 0
      %p369 = por %p367, %p368
      %p370 = scmp.ne.s32.totalorder %s362, %s364
      %p371 = scmp.eq.s32.totalorder %s34, 1
      %p372 = por %p370, %p371
      %p373 = scmp.ne.s32.totalorder %s364, %s365
      %p374 = scmp.eq.s32.totalorder %s34, 0
      %p375 = por %p373, %p374
      %p376 = scmp.ne.s32.totalorder %s364, %s365
      %p377 = scmp.eq.s32.totalorder %s35, 1
      %p378 = por %p376, %p377
      %p380 = scmp.ne.s32.totalorder %s365, %s379
      %p381 = scmp.eq.s32.totalorder %s35, 0
      %p382 = por %p380, %p381
      %s384 = sadd.s32 %s383, 1
      %p387 = scmp.eq.s32.totalorder %s29, 1
      %p388 = scmp.ne.s32.totalorder %s383, %s385
      %p389 = scmp.eq.s32.totalorder %s29, 0
      %p390 = por %p388, %p389
      %p391 = scmp.ne.s32.totalorder %s383, %s385
      %p392 = scmp.eq.s32.totalorder %s34, 1
      %p393 = por %p391, %p392
      %p394 = scmp.ne.s32.totalorder %s385, %s386
      %p395 = scmp.eq.s32.totalorder %s34, 0
      %p396 = por %p394, %p395
      %p397 = scmp.ne.s32.totalorder %s385, %s386
      %p398 = scmp.eq.s32.totalorder %s35, 1
      %p399 = por %p397, %p398
      %p401 = scmp.ne.s32.totalorder %s386, %s400
      %p402 = scmp.eq.s32.totalorder %s35, 0
      %p403 = por %p401, %p402
      %s405 = sadd.s32 %s404, 1
      %p408 = scmp.eq.s32.totalorder %s29, 1
      %p409 = scmp.ne.s32.totalorder %s404, %s406
      %p410 = scmp.eq.s32.totalorder %s29, 0
      %p411 = por %p409, %p410
      %p412 = scmp.ne.s32.totalorder %s404, %s406
      %p413 = scmp.eq.s32.totalorder %s34, 1
      %p414 = por %p412, %p413
      %p415 = scmp.ne.s32.totalorder %s406, %s407
      %p416 = scmp.eq.s32.totalorder %s34, 0
      %p417 = por %p415, %p416
      %p418 = scmp.ne.s32.totalorder %s406, %s407
      %p419 = scmp.eq.s32.totalorder %s35, 1
      %p420 = por %p418, %p419
      %p422 = scmp.ne.s32.totalorder %s407, %s421
      %p423 = scmp.eq.s32.totalorder %s35, 0
      %p424 = por %p422, %p423
      %s426 = sadd.s32 %s425, 1
      %p429 = scmp.eq.s32.totalorder %s29, 1
      %p430 = scmp.ne.s32.totalorder %s425, %s427
      %p431 = scmp.eq.s32.totalorder %s29, 0
      %p432 = por %p430, %p431
      %p433 = scmp.ne.s32.totalorder %s425, %s427
      %p434 = scmp.eq.s32.totalorder %s34, 1
      %p435 = por %p433, %p434
      %p436 = scmp.ne.s32.totalorder %s427, %s428
      %p437 = scmp.eq.s32.totalorder %s34, 0
      %p438 = por %p436, %p437
      %p439 = scmp.ne.s32.totalorder %s427, %s428
      %p440 = scmp.eq.s32.totalorder %s35, 1
      %p441 = por %p439, %p440
      %p443 = scmp.ne.s32.totalorder %s428, %s442
      %p444 = scmp.eq.s32.totalorder %s35, 0
      %p445 = por %p443, %p444
      %s447 = sadd.s32 %s446, 1
      %p450 = scmp.eq.s32.totalorder %s29, 1
      %p451 = scmp.ne.s32.totalorder %s446, %s448
      %p452 = scmp.eq.s32.totalorder %s29, 0
      %p453 = por %p451, %p452
      %p454 = scmp.ne.s32.totalorder %s446, %s448
      %p455 = scmp.eq.s32.totalorder %s34, 1
      %p456 = por %p454, %p455
      %p457 = scmp.ne.s32.totalorder %s448, %s449
      %p458 = scmp.eq.s32.totalorder %s34, 0
      %p459 = por %p457, %p458
      %p460 = scmp.ne.s32.totalorder %s448, %s449
      %p461 = scmp.eq.s32.totalorder %s35, 1
      %p462 = por %p460, %p461
      %p464 = scmp.ne.s32.totalorder %s449, %s463
      %p465 = scmp.eq.s32.totalorder %s35, 0
      %p466 = por %p464, %p465
      %s467 = ssub.s32 %s29, %s36
      %p468 = scmp.eq.s32.totalorder %s467, 0
      %s470 = sadd.s32 %s469, 1
      %s471 = scalar_select %p468, %s469, %s470
      %p474 = pneg %p468
      %p475 = scmp.eq.s32.totalorder %s29, 1
      %p476 = por %p474, %p475
      %p477 = scmp.ne.s32.totalorder %s469, %s472
      %p478 = scmp.eq.s32.totalorder %s29, 0
      %p479 = por %p477, %p478
      %p480 = scmp.ne.s32.totalorder %s469, %s472
      %p481 = scmp.eq.s32.totalorder %s34, 1
      %p482 = por %p480, %p481
      %p483 = scmp.ne.s32.totalorder %s472, %s473
      %p484 = scmp.eq.s32.totalorder %s34, 0
      %p485 = por %p483, %p484
      %p486 = scmp.ne.s32.totalorder %s472, %s473
      %p487 = scmp.eq.s32.totalorder %s35, 1
      %p488 = por %p486, %p487
      %p490 = scmp.ne.s32.totalorder %s473, %s489
      %p491 = scmp.eq.s32.totalorder %s35, 0
      %p492 = por %p490, %p491
      %p493 = scmp.le.s32.totalorder 1, %s29
      %p494 = scmp.lt.s32.totalorder %s29, 3
      %p495 = pnand %p493, %p494
      %p496 = pneg %p495
      // Predicated region
      $region9: #{transformer_forward.1} parent=5 // pred_check
        _
      $region10: #{transformer_forward.1} parent=5 // pred_check_branch
        %498 = sbr.rel (%p495) target = $region12
      $region11: #{transformer_forward.1} parent=5 // pred_region
        %s499 = ssub.s32 %s29, 1
        // Predicated region
        $region13: #{transformer_forward.1} parent=11 // pred_check
          %p500 = pneg %p102
        $region14: #{transformer_forward.1} parent=11 // pred_check_branch
          %502 = sbr.rel (%p500) target = $region16
        $region15: #{transformer_forward.1} parent=11 // pred_region
          _
        $region16: #{transformer_forward.1} parent=11 // pred_fallthru
          _
        // Predicated region
        $region17: #{transformer_forward.1} parent=11 // pred_check
          %p503 = pneg %p123
        $region18: #{transformer_forward.1} parent=11 // pred_check_branch
          %505 = sbr.rel (%p503) target = $region20
        $region19: #{transformer_forward.1} parent=11 // pred_region
          _
        $region20: #{transformer_forward.1} parent=11 // pred_fallthru
          _
        // Predicated region
        $region21: #{transformer_forward.1} parent=11 // pred_check
          %p506 = pneg %p144
        $region22: #{transformer_forward.1} parent=11 // pred_check_branch
          %508 = sbr.rel (%p506) target = $region24
        $region23: #{transformer_forward.1} parent=11 // pred_region
          _
        $region24: #{transformer_forward.1} parent=11 // pred_fallthru
          _
        // Predicated region
        $region25: #{transformer_forward.1} parent=11 // pred_check
          %p509 = pneg %p165
        $region26: #{transformer_forward.1} parent=11 // pred_check_branch
          %511 = sbr.rel (%p509) target = $region28
        $region27: #{transformer_forward.1} parent=11 // pred_region
          _
        $region28: #{transformer_forward.1} parent=11 // pred_fallthru
          _
        // Predicated region
        $region29: #{transformer_forward.1} parent=11 // pred_check
          %p512 = pneg %p186
        $region30: #{transformer_forward.1} parent=11 // pred_check_branch
          %514 = sbr.rel (%p512) target = $region32
        $region31: #{transformer_forward.1} parent=11 // pred_region
          _
        $region32: #{transformer_forward.1} parent=11 // pred_fallthru
          _
        // Predicated region
        $region33: #{transformer_forward.1} parent=11 // pred_check
          %p515 = pneg %p207
        $region34: #{transformer_forward.1} parent=11 // pred_check_branch
          %517 = sbr.rel (%p515) target = $region36
        $region35: #{transformer_forward.1} parent=11 // pred_region
          _
        $region36: #{transformer_forward.1} parent=11 // pred_fallthru
          _
        // Predicated region
        $region37: #{transformer_forward.1} parent=11 // pred_check
          %p518 = pneg %p228
        $region38: #{transformer_forward.1} parent=11 // pred_check_branch
          %520 = sbr.rel (%p518) target = $region40
        $region39: #{transformer_forward.1} parent=11 // pred_region
          _
        $region40: #{transformer_forward.1} parent=11 // pred_fallthru
          _
        // Predicated region
        $region41: #{transformer_forward.1} parent=11 // pred_check
          %p521 = pneg %p249
        $region42: #{transformer_forward.1} parent=11 // pred_check_branch
          %523 = sbr.rel (%p521) target = $region44
        $region43: #{transformer_forward.1} parent=11 // pred_region
          _
        $region44: #{transformer_forward.1} parent=11 // pred_fallthru
          _
        // Predicated region
        $region45: #{transformer_forward.1} parent=11 // pred_check
          %p524 = pneg %p270
        $region46: #{transformer_forward.1} parent=11 // pred_check_branch
          %526 = sbr.rel (%p524) target = $region48
        $region47: #{transformer_forward.1} parent=11 // pred_region
          _
        $region48: #{transformer_forward.1} parent=11 // pred_fallthru
          _
        // Predicated region
        $region49: #{transformer_forward.1} parent=11 // pred_check
          %p527 = pneg %p291
        $region50: #{transformer_forward.1} parent=11 // pred_check_branch
          %529 = sbr.rel (%p527) target = $region52
        $region51: #{transformer_forward.1} parent=11 // pred_region
          _
        $region52: #{transformer_forward.1} parent=11 // pred_fallthru
          _
        // Predicated region
        $region53: #{transformer_forward.1} parent=11 // pred_check
          %p530 = pneg %p312
        $region54: #{transformer_forward.1} parent=11 // pred_check_branch
          %532 = sbr.rel (%p530) target = $region56
        $region55: #{transformer_forward.1} parent=11 // pred_region
          _
        $region56: #{transformer_forward.1} parent=11 // pred_fallthru
          _
        // Predicated region
        $region57: #{transformer_forward.1} parent=11 // pred_check
          %p533 = pneg %p333
        $region58: #{transformer_forward.1} parent=11 // pred_check_branch
          %535 = sbr.rel (%p533) target = $region60
        $region59: #{transformer_forward.1} parent=11 // pred_region
          _
        $region60: #{transformer_forward.1} parent=11 // pred_fallthru
          _
        // Predicated region
        $region61: #{transformer_forward.1} parent=11 // pred_check
          %p536 = pneg %p354
        $region62: #{transformer_forward.1} parent=11 // pred_check_branch
          %538 = sbr.rel (%p536) target = $region64
        $region63: #{transformer_forward.1} parent=11 // pred_region
          _
        $region64: #{transformer_forward.1} parent=11 // pred_fallthru
          _
        // Predicated region
        $region65: #{transformer_forward.1} parent=11 // pred_check
          %p539 = pneg %p375
        $region66: #{transformer_forward.1} parent=11 // pred_check_branch
          %541 = sbr.rel (%p539) target = $region68
        $region67: #{transformer_forward.1} parent=11 // pred_region
          _
        $region68: #{transformer_forward.1} parent=11 // pred_fallthru
          _
        // Predicated region
        $region69: #{transformer_forward.1} parent=11 // pred_check
          %p542 = pneg %p396
        $region70: #{transformer_forward.1} parent=11 // pred_check_branch
          %544 = sbr.rel (%p542) target = $region72
        $region71: #{transformer_forward.1} parent=11 // pred_region
          _
        $region72: #{transformer_forward.1} parent=11 // pred_fallthru
          _
        // Predicated region
        $region73: #{transformer_forward.1} parent=11 // pred_check
          %p545 = pneg %p417
        $region74: #{transformer_forward.1} parent=11 // pred_check_branch
          %547 = sbr.rel (%p545) target = $region76
        $region75: #{transformer_forward.1} parent=11 // pred_region
          _
        $region76: #{transformer_forward.1} parent=11 // pred_fallthru
          _
        // Predicated region
        $region77: #{transformer_forward.1} parent=11 // pred_check
          %p548 = pneg %p438
        $region78: #{transformer_forward.1} parent=11 // pred_check_branch
          %550 = sbr.rel (%p548) target = $region80
        $region79: #{transformer_forward.1} parent=11 // pred_region
          _
        $region80: #{transformer_forward.1} parent=11 // pred_fallthru
          _
        // Predicated region
        $region81: #{transformer_forward.1} parent=11 // pred_check
          %p551 = pneg %p459
        $region82: #{transformer_forward.1} parent=11 // pred_check_branch
          %553 = sbr.rel (%p551) target = $region84
        $region83: #{transformer_forward.1} parent=11 // pred_region
          _
        $region84: #{transformer_forward.1} parent=11 // pred_fallthru
          _
      $region12: #{transformer_forward.1} parent=5 // pred_fallthru
        _
      %p554 = scmp.lt.s32.totalorder %s29, 2
      // Predicated region
      $region85: #{transformer_forward.1} parent=5 // pred_check
        %p555 = pneg %p554
      $region86: #{transformer_forward.1} parent=5 // pred_check_branch
        %557 = sbr.rel (%p555) target = $region88
      $region87: #{transformer_forward.1} parent=5 // pred_region
        // Predicated region
        $region89: #{transformer_forward.1} parent=87 // pred_check
          %p558 = pneg %p49
        $region90: #{transformer_forward.1} parent=87 // pred_check_branch
          %560 = sbr.rel (%p558) target = $region92
        $region91: #{transformer_forward.1} parent=87 // pred_region
          %p561 = scmp.lt.s32.totalorder %s29, 1
          %s562 = scalar_select %p561, %s29, 1
          %s563 = smul.addr %s562, 8
          %s564 = scalar_lea.vmem %s0, %s563
        $region92: #{transformer_forward.1} parent=87 // pred_fallthru
          _
        // Predicated region
        $region93: #{transformer_forward.1} parent=87 // pred_check
          %p565 = pneg %p75
        $region94: #{transformer_forward.1} parent=87 // pred_check_branch
          %567 = sbr.rel (%p565) target = $region96
        $region95: #{transformer_forward.1} parent=87 // pred_region
          %p568 = scmp.lt.s32.totalorder %s29, 1
          %s569 = scalar_select %p568, %s29, 1
          %s570 = smul.addr %s569, 8
          %s571 = scalar_lea.vmem %s1, %s570
        $region96: #{transformer_forward.1} parent=87 // pred_fallthru
          _
      $region88: #{transformer_forward.1} parent=5 // pred_fallthru
        _
      %p572 = scmp.le.s32.totalorder 1, %s29
      %p573 = scmp.lt.s32.totalorder %s29, 3
      %p574 = pnand %p572, %p573
      %p575 = pneg %p574
      // Predicated region
      $region97: #{transformer_forward.1} parent=5 // pred_check
        _
      $region98: #{transformer_forward.1} parent=5 // pred_check_branch
        %577 = sbr.rel (%p574) target = $region100
      $region99: #{transformer_forward.1} parent=5 // pred_region
        %s578 = ssub.s32 %s29, 1
        %p579 = scmp.lt.s32.totalorder %s34, 1
        %s580 = scalar_select %p579, %s34, 1
        %s581 = smul.addr %s580, 8
        %s582 = scalar_lea.vmem %s0, %s581
        %p583 = pneg %p55
        %p584 = pneg %p52
        %p585 = scmp.lt.s32.totalorder %s34, 1
        %s586 = scalar_select %p585, %s34, 1
        %s587 = smul.addr %s586, 8
        %s588 = scalar_lea.vmem %s1, %s587
        %p589 = pneg %p81
        %p590 = pneg %p78
        %p591 = pneg %p102
        %p592 = pneg %p99
        %p593 = pneg %p123
        %p594 = pneg %p120
        %p595 = pneg %p144
        %p596 = pneg %p141
        %p597 = pneg %p165
        %p598 = pneg %p162
        %p599 = pneg %p186
        %p600 = pneg %p183
        %p601 = pneg %p207
        %p602 = pneg %p204
        %p603 = pneg %p228
        %p604 = pneg %p225
        %p605 = pneg %p249
        %p606 = pneg %p246
        %p607 = pneg %p270
        %p608 = pneg %p267
        %p609 = pneg %p291
        %p610 = pneg %p288
        %p611 = pneg %p312
        %p612 = pneg %p309
        %p613 = pneg %p333
        %p614 = pneg %p330
        %p615 = pneg %p354
        %p616 = pneg %p351
        %p617 = pneg %p375
        %p618 = pneg %p372
        %p619 = pneg %p396
        %p620 = pneg %p393
        %p621 = pneg %p417
        %p622 = pneg %p414
        %p623 = pneg %p438
        %p624 = pneg %p435
        %p625 = pneg %p459
        %p626 = pneg %p456
        %p627 = pneg %p485
        %p628 = pneg %p482
        %s629 = sand.u32 %s472, 1
        %s630 = scalar_lea.sflag [#allocation3], %s629
        %s631 = sand.u32 %s472, 1
        %s632 = smul.addr %s631, 8
        %s633 = scalar_lea.vmem [#allocation2], %s632
        %p634 = scmp.lt.s32.totalorder %s34, 1
        %s635 = scalar_select %p634, %s34, 1
        %s636 = smul.addr %s635, 8
        %s637 = scalar_lea.vmem %s0, %s636
        %p638 = scmp.lt.s32.totalorder %s34, 1
        %s639 = scalar_select %p638, %s34, 1
        %s640 = smul.addr %s639, 8
        %s641 = scalar_lea.vmem %s1, %s640
        %v642 = vld [vmem:[%s637] sm:$0xff]
        %v643 = vld [vmem:[%s2] sm:$0xff]
        %v644 = vld [vmem:[%s2 + $0x8] sm:$0xff]
        %v645 = vld [vmem:[%s2 + $0x10] sm:$0xff]
        %v646 = vld [vmem:[%s2 + $0x18] sm:$0xff]
        %v647 = vld [vmem:[%s2 + $0x20] sm:$0xff]
        %v648 = vld [vmem:[%s2 + $0x28] sm:$0xff]
        %v649 = vld [vmem:[%s2 + $0x30] sm:$0xff]
        %v650 = vld [vmem:[%s2 + $0x38] sm:$0xff]
        %v651 = vld [vmem:[%s2 + $0x40] sm:$0xff]
        %v652 = vld [vmem:[%s2 + $0x48] sm:$0xff]
        %v653 = vld [vmem:[%s2 + $0x50] sm:$0xff]
        %v654 = vld [vmem:[%s2 + $0x58] sm:$0xff]
        %v655 = vld [vmem:[%s2 + $0x60] sm:$0xff]
        %v656 = vld [vmem:[%s2 + $0x68] sm:$0xff]
        %v657 = vld [vmem:[%s2 + $0x70] sm:$0xff]
        %v658 = vld [vmem:[%s2 + $0x78] sm:$0xff]
        %v659 = vld [vmem:[%s3] sm:$0x3]
        %v661 = vlaneseq
        %v662 = vshrl.u32 %v661, 7
        %v663 = vsub.s32 0, %v662
        %v664 = vrot.slane %v659, %v663
        %v665 = vlaneseq
        %v666 = vshrl.u32 %v665, 7
        %v667 = vsub.s32 1, %v666
        %v668 = vrot.slane %v659, %v667
        %vm671 = vcmask 523264
        %v673 = vsel %vm671, %v642, 0
        %675 = vmatprep.subr.mxu0 %v644
        %676 = vmatpush1.msra.mxu0 %v643
        %677 = vmatprep.subr.mxu0 %v646
        %678 = vmatpush1.msra.mxu0 %v645
        %679 = vmatprep.subr.mxu0 %v648
        %680 = vmatpush1.msra.mxu0 %v647
        %681 = vmatprep.subr.mxu0 %v650
        %682 = vmatpush1.msra.mxu0 %v649
        %683 = vmatprep.subr.mxu0 %v652
        %684 = vmatpush1.msra.mxu0 %v651
        %685 = vmatprep.subr.mxu0 %v654
        %686 = vmatpush1.msra.mxu0 %v653
        %687 = vmatprep.subr.mxu0 %v656
        %688 = vmatpush1.msra.mxu0 %v655
        %689 = vmatprep.subr.mxu0 %v658
        %690 = vmatpush1.msra.mxu0 %v657
        %691 = vmatprep.subr.mxu0 0.0
        %692 = vmatpush1.msra.mxu0 0.0
        %693 = vmatprep.subr.mxu0 0.0
        %694 = vmatpush1.msra.mxu0 0.0
        %695 = vmatprep.subr.mxu0 0.0
        %696 = vmatpush1.msra.mxu0 0.0
        %697 = vmatprep.subr.mxu0 0.0
        %698 = vmatpush1.msra.mxu0 0.0
        %699 = vmatprep.subr.mxu0 0.0
        %700 = vmatpush1.msra.mxu0 0.0
        %701 = vmatprep.subr.mxu0 0.0
        %702 = vmatpush1.msra.mxu0 0.0
        %703 = vmatprep.subr.mxu0 0.0
        %704 = vmatpush1.msra.mxu0 0.0
        %705 = vmatprep.subr.mxu0 0.0
        %706 = vmatpush1.msra.mxu0 0.0
        %707 = vmatprep.subr.mxu0 0.0
        %708 = vmatpush1.msra.mxu0 0.0
        %709 = vmatprep.subr.mxu0 0.0
        %710 = vmatpush1.msra.mxu0 0.0
        %711 = vmatprep.subr.mxu0 0.0
        %712 = vmatpush1.msra.mxu0 0.0
        %713 = vmatprep.subr.mxu0 0.0
        %714 = vmatpush1.msra.mxu0 0.0
        %715 = vmatprep.subr.mxu0 0.0
        %716 = vmatpush1.msra.mxu0 0.0
        %717 = vmatprep.subr.mxu0 0.0
        %718 = vmatpush1.msra.mxu0 0.0
        %719 = vmatprep.subr.mxu0 0.0
        %720 = vmatpush1.msra.mxu0 0.0
        %721 = vmatprep.subr.mxu0 0.0
        %722 = vmatpush1.msra.mxu0 0.0
        %723 = vmatprep.subr.mxu0 0.0
        %724 = vmatpush1.msra.mxu0 0.0
        %725 = vmatprep.subr.mxu0 0.0
        %726 = vmatpush1.msra.mxu0 0.0
        %727 = vmatprep.subr.mxu0 0.0
        %728 = vmatpush1.msra.mxu0 0.0
        %729 = vmatprep.subr.mxu0 0.0
        %730 = vmatpush1.msra.mxu0 0.0
        %731 = vmatprep.subr.mxu0 0.0
        %732 = vmatpush1.msra.mxu0 0.0
        %733 = vmatprep.subr.mxu0 0.0
        %734 = vmatpush1.msra.mxu0 0.0
        %735 = vmatprep.subr.mxu0 0.0
        %736 = vmatpush1.msra.mxu0 0.0
        %737 = vmatprep.subr.mxu0 0.0
        %738 = vmatpush1.msra.mxu0 0.0
        %739 = vmatprep.mubr.f32.mxu0 0.0
        %740 = vmatmul.mubr.f32.gmra.mrb[0].mxu0 %v673
        %v741 = vpop.f32.mrb[0].mxu0
        %v742 = vadd.f32 %v664, %v741
        %v743 = vpop.f32.mrb[0].mxu0
        %v744 = vadd.f32 %v668, %v743
        %745 = vdwg.mxu0
        %747 = vrot.lane.b32.xlu0 %v742, 64
        %v748 = vpop.permute.xlu0 %747
        %vm749 = vcmask 130048
        %v750 = vsel %vm749, %v742, 0
        %v752 = vsel %vm749, %v748, 0
        %754 = vmatprep.subr.mxu0 0.0
        %755 = vmatpush1.xpose.msra.mxu0 %v752
        %756 = vmatprep.subr.mxu0 0.0
        %757 = vmatpush1.xpose.msra.mxu0 0.0
        %758 = vmatprep.subr.mxu0 0.0
        %759 = vmatpush1.xpose.msra.mxu0 0.0
        %760 = vmatprep.subr.mxu0 0.0
        %761 = vmatpush1.xpose.msra.mxu0 0.0
        %762 = vmatprep.subr.mxu0 0.0
        %763 = vmatpush1.xpose.msra.mxu0 0.0
        %764 = vmatprep.subr.mxu0 0.0
        %765 = vmatpush1.xpose.msra.mxu0 0.0
        %766 = vmatprep.subr.mxu0 0.0
        %767 = vmatpush1.xpose.msra.mxu0 0.0
        %768 = vmatprep.subr.mxu0 0.0
        %769 = vmatpush1.xpose.msra.mxu0 0.0
        %770 = vmatprep.subr.mxu0 0.0
        %771 = vmatpush1.xpose.msra.mxu0 0.0
        %772 = vmatprep.subr.mxu0 0.0
        %773 = vmatpush1.xpose.msra.mxu0 0.0
        %774 = vmatprep.subr.mxu0 0.0
        %775 = vmatpush1.xpose.msra.mxu0 0.0
        %776 = vmatprep.subr.mxu0 0.0
        %777 = vmatpush1.xpose.msra.mxu0 0.0
        %778 = vmatprep.subr.mxu0 0.0
        %779 = vmatpush1.xpose.msra.mxu0 0.0
        %780 = vmatprep.subr.mxu0 0.0
        %781 = vmatpush1.xpose.msra.mxu0 0.0
        %782 = vmatprep.subr.mxu0 0.0
        %783 = vmatpush1.xpose.msra.mxu0 0.0
        %784 = vmatprep.subr.mxu0 0.0
        %785 = vmatpush1.xpose.msra.mxu0 0.0
        %786 = vmatprep.subr.mxu0 0.0
        %787 = vmatpush1.xpose.msra.mxu0 0.0
        %788 = vmatprep.subr.mxu0 0.0
        %789 = vmatpush1.xpose.msra.mxu0 0.0
        %790 = vmatprep.subr.mxu0 0.0
        %791 = vmatpush1.xpose.msra.mxu0 0.0
        %792 = vmatprep.subr.mxu0 0.0
        %793 = vmatpush1.xpose.msra.mxu0 0.0
        %794 = vmatprep.subr.mxu0 0.0
        %795 = vmatpush1.xpose.msra.mxu0 0.0
        %796 = vmatprep.subr.mxu0 0.0
        %797 = vmatpush1.xpose.msra.mxu0 0.0
        %798 = vmatprep.subr.mxu0 0.0
        %799 = vmatpush1.xpose.msra.mxu0 0.0
        %800 = vmatprep.subr.mxu0 0.0
        %801 = vmatpush1.xpose.msra.mxu0 0.0
        %802 = vmatprep.subr.mxu0 0.0
        %803 = vmatpush1.xpose.msra.mxu0 0.0
        %804 = vmatprep.subr.mxu0 0.0
        %805 = vmatpush1.xpose.msra.mxu0 0.0
        %806 = vmatprep.subr.mxu0 0.0
        %807 = vmatpush1.xpose.msra.mxu0 0.0
        %808 = vmatprep.subr.mxu0 0.0
        %809 = vmatpush1.xpose.msra.mxu0 0.0
        %810 = vmatprep.subr.mxu0 0.0
        %811 = vmatpush1.xpose.msra.mxu0 0.0
        %812 = vmatprep.subr.mxu0 0.0
        %813 = vmatpush1.xpose.msra.mxu0 0.0
        %814 = vmatprep.subr.mxu0 0.0
        %815 = vmatpush1.xpose.msra.mxu0 0.0
        %816 = vmatprep.subr.mxu0 0.0
        %817 = vmatpush1.xpose.msra.mxu0 0.0
        %818 = vmatprep.mubr.f32.mxu0 0.0
        %819 = vmatmul.mubr.f32.gmra.mrb[0].mxu0 %v750
        %v820 = vpop.f32.mrb[0].mxu0
        %v821 = vadd.f32 0.0, %v820
        %v822 = vpop.f32.mrb[0].mxu0
        %823 = vdwg.mxu0
        %vm824 = vcmask 64512
        %v825 = vsel %vm824, %v821, -inf
        %826 = vmax.xlane.f32.xlu0 %v825
        %v827 = vpop.xlane.xlu0 %826
        %v828 = vsub.f32 %v821, %v827
        %v829 = vmul.f32 %v828, 1.442695
        %v830 = vpow.pop %v829
        %v831 = vsel %vm824, %v830, 0.0
        %832 = vadd.xlane.f32.xlu0 %v831
        %v833 = vpop.xlane.xlu0 %832
        %v834 = vrcp.pop %v833
        %v835 = vmul.f32 %v830, %v834
        %v837 = vsel %vm824, %v835, 0
        %839 = vmatprep.subr.mxu0 0.0
        %840 = vmatpush1.msra.mxu0 %v744
        %841 = vmatprep.subr.mxu0 0.0
        %842 = vmatpush1.msra.mxu0 0.0
        %843 = vmatprep.subr.mxu0 0.0
        %844 = vmatpush1.msra.mxu0 0.0
        %845 = vmatprep.subr.mxu0 0.0
        %846 = vmatpush1.msra.mxu0 0.0
        %847 = vmatprep.subr.mxu0 0.0
        %848 = vmatpush1.msra.mxu0 0.0
        %849 = vmatprep.subr.mxu0 0.0
        %850 = vmatpush1.msra.mxu0 0.0
        %851 = vmatprep.subr.mxu0 0.0
        %852 = vmatpush1.msra.mxu0 0.0
        %853 = vmatprep.subr.mxu0 0.0
        %854 = vmatpush1.msra.mxu0 0.0
        %855 = vmatprep.subr.mxu0 0.0
        %856 = vmatpush1.msra.mxu0 0.0
        %857 = vmatprep.subr.mxu0 0.0
        %858 = vmatpush1.msra.mxu0 0.0
        %859 = vmatprep.subr.mxu0 0.0
        %860 = vmatpush1.msra.mxu0 0.0
        %861 = vmatprep.subr.mxu0 0.0
        %862 = vmatpush1.msra.mxu0 0.0
        %863 = vmatprep.subr.mxu0 0.0
        %864 = vmatpush1.msra.mxu0 0.0
        %865 = vmatprep.subr.mxu0 0.0
        %866 = vmatpush1.msra.mxu0 0.0
        %867 = vmatprep.subr.mxu0 0.0
        %868 = vmatpush1.msra.mxu0 0.0
        %869 = vmatprep.subr.mxu0 0.0
        %870 = vmatpush1.msra.mxu0 0.0
        %871 = vmatprep.subr.mxu0 0.0
        %872 = vmatpush1.msra.mxu0 0.0
        %873 = vmatprep.subr.mxu0 0.0
        %874 = vmatpush1.msra.mxu0 0.0
        %875 = vmatprep.subr.mxu0 0.0
        %876 = vmatpush1.msra.mxu0 0.0
        %877 = vmatprep.subr.mxu0 0.0
        %878 = vmatpush1.msra.mxu0 0.0
        %879 = vmatprep.subr.mxu0 0.0
        %880 = vmatpush1.msra.mxu0 0.0
        %881 = vmatprep.subr.mxu0 0.0
        %882 = vmatpush1.msra.mxu0 0.0
        %883 = vmatprep.subr.mxu0 0.0
        %884 = vmatpush1.msra.mxu0 0.0
        %885 = vmatprep.subr.mxu0 0.0
        %886 = vmatpush1.msra.mxu0 0.0
        %887 = vmatprep.subr.mxu0 0.0
        %888 = vmatpush1.msra.mxu0 0.0
        %889 = vmatprep.subr.mxu0 0.0
        %890 = vmatpush1.msra.mxu0 0.0
        %891 = vmatprep.subr.mxu0 0.0
        %892 = vmatpush1.msra.mxu0 0.0
        %893 = vmatprep.subr.mxu0 0.0
        %894 = vmatpush1.msra.mxu0 0.0
        %895 = vmatprep.subr.mxu0 0.0
        %896 = vmatpush1.msra.mxu0 0.0
        %897 = vmatprep.subr.mxu0 0.0
        %898 = vmatpush1.msra.mxu0 0.0
        %899 = vmatprep.subr.mxu0 0.0
        %900 = vmatpush1.msra.mxu0 0.0
        %901 = vmatprep.subr.mxu0 0.0
        %902 = vmatpush1.msra.mxu0 0.0
        %903 = vmatprep.mubr.f32.mxu0 0.0
        %904 = vmatmul.mubr.f32.gmra.mrb[0].mxu0 %v837
        %v905 = vpop.f32.mrb[0].mxu0
        %v906 = vadd.f32 0.0, %v905
        %v907 = vpop.f32.mrb[0].mxu0
        %908 = vdwg.mxu0
        %909 = vrot.lane.b32.xlu0 %v742, 112
        %v910 = vpop.permute.xlu0 %909
        %911 = vrot.lane.b32.xlu0 %v742, 48
        %v912 = vpop.permute.xlu0 %911
        %v913 = vsel %vm749, %v910, 0
        %v915 = vsel %vm749, %v912, 0
        %917 = vmatprep.subr.mxu0 0.0
        %918 = vmatpush1.xpose.msra.mxu0 %v915
        %919 = vmatprep.subr.mxu0 0.0
        %920 = vmatpush1.xpose.msra.mxu0 0.0
        %921 = vmatprep.subr.mxu0 0.0
        %922 = vmatpush1.xpose.msra.mxu0 0.0
        %923 = vmatprep.subr.mxu0 0.0
        %924 = vmatpush1.xpose.msra.mxu0 0.0
        %925 = vmatprep.subr.mxu0 0.0
        %926 = vmatpush1.xpose.msra.mxu0 0.0
        %927 = vmatprep.subr.mxu0 0.0
        %928 = vmatpush1.xpose.msra.mxu0 0.0
        %929 = vmatprep.subr.mxu0 0.0
        %930 = vmatpush1.xpose.msra.mxu0 0.0
        %931 = vmatprep.subr.mxu0 0.0
        %932 = vmatpush1.xpose.msra.mxu0 0.0
        %933 = vmatprep.subr.mxu0 0.0
        %934 = vmatpush1.xpose.msra.mxu0 0.0
        %935 = vmatprep.subr.mxu0 0.0
        %936 = vmatpush1.xpose.msra.mxu0 0.0
        %937 = vmatprep.subr.mxu0 0.0
        %938 = vmatpush1.xpose.msra.mxu0 0.0
        %939 = vmatprep.subr.mxu0 0.0
        %940 = vmatpush1.xpose.msra.mxu0 0.0
        %941 = vmatprep.subr.mxu0 0.0
        %942 = vmatpush1.xpose.msra.mxu0 0.0
        %943 = vmatprep.subr.mxu0 0.0
        %944 = vmatpush1.xpose.msra.mxu0 0.0
        %945 = vmatprep.subr.mxu0 0.0
        %946 = vmatpush1.xpose.msra.mxu0 0.0
        %947 = vmatprep.subr.mxu0 0.0
        %948 = vmatpush1.xpose.msra.mxu0 0.0
        %949 = vmatprep.subr.mxu0 0.0
        %950 = vmatpush1.xpose.msra.mxu0 0.0
        %951 = vmatprep.subr.mxu0 0.0
        %952 = vmatpush1.xpose.msra.mxu0 0.0
        %953 = vmatprep.subr.mxu0 0.0
        %954 = vmatpush1.xpose.msra.mxu0 0.0
        %955 = vmatprep.subr.mxu0 0.0
        %956 = vmatpush1.xpose.msra.mxu0 0.0
        %957 = vmatprep.subr.mxu0 0.0
        %958 = vmatpush1.xpose.msra.mxu0 0.0
        %959 = vmatprep.subr.mxu0 0.0
        %960 = vmatpush1.xpose.msra.mxu0 0.0
        %961 = vmatprep.subr.mxu0 0.0
        %962 = vmatpush1.xpose.msra.mxu0 0.0
        %963 = vmatprep.subr.mxu0 0.0
        %964 = vmatpush1.xpose.msra.mxu0 0.0
        %965 = vmatprep.subr.mxu0 0.0
        %966 = vmatpush1.xpose.msra.mxu0 0.0
        %967 = vmatprep.subr.mxu0 0.0
        %968 = vmatpush1.xpose.msra.mxu0 0.0
        %969 = vmatprep.subr.mxu0 0.0
        %970 = vmatpush1.xpose.msra.mxu0 0.0
        %971 = vmatprep.subr.mxu0 0.0
        %972 = vmatpush1.xpose.msra.mxu0 0.0
        %973 = vmatprep.subr.mxu0 0.0
        %974 = vmatpush1.xpose.msra.mxu0 0.0
        %975 = vmatprep.subr.mxu0 0.0
        %976 = vmatpush1.xpose.msra.mxu0 0.0
        %977 = vmatprep.subr.mxu0 0.0
        %978 = vmatpush1.xpose.msra.mxu0 0.0
        %979 = vmatprep.subr.mxu0 0.0
        %980 = vmatpush1.xpose.msra.mxu0 0.0
        %981 = vmatprep.mubr.f32.mxu0 0.0
        %982 = vmatmul.mubr.f32.gmra.mrb[0].mxu0 %v913
        %v983 = vpop.f32.mrb[0].mxu0
        %v984 = vadd.f32 0.0, %v983
        %v985 = vpop.f32.mrb[0].mxu0
        %986 = vdwg.mxu0
        %v987 = vsel %vm824, %v984, -inf
        %988 = vmax.xlane.f32.xlu0 %v987
        %v989 = vpop.xlane.xlu0 %988
        %v990 = vsub.f32 %v984, %v989
        %v991 = vmul.f32 %v990, 1.442695
        %v992 = vpow.pop %v991
        %v993 = vsel %vm824, %v992, 0.0
        %994 = vadd.xlane.f32.xlu0 %v993
        %v995 = vpop.xlane.xlu0 %994
        %v996 = vrcp.pop %v995
        %v997 = vmul.f32 %v992, %v996
        %999 = vrot.lane.b32.xlu0 %v744, 112
        %v1000 = vpop.permute.xlu0 %999
        %v1003 = vsel %vm824, %v997, 0
        %1005 = vmatprep.subr.mxu0 0.0
        %1006 = vmatpush1.msra.mxu0 %v1000
        %1007 = vmatprep.subr.mxu0 0.0
        %1008 = vmatpush1.msra.mxu0 0.0
        %1009 = vmatprep.subr.mxu0 0.0
        %1010 = vmatpush1.msra.mxu0 0.0
        %1011 = vmatprep.subr.mxu0 0.0
        %1012 = vmatpush1.msra.mxu0 0.0
        %1013 = vmatprep.subr.mxu0 0.0
        %1014 = vmatpush1.msra.mxu0 0.0
        %1015 = vmatprep.subr.mxu0 0.0
        %1016 = vmatpush1.msra.mxu0 0.0
        %1017 = vmatprep.subr.mxu0 0.0
        %1018 = vmatpush1.msra.mxu0 0.0
        %1019 = vmatprep.subr.mxu0 0.0
        %1020 = vmatpush1.msra.mxu0 0.0
        %1021 = vmatprep.subr.mxu0 0.0
        %1022 = vmatpush1.msra.mxu0 0.0
        %1023 = vmatprep.subr.mxu0 0.0
        %1024 = vmatpush1.msra.mxu0 0.0
        %1025 = vmatprep.subr.mxu0 0.0
        %1026 = vmatpush1.msra.mxu0 0.0
        %1027 = vmatprep.subr.mxu0 0.0
        %1028 = vmatpush1.msra.mxu0 0.0
        %1029 = vmatprep.subr.mxu0 0.0
        %1030 = vmatpush1.msra.mxu0 0.0
        %1031 = vmatprep.subr.mxu0 0.0
        %1032 = vmatpush1.msra.mxu0 0.0
        %1033 = vmatprep.subr.mxu0 0.0
        %1034 = vmatpush1.msra.mxu0 0.0
        %1035 = vmatprep.subr.mxu0 0.0
        %1036 = vmatpush1.msra.mxu0 0.0
        %1037 = vmatprep.subr.mxu0 0.0
        %1038 = vmatpush1.msra.mxu0 0.0
        %1039 = vmatprep.subr.mxu0 0.0
        %1040 = vmatpush1.msra.mxu0 0.0
        %1041 = vmatprep.subr.mxu0 0.0
        %1042 = vmatpush1.msra.mxu0 0.0
        %1043 = vmatprep.subr.mxu0 0.0
        %1044 = vmatpush1.msra.mxu0 0.0
        %1045 = vmatprep.subr.mxu0 0.0
        %1046 = vmatpush1.msra.mxu0 0.0
        %1047 = vmatprep.subr.mxu0 0.0
        %1048 = vmatpush1.msra.mxu0 0.0
        %1049 = vmatprep.subr.mxu0 0.0
        %1050 = vmatpush1.msra.mxu0 0.0
        %1051 = vmatprep.subr.mxu0 0.0
        %1052 = vmatpush1.msra.mxu0 0.0
        %1053 = vmatprep.subr.mxu0 0.0
        %1054 = vmatpush1.msra.mxu0 0.0
        %1055 = vmatprep.subr.mxu0 0.0
        %1056 = vmatpush1.msra.mxu0 0.0
        %1057 = vmatprep.subr.mxu0 0.0
        %1058 = vmatpush1.msra.mxu0 0.0
        %1059 = vmatprep.subr.mxu0 0.0
        %1060 = vmatpush1.msra.mxu0 0.0
        %1061 = vmatprep.subr.mxu0 0.0
        %1062 = vmatpush1.msra.mxu0 0.0
        %1063 = vmatprep.subr.mxu0 0.0
        %1064 = vmatpush1.msra.mxu0 0.0
        %1065 = vmatprep.subr.mxu0 0.0
        %1066 = vmatpush1.msra.mxu0 0.0
        %1067 = vmatprep.subr.mxu0 0.0
        %1068 = vmatpush1.msra.mxu0 0.0
        %1069 = vmatprep.mubr.f32.mxu0 0.0
        %1070 = vmatmul.mubr.f32.gmra.mrb[0].mxu0 %v1003
        %v1071 = vpop.f32.mrb[0].mxu0
        %v1072 = vadd.f32 0.0, %v1071
        %v1073 = vpop.f32.mrb[0].mxu0
        %1074 = vdwg.mxu0
        %1075 = vrot.lane.b32.xlu0 %v742, 96
        %v1076 = vpop.permute.xlu0 %1075
        %1077 = vrot.lane.b32.xlu0 %v742, 32
        %v1078 = vpop.permute.xlu0 %1077
        %v1079 = vsel %vm749, %v1076, 0
        %v1081 = vsel %vm749, %v1078, 0
        %1083 = vmatprep.subr.mxu0 0.0
        %1084 = vmatpush1.xpose.msra.mxu0 %v1081
        %1085 = vmatprep.subr.mxu0 0.0
        %1086 = vmatpush1.xpose.msra.mxu0 0.0
        %1087 = vmatprep.subr.mxu0 0.0
        %1088 = vmatpush1.xpose.msra.mxu0 0.0
        %1089 = vmatprep.subr.mxu0 0.0
        %1090 = vmatpush1.xpose.msra.mxu0 0.0
        %1091 = vmatprep.subr.mxu0 0.0
        %1092 = vmatpush1.xpose.msra.mxu0 0.0
        %1093 = vmatprep.subr.mxu0 0.0
        %1094 = vmatpush1.xpose.msra.mxu0 0.0
        %1095 = vmatprep.subr.mxu0 0.0
        %1096 = vmatpush1.xpose.msra.mxu0 0.0
        %1097 = vmatprep.subr.mxu0 0.0
        %1098 = vmatpush1.xpose.msra.mxu0 0.0
        %1099 = vmatprep.subr.mxu0 0.0
        %1100 = vmatpush1.xpose.msra.mxu0 0.0
        %1101 = vmatprep.subr.mxu0 0.0
        %1102 = vmatpush1.xpose.msra.mxu0 0.0
        %1103 = vmatprep.subr.mxu0 0.0
        %1104 = vmatpush1.xpose.msra.mxu0 0.0
        %1105 = vmatprep.subr.mxu0 0.0
        %1106 = vmatpush1.xpose.msra.mxu0 0.0
        %1107 = vmatprep.subr.mxu0 0.0
        %1108 = vmatpush1.xpose.msra.mxu0 0.0
        %1109 = vmatprep.subr.mxu0 0.0
        %1110 = vmatpush1.xpose.msra.mxu0 0.0
        %1111 = vmatprep.subr.mxu0 0.0
        %1112 = vmatpush1.xpose.msra.mxu0 0.0
        %1113 = vmatprep.subr.mxu0 0.0
        %1114 = vmatpush1.xpose.msra.mxu0 0.0
        %1115 = vmatprep.subr.mxu0 0.0
        %1116 = vmatpush1.xpose.msra.mxu0 0.0
        %1117 = vmatprep.subr.mxu0 0.0
        %1118 = vmatpush1.xpose.msra.mxu0 0.0
        %1119 = vmatprep.subr.mxu0 0.0
        %1120 = vmatpush1.xpose.msra.mxu0 0.0
        %1121 = vmatprep.subr.mxu0 0.0
        %1122 = vmatpush1.xpose.msra.mxu0 0.0
        %1123 = vmatprep.subr.mxu0 0.0
        %1124 = vmatpush1.xpose.msra.mxu0 0.0
        %1125 = vmatprep.subr.mxu0 0.0
        %1126 = vmatpush1.xpose.msra.mxu0 0.0
        %1127 = vmatprep.subr.mxu0 0.0
        %1128 = vmatpush1.xpose.msra.mxu0 0.0
        %1129 = vmatprep.subr.mxu0 0.0
        %1130 = vmatpush1.xpose.msra.mxu0 0.0
        %1131 = vmatprep.subr.mxu0 0.0
        %1132 = vmatpush1.xpose.msra.mxu0 0.0
        %1133 = vmatprep.subr.mxu0 0.0
        %1134 = vmatpush1.xpose.msra.mxu0 0.0
        %1135 = vmatprep.subr.mxu0 0.0
        %1136 = vmatpush1.xpose.msra.mxu0 0.0
        %1137 = vmatprep.subr.mxu0 0.0
        %1138 = vmatpush1.xpose.msra.mxu0 0.0
        %1139 = vmatprep.subr.mxu0 0.0
        %1140 = vmatpush1.xpose.msra.mxu0 0.0
        %1141 = vmatprep.subr.mxu0 0.0
        %1142 = vmatpush1.xpose.msra.mxu0 0.0
        %1143 = vmatprep.subr.mxu0 0.0
        %1144 = vmatpush1.xpose.msra.mxu0 0.0
        %1145 = vmatprep.subr.mxu0 0.0
        %1146 = vmatpush1.xpose.msra.mxu0 0.0
        %1147 = vmatprep.mubr.f32.mxu0 0.0
        %1148 = vmatmul.mubr.f32.gmra.mrb[0].mxu0 %v1079
        %v1149 = vpop.f32.mrb[0].mxu0
        %v1150 = vadd.f32 0.0, %v1149
        %v1151 = vpop.f32.mrb[0].mxu0
        %1152 = vdwg.mxu0
        %v1153 = vsel %vm824, %v1150, -inf
        %1154 = vmax.xlane.f32.xlu0 %v1153
        %v1155 = vpop.xlane.xlu0 %1154
        %v1156 = vsub.f32 %v1150, %v1155
        %v1157 = vmul.f32 %v1156, 1.442695
        %v1158 = vpow.pop %v1157
        %v1159 = vsel %vm824, %v1158, 0.0
        %1160 = vadd.xlane.f32.xlu0 %v1159
        %v1161 = vpop.xlane.xlu0 %1160
        %v1162 = vrcp.pop %v1161
        %v1163 = vmul.f32 %v1158, %v1162
        %1164 = vrot.lane.b32.xlu0 %v744, 96
        %v1165 = vpop.permute.xlu0 %1164
        %v1168 = vsel %vm824, %v1163, 0
        %1170 = vmatprep.subr.mxu0 0.0
        %1171 = vmatpush1.msra.mxu0 %v1165
        %1172 = vmatprep.subr.mxu0 0.0
        %1173 = vmatpush1.msra.mxu0 0.0
        %1174 = vmatprep.subr.mxu0 0.0
        %1175 = vmatpush1.msra.mxu0 0.0
        %1176 = vmatprep.subr.mxu0 0.0
        %1177 = vmatpush1.msra.mxu0 0.0
        %1178 = vmatprep.subr.mxu0 0.0
        %1179 = vmatpush1.msra.mxu0 0.0
        %1180 = vmatprep.subr.mxu0 0.0
        %1181 = vmatpush1.msra.mxu0 0.0
        %1182 = vmatprep.subr.mxu0 0.0
        %1183 = vmatpush1.msra.mxu0 0.0
        %1184 = vmatprep.subr.mxu0 0.0
        %1185 = vmatpush1.msra.mxu0 0.0
        %1186 = vmatprep.subr.mxu0 0.0
        %1187 = vmatpush1.msra.mxu0 0.0
        %1188 = vmatprep.subr.mxu0 0.0
        %1189 = vmatpush1.msra.mxu0 0.0
        %1190 = vmatprep.subr.mxu0 0.0
        %1191 = vmatpush1.msra.mxu0 0.0
        %1192 = vmatprep.subr.mxu0 0.0
        %1193 = vmatpush1.msra.mxu0 0.0
        %1194 = vmatprep.subr.mxu0 0.0
        %1195 = vmatpush1.msra.mxu0 0.0
        %1196 = vmatprep.subr.mxu0 0.0
        %1197 = vmatpush1.msra.mxu0 0.0
        %1198 = vmatprep.subr.mxu0 0.0
        %1199 = vmatpush1.msra.mxu0 0.0
        %1200 = vmatprep.subr.mxu0 0.0
        %1201 = vmatpush1.msra.mxu0 0.0
        %1202 = vmatprep.subr.mxu0 0.0
        %1203 = vmatpush1.msra.mxu0 0.0
        %1204 = vmatprep.subr.mxu0 0.0
        %1205 = vmatpush1.msra.mxu0 0.0
        %1206 = vmatprep.subr.mxu0 0.0
        %1207 = vmatpush1.msra.mxu0 0.0
        %1208 = vmatprep.subr.mxu0 0.0
        %1209 = vmatpush1.msra.mxu0 0.0
        %1210 = vmatprep.subr.mxu0 0.0
        %1211 = vmatpush1.msra.mxu0 0.0
        %1212 = vmatprep.subr.mxu0 0.0
        %1213 = vmatpush1.msra.mxu0 0.0
        %1214 = vmatprep.subr.mxu0 0.0
        %1215 = vmatpush1.msra.mxu0 0.0
        %1216 = vmatprep.subr.mxu0 0.0
        %1217 = vmatpush1.msra.mxu0 0.0
        %1218 = vmatprep.subr.mxu0 0.0
        %1219 = vmatpush1.msra.mxu0 0.0
        %1220 = vmatprep.subr.mxu0 0.0
        %1221 = vmatpush1.msra.mxu0 0.0
        %1222 = vmatprep.subr.mxu0 0.0
        %1223 = vmatpush1.msra.mxu0 0.0
        %1224 = vmatprep.subr.mxu0 0.0
        %1225 = vmatpush1.msra.mxu0 0.0
        %1226 = vmatprep.subr.mxu0 0.0
        %1227 = vmatpush1.msra.mxu0 0.0
        %1228 = vmatprep.subr.mxu0 0.0
        %1229 = vmatpush1.msra.mxu0 0.0
        %1230 = vmatprep.subr.mxu0 0.0
        %1231 = vmatpush1.msra.mxu0 0.0
        %1232 = vmatprep.subr.mxu0 0.0
        %1233 = vmatpush1.msra.mxu0 0.0
        %1234 = vmatprep.mubr.f32.mxu0 0.0
        %1235 = vmatmul.mubr.f32.gmra.mrb[0].mxu0 %v1168
        %v1236 = vpop.f32.mrb[0].mxu0
        %v1237 = vadd.f32 0.0, %v1236
        %v1238 = vpop.f32.mrb[0].mxu0
        %1239 = vdwg.mxu0
        %1240 = vrot.lane.b32.xlu0 %v742, 80
        %v1241 = vpop.permute.xlu0 %1240
        %1242 = vrot.lane.b32.xlu0 %v742, 16
        %v1243 = vpop.permute.xlu0 %1242
        %v1244 = vsel %vm749, %v1241, 0
        %v1246 = vsel %vm749, %v1243, 0
        %1248 = vmatprep.subr.mxu0 0.0
        %1249 = vmatpush1.xpose.msra.mxu0 %v1246
        %1250 = vmatprep.subr.mxu0 0.0
        %1251 = vmatpush1.xpose.msra.mxu0 0.0
        %1252 = vmatprep.subr.mxu0 0.0
        %1253 = vmatpush1.xpose.msra.mxu0 0.0
        %1254 = vmatprep.subr.mxu0 0.0
        %1255 = vmatpush1.xpose.msra.mxu0 0.0
        %1256 = vmatprep.subr.mxu0 0.0
        %1257 = vmatpush1.xpose.msra.mxu0 0.0
        %1258 = vmatprep.subr.mxu0 0.0
        %1259 = vmatpush1.xpose.msra.mxu0 0.0
        %1260 = vmatprep.subr.mxu0 0.0
        %1261 = vmatpush1.xpose.msra.mxu0 0.0
        %1262 = vmatprep.subr.mxu0 0.0
        %1263 = vmatpush1.xpose.msra.mxu0 0.0
        %1264 = vmatprep.subr.mxu0 0.0
        %1265 = vmatpush1.xpose.msra.mxu0 0.0
        %1266 = vmatprep.subr.mxu0 0.0
        %1267 = vmatpush1.xpose.msra.mxu0 0.0
        %1268 = vmatprep.subr.mxu0 0.0
        %1269 = vmatpush1.xpose.msra.mxu0 0.0
        %1270 = vmatprep.subr.mxu0 0.0
        %1271 = vmatpush1.xpose.msra.mxu0 0.0
        %1272 = vmatprep.subr.mxu0 0.0
        %1273 = vmatpush1.xpose.msra.mxu0 0.0
        %1274 = vmatprep.subr.mxu0 0.0
        %1275 = vmatpush1.xpose.msra.mxu0 0.0
        %1276 = vmatprep.subr.mxu0 0.0
        %1277 = vmatpush1.xpose.msra.mxu0 0.0
        %1278 = vmatprep.subr.mxu0 0.0
        %1279 = vmatpush1.xpose.msra.mxu0 0.0
        %1280 = vmatprep.subr.mxu0 0.0
        %1281 = vmatpush1.xpose.msra.mxu0 0.0
        %1282 = vmatprep.subr.mxu0 0.0
        %1283 = vmatpush1.xpose.msra.mxu0 0.0
        %1284 = vmatprep.subr.mxu0 0.0
        %1285 = vmatpush1.xpose.msra.mxu0 0.0
        %1286 = vmatprep.subr.mxu0 0.0
        %1287 = vmatpush1.xpose.msra.mxu0 0.0
        %1288 = vmatprep.subr.mxu0 0.0
        %1289 = vmatpush1.xpose.msra.mxu0 0.0
        %1290 = vmatprep.subr.mxu0 0.0
        %1291 = vmatpush1.xpose.msra.mxu0 0.0
        %1292 = vmatprep.subr.mxu0 0.0
        %1293 = vmatpush1.xpose.msra.mxu0 0.0
        %1294 = vmatprep.subr.mxu0 0.0
        %1295 = vmatpush1.xpose.msra.mxu0 0.0
        %1296 = vmatprep.subr.mxu0 0.0
        %1297 = vmatpush1.xpose.msra.mxu0 0.0
        %1298 = vmatprep.subr.mxu0 0.0
        %1299 = vmatpush1.xpose.msra.mxu0 0.0
        %1300 = vmatprep.subr.mxu0 0.0
        %1301 = vmatpush1.xpose.msra.mxu0 0.0
        %1302 = vmatprep.subr.mxu0 0.0
        %1303 = vmatpush1.xpose.msra.mxu0 0.0
        %1304 = vmatprep.subr.mxu0 0.0
        %1305 = vmatpush1.xpose.msra.mxu0 0.0
        %1306 = vmatprep.subr.mxu0 0.0
        %1307 = vmatpush1.xpose.msra.mxu0 0.0
        %1308 = vmatprep.subr.mxu0 0.0
        %1309 = vmatpush1.xpose.msra.mxu0 0.0
        %1310 = vmatprep.subr.mxu0 0.0
        %1311 = vmatpush1.xpose.msra.mxu0 0.0
        %1312 = vmatprep.mubr.f32.mxu0 0.0
        %1313 = vmatmul.mubr.f32.gmra.mrb[0].mxu0 %v1244
        %v1314 = vpop.f32.mrb[0].mxu0
        %v1315 = vadd.f32 0.0, %v1314
        %v1316 = vpop.f32.mrb[0].mxu0
        %1317 = vdwg.mxu0
        %v1318 = vsel %vm824, %v1315, -inf
        %1319 = vmax.xlane.f32.xlu0 %v1318
        %v1320 = vpop.xlane.xlu0 %1319
        %v1321 = vsub.f32 %v1315, %v1320
        %v1322 = vmul.f32 %v1321, 1.442695
        %v1323 = vpow.pop %v1322
        %v1324 = vsel %vm824, %v1323, 0.0
        %1325 = vadd.xlane.f32.xlu0 %v1324
        %v1326 = vpop.xlane.xlu0 %1325
        %v1327 = vrcp.pop %v1326
        %v1328 = vmul.f32 %v1323, %v1327
        %1329 = vrot.lane.b32.xlu0 %v744, 80
        %v1330 = vpop.permute.xlu0 %1329
        %v1333 = vsel %vm824, %v1328, 0
        %1335 = vmatprep.subr.mxu0 0.0
        %1336 = vmatpush1.msra.mxu0 %v1330
        %1337 = vmatprep.subr.mxu0 0.0
        %1338 = vmatpush1.msra.mxu0 0.0
        %1339 = vmatprep.subr.mxu0 0.0
        %1340 = vmatpush1.msra.mxu0 0.0
        %1341 = vmatprep.subr.mxu0 0.0
        %1342 = vmatpush1.msra.mxu0 0.0
        %1343 = vmatprep.subr.mxu0 0.0
        %1344 = vmatpush1.msra.mxu0 0.0
        %1345 = vmatprep.subr.mxu0 0.0
        %1346 = vmatpush1.msra.mxu0 0.0
        %1347 = vmatprep.subr.mxu0 0.0
        %1348 = vmatpush1.msra.mxu0 0.0
        %1349 = vmatprep.subr.mxu0 0.0
        %1350 = vmatpush1.msra.mxu0 0.0
        %1351 = vmatprep.subr.mxu0 0.0
        %1352 = vmatpush1.msra.mxu0 0.0
        %1353 = vmatprep.subr.mxu0 0.0
        %1354 = vmatpush1.msra.mxu0 0.0
        %1355 = vmatprep.subr.mxu0 0.0
        %1356 = vmatpush1.msra.mxu0 0.0
        %1357 = vmatprep.subr.mxu0 0.0
        %1358 = vmatpush1.msra.mxu0 0.0
        %1359 = vmatprep.subr.mxu0 0.0
        %1360 = vmatpush1.msra.mxu0 0.0
        %1361 = vmatprep.subr.mxu0 0.0
        %1362 = vmatpush1.msra.mxu0 0.0
        %1363 = vmatprep.subr.mxu0 0.0
        %1364 = vmatpush1.msra.mxu0 0.0
        %1365 = vmatprep.subr.mxu0 0.0
        %1366 = vmatpush1.msra.mxu0 0.0
        %1367 = vmatprep.subr.mxu0 0.0
        %1368 = vmatpush1.msra.mxu0 0.0
        %1369 = vmatprep.subr.mxu0 0.0
        %1370 = vmatpush1.msra.mxu0 0.0
        %1371 = vmatprep.subr.mxu0 0.0
        %1372 = vmatpush1.msra.mxu0 0.0
        %1373 = vmatprep.subr.mxu0 0.0
        %1374 = vmatpush1.msra.mxu0 0.0
        %1375 = vmatprep.subr.mxu0 0.0
        %1376 = vmatpush1.msra.mxu0 0.0
        %1377 = vmatprep.subr.mxu0 0.0
        %1378 = vmatpush1.msra.mxu0 0.0
        %1379 = vmatprep.subr.mxu0 0.0
        %1380 = vmatpush1.msra.mxu0 0.0
        %1381 = vmatprep.subr.mxu0 0.0
        %1382 = vmatpush1.msra.mxu0 0.0
        %1383 = vmatprep.subr.mxu0 0.0
        %1384 = vmatpush1.msra.mxu0 0.0
        %1385 = vmatprep.subr.mxu0 0.0
        %1386 = vmatpush1.msra.mxu0 0.0
        %1387 = vmatprep.subr.mxu0 0.0
        %1388 = vmatpush1.msra.mxu0 0.0
        %1389 = vmatprep.subr.mxu0 0.0
        %1390 = vmatpush1.msra.mxu0 0.0
        %1391 = vmatprep.subr.mxu0 0.0
        %1392 = vmatpush1.msra.mxu0 0.0
        %1393 = vmatprep.subr.mxu0 0.0
        %1394 = vmatpush1.msra.mxu0 0.0
        %1395 = vmatprep.subr.mxu0 0.0
        %1396 = vmatpush1.msra.mxu0 0.0
        %1397 = vmatprep.subr.mxu0 0.0
        %1398 = vmatpush1.msra.mxu0 0.0
        %1399 = vmatprep.mubr.f32.mxu0 0.0
        %1400 = vmatmul.mubr.f32.gmra.mrb[0].mxu0 %v1333
        %v1401 = vpop.f32.mrb[0].mxu0
        %v1402 = vadd.f32 0.0, %v1401
        %v1403 = vpop.f32.mrb[0].mxu0
        %1404 = vdwg.mxu0
        %1406 = vrot.lane.b32.xlu0 %v1072, 16
        %v1407 = vpop.permute.xlu0 %1406
        %1410 = vrot.lane.b32.xlu0 %v1237, 32
        %v1411 = vpop.permute.xlu0 %1410
        %1414 = vrot.lane.b32.xlu0 %v1402, 48
        %v1415 = vpop.permute.xlu0 %1414
        %v1417 = vsel %vm749, %v906, %v1407
        %vm1418 = vcmask 261120
        %v1419 = vsel %vm1418, %v1417, %v1411
        %vm1420 = vcmask 392192
        %v1421 = vsel %vm1420, %v1419, %v1415
        %v1422 = vld [vmem:[%s4] sm:$0xff]
        %v1423 = vld [vmem:[%s4 + $0x8] sm:$0xff]
        %v1424 = vld [vmem:[%s4 + $0x10] sm:$0xff]
        %v1425 = vld [vmem:[%s4 + $0x18] sm:$0xff]
        %v1426 = vld [vmem:[%s4 + $0x20] sm:$0xff]
        %v1427 = vld [vmem:[%s4 + $0x28] sm:$0xff]
        %v1428 = vld [vmem:[%s4 + $0x30] sm:$0xff]
        %v1429 = vld [vmem:[%s4 + $0x38] sm:$0xff]
        %v1430 = vld [vmem:[%s5] sm:$0x1]
        %v1432 = vlaneseq
        %v1433 = vshrl.u32 %v1432, 7
        %v1434 = vsub.s32 0, %v1433
        %v1435 = vrot.slane %v1430, %v1434
        %v1438 = vsel %vm671, %v1421, 0
        %1440 = vmatprep.subr.mxu0 0.0
        %1441 = vmatpush1.msra.mxu0 %v1422
        %1442 = vmatprep.subr.mxu0 0.0
        %1443 = vmatpush1.msra.mxu0 %v1423
        %1444 = vmatprep.subr.mxu0 0.0
        %1445 = vmatpush1.msra.mxu0 %v1424
        %1446 = vmatprep.subr.mxu0 0.0
        %1447 = vmatpush1.msra.mxu0 %v1425
        %1448 = vmatprep.subr.mxu0 0.0
        %1449 = vmatpush1.msra.mxu0 %v1426
        %1450 = vmatprep.subr.mxu0 0.0
        %1451 = vmatpush1.msra.mxu0 %v1427
        %1452 = vmatprep.subr.mxu0 0.0
        %1453 = vmatpush1.msra.mxu0 %v1428
        %1454 = vmatprep.subr.mxu0 0.0
        %1455 = vmatpush1.msra.mxu0 %v1429
        %1456 = vmatprep.subr.mxu0 0.0
        %1457 = vmatpush1.msra.mxu0 0.0
        %1458 = vmatprep.subr.mxu0 0.0
        %1459 = vmatpush1.msra.mxu0 0.0
        %1460 = vmatprep.subr.mxu0 0.0
        %1461 = vmatpush1.msra.mxu0 0.0
        %1462 = vmatprep.subr.mxu0 0.0
        %1463 = vmatpush1.msra.mxu0 0.0
        %1464 = vmatprep.subr.mxu0 0.0
        %1465 = vmatpush1.msra.mxu0 0.0
        %1466 = vmatprep.subr.mxu0 0.0
        %1467 = vmatpush1.msra.mxu0 0.0
        %1468 = vmatprep.subr.mxu0 0.0
        %1469 = vmatpush1.msra.mxu0 0.0
        %1470 = vmatprep.subr.mxu0 0.0
        %1471 = vmatpush1.msra.mxu0 0.0
        %1472 = vmatprep.subr.mxu0 0.0
        %1473 = vmatpush1.msra.mxu0 0.0
        %1474 = vmatprep.subr.mxu0 0.0
        %1475 = vmatpush1.msra.mxu0 0.0
        %1476 = vmatprep.subr.mxu0 0.0
        %1477 = vmatpush1.msra.mxu0 0.0
        %1478 = vmatprep.subr.mxu0 0.0
        %1479 = vmatpush1.msra.mxu0 0.0
        %1480 = vmatprep.subr.mxu0 0.0
        %1481 = vmatpush1.msra.mxu0 0.0
        %1482 = vmatprep.subr.mxu0 0.0
        %1483 = vmatpush1.msra.mxu0 0.0
        %1484 = vmatprep.subr.mxu0 0.0
        %1485 = vmatpush1.msra.mxu0 0.0
        %1486 = vmatprep.subr.mxu0 0.0
        %1487 = vmatpush1.msra.mxu0 0.0
        %1488 = vmatprep.subr.mxu0 0.0
        %1489 = vmatpush1.msra.mxu0 0.0
        %1490 = vmatprep.subr.mxu0 0.0
        %1491 = vmatpush1.msra.mxu0 0.0
        %1492 = vmatprep.subr.mxu0 0.0
        %1493 = vmatpush1.msra.mxu0 0.0
        %1494 = vmatprep.subr.mxu0 0.0
        %1495 = vmatpush1.msra.mxu0 0.0
        %1496 = vmatprep.subr.mxu0 0.0
        %1497 = vmatpush1.msra.mxu0 0.0
        %1498 = vmatprep.subr.mxu0 0.0
        %1499 = vmatpush1.msra.mxu0 0.0
        %1500 = vmatprep.subr.mxu0 0.0
        %1501 = vmatpush1.msra.mxu0 0.0
        %1502 = vmatprep.subr.mxu0 0.0
        %1503 = vmatpush1.msra.mxu0 0.0
        %1504 = vmatprep.mubr.f32.mxu0 0.0
        %1505 = vmatmul.mubr.f32.gmra.mrb[0].mxu0 %v1438
        %v1506 = vpop.f32.mrb[0].mxu0
        %v1507 = vadd.f32 %v1435, %v1506
        %v1508 = vpop.f32.mrb[0].mxu0
        %1509 = vdwg.mxu0
        %v1510 = vld [vmem:[%s6] sm:$0xf]
        %v1511 = vadd.f32 %v1507, %v642
        %v1512 = vsel %vm671, %v1511, 0.0
        %1513 = vadd.xlane.f32.xlu0 %v1512
        %v1514 = vpop.xlane.xlu0 %1513
        %v1515 = vrcp.pop 64.0
        %v1516 = vmul.f32 %v1514, %v1515
        %v1517 = vsub.f32 %v1511, %v1516
        %v1518 = vmul.f32 %v1517, %v1517
        %v1519 = vsel %vm671, %v1518, 0.0
        %1520 = vadd.xlane.f32.xlu0 %v1519
        %v1521 = vpop.xlane.xlu0 %1520
        %v1522 = vmul.f32 %v1521, %v1515
        %v1523 = vadd.f32 %v1522, 1e-05
        %v1524 = vrsqrt.pop %v1523
        %v1525 = vmul.f32 %v1517, %v1524
        %v1526 = vlaneseq
        %v1527 = vshrl.u32 %v1526, 7
        %v1528 = vsub.s32 0, %v1527
        %v1529 = vrot.slane %v1510, %v1528
        %v1530 = vmul.f32 %v1525, %v1529
        %v1531 = vlaneseq
        %v1532 = vshrl.u32 %v1531, 7
        %v1533 = vsub.s32 1, %v1532
        %v1534 = vrot.slane %v1510, %v1533
        %v1535 = vadd.f32 %v1530, %v1534
        %v1536 = vadd.f32 %v1535, %v1535
        %v1537 = vsel %vm671, %v1536, 0.0
        %1538 = vadd.xlane.f32.xlu0 %v1537
        %v1539 = vpop.xlane.xlu0 %1538
        %v1540 = vmul.f32 %v1539, %v1515
        %v1541 = vsub.f32 %v1536, %v1540
        %v1542 = vmul.f32 %v1541, %v1541
        %v1543 = vsel %vm671, %v1542, 0.0
        %1544 = vadd.xlane.f32.xlu0 %v1543
        %v1545 = vpop.xlane.xlu0 %1544
        %v1546 = vmul.f32 %v1545, %v1515
        %v1547 = vadd.f32 %v1546, 1e-05
        %v1548 = vrsqrt.pop %v1547
        %v1549 = vmul.f32 %v1541, %v1548
        %v1550 = vlaneseq
        %v1551 = vshrl.u32 %v1550, 7
        %v1552 = vsub.s32 2, %v1551
        %v1553 = vrot.slane %v1510, %v1552
        %v1554 = vmul.f32 %v1549, %v1553
        %v1555 = vlaneseq
        %v1556 = vshrl.u32 %v1555, 7
        %v1557 = vsub.s32 3, %v1556
        %v1558 = vrot.slane %v1510, %v1557
        %v1559 = vadd.f32 %v1554, %v1558
        %s1560 = scalar_lea.vmem %s2, 128
        %v1561 = vld [vmem:[%s1560] sm:$0xff]
        %v1562 = vld [vmem:[%s1560 + $0x8] sm:$0xff]
        %v1563 = vld [vmem:[%s1560 + $0x10] sm:$0xff]
        %v1564 = vld [vmem:[%s1560 + $0x18] sm:$0xff]
        %v1565 = vld [vmem:[%s1560 + $0x20] sm:$0xff]
        %v1566 = vld [vmem:[%s1560 + $0x28] sm:$0xff]
        %v1567 = vld [vmem:[%s1560 + $0x30] sm:$0xff]
        %v1568 = vld [vmem:[%s1560 + $0x38] sm:$0xff]
        %v1569 = vld [vmem:[%s1560 + $0x40] sm:$0xff]
        %v1570 = vld [vmem:[%s1560 + $0x48] sm:$0xff]
        %v1571 = vld [vmem:[%s1560 + $0x50] sm:$0xff]
        %v1572 = vld [vmem:[%s1560 + $0x58] sm:$0xff]
        %v1573 = vld [vmem:[%s1560 + $0x60] sm:$0xff]
        %v1574 = vld [vmem:[%s1560 + $0x68] sm:$0xff]
        %v1575 = vld [vmem:[%s1560 + $0x70] sm:$0xff]
        %v1576 = vld [vmem:[%s1560 + $0x78] sm:$0xff]
        %s1577 = scalar_lea.vmem %s3, 2
        %v1578 = vld [vmem:[%s1577] sm:$0x3]
        %v1580 = vlaneseq
        %v1581 = vshrl.u32 %v1580, 7
        %v1582 = vsub.s32 0, %v1581
        %v1583 = vrot.slane %v1578, %v1582
        %v1584 = vlaneseq
        %v1585 = vshrl.u32 %v1584, 7
        %v1586 = vsub.s32 1, %v1585
        %v1587 = vrot.slane %v1578, %v1586
        %v1591 = vsel %vm671, %v1559, 0
        %1593 = vmatprep.subr.mxu0 %v1562
        %1594 = vmatpush1.msra.mxu0 %v1561
        %1595 = vmatprep.subr.mxu0 %v1564
        %1596 = vmatpush1.msra.mxu0 %v1563
        %1597 = vmatprep.subr.mxu0 %v1566
        %1598 = vmatpush1.msra.mxu0 %v1565
        %1599 = vmatprep.subr.mxu0 %v1568
        %1600 = vmatpush1.msra.mxu0 %v1567
        %1601 = vmatprep.subr.mxu0 %v1570
        %1602 = vmatpush1.msra.mxu0 %v1569
        %1603 = vmatprep.subr.mxu0 %v1572
        %1604 = vmatpush1.msra.mxu0 %v1571
        %1605 = vmatprep.subr.mxu0 %v1574
        %1606 = vmatpush1.msra.mxu0 %v1573
        %1607 = vmatprep.subr.mxu0 %v1576
        %1608 = vmatpush1.msra.mxu0 %v1575
        %1609 = vmatprep.subr.mxu0 0.0
        %1610 = vmatpush1.msra.mxu0 0.0
        %1611 = vmatprep.subr.mxu0 0.0
        %1612 = vmatpush1.msra.mxu0 0.0
        %1613 = vmatprep.subr.mxu0 0.0
        %1614 = vmatpush1.msra.mxu0 0.0
        %1615 = vmatprep.subr.mxu0 0.0
        %1616 = vmatpush1.msra.mxu0 0.0
        %1617 = vmatprep.subr.mxu0 0.0
        %1618 = vmatpush1.msra.mxu0 0.0
        %1619 = vmatprep.subr.mxu0 0.0
        %1620 = vmatpush1.msra.mxu0 0.0
        %1621 = vmatprep.subr.mxu0 0.0
        %1622 = vmatpush1.msra.mxu0 0.0
        %1623 = vmatprep.subr.mxu0 0.0
        %1624 = vmatpush1.msra.mxu0 0.0
        %1625 = vmatprep.subr.mxu0 0.0
        %1626 = vmatpush1.msra.mxu0 0.0
        %1627 = vmatprep.subr.mxu0 0.0
        %1628 = vmatpush1.msra.mxu0 0.0
        %1629 = vmatprep.subr.mxu0 0.0
        %1630 = vmatpush1.msra.mxu0 0.0
        %1631 = vmatprep.subr.mxu0 0.0
        %1632 = vmatpush1.msra.mxu0 0.0
        %1633 = vmatprep.subr.mxu0 0.0
        %1634 = vmatpush1.msra.mxu0 0.0
        %1635 = vmatprep.subr.mxu0 0.0
        %1636 = vmatpush1.msra.mxu0 0.0
        %1637 = vmatprep.subr.mxu0 0.0
        %1638 = vmatpush1.msra.mxu0 0.0
        %1639 = vmatprep.subr.mxu0 0.0
        %1640 = vmatpush1.msra.mxu0 0.0
        %1641 = vmatprep.subr.mxu0 0.0
        %1642 = vmatpush1.msra.mxu0 0.0
        %1643 = vmatprep.subr.mxu0 0.0
        %1644 = vmatpush1.msra.mxu0 0.0
        %1645 = vmatprep.subr.mxu0 0.0
        %1646 = vmatpush1.msra.mxu0 0.0
        %1647 = vmatprep.subr.mxu0 0.0
        %1648 = vmatpush1.msra.mxu0 0.0
        %1649 = vmatprep.subr.mxu0 0.0
        %1650 = vmatpush1.msra.mxu0 0.0
        %1651 = vmatprep.subr.mxu0 0.0
        %1652 = vmatpush1.msra.mxu0 0.0
        %1653 = vmatprep.subr.mxu0 0.0
        %1654 = vmatpush1.msra.mxu0 0.0
        %1655 = vmatprep.subr.mxu0 0.0
        %1656 = vmatpush1.msra.mxu0 0.0
        %1657 = vmatprep.mubr.f32.mxu0 0.0
        %1658 = vmatmul.mubr.f32.gmra.mrb[0].mxu0 %v1591
        %v1659 = vpop.f32.mrb[0].mxu0
        %v1660 = vadd.f32 %v1583, %v1659
        %v1661 = vpop.f32.mrb[0].mxu0
        %v1662 = vadd.f32 %v1587, %v1661
        %1663 = vdwg.mxu0
        %1665 = vrot.lane.b32.xlu0 %v1660, 64
        %v1666 = vpop.permute.xlu0 %1665
        %v1667 = vsel %vm749, %v1660, 0
        %v1669 = vsel %vm749, %v1666, 0
        %1671 = vmatprep.subr.mxu0 0.0
        %1672 = vmatpush1.xpose.msra.mxu0 %v1669
        %1673 = vmatprep.subr.mxu0 0.0
        %1674 = vmatpush1.xpose.msra.mxu0 0.0
        %1675 = vmatprep.subr.mxu0 0.0
        %1676 = vmatpush1.xpose.msra.mxu0 0.0
        %1677 = vmatprep.subr.mxu0 0.0
        %1678 = vmatpush1.xpose.msra.mxu0 0.0
        %1679 = vmatprep.subr.mxu0 0.0
        %1680 = vmatpush1.xpose.msra.mxu0 0.0
        %1681 = vmatprep.subr.mxu0 0.0
        %1682 = vmatpush1.xpose.msra.mxu0 0.0
        %1683 = vmatprep.subr.mxu0 0.0
        %1684 = vmatpush1.xpose.msra.mxu0 0.0
        %1685 = vmatprep.subr.mxu0 0.0
        %1686 = vmatpush1.xpose.msra.mxu0 0.0
        %1687 = vmatprep.subr.mxu0 0.0
        %1688 = vmatpush1.xpose.msra.mxu0 0.0
        %1689 = vmatprep.subr.mxu0 0.0
        %1690 = vmatpush1.xpose.msra.mxu0 0.0
        %1691 = vmatprep.subr.mxu0 0.0
        %1692 = vmatpush1.xpose.msra.mxu0 0.0
        %1693 = vmatprep.subr.mxu0 0.0
        %1694 = vmatpush1.xpose.msra.mxu0 0.0
        %1695 = vmatprep.subr.mxu0 0.0
        %1696 = vmatpush1.xpose.msra.mxu0 0.0
        %1697 = vmatprep.subr.mxu0 0.0
        %1698 = vmatpush1.xpose.msra.mxu0 0.0
        %1699 = vmatprep.subr.mxu0 0.0
        %1700 = vmatpush1.xpose.msra.mxu0 0.0
        %1701 = vmatprep.subr.mxu0 0.0
        %1702 = vmatpush1.xpose.msra.mxu0 0.0
        %1703 = vmatprep.subr.mxu0 0.0
        %1704 = vmatpush1.xpose.msra.mxu0 0.0
        %1705 = vmatprep.subr.mxu0 0.0
        %1706 = vmatpush1.xpose.msra.mxu0 0.0
        %1707 = vmatprep.subr.mxu0 0.0
        %1708 = vmatpush1.xpose.msra.mxu0 0.0
        %1709 = vmatprep.subr.mxu0 0.0
        %1710 = vmatpush1.xpose.msra.mxu0 0.0
        %1711 = vmatprep.subr.mxu0 0.0
        %1712 = vmatpush1.xpose.msra.mxu0 0.0
        %1713 = vmatprep.subr.mxu0 0.0
        %1714 = vmatpush1.xpose.msra.mxu0 0.0
        %1715 = vmatprep.subr.mxu0 0.0
        %1716 = vmatpush1.xpose.msra.mxu0 0.0
        %1717 = vmatprep.subr.mxu0 0.0
        %1718 = vmatpush1.xpose.msra.mxu0 0.0
        %1719 = vmatprep.subr.mxu0 0.0
        %1720 = vmatpush1.xpose.msra.mxu0 0.0
        %1721 = vmatprep.subr.mxu0 0.0
        %1722 = vmatpush1.xpose.msra.mxu0 0.0
        %1723 = vmatprep.subr.mxu0 0.0
        %1724 = vmatpush1.xpose.msra.mxu0 0.0
        %1725 = vmatprep.subr.mxu0 0.0
        %1726 = vmatpush1.xpose.msra.mxu0 0.0
        %1727 = vmatprep.subr.mxu0 0.0
        %1728 = vmatpush1.xpose.msra.mxu0 0.0
        %1729 = vmatprep.subr.mxu0 0.0
        %1730 = vmatpush1.xpose.msra.mxu0 0.0
        %1731 = vmatprep.subr.mxu0 0.0
        %1732 = vmatpush1.xpose.msra.mxu0 0.0
        %1733 = vmatprep.subr.mxu0 0.0
        %1734 = vmatpush1.xpose.msra.mxu0 0.0
        %1735 = vmatprep.mubr.f32.mxu0 0.0
        %1736 = vmatmul.mubr.f32.gmra.mrb[0].mxu0 %v1667
        %v1737 = vpop.f32.mrb[0].mxu0
        %v1738 = vadd.f32 0.0, %v1737
        %v1739 = vpop.f32.mrb[0].mxu0
        %1740 = vdwg.mxu0
        %v1741 = vsel %vm824, %v1738, -inf
        %1742 = vmax.xlane.f32.xlu0 %v1741
        %v1743 = vpop.xlane.xlu0 %1742
        %v1744 = vsub.f32 %v1738, %v1743
        %v1745 = vmul.f32 %v1744, 1.442695
        %v1746 = vpow.pop %v1745
        %v1747 = vsel %vm824, %v1746, 0.0
        %1748 = vadd.xlane.f32.xlu0 %v1747
        %v1749 = vpop.xlane.xlu0 %1748
        %v1750 = vrcp.pop %v1749
        %v1751 = vmul.f32 %v1746, %v1750
        %v1753 = vsel %vm824, %v1751, 0
        %1755 = vmatprep.subr.mxu0 0.0
        %1756 = vmatpush1.msra.mxu0 %v1662
        %1757 = vmatprep.subr.mxu0 0.0
        %1758 = vmatpush1.msra.mxu0 0.0
        %1759 = vmatprep.subr.mxu0 0.0
        %1760 = vmatpush1.msra.mxu0 0.0
        %1761 = vmatprep.subr.mxu0 0.0
        %1762 = vmatpush1.msra.mxu0 0.0
        %1763 = vmatprep.subr.mxu0 0.0
        %1764 = vmatpush1.msra.mxu0 0.0
        %1765 = vmatprep.subr.mxu0 0.0
        %1766 = vmatpush1.msra.mxu0 0.0
        %1767 = vmatprep.subr.mxu0 0.0
        %1768 = vmatpush1.msra.mxu0 0.0
        %1769 = vmatprep.subr.mxu0 0.0
        %1770 = vmatpush1.msra.mxu0 0.0
        %1771 = vmatprep.subr.mxu0 0.0
        %1772 = vmatpush1.msra.mxu0 0.0
        %1773 = vmatprep.subr.mxu0 0.0
        %1774 = vmatpush1.msra.mxu0 0.0
        %1775 = vmatprep.subr.mxu0 0.0
        %1776 = vmatpush1.msra.mxu0 0.0
        %1777 = vmatprep.subr.mxu0 0.0
        %1778 = vmatpush1.msra.mxu0 0.0
        %1779 = vmatprep.subr.mxu0 0.0
        %1780 = vmatpush1.msra.mxu0 0.0
        %1781 = vmatprep.subr.mxu0 0.0
        %1782 = vmatpush1.msra.mxu0 0.0
        %1783 = vmatprep.subr.mxu0 0.0
        %1784 = vmatpush1.msra.mxu0 0.0
        %1785 = vmatprep.subr.mxu0 0.0
        %1786 = vmatpush1.msra.mxu0 0.0
        %1787 = vmatprep.subr.mxu0 0.0
        %1788 = vmatpush1.msra.mxu0 0.0
        %1789 = vmatprep.subr.mxu0 0.0
        %1790 = vmatpush1.msra.mxu0 0.0
        %1791 = vmatprep.subr.mxu0 0.0
        %1792 = vmatpush1.msra.mxu0 0.0
        %1793 = vmatprep.subr.mxu0 0.0
        %1794 = vmatpush1.msra.mxu0 0.0
        %1795 = vmatprep.subr.mxu0 0.0
        %1796 = vmatpush1.msra.mxu0 0.0
        %1797 = vmatprep.subr.mxu0 0.0
        %1798 = vmatpush1.msra.mxu0 0.0
        %1799 = vmatprep.subr.mxu0 0.0
        %1800 = vmatpush1.msra.mxu0 0.0
        %1801 = vmatprep.subr.mxu0 0.0
        %1802 = vmatpush1.msra.mxu0 0.0
        %1803 = vmatprep.subr.mxu0 0.0
        %1804 = vmatpush1.msra.mxu0 0.0
        %1805 = vmatprep.subr.mxu0 0.0
        %1806 = vmatpush1.msra.mxu0 0.0
        %1807 = vmatprep.subr.mxu0 0.0
        %1808 = vmatpush1.msra.mxu0 0.0
        %1809 = vmatprep.subr.mxu0 0.0
        %1810 = vmatpush1.msra.mxu0 0.0
        %1811 = vmatprep.subr.mxu0 0.0
        %1812 = vmatpush1.msra.mxu0 0.0
        %1813 = vmatprep.subr.mxu0 0.0
        %1814 = vmatpush1.msra.mxu0 0.0
        %1815 = vmatprep.subr.mxu0 0.0
        %1816 = vmatpush1.msra.mxu0 0.0
        %1817 = vmatprep.subr.mxu0 0.0
        %1818 = vmatpush1.msra.mxu0 0.0
        %1819 = vmatprep.mubr.f32.mxu0 0.0
        %1820 = vmatmul.mubr.f32.gmra.mrb[0].mxu0 %v1753
        %v1821 = vpop.f32.mrb[0].mxu0
        %v1822 = vadd.f32 0.0, %v1821
        %v1823 = vpop.f32.mrb[0].mxu0
        %1824 = vdwg.mxu0
        %1825 = vrot.lane.b32.xlu0 %v1660, 112
        %v1826 = vpop.permute.xlu0 %1825
        %1827 = vrot.lane.b32.xlu0 %v1660, 48
        %v1828 = vpop.permute.xlu0 %1827
        %v1829 = vsel %vm749, %v1826, 0
        %v1831 = vsel %vm749, %v1828, 0
        %1833 = vmatprep.subr.mxu0 0.0
        %1834 = vmatpush1.xpose.msra.mxu0 %v1831
        %1835 = vmatprep.subr.mxu0 0.0
        %1836 = vmatpush1.xpose.msra.mxu0 0.0
        %1837 = vmatprep.subr.mxu0 0.0
        %1838 = vmatpush1.xpose.msra.mxu0 0.0
        %1839 = vmatprep.subr.mxu0 0.0
        %1840 = vmatpush1.xpose.msra.mxu0 0.0
        %1841 = vmatprep.subr.mxu0 0.0
        %1842 = vmatpush1.xpose.msra.mxu0 0.0
        %1843 = vmatprep.subr.mxu0 0.0
        %1844 = vmatpush1.xpose.msra.mxu0 0.0
        %1845 = vmatprep.subr.mxu0 0.0
        %1846 = vmatpush1.xpose.msra.mxu0 0.0
        %1847 = vmatprep.subr.mxu0 0.0
        %1848 = vmatpush1.xpose.msra.mxu0 0.0
        %1849 = vmatprep.subr.mxu0 0.0
        %1850 = vmatpush1.xpose.msra.mxu0 0.0
        %1851 = vmatprep.subr.mxu0 0.0
        %1852 = vmatpush1.xpose.msra.mxu0 0.0
        %1853 = vmatprep.subr.mxu0 0.0
        %1854 = vmatpush1.xpose.msra.mxu0 0.0
        %1855 = vmatprep.subr.mxu0 0.0
        %1856 = vmatpush1.xpose.msra.mxu0 0.0
        %1857 = vmatprep.subr.mxu0 0.0
        %1858 = vmatpush1.xpose.msra.mxu0 0.0
        %1859 = vmatprep.subr.mxu0 0.0
        %1860 = vmatpush1.xpose.msra.mxu0 0.0
        %1861 = vmatprep.subr.mxu0 0.0
        %1862 = vmatpush1.xpose.msra.mxu0 0.0
        %1863 = vmatprep.subr.mxu0 0.0
        %1864 = vmatpush1.xpose.msra.mxu0 0.0
        %1865 = vmatprep.subr.mxu0 0.0
        %1866 = vmatpush1.xpose.msra.mxu0 0.0
        %1867 = vmatprep.subr.mxu0 0.0
        %1868 = vmatpush1.xpose.msra.mxu0 0.0
        %1869 = vmatprep.subr.mxu0 0.0
        %1870 = vmatpush1.xpose.msra.mxu0 0.0
        %1871 = vmatprep.subr.mxu0 0.0
        %1872 = vmatpush1.xpose.msra.mxu0 0.0
        %1873 = vmatprep.subr.mxu0 0.0
        %1874 = vmatpush1.xpose.msra.mxu0 0.0
        %1875 = vmatprep.subr.mxu0 0.0
        %1876 = vmatpush1.xpose.msra.mxu0 0.0
        %1877 = vmatprep.subr.mxu0 0.0
        %1878 = vmatpush1.xpose.msra.mxu0 0.0
        %1879 = vmatprep.subr.mxu0 0.0
        %1880 = vmatpush1.xpose.msra.mxu0 0.0
        %1881 = vmatprep.subr.mxu0 0.0
        %1882 = vmatpush1.xpose.msra.mxu0 0.0
        %1883 = vmatprep.subr.mxu0 0.0
        %1884 = vmatpush1.xpose.msra.mxu0 0.0
        %1885 = vmatprep.subr.mxu0 0.0
        %1886 = vmatpush1.xpose.msra.mxu0 0.0
        %1887 = vmatprep.subr.mxu0 0.0
        %1888 = vmatpush1.xpose.msra.mxu0 0.0
        %1889 = vmatprep.subr.mxu0 0.0
        %1890 = vmatpush1.xpose.msra.mxu0 0.0
        %1891 = vmatprep.subr.mxu0 0.0
        %1892 = vmatpush1.xpose.msra.mxu0 0.0
        %1893 = vmatprep.subr.mxu0 0.0
        %1894 = vmatpush1.xpose.msra.mxu0 0.0
        %1895 = vmatprep.subr.mxu0 0.0
        %1896 = vmatpush1.xpose.msra.mxu0 0.0
        %1897 = vmatprep.mubr.f32.mxu0 0.0
        %1898 = vmatmul.mubr.f32.gmra.mrb[0].mxu0 %v1829
        %v1899 = vpop.f32.mrb[0].mxu0
        %v1900 = vadd.f32 0.0, %v1899
        %v1901 = vpop.f32.mrb[0].mxu0
        %1902 = vdwg.mxu0
        %v1903 = vsel %vm824, %v1900, -inf
        %1904 = vmax.xlane.f32.xlu0 %v1903
        %v1905 = vpop.xlane.xlu0 %1904
        %v1906 = vsub.f32 %v1900, %v1905
        %v1907 = vmul.f32 %v1906, 1.442695
        %v1908 = vpow.pop %v1907
        %v1909 = vsel %vm824, %v1908, 0.0
        %1910 = vadd.xlane.f32.xlu0 %v1909
        %v1911 = vpop.xlane.xlu0 %1910
        %v1912 = vrcp.pop %v1911
        %v1913 = vmul.f32 %v1908, %v1912
        %1915 = vrot.lane.b32.xlu0 %v1662, 112
        %v1916 = vpop.permute.xlu0 %1915
        %v1919 = vsel %vm824, %v1913, 0
        %1921 = vmatprep.subr.mxu0 0.0
        %1922 = vmatpush1.msra.mxu0 %v1916
        %1923 = vmatprep.subr.mxu0 0.0
        %1924 = vmatpush1.msra.mxu0 0.0
        %1925 = vmatprep.subr.mxu0 0.0
        %1926 = vmatpush1.msra.mxu0 0.0
        %1927 = vmatprep.subr.mxu0 0.0
        %1928 = vmatpush1.msra.mxu0 0.0
        %1929 = vmatprep.subr.mxu0 0.0
        %1930 = vmatpush1.msra.mxu0 0.0
        %1931 = vmatprep.subr.mxu0 0.0
        %1932 = vmatpush1.msra.mxu0 0.0
        %1933 = vmatprep.subr.mxu0 0.0
        %1934 = vmatpush1.msra.mxu0 0.0
        %1935 = vmatprep.subr.mxu0 0.0
        %1936 = vmatpush1.msra.mxu0 0.0
        %1937 = vmatprep.subr.mxu0 0.0
        %1938 = vmatpush1.msra.mxu0 0.0
        %1939 = vmatprep.subr.mxu0 0.0
        %1940 = vmatpush1.msra.mxu0 0.0
        %1941 = vmatprep.subr.mxu0 0.0
        %1942 = vmatpush1.msra.mxu0 0.0
        %1943 = vmatprep.subr.mxu0 0.0
        %1944 = vmatpush1.msra.mxu0 0.0
        %1945 = vmatprep.subr.mxu0 0.0
        %1946 = vmatpush1.msra.mxu0 0.0
        %1947 = vmatprep.subr.mxu0 0.0
        %1948 = vmatpush1.msra.mxu0 0.0
        %1949 = vmatprep.subr.mxu0 0.0
        %1950 = vmatpush1.msra.mxu0 0.0
        %1951 = vmatprep.subr.mxu0 0.0
        %1952 = vmatpush1.msra.mxu0 0.0
        %1953 = vmatprep.subr.mxu0 0.0
        %1954 = vmatpush1.msra.mxu0 0.0
        %1955 = vmatprep.subr.mxu0 0.0
        %1956 = vmatpush1.msra.mxu0 0.0
        %1957 = vmatprep.subr.mxu0 0.0
        %1958 = vmatpush1.msra.mxu0 0.0
        %1959 = vmatprep.subr.mxu0 0.0
        %1960 = vmatpush1.msra.mxu0 0.0
        %1961 = vmatprep.subr.mxu0 0.0
        %1962 = vmatpush1.msra.mxu0 0.0
        %1963 = vmatprep.subr.mxu0 0.0
        %1964 = vmatpush1.msra.mxu0 0.0
        %1965 = vmatprep.subr.mxu0 0.0
        %1966 = vmatpush1.msra.mxu0 0.0
        %1967 = vmatprep.subr.mxu0 0.0
        %1968 = vmatpush1.msra.mxu0 0.0
        %1969 = vmatprep.subr.mxu0 0.0
        %1970 = vmatpush1.msra.mxu0 0.0
        %1971 = vmatprep.subr.mxu0 0.0
        %1972 = vmatpush1.msra.mxu0 0.0
        %1973 = vmatprep.subr.mxu0 0.0
        %1974 = vmatpush1.msra.mxu0 0.0
        %1975 = vmatprep.subr.mxu0 0.0
        %1976 = vmatpush1.msra.mxu0 0.0
        %1977 = vmatprep.subr.mxu0 0.0
        %1978 = vmatpush1.msra.mxu0 0.0
        %1979 = vmatprep.subr.mxu0 0.0
        %1980 = vmatpush1.msra.mxu0 0.0
        %1981 = vmatprep.subr.mxu0 0.0
        %1982 = vmatpush1.msra.mxu0 0.0
        %1983 = vmatprep.subr.mxu0 0.0
        %1984 = vmatpush1.msra.mxu0 0.0
        %1985 = vmatprep.mubr.f32.mxu0 0.0
        %1986 = vmatmul.mubr.f32.gmra.mrb[0].mxu0 %v1919
        %v1987 = vpop.f32.mrb[0].mxu0
        %v1988 = vadd.f32 0.0, %v1987
        %v1989 = vpop.f32.mrb[0].mxu0
        %1990 = vdwg.mxu0
        %1991 = vrot.lane.b32.xlu0 %v1660, 96
        %v1992 = vpop.permute.xlu0 %1991
        %1993 = vrot.lane.b32.xlu0 %v1660, 32
        %v1994 = vpop.permute.xlu0 %1993
        %v1995 = vsel %vm749, %v1992, 0
        %v1997 = vsel %vm749, %v1994, 0
        %1999 = vmatprep.subr.mxu0 0.0
        %2000 = vmatpush1.xpose.msra.mxu0 %v1997
        %2001 = vmatprep.subr.mxu0 0.0
        %2002 = vmatpush1.xpose.msra.mxu0 0.0
        %2003 = vmatprep.subr.mxu0 0.0
        %2004 = vmatpush1.xpose.msra.mxu0 0.0
        %2005 = vmatprep.subr.mxu0 0.0
        %2006 = vmatpush1.xpose.msra.mxu0 0.0
        %2007 = vmatprep.subr.mxu0 0.0
        %2008 = vmatpush1.xpose.msra.mxu0 0.0
        %2009 = vmatprep.subr.mxu0 0.0
        %2010 = vmatpush1.xpose.msra.mxu0 0.0
        %2011 = vmatprep.subr.mxu0 0.0
        %2012 = vmatpush1.xpose.msra.mxu0 0.0
        %2013 = vmatprep.subr.mxu0 0.0
        %2014 = vmatpush1.xpose.msra.mxu0 0.0
        %2015 = vmatprep.subr.mxu0 0.0
        %2016 = vmatpush1.xpose.msra.mxu0 0.0
        %2017 = vmatprep.subr.mxu0 0.0
        %2018 = vmatpush1.xpose.msra.mxu0 0.0
        %2019 = vmatprep.subr.mxu0 0.0
        %2020 = vmatpush1.xpose.msra.mxu0 0.0
        %2021 = vmatprep.subr.mxu0 0.0
        %2022 = vmatpush1.xpose.msra.mxu0 0.0
        %2023 = vmatprep.subr.mxu0 0.0
        %2024 = vmatpush1.xpose.msra.mxu0 0.0
        %2025 = vmatprep.subr.mxu0 0.0
        %2026 = vmatpush1.xpose.msra.mxu0 0.0
        %2027 = vmatprep.subr.mxu0 0.0
        %2028 = vmatpush1.xpose.msra.mxu0 0.0
        %2029 = vmatprep.subr.mxu0 0.0
        %2030 = vmatpush1.xpose.msra.mxu0 0.0
        %2031 = vmatprep.subr.mxu0 0.0
        %2032 = vmatpush1.xpose.msra.mxu0 0.0
        %2033 = vmatprep.subr.mxu0 0.0
        %2034 = vmatpush1.xpose.msra.mxu0 0.0
        %2035 = vmatprep.subr.mxu0 0.0
        %2036 = vmatpush1.xpose.msra.mxu0 0.0
        %2037 = vmatprep.subr.mxu0 0.0
        %2038 = vmatpush1.xpose.msra.mxu0 0.0
        %2039 = vmatprep.subr.mxu0 0.0
        %2040 = vmatpush1.xpose.msra.mxu0 0.0
        %2041 = vmatprep.subr.mxu0 0.0
        %2042 = vmatpush1.xpose.msra.mxu0 0.0
        %2043 = vmatprep.subr.mxu0 0.0
        %2044 = vmatpush1.xpose.msra.mxu0 0.0
        %2045 = vmatprep.subr.mxu0 0.0
        %2046 = vmatpush1.xpose.msra.mxu0 0.0
        %2047 = vmatprep.subr.mxu0 0.0
        %2048 = vmatpush1.xpose.msra.mxu0 0.0
        %2049 = vmatprep.subr.mxu0 0.0
        %2050 = vmatpush1.xpose.msra.mxu0 0.0
        %2051 = vmatprep.subr.mxu0 0.0
        %2052 = vmatpush1.xpose.msra.mxu0 0.0
        %2053 = vmatprep.subr.mxu0 0.0
        %2054 = vmatpush1.xpose.msra.mxu0 0.0
        %2055 = vmatprep.subr.mxu0 0.0
        %2056 = vmatpush1.xpose.msra.mxu0 0.0
        %2057 = vmatprep.subr.mxu0 0.0
        %2058 = vmatpush1.xpose.msra.mxu0 0.0
        %2059 = vmatprep.subr.mxu0 0.0
        %2060 = vmatpush1.xpose.msra.mxu0 0.0
        %2061 = vmatprep.subr.mxu0 0.0
        %2062 = vmatpush1.xpose.msra.mxu0 0.0
        %2063 = vmatprep.mubr.f32.mxu0 0.0
        %2064 = vmatmul.mubr.f32.gmra.mrb[0].mxu0 %v1995
        %v2065 = vpop.f32.mrb[0].mxu0
        %v2066 = vadd.f32 0.0, %v2065
        %v2067 = vpop.f32.mrb[0].mxu0
        %2068 = vdwg.mxu0
        %v2069 = vsel %vm824, %v2066, -inf
        %2070 = vmax.xlane.f32.xlu0 %v2069
        %v2071 = vpop.xlane.xlu0 %2070
        %v2072 = vsub.f32 %v2066, %v2071
        %v2073 = vmul.f32 %v2072, 1.442695
        %v2074 = vpow.pop %v2073
        %v2075 = vsel %vm824, %v2074, 0.0
        %2076 = vadd.xlane.f32.xlu0 %v2075
        %v2077 = vpop.xlane.xlu0 %2076
        %v2078 = vrcp.pop %v2077
        %v2079 = vmul.f32 %v2074, %v2078
        %2080 = vrot.lane.b32.xlu0 %v1662, 96
        %v2081 = vpop.permute.xlu0 %2080
        %v2084 = vsel %vm824, %v2079, 0
        %2086 = vmatprep.subr.mxu0 0.0
        %2087 = vmatpush1.msra.mxu0 %v2081
        %2088 = vmatprep.subr.mxu0 0.0
        %2089 = vmatpush1.msra.mxu0 0.0
        %2090 = vmatprep.subr.mxu0 0.0
        %2091 = vmatpush1.msra.mxu0 0.0
        %2092 = vmatprep.subr.mxu0 0.0
        %2093 = vmatpush1.msra.mxu0 0.0
        %2094 = vmatprep.subr.mxu0 0.0
        %2095 = vmatpush1.msra.mxu0 0.0
        %2096 = vmatprep.subr.mxu0 0.0
        %2097 = vmatpush1.msra.mxu0 0.0
        %2098 = vmatprep.subr.mxu0 0.0
        %2099 = vmatpush1.msra.mxu0 0.0
        %2100 = vmatprep.subr.mxu0 0.0
        %2101 = vmatpush1.msra.mxu0 0.0
        %2102 = vmatprep.subr.mxu0 0.0
        %2103 = vmatpush1.msra.mxu0 0.0
        %2104 = vmatprep.subr.mxu0 0.0
        %2105 = vmatpush1.msra.mxu0 0.0
        %2106 = vmatprep.subr.mxu0 0.0
        %2107 = vmatpush1.msra.mxu0 0.0
        %2108 = vmatprep.subr.mxu0 0.0
        %2109 = vmatpush1.msra.mxu0 0.0
        %2110 = vmatprep.subr.mxu0 0.0
        %2111 = vmatpush1.msra.mxu0 0.0
        %2112 = vmatprep.subr.mxu0 0.0
        %2113 = vmatpush1.msra.mxu0 0.0
        %2114 = vmatprep.subr.mxu0 0.0
        %2115 = vmatpush1.msra.mxu0 0.0
        %2116 = vmatprep.subr.mxu0 0.0
        %2117 = vmatpush1.msra.mxu0 0.0
        %2118 = vmatprep.subr.mxu0 0.0
        %2119 = vmatpush1.msra.mxu0 0.0
        %2120 = vmatprep.subr.mxu0 0.0
        %2121 = vmatpush1.msra.mxu0 0.0
        %2122 = vmatprep.subr.mxu0 0.0
        %2123 = vmatpush1.msra.mxu0 0.0
        %2124 = vmatprep.subr.mxu0 0.0
        %2125 = vmatpush1.msra.mxu0 0.0
        %2126 = vmatprep.subr.mxu0 0.0
        %2127 = vmatpush1.msra.mxu0 0.0
        %2128 = vmatprep.subr.mxu0 0.0
        %2129 = vmatpush1.msra.mxu0 0.0
        %2130 = vmatprep.subr.mxu0 0.0
        %2131 = vmatpush1.msra.mxu0 0.0
        %2132 = vmatprep.subr.mxu0 0.0
        %2133 = vmatpush1.msra.mxu0 0.0
        %2134 = vmatprep.subr.mxu0 0.0
        %2135 = vmatpush1.msra.mxu0 0.0
        %2136 = vmatprep.subr.mxu0 0.0
        %2137 = vmatpush1.msra.mxu0 0.0
        %2138 = vmatprep.subr.mxu0 0.0
        %2139 = vmatpush1.msra.mxu0 0.0
        %2140 = vmatprep.subr.mxu0 0.0
        %2141 = vmatpush1.msra.mxu0 0.0
        %2142 = vmatprep.subr.mxu0 0.0
        %2143 = vmatpush1.msra.mxu0 0.0
        %2144 = vmatprep.subr.mxu0 0.0
        %2145 = vmatpush1.msra.mxu0 0.0
        %2146 = vmatprep.subr.mxu0 0.0
        %2147 = vmatpush1.msra.mxu0 0.0
        %2148 = vmatprep.subr.mxu0 0.0
        %2149 = vmatpush1.msra.mxu0 0.0
        %2150 = vmatprep.mubr.f32.mxu0 0.0
        %2151 = vmatmul.mubr.f32.gmra.mrb[0].mxu0 %v2084
        %v2152 = vpop.f32.mrb[0].mxu0
        %v2153 = vadd.f32 0.0, %v2152
        %v2154 = vpop.f32.mrb[0].mxu0
        %2155 = vdwg.mxu0
        %2156 = vrot.lane.b32.xlu0 %v1660, 80
        %v2157 = vpop.permute.xlu0 %2156
        %2158 = vrot.lane.b32.xlu0 %v1660, 16
        %v2159 = vpop.permute.xlu0 %2158
        %v2160 = vsel %vm749, %v2157, 0
        %v2162 = vsel %vm749, %v2159, 0
        %2164 = vmatprep.subr.mxu0 0.0
        %2165 = vmatpush1.xpose.msra.mxu0 %v2162
        %2166 = vmatprep.subr.mxu0 0.0
        %2167 = vmatpush1.xpose.msra.mxu0 0.0
        %2168 = vmatprep.subr.mxu0 0.0
        %2169 = vmatpush1.xpose.msra.mxu0 0.0
        %2170 = vmatprep.subr.mxu0 0.0
        %2171 = vmatpush1.xpose.msra.mxu0 0.0
        %2172 = vmatprep.subr.mxu0 0.0
        %2173 = vmatpush1.xpose.msra.mxu0 0.0
        %2174 = vmatprep.subr.mxu0 0.0
        %2175 = vmatpush1.xpose.msra.mxu0 0.0
        %2176 = vmatprep.subr.mxu0 0.0
        %2177 = vmatpush1.xpose.msra.mxu0 0.0
        %2178 = vmatprep.subr.mxu0 0.0
        %2179 = vmatpush1.xpose.msra.mxu0 0.0
        %2180 = vmatprep.subr.mxu0 0.0
        %2181 = vmatpush1.xpose.msra.mxu0 0.0
        %2182 = vmatprep.subr.mxu0 0.0
        %2183 = vmatpush1.xpose.msra.mxu0 0.0
        %2184 = vmatprep.subr.mxu0 0.0
        %2185 = vmatpush1.xpose.msra.mxu0 0.0
        %2186 = vmatprep.subr.mxu0 0.0
        %2187 = vmatpush1.xpose.msra.mxu0 0.0
        %2188 = vmatprep.subr.mxu0 0.0
        %2189 = vmatpush1.xpose.msra.mxu0 0.0
        %2190 = vmatprep.subr.mxu0 0.0
        %2191 = vmatpush1.xpose.msra.mxu0 0.0
        %2192 = vmatprep.subr.mxu0 0.0
        %2193 = vmatpush1.xpose.msra.mxu0 0.0
        %2194 = vmatprep.subr.mxu0 0.0
        %2195 = vmatpush1.xpose.msra.mxu0 0.0
        %2196 = vmatprep.subr.mxu0 0.0
        %2197 = vmatpush1.xpose.msra.mxu0 0.0
        %2198 = vmatprep.subr.mxu0 0.0
        %2199 = vmatpush1.xpose.msra.mxu0 0.0
        %2200 = vmatprep.subr.mxu0 0.0
        %2201 = vmatpush1.xpose.msra.mxu0 0.0
        %2202 = vmatprep.subr.mxu0 0.0
        %2203 = vmatpush1.xpose.msra.mxu0 0.0
        %2204 = vmatprep.subr.mxu0 0.0
        %2205 = vmatpush1.xpose.msra.mxu0 0.0
        %2206 = vmatprep.subr.mxu0 0.0
        %2207 = vmatpush1.xpose.msra.mxu0 0.0
        %2208 = vmatprep.subr.mxu0 0.0
        %2209 = vmatpush1.xpose.msra.mxu0 0.0
        %2210 = vmatprep.subr.mxu0 0.0
        %2211 = vmatpush1.xpose.msra.mxu0 0.0
        %2212 = vmatprep.subr.mxu0 0.0
        %2213 = vmatpush1.xpose.msra.mxu0 0.0
        %2214 = vmatprep.subr.mxu0 0.0
        %2215 = vmatpush1.xpose.msra.mxu0 0.0
        %2216 = vmatprep.subr.mxu0 0.0
        %2217 = vmatpush1.xpose.msra.mxu0 0.0
        %2218 = vmatprep.subr.mxu0 0.0
        %2219 = vmatpush1.xpose.msra.mxu0 0.0
        %2220 = vmatprep.subr.mxu0 0.0
        %2221 = vmatpush1.xpose.msra.mxu0 0.0
        %2222 = vmatprep.subr.mxu0 0.0
        %2223 = vmatpush1.xpose.msra.mxu0 0.0
        %2224 = vmatprep.subr.mxu0 0.0
        %2225 = vmatpush1.xpose.msra.mxu0 0.0
        %2226 = vmatprep.subr.mxu0 0.0
        %2227 = vmatpush1.xpose.msra.mxu0 0.0
        %2228 = vmatprep.mubr.f32.mxu0 0.0
        %2229 = vmatmul.mubr.f32.gmra.mrb[0].mxu0 %v2160
        %v2230 = vpop.f32.mrb[0].mxu0
        %v2231 = vadd.f32 0.0, %v2230
        %v2232 = vpop.f32.mrb[0].mxu0
        %2233 = vdwg.mxu0
        %v2234 = vsel %vm824, %v2231, -inf
        %2235 = vmax.xlane.f32.xlu0 %v2234
        %v2236 = vpop.xlane.xlu0 %2235
        %v2237 = vsub.f32 %v2231, %v2236
        %v2238 = vmul.f32 %v2237, 1.442695
        %v2239 = vpow.pop %v2238
        %v2240 = vsel %vm824, %v2239, 0.0
        %2241 = vadd.xlane.f32.xlu0 %v2240
        %v2242 = vpop.xlane.xlu0 %2241
        %v2243 = vrcp.pop %v2242
        %v2244 = vmul.f32 %v2239, %v2243
        %2245 = vrot.lane.b32.xlu0 %v1662, 80
        %v2246 = vpop.permute.xlu0 %2245
        %v2249 = vsel %vm824, %v2244, 0
        %2251 = vmatprep.subr.mxu0 0.0
        %2252 = vmatpush1.msra.mxu0 %v2246
        %2253 = vmatprep.subr.mxu0 0.0
        %2254 = vmatpush1.msra.mxu0 0.0
        %2255 = vmatprep.subr.mxu0 0.0
        %2256 = vmatpush1.msra.mxu0 0.0
        %2257 = vmatprep.subr.mxu0 0.0
        %2258 = vmatpush1.msra.mxu0 0.0
        %2259 = vmatprep.subr.mxu0 0.0
        %2260 = vmatpush1.msra.mxu0 0.0
        %2261 = vmatprep.subr.mxu0 0.0
        %2262 = vmatpush1.msra.mxu0 0.0
        %2263 = vmatprep.subr.mxu0 0.0
        %2264 = vmatpush1.msra.mxu0 0.0
        %2265 = vmatprep.subr.mxu0 0.0
        %2266 = vmatpush1.msra.mxu0 0.0
        %2267 = vmatprep.subr.mxu0 0.0
        %2268 = vmatpush1.msra.mxu0 0.0
        %2269 = vmatprep.subr.mxu0 0.0
        %2270 = vmatpush1.msra.mxu0 0.0
        %2271 = vmatprep.subr.mxu0 0.0
        %2272 = vmatpush1.msra.mxu0 0.0
        %2273 = vmatprep.subr.mxu0 0.0
        %2274 = vmatpush1.msra.mxu0 0.0
        %2275 = vmatprep.subr.mxu0 0.0
        %2276 = vmatpush1.msra.mxu0 0.0
        %2277 = vmatprep.subr.mxu0 0.0
        %2278 = vmatpush1.msra.mxu0 0.0
        %2279 = vmatprep.subr.mxu0 0.0
        %2280 = vmatpush1.msra.mxu0 0.0
        %2281 = vmatprep.subr.mxu0 0.0
        %2282 = vmatpush1.msra.mxu0 0.0
        %2283 = vmatprep.subr.mxu0 0.0
        %2284 = vmatpush1.msra.mxu0 0.0
        %2285 = vmatprep.subr.mxu0 0.0
        %2286 = vmatpush1.msra.mxu0 0.0
        %2287 = vmatprep.subr.mxu0 0.0
        %2288 = vmatpush1.msra.mxu0 0.0
        %2289 = vmatprep.subr.mxu0 0.0
        %2290 = vmatpush1.msra.mxu0 0.0
        %2291 = vmatprep.subr.mxu0 0.0
        %2292 = vmatpush1.msra.mxu0 0.0
        %2293 = vmatprep.subr.mxu0 0.0
        %2294 = vmatpush1.msra.mxu0 0.0
        %2295 = vmatprep.subr.mxu0 0.0
        %2296 = vmatpush1.msra.mxu0 0.0
        %2297 = vmatprep.subr.mxu0 0.0
        %2298 = vmatpush1.msra.mxu0 0.0
        %2299 = vmatprep.subr.mxu0 0.0
        %2300 = vmatpush1.msra.mxu0 0.0
        %2301 = vmatprep.subr.mxu0 0.0
        %2302 = vmatpush1.msra.mxu0 0.0
        %2303 = vmatprep.subr.mxu0 0.0
        %2304 = vmatpush1.msra.mxu0 0.0
        %2305 = vmatprep.subr.mxu0 0.0
        %2306 = vmatpush1.msra.mxu0 0.0
        %2307 = vmatprep.subr.mxu0 0.0
        %2308 = vmatpush1.msra.mxu0 0.0
        %2309 = vmatprep.subr.mxu0 0.0
        %2310 = vmatpush1.msra.mxu0 0.0
        %2311 = vmatprep.subr.mxu0 0.0
        %2312 = vmatpush1.msra.mxu0 0.0
        %2313 = vmatprep.subr.mxu0 0.0
        %2314 = vmatpush1.msra.mxu0 0.0
        %2315 = vmatprep.mubr.f32.mxu0 0.0
        %2316 = vmatmul.mubr.f32.gmra.mrb[0].mxu0 %v2249
        %v2317 = vpop.f32.mrb[0].mxu0
        %v2318 = vadd.f32 0.0, %v2317
        %v2319 = vpop.f32.mrb[0].mxu0
        %2320 = vdwg.mxu0
        %2322 = vrot.lane.b32.xlu0 %v1988, 16
        %v2323 = vpop.permute.xlu0 %2322
        %2326 = vrot.lane.b32.xlu0 %v2153, 32
        %v2327 = vpop.permute.xlu0 %2326
        %2330 = vrot.lane.b32.xlu0 %v2318, 48
        %v2331 = vpop.permute.xlu0 %2330
        %v2333 = vsel %vm749, %v1822, %v2323
        %v2334 = vsel %vm1418, %v2333, %v2327
        %v2335 = vsel %vm1420, %v2334, %v2331
        %s2336 = scalar_lea.vmem %s4, 64
        %v2337 = vld [vmem:[%s2336] sm:$0xff]
        %v2338 = vld [vmem:[%s2336 + $0x8] sm:$0xff]
        %v2339 = vld [vmem:[%s2336 + $0x10] sm:$0xff]
        %v2340 = vld [vmem:[%s2336 + $0x18] sm:$0xff]
        %v2341 = vld [vmem:[%s2336 + $0x20] sm:$0xff]
        %v2342 = vld [vmem:[%s2336 + $0x28] sm:$0xff]
        %v2343 = vld [vmem:[%s2336 + $0x30] sm:$0xff]
        %v2344 = vld [vmem:[%s2336 + $0x38] sm:$0xff]
        %s2345 = scalar_lea.vmem %s5, 1
        %v2346 = vld [vmem:[%s2345] sm:$0x1]
        %v2348 = vlaneseq
        %v2349 = vshrl.u32 %v2348, 7
        %v2350 = vsub.s32 0, %v2349
        %v2351 = vrot.slane %v2346, %v2350
        %v2354 = vsel %vm671, %v2335, 0
        %2356 = vmatprep.subr.mxu0 0.0
        %2357 = vmatpush1.msra.mxu0 %v2337
        %2358 = vmatprep.subr.mxu0 0.0
        %2359 = vmatpush1.msra.mxu0 %v2338
        %2360 = vmatprep.subr.mxu0 0.0
        %2361 = vmatpush1.msra.mxu0 %v2339
        %2362 = vmatprep.subr.mxu0 0.0
        %2363 = vmatpush1.msra.mxu0 %v2340
        %2364 = vmatprep.subr.mxu0 0.0
        %2365 = vmatpush1.msra.mxu0 %v2341
        %2366 = vmatprep.subr.mxu0 0.0
        %2367 = vmatpush1.msra.mxu0 %v2342
        %2368 = vmatprep.subr.mxu0 0.0
        %2369 = vmatpush1.msra.mxu0 %v2343
        %2370 = vmatprep.subr.mxu0 0.0
        %2371 = vmatpush1.msra.mxu0 %v2344
        %2372 = vmatprep.subr.mxu0 0.0
        %2373 = vmatpush1.msra.mxu0 0.0
        %2374 = vmatprep.subr.mxu0 0.0
        %2375 = vmatpush1.msra.mxu0 0.0
        %2376 = vmatprep.subr.mxu0 0.0
        %2377 = vmatpush1.msra.mxu0 0.0
        %2378 = vmatprep.subr.mxu0 0.0
        %2379 = vmatpush1.msra.mxu0 0.0
        %2380 = vmatprep.subr.mxu0 0.0
        %2381 = vmatpush1.msra.mxu0 0.0
        %2382 = vmatprep.subr.mxu0 0.0
        %2383 = vmatpush1.msra.mxu0 0.0
        %2384 = vmatprep.subr.mxu0 0.0
        %2385 = vmatpush1.msra.mxu0 0.0
        %2386 = vmatprep.subr.mxu0 0.0
        %2387 = vmatpush1.msra.mxu0 0.0
        %2388 = vmatprep.subr.mxu0 0.0
        %2389 = vmatpush1.msra.mxu0 0.0
        %2390 = vmatprep.subr.mxu0 0.0
        %2391 = vmatpush1.msra.mxu0 0.0
        %2392 = vmatprep.subr.mxu0 0.0
        %2393 = vmatpush1.msra.mxu0 0.0
        %2394 = vmatprep.subr.mxu0 0.0
        %2395 = vmatpush1.msra.mxu0 0.0
        %2396 = vmatprep.subr.mxu0 0.0
        %2397 = vmatpush1.msra.mxu0 0.0
        %2398 = vmatprep.subr.mxu0 0.0
        %2399 = vmatpush1.msra.mxu0 0.0
        %2400 = vmatprep.subr.mxu0 0.0
        %2401 = vmatpush1.msra.mxu0 0.0
        %2402 = vmatprep.subr.mxu0 0.0
        %2403 = vmatpush1.msra.mxu0 0.0
        %2404 = vmatprep.subr.mxu0 0.0
        %2405 = vmatpush1.msra.mxu0 0.0
        %2406 = vmatprep.subr.mxu0 0.0
        %2407 = vmatpush1.msra.mxu0 0.0
        %2408 = vmatprep.subr.mxu0 0.0
        %2409 = vmatpush1.msra.mxu0 0.0
        %2410 = vmatprep.subr.mxu0 0.0
        %2411 = vmatpush1.msra.mxu0 0.0
        %2412 = vmatprep.subr.mxu0 0.0
        %2413 = vmatpush1.msra.mxu0 0.0
        %2414 = vmatprep.subr.mxu0 0.0
        %2415 = vmatpush1.msra.mxu0 0.0
        %2416 = vmatprep.subr.mxu0 0.0
        %2417 = vmatpush1.msra.mxu0 0.0
        %2418 = vmatprep.subr.mxu0 0.0
        %2419 = vmatpush1.msra.mxu0 0.0
        %2420 = vmatprep.mubr.f32.mxu0 0.0
        %2421 = vmatmul.mubr.f32.gmra.mrb[0].mxu0 %v2354
        %v2422 = vpop.f32.mrb[0].mxu0
        %v2423 = vadd.f32 %v2351, %v2422
        %v2424 = vpop.f32.mrb[0].mxu0
        %2425 = vdwg.mxu0
        %s2426 = scalar_lea.vmem %s6, 4
        %v2427 = vld [vmem:[%s2426] sm:$0xf]
        %v2428 = vadd.f32 %v2423, %v1559
        %v2429 = vsel %vm671, %v2428, 0.0
        %2430 = vadd.xlane.f32.xlu0 %v2429
        %v2431 = vpop.xlane.xlu0 %2430
        %v2432 = vmul.f32 %v2431, %v1515
        %v2433 = vsub.f32 %v2428, %v2432
        %v2434 = vmul.f32 %v2433, %v2433
        %v2435 = vsel %vm671, %v2434, 0.0
        %2436 = vadd.xlane.f32.xlu0 %v2435
        %v2437 = vpop.xlane.xlu0 %2436
        %v2438 = vmul.f32 %v2437, %v1515
        %v2439 = vadd.f32 %v2438, 1e-05
        %v2440 = vrsqrt.pop %v2439
        %v2441 = vmul.f32 %v2433, %v2440
        %v2442 = vlaneseq
        %v2443 = vshrl.u32 %v2442, 7
        %v2444 = vsub.s32 0, %v2443
        %v2445 = vrot.slane %v2427, %v2444
        %v2446 = vmul.f32 %v2441, %v2445
        %v2447 = vlaneseq
        %v2448 = vshrl.u32 %v2447, 7
        %v2449 = vsub.s32 1, %v2448
        %v2450 = vrot.slane %v2427, %v2449
        %v2451 = vadd.f32 %v2446, %v2450
        %v2452 = vadd.f32 %v2451, %v2451
        %v2453 = vsel %vm671, %v2452, 0.0
        %2454 = vadd.xlane.f32.xlu0 %v2453
        %v2455 = vpop.xlane.xlu0 %2454
        %v2456 = vmul.f32 %v2455, %v1515
        %v2457 = vsub.f32 %v2452, %v2456
        %v2458 = vmul.f32 %v2457, %v2457
        %v2459 = vsel %vm671, %v2458, 0.0
        %2460 = vadd.xlane.f32.xlu0 %v2459
        %v2461 = vpop.xlane.xlu0 %2460
        %v2462 = vmul.f32 %v2461, %v1515
        %v2463 = vadd.f32 %v2462, 1e-05
        %v2464 = vrsqrt.pop %v2463
        %v2465 = vmul.f32 %v2457, %v2464
        %v2466 = vlaneseq
        %v2467 = vshrl.u32 %v2466, 7
        %v2468 = vsub.s32 2, %v2467
        %v2469 = vrot.slane %v2427, %v2468
        %v2470 = vmul.f32 %v2465, %v2469
        %v2471 = vlaneseq
        %v2472 = vshrl.u32 %v2471, 7
        %v2473 = vsub.s32 3, %v2472
        %v2474 = vrot.slane %v2427, %v2473
        %v2475 = vadd.f32 %v2470, %v2474
        %v2476 = vld [vmem:[%s13] sm:$0xff]
        %v2477 = vld [vmem:[%s13 + $0x8] sm:$0xff]
        %v2478 = vld [vmem:[%s13 + $0x10] sm:$0xff]
        %v2479 = vld [vmem:[%s13 + $0x18] sm:$0xff]
        %v2480 = vld [vmem:[%s13 + $0x20] sm:$0xff]
        %v2481 = vld [vmem:[%s13 + $0x28] sm:$0xff]
        %v2482 = vld [vmem:[%s13 + $0x30] sm:$0xff]
        %v2483 = vld [vmem:[%s13 + $0x38] sm:$0xff]
        %v2484 = vld [vmem:[%s13 + $0x40] sm:$0xff]
        %v2485 = vld [vmem:[%s13 + $0x48] sm:$0xff]
        %v2486 = vld [vmem:[%s13 + $0x50] sm:$0xff]
        %v2487 = vld [vmem:[%s13 + $0x58] sm:$0xff]
        %v2488 = vld [vmem:[%s13 + $0x60] sm:$0xff]
        %v2489 = vld [vmem:[%s13 + $0x68] sm:$0xff]
        %v2490 = vld [vmem:[%s13 + $0x70] sm:$0xff]
        %v2491 = vld [vmem:[%s13 + $0x78] sm:$0xff]
        %v2492 = vld [vmem:[%s14] sm:$0x3]
        %v2494 = vlaneseq
        %v2495 = vshrl.u32 %v2494, 7
        %v2496 = vsub.s32 0, %v2495
        %v2497 = vrot.slane %v2492, %v2496
        %v2498 = vlaneseq
        %v2499 = vshrl.u32 %v2498, 7
        %v2500 = vsub.s32 1, %v2499
        %v2501 = vrot.slane %v2492, %v2500
        %v2505 = vsel %vm671, %v2475, 0
        %2507 = vmatprep.subr.mxu0 %v2477
        %2508 = vmatpush1.msra.mxu0 %v2476
        %2509 = vmatprep.subr.mxu0 %v2479
        %2510 = vmatpush1.msra.mxu0 %v2478
        %2511 = vmatprep.subr.mxu0 %v2481
        %2512 = vmatpush1.msra.mxu0 %v2480
        %2513 = vmatprep.subr.mxu0 %v2483
        %2514 = vmatpush1.msra.mxu0 %v2482
        %2515 = vmatprep.subr.mxu0 %v2485
        %2516 = vmatpush1.msra.mxu0 %v2484
        %2517 = vmatprep.subr.mxu0 %v2487
        %2518 = vmatpush1.msra.mxu0 %v2486
        %2519 = vmatprep.subr.mxu0 %v2489
        %2520 = vmatpush1.msra.mxu0 %v2488
        %2521 = vmatprep.subr.mxu0 %v2491
        %2522 = vmatpush1.msra.mxu0 %v2490
        %2523 = vmatprep.subr.mxu0 0.0
        %2524 = vmatpush1.msra.mxu0 0.0
        %2525 = vmatprep.subr.mxu0 0.0
        %2526 = vmatpush1.msra.mxu0 0.0
        %2527 = vmatprep.subr.mxu0 0.0
        %2528 = vmatpush1.msra.mxu0 0.0
        %2529 = vmatprep.subr.mxu0 0.0
        %2530 = vmatpush1.msra.mxu0 0.0
        %2531 = vmatprep.subr.mxu0 0.0
        %2532 = vmatpush1.msra.mxu0 0.0
        %2533 = vmatprep.subr.mxu0 0.0
        %2534 = vmatpush1.msra.mxu0 0.0
        %2535 = vmatprep.subr.mxu0 0.0
        %2536 = vmatpush1.msra.mxu0 0.0
        %2537 = vmatprep.subr.mxu0 0.0
        %2538 = vmatpush1.msra.mxu0 0.0
        %2539 = vmatprep.subr.mxu0 0.0
        %2540 = vmatpush1.msra.mxu0 0.0
        %2541 = vmatprep.subr.mxu0 0.0
        %2542 = vmatpush1.msra.mxu0 0.0
        %2543 = vmatprep.subr.mxu0 0.0
        %2544 = vmatpush1.msra.mxu0 0.0
        %2545 = vmatprep.subr.mxu0 0.0
        %2546 = vmatpush1.msra.mxu0 0.0
        %2547 = vmatprep.subr.mxu0 0.0
        %2548 = vmatpush1.msra.mxu0 0.0
        %2549 = vmatprep.subr.mxu0 0.0
        %2550 = vmatpush1.msra.mxu0 0.0
        %2551 = vmatprep.subr.mxu0 0.0
        %2552 = vmatpush1.msra.mxu0 0.0
        %2553 = vmatprep.subr.mxu0 0.0
        %2554 = vmatpush1.msra.mxu0 0.0
        %2555 = vmatprep.subr.mxu0 0.0
        %2556 = vmatpush1.msra.mxu0 0.0
        %2557 = vmatprep.subr.mxu0 0.0
        %2558 = vmatpush1.msra.mxu0 0.0
        %2559 = vmatprep.subr.mxu0 0.0
        %2560 = vmatpush1.msra.mxu0 0.0
        %2561 = vmatprep.subr.mxu0 0.0
        %2562 = vmatpush1.msra.mxu0 0.0
        %2563 = vmatprep.subr.mxu0 0.0
        %2564 = vmatpush1.msra.mxu0 0.0
        %2565 = vmatprep.subr.mxu0 0.0
        %2566 = vmatpush1.msra.mxu0 0.0
        %2567 = vmatprep.subr.mxu0 0.0
        %2568 = vmatpush1.msra.mxu0 0.0
        %2569 = vmatprep.subr.mxu0 0.0
        %2570 = vmatpush1.msra.mxu0 0.0
        %2571 = vmatprep.mubr.f32.mxu0 0.0
        %2572 = vmatmul.mubr.f32.gmra.mrb[0].mxu0 %v2505
        %v2573 = vpop.f32.mrb[0].mxu0
        %v2574 = vadd.f32 %v2497, %v2573
        %v2575 = vpop.f32.mrb[0].mxu0
        %v2576 = vadd.f32 %v2501, %v2575
        %2577 = vdwg.mxu0
        %v2578 = vld [vmem:[%s641] sm:$0xff]
        %v2579 = vld [vmem:[%s17] sm:$0x3f]
        %v2580 = vld [vmem:[%s7] sm:$0xff]
        %v2581 = vld [vmem:[%s7 + $0x8] sm:$0xff]
        %v2582 = vld [vmem:[%s7 + $0x10] sm:$0xff]
        %v2583 = vld [vmem:[%s7 + $0x18] sm:$0xff]
        %v2584 = vld [vmem:[%s7 + $0x20] sm:$0xff]
        %v2585 = vld [vmem:[%s7 + $0x28] sm:$0xff]
        %v2586 = vld [vmem:[%s7 + $0x30] sm:$0xff]
        %v2587 = vld [vmem:[%s7 + $0x38] sm:$0xff]
        %v2588 = vld [vmem:[%s7 + $0x40] sm:$0xff]
        %v2589 = vld [vmem:[%s7 + $0x48] sm:$0xff]
        %v2590 = vld [vmem:[%s7 + $0x50] sm:$0xff]
        %v2591 = vld [vmem:[%s7 + $0x58] sm:$0xff]
        %v2592 = vld [vmem:[%s7 + $0x60] sm:$0xff]
        %v2593 = vld [vmem:[%s7 + $0x68] sm:$0xff]
        %v2594 = vld [vmem:[%s7 + $0x70] sm:$0xff]
        %v2595 = vld [vmem:[%s7 + $0x78] sm:$0xff]
        %v2596 = vld [vmem:[%s8] sm:$0x3]
        %v2598 = vlaneseq
        %v2599 = vshrl.u32 %v2598, 7
        %v2600 = vsub.s32 0, %v2599
        %v2601 = vrot.slane %v2596, %v2600
        %v2602 = vlaneseq
        %v2603 = vshrl.u32 %v2602, 7
        %v2604 = vsub.s32 1, %v2603
        %v2605 = vrot.slane %v2596, %v2604
        %v2609 = vsel %vm671, %v2578, 0
        %2611 = vmatprep.subr.mxu0 %v2581
        %2612 = vmatpush1.msra.mxu0 %v2580
        %2613 = vmatprep.subr.mxu0 %v2583
        %2614 = vmatpush1.msra.mxu0 %v2582
        %2615 = vmatprep.subr.mxu0 %v2585
        %2616 = vmatpush1.msra.mxu0 %v2584
        %2617 = vmatprep.subr.mxu0 %v2587
        %2618 = vmatpush1.msra.mxu0 %v2586
        %2619 = vmatprep.subr.mxu0 %v2589
        %2620 = vmatpush1.msra.mxu0 %v2588
        %2621 = vmatprep.subr.mxu0 %v2591
        %2622 = vmatpush1.msra.mxu0 %v2590
        %2623 = vmatprep.subr.mxu0 %v2593
        %2624 = vmatpush1.msra.mxu0 %v2592
        %2625 = vmatprep.subr.mxu0 %v2595
        %2626 = vmatpush1.msra.mxu0 %v2594
        %2627 = vmatprep.subr.mxu0 0.0
        %2628 = vmatpush1.msra.mxu0 0.0
        %2629 = vmatprep.subr.mxu0 0.0
        %2630 = vmatpush1.msra.mxu0 0.0
        %2631 = vmatprep.subr.mxu0 0.0
        %2632 = vmatpush1.msra.mxu0 0.0
        %2633 = vmatprep.subr.mxu0 0.0
        %2634 = vmatpush1.msra.mxu0 0.0
        %2635 = vmatprep.subr.mxu0 0.0
        %2636 = vmatpush1.msra.mxu0 0.0
        %2637 = vmatprep.subr.mxu0 0.0
        %2638 = vmatpush1.msra.mxu0 0.0
        %2639 = vmatprep.subr.mxu0 0.0
        %2640 = vmatpush1.msra.mxu0 0.0
        %2641 = vmatprep.subr.mxu0 0.0
        %2642 = vmatpush1.msra.mxu0 0.0
        %2643 = vmatprep.subr.mxu0 0.0
        %2644 = vmatpush1.msra.mxu0 0.0
        %2645 = vmatprep.subr.mxu0 0.0
        %2646 = vmatpush1.msra.mxu0 0.0
        %2647 = vmatprep.subr.mxu0 0.0
        %2648 = vmatpush1.msra.mxu0 0.0
        %2649 = vmatprep.subr.mxu0 0.0
        %2650 = vmatpush1.msra.mxu0 0.0
        %2651 = vmatprep.subr.mxu0 0.0
        %2652 = vmatpush1.msra.mxu0 0.0
        %2653 = vmatprep.subr.mxu0 0.0
        %2654 = vmatpush1.msra.mxu0 0.0
        %2655 = vmatprep.subr.mxu0 0.0
        %2656 = vmatpush1.msra.mxu0 0.0
        %2657 = vmatprep.subr.mxu0 0.0
        %2658 = vmatpush1.msra.mxu0 0.0
        %2659 = vmatprep.subr.mxu0 0.0
        %2660 = vmatpush1.msra.mxu0 0.0
        %2661 = vmatprep.subr.mxu0 0.0
        %2662 = vmatpush1.msra.mxu0 0.0
        %2663 = vmatprep.subr.mxu0 0.0
        %2664 = vmatpush1.msra.mxu0 0.0
        %2665 = vmatprep.subr.mxu0 0.0
        %2666 = vmatpush1.msra.mxu0 0.0
        %2667 = vmatprep.subr.mxu0 0.0
        %2668 = vmatpush1.msra.mxu0 0.0
        %2669 = vmatprep.subr.mxu0 0.0
        %2670 = vmatpush1.msra.mxu0 0.0
        %2671 = vmatprep.subr.mxu0 0.0
        %2672 = vmatpush1.msra.mxu0 0.0
        %2673 = vmatprep.subr.mxu0 0.0
        %2674 = vmatpush1.msra.mxu0 0.0
        %2675 = vmatprep.mubr.f32.mxu0 0.0
        %2676 = vmatmul.mubr.f32.gmra.mrb[0].mxu0 %v2609
        %v2677 = vpop.f32.mrb[0].mxu0
        %v2678 = vadd.f32 %v2601, %v2677
        %v2679 = vpop.f32.mrb[0].mxu0
        %v2680 = vadd.f32 %v2605, %v2679
        %2681 = vdwg.mxu0
        %2683 = vrot.lane.b32.xlu0 %v2678, 64
        %v2684 = vpop.permute.xlu0 %2683
        %v2685 = vsel %vm749, %v2678, 0
        %v2687 = vsel %vm749, %v2684, 0
        %2689 = vmatprep.subr.mxu0 0.0
        %2690 = vmatpush1.xpose.msra.mxu0 %v2687
        %2691 = vmatprep.subr.mxu0 0.0
        %2692 = vmatpush1.xpose.msra.mxu0 0.0
        %2693 = vmatprep.subr.mxu0 0.0
        %2694 = vmatpush1.xpose.msra.mxu0 0.0
        %2695 = vmatprep.subr.mxu0 0.0
        %2696 = vmatpush1.xpose.msra.mxu0 0.0
        %2697 = vmatprep.subr.mxu0 0.0
        %2698 = vmatpush1.xpose.msra.mxu0 0.0
        %2699 = vmatprep.subr.mxu0 0.0
        %2700 = vmatpush1.xpose.msra.mxu0 0.0
        %2701 = vmatprep.subr.mxu0 0.0
        %2702 = vmatpush1.xpose.msra.mxu0 0.0
        %2703 = vmatprep.subr.mxu0 0.0
        %2704 = vmatpush1.xpose.msra.mxu0 0.0
        %2705 = vmatprep.subr.mxu0 0.0
        %2706 = vmatpush1.xpose.msra.mxu0 0.0
        %2707 = vmatprep.subr.mxu0 0.0
        %2708 = vmatpush1.xpose.msra.mxu0 0.0
        %2709 = vmatprep.subr.mxu0 0.0
        %2710 = vmatpush1.xpose.msra.mxu0 0.0
        %2711 = vmatprep.subr.mxu0 0.0
        %2712 = vmatpush1.xpose.msra.mxu0 0.0
        %2713 = vmatprep.subr.mxu0 0.0
        %2714 = vmatpush1.xpose.msra.mxu0 0.0
        %2715 = vmatprep.subr.mxu0 0.0
        %2716 = vmatpush1.xpose.msra.mxu0 0.0
        %2717 = vmatprep.subr.mxu0 0.0
        %2718 = vmatpush1.xpose.msra.mxu0 0.0
        %2719 = vmatprep.subr.mxu0 0.0
        %2720 = vmatpush1.xpose.msra.mxu0 0.0
        %2721 = vmatprep.subr.mxu0 0.0
        %2722 = vmatpush1.xpose.msra.mxu0 0.0
        %2723 = vmatprep.subr.mxu0 0.0
        %2724 = vmatpush1.xpose.msra.mxu0 0.0
        %2725 = vmatprep.subr.mxu0 0.0
        %2726 = vmatpush1.xpose.msra.mxu0 0.0
        %2727 = vmatprep.subr.mxu0 0.0
        %2728 = vmatpush1.xpose.msra.mxu0 0.0
        %2729 = vmatprep.subr.mxu0 0.0
        %2730 = vmatpush1.xpose.msra.mxu0 0.0
        %2731 = vmatprep.subr.mxu0 0.0
        %2732 = vmatpush1.xpose.msra.mxu0 0.0
        %2733 = vmatprep.subr.mxu0 0.0
        %2734 = vmatpush1.xpose.msra.mxu0 0.0
        %2735 = vmatprep.subr.mxu0 0.0
        %2736 = vmatpush1.xpose.msra.mxu0 0.0
        %2737 = vmatprep.subr.mxu0 0.0
        %2738 = vmatpush1.xpose.msra.mxu0 0.0
        %2739 = vmatprep.subr.mxu0 0.0
        %2740 = vmatpush1.xpose.msra.mxu0 0.0
        %2741 = vmatprep.subr.mxu0 0.0
        %2742 = vmatpush1.xpose.msra.mxu0 0.0
        %2743 = vmatprep.subr.mxu0 0.0
        %2744 = vmatpush1.xpose.msra.mxu0 0.0
        %2745 = vmatprep.subr.mxu0 0.0
        %2746 = vmatpush1.xpose.msra.mxu0 0.0
        %2747 = vmatprep.subr.mxu0 0.0
        %2748 = vmatpush1.xpose.msra.mxu0 0.0
        %2749 = vmatprep.subr.mxu0 0.0
        %2750 = vmatpush1.xpose.msra.mxu0 0.0
        %2751 = vmatprep.subr.mxu0 0.0
        %2752 = vmatpush1.xpose.msra.mxu0 0.0
        %2753 = vmatprep.mubr.f32.mxu0 0.0
        %2754 = vmatmul.mubr.f32.gmra.mrb[0].mxu0 %v2685
        %v2755 = vpop.f32.mrb[0].mxu0
        %v2756 = vadd.f32 0.0, %v2755
        %v2757 = vpop.f32.mrb[0].mxu0
        %2758 = vdwg.mxu0
        %v2759 = vsel %vm824, %v2756, -inf
        %2760 = vmax.xlane.f32.xlu0 %v2759
        %v2761 = vpop.xlane.xlu0 %2760
        %v2762 = vsub.f32 %v2756, %v2761
        %v2763 = vmul.f32 %v2762, 1.442695
        %v2764 = vpow.pop %v2763
        %v2765 = vsel %vm824, %v2764, 0.0
        %2766 = vadd.xlane.f32.xlu0 %v2765
        %v2767 = vpop.xlane.xlu0 %2766
        %v2768 = vrcp.pop %v2767
        %v2769 = vmul.f32 %v2764, %v2768
        %v2771 = vsel %vm824, %v2769, 0
        %2773 = vmatprep.subr.mxu0 0.0
        %2774 = vmatpush1.msra.mxu0 %v2680
        %2775 = vmatprep.subr.mxu0 0.0
        %2776 = vmatpush1.msra.mxu0 0.0
        %2777 = vmatprep.subr.mxu0 0.0
        %2778 = vmatpush1.msra.mxu0 0.0
        %2779 = vmatprep.subr.mxu0 0.0
        %2780 = vmatpush1.msra.mxu0 0.0
        %2781 = vmatprep.subr.mxu0 0.0
        %2782 = vmatpush1.msra.mxu0 0.0
        %2783 = vmatprep.subr.mxu0 0.0
        %2784 = vmatpush1.msra.mxu0 0.0
        %2785 = vmatprep.subr.mxu0 0.0
        %2786 = vmatpush1.msra.mxu0 0.0
        %2787 = vmatprep.subr.mxu0 0.0
        %2788 = vmatpush1.msra.mxu0 0.0
        %2789 = vmatprep.subr.mxu0 0.0
        %2790 = vmatpush1.msra.mxu0 0.0
        %2791 = vmatprep.subr.mxu0 0.0
        %2792 = vmatpush1.msra.mxu0 0.0
        %2793 = vmatprep.subr.mxu0 0.0
        %2794 = vmatpush1.msra.mxu0 0.0
        %2795 = vmatprep.subr.mxu0 0.0
        %2796 = vmatpush1.msra.mxu0 0.0
        %2797 = vmatprep.subr.mxu0 0.0
        %2798 = vmatpush1.msra.mxu0 0.0
        %2799 = vmatprep.subr.mxu0 0.0
        %2800 = vmatpush1.msra.mxu0 0.0
        %2801 = vmatprep.subr.mxu0 0.0
        %2802 = vmatpush1.msra.mxu0 0.0
        %2803 = vmatprep.subr.mxu0 0.0
        %2804 = vmatpush1.msra.mxu0 0.0
        %2805 = vmatprep.subr.mxu0 0.0
        %2806 = vmatpush1.msra.mxu0 0.0
        %2807 = vmatprep.subr.mxu0 0.0
        %2808 = vmatpush1.msra.mxu0 0.0
        %2809 = vmatprep.subr.mxu0 0.0
        %2810 = vmatpush1.msra.mxu0 0.0
        %2811 = vmatprep.subr.mxu0 0.0
        %2812 = vmatpush1.msra.mxu0 0.0
        %2813 = vmatprep.subr.mxu0 0.0
        %2814 = vmatpush1.msra.mxu0 0.0
        %2815 = vmatprep.subr.mxu0 0.0
        %2816 = vmatpush1.msra.mxu0 0.0
        %2817 = vmatprep.subr.mxu0 0.0
        %2818 = vmatpush1.msra.mxu0 0.0
        %2819 = vmatprep.subr.mxu0 0.0
        %2820 = vmatpush1.msra.mxu0 0.0
        %2821 = vmatprep.subr.mxu0 0.0
        %2822 = vmatpush1.msra.mxu0 0.0
        %2823 = vmatprep.subr.mxu0 0.0
        %2824 = vmatpush1.msra.mxu0 0.0
        %2825 = vmatprep.subr.mxu0 0.0
        %2826 = vmatpush1.msra.mxu0 0.0
        %2827 = vmatprep.subr.mxu0 0.0
        %2828 = vmatpush1.msra.mxu0 0.0
        %2829 = vmatprep.subr.mxu0 0.0
        %2830 = vmatpush1.msra.mxu0 0.0
        %2831 = vmatprep.subr.mxu0 0.0
        %2832 = vmatpush1.msra.mxu0 0.0
        %2833 = vmatprep.subr.mxu0 0.0
        %2834 = vmatpush1.msra.mxu0 0.0
        %2835 = vmatprep.subr.mxu0 0.0
        %2836 = vmatpush1.msra.mxu0 0.0
        %2837 = vmatprep.mubr.f32.mxu0 0.0
        %2838 = vmatmul.mubr.f32.gmra.mrb[0].mxu0 %v2771
        %v2839 = vpop.f32.mrb[0].mxu0
        %v2840 = vadd.f32 0.0, %v2839
        %v2841 = vpop.f32.mrb[0].mxu0
        %2842 = vdwg.mxu0
        %2843 = vrot.lane.b32.xlu0 %v2678, 112
        %v2844 = vpop.permute.xlu0 %2843
        %2845 = vrot.lane.b32.xlu0 %v2678, 48
        %v2846 = vpop.permute.xlu0 %2845
        %v2847 = vsel %vm749, %v2844, 0
        %v2849 = vsel %vm749, %v2846, 0
        %2851 = vmatprep.subr.mxu0 0.0
        %2852 = vmatpush1.xpose.msra.mxu0 %v2849
        %2853 = vmatprep.subr.mxu0 0.0
        %2854 = vmatpush1.xpose.msra.mxu0 0.0
        %2855 = vmatprep.subr.mxu0 0.0
        %2856 = vmatpush1.xpose.msra.mxu0 0.0
        %2857 = vmatprep.subr.mxu0 0.0
        %2858 = vmatpush1.xpose.msra.mxu0 0.0
        %2859 = vmatprep.subr.mxu0 0.0
        %2860 = vmatpush1.xpose.msra.mxu0 0.0
        %2861 = vmatprep.subr.mxu0 0.0
        %2862 = vmatpush1.xpose.msra.mxu0 0.0
        %2863 = vmatprep.subr.mxu0 0.0
        %2864 = vmatpush1.xpose.msra.mxu0 0.0
        %2865 = vmatprep.subr.mxu0 0.0
        %2866 = vmatpush1.xpose.msra.mxu0 0.0
        %2867 = vmatprep.subr.mxu0 0.0
        %2868 = vmatpush1.xpose.msra.mxu0 0.0
        %2869 = vmatprep.subr.mxu0 0.0
        %2870 = vmatpush1.xpose.msra.mxu0 0.0
        %2871 = vmatprep.subr.mxu0 0.0
        %2872 = vmatpush1.xpose.msra.mxu0 0.0
        %2873 = vmatprep.subr.mxu0 0.0
        %2874 = vmatpush1.xpose.msra.mxu0 0.0
        %2875 = vmatprep.subr.mxu0 0.0
        %2876 = vmatpush1.xpose.msra.mxu0 0.0
        %2877 = vmatprep.subr.mxu0 0.0
        %2878 = vmatpush1.xpose.msra.mxu0 0.0
        %2879 = vmatprep.subr.mxu0 0.0
        %2880 = vmatpush1.xpose.msra.mxu0 0.0
        %2881 = vmatprep.subr.mxu0 0.0
        %2882 = vmatpush1.xpose.msra.mxu0 0.0
        %2883 = vmatprep.subr.mxu0 0.0
        %2884 = vmatpush1.xpose.msra.mxu0 0.0
        %2885 = vmatprep.subr.mxu0 0.0
        %2886 = vmatpush1.xpose.msra.mxu0 0.0
        %2887 = vmatprep.subr.mxu0 0.0
        %2888 = vmatpush1.xpose.msra.mxu0 0.0
        %2889 = vmatprep.subr.mxu0 0.0
        %2890 = vmatpush1.xpose.msra.mxu0 0.0
        %2891 = vmatprep.subr.mxu0 0.0
        %2892 = vmatpush1.xpose.msra.mxu0 0.0
        %2893 = vmatprep.subr.mxu0 0.0
        %2894 = vmatpush1.xpose.msra.mxu0 0.0
        %2895 = vmatprep.subr.mxu0 0.0
        %2896 = vmatpush1.xpose.msra.mxu0 0.0
        %2897 = vmatprep.subr.mxu0 0.0
        %2898 = vmatpush1.xpose.msra.mxu0 0.0
        %2899 = vmatprep.subr.mxu0 0.0
        %2900 = vmatpush1.xpose.msra.mxu0 0.0
        %2901 = vmatprep.subr.mxu0 0.0
        %2902 = vmatpush1.xpose.msra.mxu0 0.0
        %2903 = vmatprep.subr.mxu0 0.0
        %2904 = vmatpush1.xpose.msra.mxu0 0.0
        %2905 = vmatprep.subr.mxu0 0.0
        %2906 = vmatpush1.xpose.msra.mxu0 0.0
        %2907 = vmatprep.subr.mxu0 0.0
        %2908 = vmatpush1.xpose.msra.mxu0 0.0
        %2909 = vmatprep.subr.mxu0 0.0
        %2910 = vmatpush1.xpose.msra.mxu0 0.0
        %2911 = vmatprep.subr.mxu0 0.0
        %2912 = vmatpush1.xpose.msra.mxu0 0.0
        %2913 = vmatprep.subr.mxu0 0.0
        %2914 = vmatpush1.xpose.msra.mxu0 0.0
        %2915 = vmatprep.mubr.f32.mxu0 0.0
        %2916 = vmatmul.mubr.f32.gmra.mrb[0].mxu0 %v2847
        %v2917 = vpop.f32.mrb[0].mxu0
        %v2918 = vadd.f32 0.0, %v2917
        %v2919 = vpop.f32.mrb[0].mxu0
        %2920 = vdwg.mxu0
        %v2921 = vsel %vm824, %v2918, -inf
        %2922 = vmax.xlane.f32.xlu0 %v2921
        %v2923 = vpop.xlane.xlu0 %2922
        %v2924 = vsub.f32 %v2918, %v2923
        %v2925 = vmul.f32 %v2924, 1.442695
        %v2926 = vpow.pop %v2925
        %v2927 = vsel %vm824, %v2926, 0.0
        %2928 = vadd.xlane.f32.xlu0 %v2927
        %v2929 = vpop.xlane.xlu0 %2928
        %v2930 = vrcp.pop %v2929
        %v2931 = vmul.f32 %v2926, %v2930
        %2933 = vrot.lane.b32.xlu0 %v2680, 112
        %v2934 = vpop.permute.xlu0 %2933
        %v2937 = vsel %vm824, %v2931, 0
        %2939 = vmatprep.subr.mxu0 0.0
        %2940 = vmatpush1.msra.mxu0 %v2934
        %2941 = vmatprep.subr.mxu0 0.0
        %2942 = vmatpush1.msra.mxu0 0.0
        %2943 = vmatprep.subr.mxu0 0.0
        %2944 = vmatpush1.msra.mxu0 0.0
        %2945 = vmatprep.subr.mxu0 0.0
        %2946 = vmatpush1.msra.mxu0 0.0
        %2947 = vmatprep.subr.mxu0 0.0
        %2948 = vmatpush1.msra.mxu0 0.0
        %2949 = vmatprep.subr.mxu0 0.0
        %2950 = vmatpush1.msra.mxu0 0.0
        %2951 = vmatprep.subr.mxu0 0.0
        %2952 = vmatpush1.msra.mxu0 0.0
        %2953 = vmatprep.subr.mxu0 0.0
        %2954 = vmatpush1.msra.mxu0 0.0
        %2955 = vmatprep.subr.mxu0 0.0
        %2956 = vmatpush1.msra.mxu0 0.0
        %2957 = vmatprep.subr.mxu0 0.0
        %2958 = vmatpush1.msra.mxu0 0.0
        %2959 = vmatprep.subr.mxu0 0.0
        %2960 = vmatpush1.msra.mxu0 0.0
        %2961 = vmatprep.subr.mxu0 0.0
        %2962 = vmatpush1.msra.mxu0 0.0
        %2963 = vmatprep.subr.mxu0 0.0
        %2964 = vmatpush1.msra.mxu0 0.0
        %2965 = vmatprep.subr.mxu0 0.0
        %2966 = vmatpush1.msra.mxu0 0.0
        %2967 = vmatprep.subr.mxu0 0.0
        %2968 = vmatpush1.msra.mxu0 0.0
        %2969 = vmatprep.subr.mxu0 0.0
        %2970 = vmatpush1.msra.mxu0 0.0
        %2971 = vmatprep.subr.mxu0 0.0
        %2972 = vmatpush1.msra.mxu0 0.0
        %2973 = vmatprep.subr.mxu0 0.0
        %2974 = vmatpush1.msra.mxu0 0.0
        %2975 = vmatprep.subr.mxu0 0.0
        %2976 = vmatpush1.msra.mxu0 0.0
        %2977 = vmatprep.subr.mxu0 0.0
        %2978 = vmatpush1.msra.mxu0 0.0
        %2979 = vmatprep.subr.mxu0 0.0
        %2980 = vmatpush1.msra.mxu0 0.0
        %2981 = vmatprep.subr.mxu0 0.0
        %2982 = vmatpush1.msra.mxu0 0.0
        %2983 = vmatprep.subr.mxu0 0.0
        %2984 = vmatpush1.msra.mxu0 0.0
        %2985 = vmatprep.subr.mxu0 0.0
        %2986 = vmatpush1.msra.mxu0 0.0
        %2987 = vmatprep.subr.mxu0 0.0
        %2988 = vmatpush1.msra.mxu0 0.0
        %2989 = vmatprep.subr.mxu0 0.0
        %2990 = vmatpush1.msra.mxu0 0.0
        %2991 = vmatprep.subr.mxu0 0.0
        %2992 = vmatpush1.msra.mxu0 0.0
        %2993 = vmatprep.subr.mxu0 0.0
        %2994 = vmatpush1.msra.mxu0 0.0
        %2995 = vmatprep.subr.mxu0 0.0
        %2996 = vmatpush1.msra.mxu0 0.0
        %2997 = vmatprep.subr.mxu0 0.0
        %2998 = vmatpush1.msra.mxu0 0.0
        %2999 = vmatprep.subr.mxu0 0.0
        %3000 = vmatpush1.msra.mxu0 0.0
        %3001 = vmatprep.subr.mxu0 0.0
        %3002 = vmatpush1.msra.mxu0 0.0
        %3003 = vmatprep.mubr.f32.mxu0 0.0
        %3004 = vmatmul.mubr.f32.gmra.mrb[0].mxu0 %v2937
        %v3005 = vpop.f32.mrb[0].mxu0
        %v3006 = vadd.f32 0.0, %v3005
        %v3007 = vpop.f32.mrb[0].mxu0
        %3008 = vdwg.mxu0
        %3009 = vrot.lane.b32.xlu0 %v2678, 96
        %v3010 = vpop.permute.xlu0 %3009
        %3011 = vrot.lane.b32.xlu0 %v2678, 32
        %v3012 = vpop.permute.xlu0 %3011
        %v3013 = vsel %vm749, %v3010, 0
        %v3015 = vsel %vm749, %v3012, 0
        %3017 = vmatprep.subr.mxu0 0.0
        %3018 = vmatpush1.xpose.msra.mxu0 %v3015
        %3019 = vmatprep.subr.mxu0 0.0
        %3020 = vmatpush1.xpose.msra.mxu0 0.0
        %3021 = vmatprep.subr.mxu0 0.0
        %3022 = vmatpush1.xpose.msra.mxu0 0.0
        %3023 = vmatprep.subr.mxu0 0.0
        %3024 = vmatpush1.xpose.msra.mxu0 0.0
        %3025 = vmatprep.subr.mxu0 0.0
        %3026 = vmatpush1.xpose.msra.mxu0 0.0
        %3027 = vmatprep.subr.mxu0 0.0
        %3028 = vmatpush1.xpose.msra.mxu0 0.0
        %3029 = vmatprep.subr.mxu0 0.0
        %3030 = vmatpush1.xpose.msra.mxu0 0.0
        %3031 = vmatprep.subr.mxu0 0.0
        %3032 = vmatpush1.xpose.msra.mxu0 0.0
        %3033 = vmatprep.subr.mxu0 0.0
        %3034 = vmatpush1.xpose.msra.mxu0 0.0
        %3035 = vmatprep.subr.mxu0 0.0
        %3036 = vmatpush1.xpose.msra.mxu0 0.0
        %3037 = vmatprep.subr.mxu0 0.0
        %3038 = vmatpush1.xpose.msra.mxu0 0.0
        %3039 = vmatprep.subr.mxu0 0.0
        %3040 = vmatpush1.xpose.msra.mxu0 0.0
        %3041 = vmatprep.subr.mxu0 0.0
        %3042 = vmatpush1.xpose.msra.mxu0 0.0
        %3043 = vmatprep.subr.mxu0 0.0
        %3044 = vmatpush1.xpose.msra.mxu0 0.0
        %3045 = vmatprep.subr.mxu0 0.0
        %3046 = vmatpush1.xpose.msra.mxu0 0.0
        %3047 = vmatprep.subr.mxu0 0.0
        %3048 = vmatpush1.xpose.msra.mxu0 0.0
        %3049 = vmatprep.subr.mxu0 0.0
        %3050 = vmatpush1.xpose.msra.mxu0 0.0
        %3051 = vmatprep.subr.mxu0 0.0
        %3052 = vmatpush1.xpose.msra.mxu0 0.0
        %3053 = vmatprep.subr.mxu0 0.0
        %3054 = vmatpush1.xpose.msra.mxu0 0.0
        %3055 = vmatprep.subr.mxu0 0.0
        %3056 = vmatpush1.xpose.msra.mxu0 0.0
        %3057 = vmatprep.subr.mxu0 0.0
        %3058 = vmatpush1.xpose.msra.mxu0 0.0
        %3059 = vmatprep.subr.mxu0 0.0
        %3060 = vmatpush1.xpose.msra.mxu0 0.0
        %3061 = vmatprep.subr.mxu0 0.0
        %3062 = vmatpush1.xpose.msra.mxu0 0.0
        %3063 = vmatprep.subr.mxu0 0.0
        %3064 = vmatpush1.xpose.msra.mxu0 0.0
        %3065 = vmatprep.subr.mxu0 0.0
        %3066 = vmatpush1.xpose.msra.mxu0 0.0
        %3067 = vmatprep.subr.mxu0 0.0
        %3068 = vmatpush1.xpose.msra.mxu0 0.0
        %3069 = vmatprep.subr.mxu0 0.0
        %3070 = vmatpush1.xpose.msra.mxu0 0.0
        %3071 = vmatprep.subr.mxu0 0.0
        %3072 = vmatpush1.xpose.msra.mxu0 0.0
        %3073 = vmatprep.subr.mxu0 0.0
        %3074 = vmatpush1.xpose.msra.mxu0 0.0
        %3075 = vmatprep.subr.mxu0 0.0
        %3076 = vmatpush1.xpose.msra.mxu0 0.0
        %3077 = vmatprep.subr.mxu0 0.0
        %3078 = vmatpush1.xpose.msra.mxu0 0.0
        %3079 = vmatprep.subr.mxu0 0.0
        %3080 = vmatpush1.xpose.msra.mxu0 0.0
        %3081 = vmatprep.mubr.f32.mxu0 0.0
        %3082 = vmatmul.mubr.f32.gmra.mrb[0].mxu0 %v3013
        %v3083 = vpop.f32.mrb[0].mxu0
        %v3084 = vadd.f32 0.0, %v3083
        %v3085 = vpop.f32.mrb[0].mxu0
        %3086 = vdwg.mxu0
        %v3087 = vsel %vm824, %v3084, -inf
        %3088 = vmax.xlane.f32.xlu0 %v3087
        %v3089 = vpop.xlane.xlu0 %3088
        %v3090 = vsub.f32 %v3084, %v3089
        %v3091 = vmul.f32 %v3090, 1.442695
        %v3092 = vpow.pop %v3091
        %v3093 = vsel %vm824, %v3092, 0.0
        %3094 = vadd.xlane.f32.xlu0 %v3093
        %v3095 = vpop.xlane.xlu0 %3094
        %v3096 = vrcp.pop %v3095
        %v3097 = vmul.f32 %v3092, %v3096
        %3098 = vrot.lane.b32.xlu0 %v2680, 96
        %v3099 = vpop.permute.xlu0 %3098
        %v3102 = vsel %vm824, %v3097, 0
        %3104 = vmatprep.subr.mxu0 0.0
        %3105 = vmatpush1.msra.mxu0 %v3099
        %3106 = vmatprep.subr.mxu0 0.0
        %3107 = vmatpush1.msra.mxu0 0.0
        %3108 = vmatprep.subr.mxu0 0.0
        %3109 = vmatpush1.msra.mxu0 0.0
        %3110 = vmatprep.subr.mxu0 0.0
        %3111 = vmatpush1.msra.mxu0 0.0
        %3112 = vmatprep.subr.mxu0 0.0
        %3113 = vmatpush1.msra.mxu0 0.0
        %3114 = vmatprep.subr.mxu0 0.0
        %3115 = vmatpush1.msra.mxu0 0.0
        %3116 = vmatprep.subr.mxu0 0.0
        %3117 = vmatpush1.msra.mxu0 0.0
        %3118 = vmatprep.subr.mxu0 0.0
        %3119 = vmatpush1.msra.mxu0 0.0
        %3120 = vmatprep.subr.mxu0 0.0
        %3121 = vmatpush1.msra.mxu0 0.0
        %3122 = vmatprep.subr.mxu0 0.0
        %3123 = vmatpush1.msra.mxu0 0.0
        %3124 = vmatprep.subr.mxu0 0.0
        %3125 = vmatpush1.msra.mxu0 0.0
        %3126 = vmatprep.subr.mxu0 0.0
        %3127 = vmatpush1.msra.mxu0 0.0
        %3128 = vmatprep.subr.mxu0 0.0
        %3129 = vmatpush1.msra.mxu0 0.0
        %3130 = vmatprep.subr.mxu0 0.0
        %3131 = vmatpush1.msra.mxu0 0.0
        %3132 = vmatprep.subr.mxu0 0.0
        %3133 = vmatpush1.msra.mxu0 0.0
        %3134 = vmatprep.subr.mxu0 0.0
        %3135 = vmatpush1.msra.mxu0 0.0
        %3136 = vmatprep.subr.mxu0 0.0
        %3137 = vmatpush1.msra.mxu0 0.0
        %3138 = vmatprep.subr.mxu0 0.0
        %3139 = vmatpush1.msra.mxu0 0.0
        %3140 = vmatprep.subr.mxu0 0.0
        %3141 = vmatpush1.msra.mxu0 0.0
        %3142 = vmatprep.subr.mxu0 0.0
        %3143 = vmatpush1.msra.mxu0 0.0
        %3144 = vmatprep.subr.mxu0 0.0
        %3145 = vmatpush1.msra.mxu0 0.0
        %3146 = vmatprep.subr.mxu0 0.0
        %3147 = vmatpush1.msra.mxu0 0.0
        %3148 = vmatprep.subr.mxu0 0.0
        %3149 = vmatpush1.msra.mxu0 0.0
        %3150 = vmatprep.subr.mxu0 0.0
        %3151 = vmatpush1.msra.mxu0 0.0
        %3152 = vmatprep.subr.mxu0 0.0
        %3153 = vmatpush1.msra.mxu0 0.0
        %3154 = vmatprep.subr.mxu0 0.0
        %3155 = vmatpush1.msra.mxu0 0.0
        %3156 = vmatprep.subr.mxu0 0.0
        %3157 = vmatpush1.msra.mxu0 0.0
        %3158 = vmatprep.subr.mxu0 0.0
        %3159 = vmatpush1.msra.mxu0 0.0
        %3160 = vmatprep.subr.mxu0 0.0
        %3161 = vmatpush1.msra.mxu0 0.0
        %3162 = vmatprep.subr.mxu0 0.0
        %3163 = vmatpush1.msra.mxu0 0.0
        %3164 = vmatprep.subr.mxu0 0.0
        %3165 = vmatpush1.msra.mxu0 0.0
        %3166 = vmatprep.subr.mxu0 0.0
        %3167 = vmatpush1.msra.mxu0 0.0
        %3168 = vmatprep.mubr.f32.mxu0 0.0
        %3169 = vmatmul.mubr.f32.gmra.mrb[0].mxu0 %v3102
        %v3170 = vpop.f32.mrb[0].mxu0
        %v3171 = vadd.f32 0.0, %v3170
        %v3172 = vpop.f32.mrb[0].mxu0
        %3173 = vdwg.mxu0
        %3174 = vrot.lane.b32.xlu0 %v2678, 80
        %v3175 = vpop.permute.xlu0 %3174
        %3176 = vrot.lane.b32.xlu0 %v2678, 16
        %v3177 = vpop.permute.xlu0 %3176
        %v3178 = vsel %vm749, %v3175, 0
        %v3180 = vsel %vm749, %v3177, 0
        %3182 = vmatprep.subr.mxu0 0.0
        %3183 = vmatpush1.xpose.msra.mxu0 %v3180
        %3184 = vmatprep.subr.mxu0 0.0
        %3185 = vmatpush1.xpose.msra.mxu0 0.0
        %3186 = vmatprep.subr.mxu0 0.0
        %3187 = vmatpush1.xpose.msra.mxu0 0.0
        %3188 = vmatprep.subr.mxu0 0.0
        %3189 = vmatpush1.xpose.msra.mxu0 0.0
        %3190 = vmatprep.subr.mxu0 0.0
        %3191 = vmatpush1.xpose.msra.mxu0 0.0
        %3192 = vmatprep.subr.mxu0 0.0
        %3193 = vmatpush1.xpose.msra.mxu0 0.0
        %3194 = vmatprep.subr.mxu0 0.0
        %3195 = vmatpush1.xpose.msra.mxu0 0.0
        %3196 = vmatprep.subr.mxu0 0.0
        %3197 = vmatpush1.xpose.msra.mxu0 0.0
        %3198 = vmatprep.subr.mxu0 0.0
        %3199 = vmatpush1.xpose.msra.mxu0 0.0
        %3200 = vmatprep.subr.mxu0 0.0
        %3201 = vmatpush1.xpose.msra.mxu0 0.0
        %3202 = vmatprep.subr.mxu0 0.0
        %3203 = vmatpush1.xpose.msra.mxu0 0.0
        %3204 = vmatprep.subr.mxu0 0.0
        %3205 = vmatpush1.xpose.msra.mxu0 0.0
        %3206 = vmatprep.subr.mxu0 0.0
        %3207 = vmatpush1.xpose.msra.mxu0 0.0
        %3208 = vmatprep.subr.mxu0 0.0
        %3209 = vmatpush1.xpose.msra.mxu0 0.0
        %3210 = vmatprep.subr.mxu0 0.0
        %3211 = vmatpush1.xpose.msra.mxu0 0.0
        %3212 = vmatprep.subr.mxu0 0.0
        %3213 = vmatpush1.xpose.msra.mxu0 0.0
        %3214 = vmatprep.subr.mxu0 0.0
        %3215 = vmatpush1.xpose.msra.mxu0 0.0
        %3216 = vmatprep.subr.mxu0 0.0
        %3217 = vmatpush1.xpose.msra.mxu0 0.0
        %3218 = vmatprep.subr.mxu0 0.0
        %3219 = vmatpush1.xpose.msra.mxu0 0.0
        %3220 = vmatprep.subr.mxu0 0.0
        %3221 = vmatpush1.xpose.msra.mxu0 0.0
        %3222 = vmatprep.subr.mxu0 0.0
        %3223 = vmatpush1.xpose.msra.mxu0 0.0
        %3224 = vmatprep.subr.mxu0 0.0
        %3225 = vmatpush1.xpose.msra.mxu0 0.0
        %3226 = vmatprep.subr.mxu0 0.0
        %3227 = vmatpush1.xpose.msra.mxu0 0.0
        %3228 = vmatprep.subr.mxu0 0.0
        %3229 = vmatpush1.xpose.msra.mxu0 0.0
        %3230 = vmatprep.subr.mxu0 0.0
        %3231 = vmatpush1.xpose.msra.mxu0 0.0
        %3232 = vmatprep.subr.mxu0 0.0
        %3233 = vmatpush1.xpose.msra.mxu0 0.0
        %3234 = vmatprep.subr.mxu0 0.0
        %3235 = vmatpush1.xpose.msra.mxu0 0.0
        %3236 = vmatprep.subr.mxu0 0.0
        %3237 = vmatpush1.xpose.msra.mxu0 0.0
        %3238 = vmatprep.subr.mxu0 0.0
        %3239 = vmatpush1.xpose.msra.mxu0 0.0
        %3240 = vmatprep.subr.mxu0 0.0
        %3241 = vmatpush1.xpose.msra.mxu0 0.0
        %3242 = vmatprep.subr.mxu0 0.0
        %3243 = vmatpush1.xpose.msra.mxu0 0.0
        %3244 = vmatprep.subr.mxu0 0.0
        %3245 = vmatpush1.xpose.msra.mxu0 0.0
        %3246 = vmatprep.mubr.f32.mxu0 0.0
        %3247 = vmatmul.mubr.f32.gmra.mrb[0].mxu0 %v3178
        %v3248 = vpop.f32.mrb[0].mxu0
        %v3249 = vadd.f32 0.0, %v3248
        %v3250 = vpop.f32.mrb[0].mxu0
        %3251 = vdwg.mxu0
        %v3252 = vsel %vm824, %v3249, -inf
        %3253 = vmax.xlane.f32.xlu0 %v3252
        %v3254 = vpop.xlane.xlu0 %3253
        %v3255 = vsub.f32 %v3249, %v3254
        %v3256 = vmul.f32 %v3255, 1.442695
        %v3257 = vpow.pop %v3256
        %v3258 = vsel %vm824, %v3257, 0.0
        %3259 = vadd.xlane.f32.xlu0 %v3258
        %v3260 = vpop.xlane.xlu0 %3259
        %v3261 = vrcp.pop %v3260
        %v3262 = vmul.f32 %v3257, %v3261
        %3263 = vrot.lane.b32.xlu0 %v2680, 80
        %v3264 = vpop.permute.xlu0 %3263
        %v3267 = vsel %vm824, %v3262, 0
        %3269 = vmatprep.subr.mxu0 0.0
        %3270 = vmatpush1.msra.mxu0 %v3264
        %3271 = vmatprep.subr.mxu0 0.0
        %3272 = vmatpush1.msra.mxu0 0.0
        %3273 = vmatprep.subr.mxu0 0.0
        %3274 = vmatpush1.msra.mxu0 0.0
        %3275 = vmatprep.subr.mxu0 0.0
        %3276 = vmatpush1.msra.mxu0 0.0
        %3277 = vmatprep.subr.mxu0 0.0
        %3278 = vmatpush1.msra.mxu0 0.0
        %3279 = vmatprep.subr.mxu0 0.0
        %3280 = vmatpush1.msra.mxu0 0.0
        %3281 = vmatprep.subr.mxu0 0.0
        %3282 = vmatpush1.msra.mxu0 0.0
        %3283 = vmatprep.subr.mxu0 0.0
        %3284 = vmatpush1.msra.mxu0 0.0
        %3285 = vmatprep.subr.mxu0 0.0
        %3286 = vmatpush1.msra.mxu0 0.0
        %3287 = vmatprep.subr.mxu0 0.0
        %3288 = vmatpush1.msra.mxu0 0.0
        %3289 = vmatprep.subr.mxu0 0.0
        %3290 = vmatpush1.msra.mxu0 0.0
        %3291 = vmatprep.subr.mxu0 0.0
        %3292 = vmatpush1.msra.mxu0 0.0
        %3293 = vmatprep.subr.mxu0 0.0
        %3294 = vmatpush1.msra.mxu0 0.0
        %3295 = vmatprep.subr.mxu0 0.0
        %3296 = vmatpush1.msra.mxu0 0.0
        %3297 = vmatprep.subr.mxu0 0.0
        %3298 = vmatpush1.msra.mxu0 0.0
        %3299 = vmatprep.subr.mxu0 0.0
        %3300 = vmatpush1.msra.mxu0 0.0
        %3301 = vmatprep.subr.mxu0 0.0
        %3302 = vmatpush1.msra.mxu0 0.0
        %3303 = vmatprep.subr.mxu0 0.0
        %3304 = vmatpush1.msra.mxu0 0.0
        %3305 = vmatprep.subr.mxu0 0.0
        %3306 = vmatpush1.msra.mxu0 0.0
        %3307 = vmatprep.subr.mxu0 0.0
        %3308 = vmatpush1.msra.mxu0 0.0
        %3309 = vmatprep.subr.mxu0 0.0
        %3310 = vmatpush1.msra.mxu0 0.0
        %3311 = vmatprep.subr.mxu0 0.0
        %3312 = vmatpush1.msra.mxu0 0.0
        %3313 = vmatprep.subr.mxu0 0.0
        %3314 = vmatpush1.msra.mxu0 0.0
        %3315 = vmatprep.subr.mxu0 0.0
        %3316 = vmatpush1.msra.mxu0 0.0
        %3317 = vmatprep.subr.mxu0 0.0
        %3318 = vmatpush1.msra.mxu0 0.0
        %3319 = vmatprep.subr.mxu0 0.0
        %3320 = vmatpush1.msra.mxu0 0.0
        %3321 = vmatprep.subr.mxu0 0.0
        %3322 = vmatpush1.msra.mxu0 0.0
        %3323 = vmatprep.subr.mxu0 0.0
        %3324 = vmatpush1.msra.mxu0 0.0
        %3325 = vmatprep.subr.mxu0 0.0
        %3326 = vmatpush1.msra.mxu0 0.0
        %3327 = vmatprep.subr.mxu0 0.0
        %3328 = vmatpush1.msra.mxu0 0.0
        %3329 = vmatprep.subr.mxu0 0.0
        %3330 = vmatpush1.msra.mxu0 0.0
        %3331 = vmatprep.subr.mxu0 0.0
        %3332 = vmatpush1.msra.mxu0 0.0
        %3333 = vmatprep.mubr.f32.mxu0 0.0
        %3334 = vmatmul.mubr.f32.gmra.mrb[0].mxu0 %v3267
        %v3335 = vpop.f32.mrb[0].mxu0
        %v3336 = vadd.f32 0.0, %v3335
        %v3337 = vpop.f32.mrb[0].mxu0
        %3338 = vdwg.mxu0
        %3340 = vrot.lane.b32.xlu0 %v3006, 16
        %v3341 = vpop.permute.xlu0 %3340
        %3344 = vrot.lane.b32.xlu0 %v3171, 32
        %v3345 = vpop.permute.xlu0 %3344
        %3348 = vrot.lane.b32.xlu0 %v3336, 48
        %v3349 = vpop.permute.xlu0 %3348
        %v3351 = vsel %vm749, %v2840, %v3341
        %v3352 = vsel %vm1418, %v3351, %v3345
        %v3353 = vsel %vm1420, %v3352, %v3349
        %v3354 = vld [vmem:[%s9] sm:$0xff]
        %v3355 = vld [vmem:[%s9 + $0x8] sm:$0xff]
        %v3356 = vld [vmem:[%s9 + $0x10] sm:$0xff]
        %v3357 = vld [vmem:[%s9 + $0x18] sm:$0xff]
        %v3358 = vld [vmem:[%s9 + $0x20] sm:$0xff]
        %v3359 = vld [vmem:[%s9 + $0x28] sm:$0xff]
        %v3360 = vld [vmem:[%s9 + $0x30] sm:$0xff]
        %v3361 = vld [vmem:[%s9 + $0x38] sm:$0xff]
        %v3362 = vld [vmem:[%s10] sm:$0x1]
        %v3364 = vlaneseq
        %v3365 = vshrl.u32 %v3364, 7
        %v3366 = vsub.s32 0, %v3365
        %v3367 = vrot.slane %v3362, %v3366
        %v3370 = vsel %vm671, %v3353, 0
        %3372 = vmatprep.subr.mxu0 0.0
        %3373 = vmatpush1.msra.mxu0 %v3354
        %3374 = vmatprep.subr.mxu0 0.0
        %3375 = vmatpush1.msra.mxu0 %v3355
        %3376 = vmatprep.subr.mxu0 0.0
        %3377 = vmatpush1.msra.mxu0 %v3356
        %3378 = vmatprep.subr.mxu0 0.0
        %3379 = vmatpush1.msra.mxu0 %v3357
        %3380 = vmatprep.subr.mxu0 0.0
        %3381 = vmatpush1.msra.mxu0 %v3358
        %3382 = vmatprep.subr.mxu0 0.0
        %3383 = vmatpush1.msra.mxu0 %v3359
        %3384 = vmatprep.subr.mxu0 0.0
        %3385 = vmatpush1.msra.mxu0 %v3360
        %3386 = vmatprep.subr.mxu0 0.0
        %3387 = vmatpush1.msra.mxu0 %v3361
        %3388 = vmatprep.subr.mxu0 0.0
        %3389 = vmatpush1.msra.mxu0 0.0
        %3390 = vmatprep.subr.mxu0 0.0
        %3391 = vmatpush1.msra.mxu0 0.0
        %3392 = vmatprep.subr.mxu0 0.0
        %3393 = vmatpush1.msra.mxu0 0.0
        %3394 = vmatprep.subr.mxu0 0.0
        %3395 = vmatpush1.msra.mxu0 0.0
        %3396 = vmatprep.subr.mxu0 0.0
        %3397 = vmatpush1.msra.mxu0 0.0
        %3398 = vmatprep.subr.mxu0 0.0
        %3399 = vmatpush1.msra.mxu0 0.0
        %3400 = vmatprep.subr.mxu0 0.0
        %3401 = vmatpush1.msra.mxu0 0.0
        %3402 = vmatprep.subr.mxu0 0.0
        %3403 = vmatpush1.msra.mxu0 0.0
        %3404 = vmatprep.subr.mxu0 0.0
        %3405 = vmatpush1.msra.mxu0 0.0
        %3406 = vmatprep.subr.mxu0 0.0
        %3407 = vmatpush1.msra.mxu0 0.0
        %3408 = vmatprep.subr.mxu0 0.0
        %3409 = vmatpush1.msra.mxu0 0.0
        %3410 = vmatprep.subr.mxu0 0.0
        %3411 = vmatpush1.msra.mxu0 0.0
        %3412 = vmatprep.subr.mxu0 0.0
        %3413 = vmatpush1.msra.mxu0 0.0
        %3414 = vmatprep.subr.mxu0 0.0
        %3415 = vmatpush1.msra.mxu0 0.0
        %3416 = vmatprep.subr.mxu0 0.0
        %3417 = vmatpush1.msra.mxu0 0.0
        %3418 = vmatprep.subr.mxu0 0.0
        %3419 = vmatpush1.msra.mxu0 0.0
        %3420 = vmatprep.subr.mxu0 0.0
        %3421 = vmatpush1.msra.mxu0 0.0
        %3422 = vmatprep.subr.mxu0 0.0
        %3423 = vmatpush1.msra.mxu0 0.0
        %3424 = vmatprep.subr.mxu0 0.0
        %3425 = vmatpush1.msra.mxu0 0.0
        %3426 = vmatprep.subr.mxu0 0.0
        %3427 = vmatpush1.msra.mxu0 0.0
        %3428 = vmatprep.subr.mxu0 0.0
        %3429 = vmatpush1.msra.mxu0 0.0
        %3430 = vmatprep.subr.mxu0 0.0
        %3431 = vmatpush1.msra.mxu0 0.0
        %3432 = vmatprep.subr.mxu0 0.0
        %3433 = vmatpush1.msra.mxu0 0.0
        %3434 = vmatprep.subr.mxu0 0.0
        %3435 = vmatpush1.msra.mxu0 0.0
        %3436 = vmatprep.mubr.f32.mxu0 0.0
        %3437 = vmatmul.mubr.f32.gmra.mrb[0].mxu0 %v3370
        %v3438 = vpop.f32.mrb[0].mxu0
        %v3439 = vadd.f32 %v3367, %v3438
        %v3440 = vpop.f32.mrb[0].mxu0
        %3441 = vdwg.mxu0
        %v3442 = vadd.f32 %v3439, %v2578
        %v3443 = vsel %vm671, %v3442, 0.0
        %3444 = vadd.xlane.f32.xlu0 %v3443
        %v3445 = vpop.xlane.xlu0 %3444
        %v3446 = vmul.f32 %v3445, %v1515
        %v3447 = vsub.f32 %v3442, %v3446
        %v3448 = vmul.f32 %v3447, %v3447
        %v3449 = vsel %vm671, %v3448, 0.0
        %3450 = vadd.xlane.f32.xlu0 %v3449
        %v3451 = vpop.xlane.xlu0 %3450
        %v3452 = vmul.f32 %v3451, %v1515
        %v3453 = vadd.f32 %v3452, 1e-05
        %v3454 = vrsqrt.pop %v3453
        %v3455 = vmul.f32 %v3447, %v3454
        %v3456 = vlaneseq
        %v3457 = vshrl.u32 %v3456, 7
        %v3458 = vsub.s32 0, %v3457
        %v3459 = vrot.slane %v2579, %v3458
        %v3460 = vmul.f32 %v3455, %v3459
        %v3461 = vlaneseq
        %v3462 = vshrl.u32 %v3461, 7
        %v3463 = vsub.s32 1, %v3462
        %v3464 = vrot.slane %v2579, %v3463
        %v3465 = vadd.f32 %v3460, %v3464
        %v3466 = vld [vmem:[%s11] sm:$0xff]
        %v3467 = vld [vmem:[%s11 + $0x8] sm:$0xff]
        %v3468 = vld [vmem:[%s11 + $0x10] sm:$0xff]
        %v3469 = vld [vmem:[%s11 + $0x18] sm:$0xff]
        %v3470 = vld [vmem:[%s11 + $0x20] sm:$0xff]
        %v3471 = vld [vmem:[%s11 + $0x28] sm:$0xff]
        %v3472 = vld [vmem:[%s11 + $0x30] sm:$0xff]
        %v3473 = vld [vmem:[%s11 + $0x38] sm:$0xff]
        %v3474 = vld [vmem:[%s12] sm:$0x1]
        %v3476 = vlaneseq
        %v3477 = vshrl.u32 %v3476, 7
        %v3478 = vsub.s32 0, %v3477
        %v3479 = vrot.slane %v3474, %v3478
        %v3482 = vsel %vm671, %v3465, 0
        %3484 = vmatprep.subr.mxu0 0.0
        %3485 = vmatpush1.msra.mxu0 %v3466
        %3486 = vmatprep.subr.mxu0 0.0
        %3487 = vmatpush1.msra.mxu0 %v3467
        %3488 = vmatprep.subr.mxu0 0.0
        %3489 = vmatpush1.msra.mxu0 %v3468
        %3490 = vmatprep.subr.mxu0 0.0
        %3491 = vmatpush1.msra.mxu0 %v3469
        %3492 = vmatprep.subr.mxu0 0.0
        %3493 = vmatpush1.msra.mxu0 %v3470
        %3494 = vmatprep.subr.mxu0 0.0
        %3495 = vmatpush1.msra.mxu0 %v3471
        %3496 = vmatprep.subr.mxu0 0.0
        %3497 = vmatpush1.msra.mxu0 %v3472
        %3498 = vmatprep.subr.mxu0 0.0
        %3499 = vmatpush1.msra.mxu0 %v3473
        %3500 = vmatprep.subr.mxu0 0.0
        %3501 = vmatpush1.msra.mxu0 0.0
        %3502 = vmatprep.subr.mxu0 0.0
        %3503 = vmatpush1.msra.mxu0 0.0
        %3504 = vmatprep.subr.mxu0 0.0
        %3505 = vmatpush1.msra.mxu0 0.0
        %3506 = vmatprep.subr.mxu0 0.0
        %3507 = vmatpush1.msra.mxu0 0.0
        %3508 = vmatprep.subr.mxu0 0.0
        %3509 = vmatpush1.msra.mxu0 0.0
        %3510 = vmatprep.subr.mxu0 0.0
        %3511 = vmatpush1.msra.mxu0 0.0
        %3512 = vmatprep.subr.mxu0 0.0
        %3513 = vmatpush1.msra.mxu0 0.0
        %3514 = vmatprep.subr.mxu0 0.0
        %3515 = vmatpush1.msra.mxu0 0.0
        %3516 = vmatprep.subr.mxu0 0.0
        %3517 = vmatpush1.msra.mxu0 0.0
        %3518 = vmatprep.subr.mxu0 0.0
        %3519 = vmatpush1.msra.mxu0 0.0
        %3520 = vmatprep.subr.mxu0 0.0
        %3521 = vmatpush1.msra.mxu0 0.0
        %3522 = vmatprep.subr.mxu0 0.0
        %3523 = vmatpush1.msra.mxu0 0.0
        %3524 = vmatprep.subr.mxu0 0.0
        %3525 = vmatpush1.msra.mxu0 0.0
        %3526 = vmatprep.subr.mxu0 0.0
        %3527 = vmatpush1.msra.mxu0 0.0
        %3528 = vmatprep.subr.mxu0 0.0
        %3529 = vmatpush1.msra.mxu0 0.0
        %3530 = vmatprep.subr.mxu0 0.0
        %3531 = vmatpush1.msra.mxu0 0.0
        %3532 = vmatprep.subr.mxu0 0.0
        %3533 = vmatpush1.msra.mxu0 0.0
        %3534 = vmatprep.subr.mxu0 0.0
        %3535 = vmatpush1.msra.mxu0 0.0
        %3536 = vmatprep.subr.mxu0 0.0
        %3537 = vmatpush1.msra.mxu0 0.0
        %3538 = vmatprep.subr.mxu0 0.0
        %3539 = vmatpush1.msra.mxu0 0.0
        %3540 = vmatprep.subr.mxu0 0.0
        %3541 = vmatpush1.msra.mxu0 0.0
        %3542 = vmatprep.subr.mxu0 0.0
        %3543 = vmatpush1.msra.mxu0 0.0
        %3544 = vmatprep.subr.mxu0 0.0
        %3545 = vmatpush1.msra.mxu0 0.0
        %3546 = vmatprep.subr.mxu0 0.0
        %3547 = vmatpush1.msra.mxu0 0.0
        %3548 = vmatprep.mubr.f32.mxu0 0.0
        %3549 = vmatmul.mubr.f32.gmra.mrb[0].mxu0 %v3482
        %v3550 = vpop.f32.mrb[0].mxu0
        %v3551 = vadd.f32 %v3479, %v3550
        %v3552 = vpop.f32.mrb[0].mxu0
        %3553 = vdwg.mxu0
        %v3555 = vsel %vm749, %v3551, 0
        %v3558 = vsel %vm749, %v2574, 0
        %3560 = vmatprep.subr.mxu0 0.0
        %3561 = vmatpush1.xpose.msra.mxu0 %v3558
        %3562 = vmatprep.subr.mxu0 0.0
        %3563 = vmatpush1.xpose.msra.mxu0 0.0
        %3564 = vmatprep.subr.mxu0 0.0
        %3565 = vmatpush1.xpose.msra.mxu0 0.0
        %3566 = vmatprep.subr.mxu0 0.0
        %3567 = vmatpush1.xpose.msra.mxu0 0.0
        %3568 = vmatprep.subr.mxu0 0.0
        %3569 = vmatpush1.xpose.msra.mxu0 0.0
        %3570 = vmatprep.subr.mxu0 0.0
        %3571 = vmatpush1.xpose.msra.mxu0 0.0
        %3572 = vmatprep.subr.mxu0 0.0
        %3573 = vmatpush1.xpose.msra.mxu0 0.0
        %3574 = vmatprep.subr.mxu0 0.0
        %3575 = vmatpush1.xpose.msra.mxu0 0.0
        %3576 = vmatprep.subr.mxu0 0.0
        %3577 = vmatpush1.xpose.msra.mxu0 0.0
        %3578 = vmatprep.subr.mxu0 0.0
        %3579 = vmatpush1.xpose.msra.mxu0 0.0
        %3580 = vmatprep.subr.mxu0 0.0
        %3581 = vmatpush1.xpose.msra.mxu0 0.0
        %3582 = vmatprep.subr.mxu0 0.0
        %3583 = vmatpush1.xpose.msra.mxu0 0.0
        %3584 = vmatprep.subr.mxu0 0.0
        %3585 = vmatpush1.xpose.msra.mxu0 0.0
        %3586 = vmatprep.subr.mxu0 0.0
        %3587 = vmatpush1.xpose.msra.mxu0 0.0
        %3588 = vmatprep.subr.mxu0 0.0
        %3589 = vmatpush1.xpose.msra.mxu0 0.0
        %3590 = vmatprep.subr.mxu0 0.0
        %3591 = vmatpush1.xpose.msra.mxu0 0.0
        %3592 = vmatprep.subr.mxu0 0.0
        %3593 = vmatpush1.xpose.msra.mxu0 0.0
        %3594 = vmatprep.subr.mxu0 0.0
        %3595 = vmatpush1.xpose.msra.mxu0 0.0
        %3596 = vmatprep.subr.mxu0 0.0
        %3597 = vmatpush1.xpose.msra.mxu0 0.0
        %3598 = vmatprep.subr.mxu0 0.0
        %3599 = vmatpush1.xpose.msra.mxu0 0.0
        %3600 = vmatprep.subr.mxu0 0.0
        %3601 = vmatpush1.xpose.msra.mxu0 0.0
        %3602 = vmatprep.subr.mxu0 0.0
        %3603 = vmatpush1.xpose.msra.mxu0 0.0
        %3604 = vmatprep.subr.mxu0 0.0
        %3605 = vmatpush1.xpose.msra.mxu0 0.0
        %3606 = vmatprep.subr.mxu0 0.0
        %3607 = vmatpush1.xpose.msra.mxu0 0.0
        %3608 = vmatprep.subr.mxu0 0.0
        %3609 = vmatpush1.xpose.msra.mxu0 0.0
        %3610 = vmatprep.subr.mxu0 0.0
        %3611 = vmatpush1.xpose.msra.mxu0 0.0
        %3612 = vmatprep.subr.mxu0 0.0
        %3613 = vmatpush1.xpose.msra.mxu0 0.0
        %3614 = vmatprep.subr.mxu0 0.0
        %3615 = vmatpush1.xpose.msra.mxu0 0.0
        %3616 = vmatprep.subr.mxu0 0.0
        %3617 = vmatpush1.xpose.msra.mxu0 0.0
        %3618 = vmatprep.subr.mxu0 0.0
        %3619 = vmatpush1.xpose.msra.mxu0 0.0
        %3620 = vmatprep.subr.mxu0 0.0
        %3621 = vmatpush1.xpose.msra.mxu0 0.0
        %3622 = vmatprep.subr.mxu0 0.0
        %3623 = vmatpush1.xpose.msra.mxu0 0.0
        %3624 = vmatprep.mubr.f32.mxu0 0.0
        %3625 = vmatmul.mubr.f32.gmra.mrb[0].mxu0 %v3555
        %v3626 = vpop.f32.mrb[0].mxu0
        %v3627 = vadd.f32 0.0, %v3626
        %v3628 = vpop.f32.mrb[0].mxu0
        %3629 = vdwg.mxu0
        %v3630 = vsel %vm824, %v3627, -inf
        %3631 = vmax.xlane.f32.xlu0 %v3630
        %v3632 = vpop.xlane.xlu0 %3631
        %v3633 = vsub.f32 %v3627, %v3632
        %v3634 = vmul.f32 %v3633, 1.442695
        %v3635 = vpow.pop %v3634
        %v3636 = vsel %vm824, %v3635, 0.0
        %3637 = vadd.xlane.f32.xlu0 %v3636
        %v3638 = vpop.xlane.xlu0 %3637
        %v3639 = vrcp.pop %v3638
        %v3640 = vmul.f32 %v3635, %v3639
        %3641 = vrot.lane.b32.xlu0 %v2574, 64
        %v3642 = vpop.permute.xlu0 %3641
        %v3645 = vsel %vm824, %v3640, 0
        %3647 = vmatprep.subr.mxu0 0.0
        %3648 = vmatpush1.msra.mxu0 %v3642
        %3649 = vmatprep.subr.mxu0 0.0
        %3650 = vmatpush1.msra.mxu0 0.0
        %3651 = vmatprep.subr.mxu0 0.0
        %3652 = vmatpush1.msra.mxu0 0.0
        %3653 = vmatprep.subr.mxu0 0.0
        %3654 = vmatpush1.msra.mxu0 0.0
        %3655 = vmatprep.subr.mxu0 0.0
        %3656 = vmatpush1.msra.mxu0 0.0
        %3657 = vmatprep.subr.mxu0 0.0
        %3658 = vmatpush1.msra.mxu0 0.0
        %3659 = vmatprep.subr.mxu0 0.0
        %3660 = vmatpush1.msra.mxu0 0.0
        %3661 = vmatprep.subr.mxu0 0.0
        %3662 = vmatpush1.msra.mxu0 0.0
        %3663 = vmatprep.subr.mxu0 0.0
        %3664 = vmatpush1.msra.mxu0 0.0
        %3665 = vmatprep.subr.mxu0 0.0
        %3666 = vmatpush1.msra.mxu0 0.0
        %3667 = vmatprep.subr.mxu0 0.0
        %3668 = vmatpush1.msra.mxu0 0.0
        %3669 = vmatprep.subr.mxu0 0.0
        %3670 = vmatpush1.msra.mxu0 0.0
        %3671 = vmatprep.subr.mxu0 0.0
        %3672 = vmatpush1.msra.mxu0 0.0
        %3673 = vmatprep.subr.mxu0 0.0
        %3674 = vmatpush1.msra.mxu0 0.0
        %3675 = vmatprep.subr.mxu0 0.0
        %3676 = vmatpush1.msra.mxu0 0.0
        %3677 = vmatprep.subr.mxu0 0.0
        %3678 = vmatpush1.msra.mxu0 0.0
        %3679 = vmatprep.subr.mxu0 0.0
        %3680 = vmatpush1.msra.mxu0 0.0
        %3681 = vmatprep.subr.mxu0 0.0
        %3682 = vmatpush1.msra.mxu0 0.0
        %3683 = vmatprep.subr.mxu0 0.0
        %3684 = vmatpush1.msra.mxu0 0.0
        %3685 = vmatprep.subr.mxu0 0.0
        %3686 = vmatpush1.msra.mxu0 0.0
        %3687 = vmatprep.subr.mxu0 0.0
        %3688 = vmatpush1.msra.mxu0 0.0
        %3689 = vmatprep.subr.mxu0 0.0
        %3690 = vmatpush1.msra.mxu0 0.0
        %3691 = vmatprep.subr.mxu0 0.0
        %3692 = vmatpush1.msra.mxu0 0.0
        %3693 = vmatprep.subr.mxu0 0.0
        %3694 = vmatpush1.msra.mxu0 0.0
        %3695 = vmatprep.subr.mxu0 0.0
        %3696 = vmatpush1.msra.mxu0 0.0
        %3697 = vmatprep.subr.mxu0 0.0
        %3698 = vmatpush1.msra.mxu0 0.0
        %3699 = vmatprep.subr.mxu0 0.0
        %3700 = vmatpush1.msra.mxu0 0.0
        %3701 = vmatprep.subr.mxu0 0.0
        %3702 = vmatpush1.msra.mxu0 0.0
        %3703 = vmatprep.subr.mxu0 0.0
        %3704 = vmatpush1.msra.mxu0 0.0
        %3705 = vmatprep.subr.mxu0 0.0
        %3706 = vmatpush1.msra.mxu0 0.0
        %3707 = vmatprep.subr.mxu0 0.0
        %3708 = vmatpush1.msra.mxu0 0.0
        %3709 = vmatprep.subr.mxu0 0.0
        %3710 = vmatpush1.msra.mxu0 0.0
        %3711 = vmatprep.mubr.f32.mxu0 0.0
        %3712 = vmatmul.mubr.f32.gmra.mrb[0].mxu0 %v3645
        %v3713 = vpop.f32.mrb[0].mxu0
        %v3714 = vadd.f32 0.0, %v3713
        %v3715 = vpop.f32.mrb[0].mxu0
        %3716 = vdwg.mxu0
        %3717 = vrot.lane.b32.xlu0 %v3551, 112
        %v3718 = vpop.permute.xlu0 %3717
        %3719 = vrot.lane.b32.xlu0 %v2574, 112
        %v3720 = vpop.permute.xlu0 %3719
        %v3721 = vsel %vm749, %v3718, 0
        %v3723 = vsel %vm749, %v3720, 0
        %3725 = vmatprep.subr.mxu0 0.0
        %3726 = vmatpush1.xpose.msra.mxu0 %v3723
        %3727 = vmatprep.subr.mxu0 0.0
        %3728 = vmatpush1.xpose.msra.mxu0 0.0
        %3729 = vmatprep.subr.mxu0 0.0
        %3730 = vmatpush1.xpose.msra.mxu0 0.0
        %3731 = vmatprep.subr.mxu0 0.0
        %3732 = vmatpush1.xpose.msra.mxu0 0.0
        %3733 = vmatprep.subr.mxu0 0.0
        %3734 = vmatpush1.xpose.msra.mxu0 0.0
        %3735 = vmatprep.subr.mxu0 0.0
        %3736 = vmatpush1.xpose.msra.mxu0 0.0
        %3737 = vmatprep.subr.mxu0 0.0
        %3738 = vmatpush1.xpose.msra.mxu0 0.0
        %3739 = vmatprep.subr.mxu0 0.0
        %3740 = vmatpush1.xpose.msra.mxu0 0.0
        %3741 = vmatprep.subr.mxu0 0.0
        %3742 = vmatpush1.xpose.msra.mxu0 0.0
        %3743 = vmatprep.subr.mxu0 0.0
        %3744 = vmatpush1.xpose.msra.mxu0 0.0
        %3745 = vmatprep.subr.mxu0 0.0
        %3746 = vmatpush1.xpose.msra.mxu0 0.0
        %3747 = vmatprep.subr.mxu0 0.0
        %3748 = vmatpush1.xpose.msra.mxu0 0.0
        %3749 = vmatprep.subr.mxu0 0.0
        %3750 = vmatpush1.xpose.msra.mxu0 0.0
        %3751 = vmatprep.subr.mxu0 0.0
        %3752 = vmatpush1.xpose.msra.mxu0 0.0
        %3753 = vmatprep.subr.mxu0 0.0
        %3754 = vmatpush1.xpose.msra.mxu0 0.0
        %3755 = vmatprep.subr.mxu0 0.0
        %3756 = vmatpush1.xpose.msra.mxu0 0.0
        %3757 = vmatprep.subr.mxu0 0.0
        %3758 = vmatpush1.xpose.msra.mxu0 0.0
        %3759 = vmatprep.subr.mxu0 0.0
        %3760 = vmatpush1.xpose.msra.mxu0 0.0
        %3761 = vmatprep.subr.mxu0 0.0
        %3762 = vmatpush1.xpose.msra.mxu0 0.0
        %3763 = vmatprep.subr.mxu0 0.0
        %3764 = vmatpush1.xpose.msra.mxu0 0.0
        %3765 = vmatprep.subr.mxu0 0.0
        %3766 = vmatpush1.xpose.msra.mxu0 0.0
        %3767 = vmatprep.subr.mxu0 0.0
        %3768 = vmatpush1.xpose.msra.mxu0 0.0
        %3769 = vmatprep.subr.mxu0 0.0
        %3770 = vmatpush1.xpose.msra.mxu0 0.0
        %3771 = vmatprep.subr.mxu0 0.0
        %3772 = vmatpush1.xpose.msra.mxu0 0.0
        %3773 = vmatprep.subr.mxu0 0.0
        %3774 = vmatpush1.xpose.msra.mxu0 0.0
        %3775 = vmatprep.subr.mxu0 0.0
        %3776 = vmatpush1.xpose.msra.mxu0 0.0
        %3777 = vmatprep.subr.mxu0 0.0
        %3778 = vmatpush1.xpose.msra.mxu0 0.0
        %3779 = vmatprep.subr.mxu0 0.0
        %3780 = vmatpush1.xpose.msra.mxu0 0.0
        %3781 = vmatprep.subr.mxu0 0.0
        %3782 = vmatpush1.xpose.msra.mxu0 0.0
        %3783 = vmatprep.subr.mxu0 0.0
        %3784 = vmatpush1.xpose.msra.mxu0 0.0
        %3785 = vmatprep.subr.mxu0 0.0
        %3786 = vmatpush1.xpose.msra.mxu0 0.0
        %3787 = vmatprep.subr.mxu0 0.0
        %3788 = vmatpush1.xpose.msra.mxu0 0.0
        %3789 = vmatprep.mubr.f32.mxu0 0.0
        %3790 = vmatmul.mubr.f32.gmra.mrb[0].mxu0 %v3721
        %v3791 = vpop.f32.mrb[0].mxu0
        %v3792 = vadd.f32 0.0, %v3791
        %v3793 = vpop.f32.mrb[0].mxu0
        %3794 = vdwg.mxu0
        %v3795 = vsel %vm824, %v3792, -inf
        %3796 = vmax.xlane.f32.xlu0 %v3795
        %v3797 = vpop.xlane.xlu0 %3796
        %v3798 = vsub.f32 %v3792, %v3797
        %v3799 = vmul.f32 %v3798, 1.442695
        %v3800 = vpow.pop %v3799
        %v3801 = vsel %vm824, %v3800, 0.0
        %3802 = vadd.xlane.f32.xlu0 %v3801
        %v3803 = vpop.xlane.xlu0 %3802
        %v3804 = vrcp.pop %v3803
        %v3805 = vmul.f32 %v3800, %v3804
        %3806 = vrot.lane.b32.xlu0 %v2574, 48
        %v3807 = vpop.permute.xlu0 %3806
        %v3810 = vsel %vm824, %v3805, 0
        %3812 = vmatprep.subr.mxu0 0.0
        %3813 = vmatpush1.msra.mxu0 %v3807
        %3814 = vmatprep.subr.mxu0 0.0
        %3815 = vmatpush1.msra.mxu0 0.0
        %3816 = vmatprep.subr.mxu0 0.0
        %3817 = vmatpush1.msra.mxu0 0.0
        %3818 = vmatprep.subr.mxu0 0.0
        %3819 = vmatpush1.msra.mxu0 0.0
        %3820 = vmatprep.subr.mxu0 0.0
        %3821 = vmatpush1.msra.mxu0 0.0
        %3822 = vmatprep.subr.mxu0 0.0
        %3823 = vmatpush1.msra.mxu0 0.0
        %3824 = vmatprep.subr.mxu0 0.0
        %3825 = vmatpush1.msra.mxu0 0.0
        %3826 = vmatprep.subr.mxu0 0.0
        %3827 = vmatpush1.msra.mxu0 0.0
        %3828 = vmatprep.subr.mxu0 0.0
        %3829 = vmatpush1.msra.mxu0 0.0
        %3830 = vmatprep.subr.mxu0 0.0
        %3831 = vmatpush1.msra.mxu0 0.0
        %3832 = vmatprep.subr.mxu0 0.0
        %3833 = vmatpush1.msra.mxu0 0.0
        %3834 = vmatprep.subr.mxu0 0.0
        %3835 = vmatpush1.msra.mxu0 0.0
        %3836 = vmatprep.subr.mxu0 0.0
        %3837 = vmatpush1.msra.mxu0 0.0
        %3838 = vmatprep.subr.mxu0 0.0
        %3839 = vmatpush1.msra.mxu0 0.0
        %3840 = vmatprep.subr.mxu0 0.0
        %3841 = vmatpush1.msra.mxu0 0.0
        %3842 = vmatprep.subr.mxu0 0.0
        %3843 = vmatpush1.msra.mxu0 0.0
        %3844 = vmatprep.subr.mxu0 0.0
        %3845 = vmatpush1.msra.mxu0 0.0
        %3846 = vmatprep.subr.mxu0 0.0
        %3847 = vmatpush1.msra.mxu0 0.0
        %3848 = vmatprep.subr.mxu0 0.0
        %3849 = vmatpush1.msra.mxu0 0.0
        %3850 = vmatprep.subr.mxu0 0.0
        %3851 = vmatpush1.msra.mxu0 0.0
        %3852 = vmatprep.subr.mxu0 0.0
        %3853 = vmatpush1.msra.mxu0 0.0
        %3854 = vmatprep.subr.mxu0 0.0
        %3855 = vmatpush1.msra.mxu0 0.0
        %3856 = vmatprep.subr.mxu0 0.0
        %3857 = vmatpush1.msra.mxu0 0.0
        %3858 = vmatprep.subr.mxu0 0.0
        %3859 = vmatpush1.msra.mxu0 0.0
        %3860 = vmatprep.subr.mxu0 0.0
        %3861 = vmatpush1.msra.mxu0 0.0
        %3862 = vmatprep.subr.mxu0 0.0
        %3863 = vmatpush1.msra.mxu0 0.0
        %3864 = vmatprep.subr.mxu0 0.0
        %3865 = vmatpush1.msra.mxu0 0.0
        %3866 = vmatprep.subr.mxu0 0.0
        %3867 = vmatpush1.msra.mxu0 0.0
        %3868 = vmatprep.subr.mxu0 0.0
        %3869 = vmatpush1.msra.mxu0 0.0
        %3870 = vmatprep.subr.mxu0 0.0
        %3871 = vmatpush1.msra.mxu0 0.0
        %3872 = vmatprep.subr.mxu0 0.0
        %3873 = vmatpush1.msra.mxu0 0.0
        %3874 = vmatprep.subr.mxu0 0.0
        %3875 = vmatpush1.msra.mxu0 0.0
        %3876 = vmatprep.mubr.f32.mxu0 0.0
        %3877 = vmatmul.mubr.f32.gmra.mrb[0].mxu0 %v3810
        %v3878 = vpop.f32.mrb[0].mxu0
        %v3879 = vadd.f32 0.0, %v3878
        %v3880 = vpop.f32.mrb[0].mxu0
        %3881 = vdwg.mxu0
        %3882 = vrot.lane.b32.xlu0 %v3551, 96
        %v3883 = vpop.permute.xlu0 %3882
        %3884 = vrot.lane.b32.xlu0 %v2574, 96
        %v3885 = vpop.permute.xlu0 %3884
        %v3886 = vsel %vm749, %v3883, 0
        %v3888 = vsel %vm749, %v3885, 0
        %3890 = vmatprep.subr.mxu0 0.0
        %3891 = vmatpush1.xpose.msra.mxu0 %v3888
        %3892 = vmatprep.subr.mxu0 0.0
        %3893 = vmatpush1.xpose.msra.mxu0 0.0
        %3894 = vmatprep.subr.mxu0 0.0
        %3895 = vmatpush1.xpose.msra.mxu0 0.0
        %3896 = vmatprep.subr.mxu0 0.0
        %3897 = vmatpush1.xpose.msra.mxu0 0.0
        %3898 = vmatprep.subr.mxu0 0.0
        %3899 = vmatpush1.xpose.msra.mxu0 0.0
        %3900 = vmatprep.subr.mxu0 0.0
        %3901 = vmatpush1.xpose.msra.mxu0 0.0
        %3902 = vmatprep.subr.mxu0 0.0
        %3903 = vmatpush1.xpose.msra.mxu0 0.0
        %3904 = vmatprep.subr.mxu0 0.0
        %3905 = vmatpush1.xpose.msra.mxu0 0.0
        %3906 = vmatprep.subr.mxu0 0.0
        %3907 = vmatpush1.xpose.msra.mxu0 0.0
        %3908 = vmatprep.subr.mxu0 0.0
        %3909 = vmatpush1.xpose.msra.mxu0 0.0
        %3910 = vmatprep.subr.mxu0 0.0
        %3911 = vmatpush1.xpose.msra.mxu0 0.0
        %3912 = vmatprep.subr.mxu0 0.0
        %3913 = vmatpush1.xpose.msra.mxu0 0.0
        %3914 = vmatprep.subr.mxu0 0.0
        %3915 = vmatpush1.xpose.msra.mxu0 0.0
        %3916 = vmatprep.subr.mxu0 0.0
        %3917 = vmatpush1.xpose.msra.mxu0 0.0
        %3918 = vmatprep.subr.mxu0 0.0
        %3919 = vmatpush1.xpose.msra.mxu0 0.0
        %3920 = vmatprep.subr.mxu0 0.0
        %3921 = vmatpush1.xpose.msra.mxu0 0.0
        %3922 = vmatprep.subr.mxu0 0.0
        %3923 = vmatpush1.xpose.msra.mxu0 0.0
        %3924 = vmatprep.subr.mxu0 0.0
        %3925 = vmatpush1.xpose.msra.mxu0 0.0
        %3926 = vmatprep.subr.mxu0 0.0
        %3927 = vmatpush1.xpose.msra.mxu0 0.0
        %3928 = vmatprep.subr.mxu0 0.0
        %3929 = vmatpush1.xpose.msra.mxu0 0.0
        %3930 = vmatprep.subr.mxu0 0.0
        %3931 = vmatpush1.xpose.msra.mxu0 0.0
        %3932 = vmatprep.subr.mxu0 0.0
        %3933 = vmatpush1.xpose.msra.mxu0 0.0
        %3934 = vmatprep.subr.mxu0 0.0
        %3935 = vmatpush1.xpose.msra.mxu0 0.0
        %3936 = vmatprep.subr.mxu0 0.0
        %3937 = vmatpush1.xpose.msra.mxu0 0.0
        %3938 = vmatprep.subr.mxu0 0.0
        %3939 = vmatpush1.xpose.msra.mxu0 0.0
        %3940 = vmatprep.subr.mxu0 0.0
        %3941 = vmatpush1.xpose.msra.mxu0 0.0
        %3942 = vmatprep.subr.mxu0 0.0
        %3943 = vmatpush1.xpose.msra.mxu0 0.0
        %3944 = vmatprep.subr.mxu0 0.0
        %3945 = vmatpush1.xpose.msra.mxu0 0.0
        %3946 = vmatprep.subr.mxu0 0.0
        %3947 = vmatpush1.xpose.msra.mxu0 0.0
        %3948 = vmatprep.subr.mxu0 0.0
        %3949 = vmatpush1.xpose.msra.mxu0 0.0
        %3950 = vmatprep.subr.mxu0 0.0
        %3951 = vmatpush1.xpose.msra.mxu0 0.0
        %3952 = vmatprep.subr.mxu0 0.0
        %3953 = vmatpush1.xpose.msra.mxu0 0.0
        %3954 = vmatprep.mubr.f32.mxu0 0.0
        %3955 = vmatmul.mubr.f32.gmra.mrb[0].mxu0 %v3886
        %v3956 = vpop.f32.mrb[0].mxu0
        %v3957 = vadd.f32 0.0, %v3956
        %v3958 = vpop.f32.mrb[0].mxu0
        %3959 = vdwg.mxu0
        %v3960 = vsel %vm824, %v3957, -inf
        %3961 = vmax.xlane.f32.xlu0 %v3960
        %v3962 = vpop.xlane.xlu0 %3961
        %v3963 = vsub.f32 %v3957, %v3962
        %v3964 = vmul.f32 %v3963, 1.442695
        %v3965 = vpow.pop %v3964
        %v3966 = vsel %vm824, %v3965, 0.0
        %3967 = vadd.xlane.f32.xlu0 %v3966
        %v3968 = vpop.xlane.xlu0 %3967
        %v3969 = vrcp.pop %v3968
        %v3970 = vmul.f32 %v3965, %v3969
        %3971 = vrot.lane.b32.xlu0 %v2574, 32
        %v3972 = vpop.permute.xlu0 %3971
        %v3975 = vsel %vm824, %v3970, 0
        %3977 = vmatprep.subr.mxu0 0.0
        %3978 = vmatpush1.msra.mxu0 %v3972
        %3979 = vmatprep.subr.mxu0 0.0
        %3980 = vmatpush1.msra.mxu0 0.0
        %3981 = vmatprep.subr.mxu0 0.0
        %3982 = vmatpush1.msra.mxu0 0.0
        %3983 = vmatprep.subr.mxu0 0.0
        %3984 = vmatpush1.msra.mxu0 0.0
        %3985 = vmatprep.subr.mxu0 0.0
        %3986 = vmatpush1.msra.mxu0 0.0
        %3987 = vmatprep.subr.mxu0 0.0
        %3988 = vmatpush1.msra.mxu0 0.0
        %3989 = vmatprep.subr.mxu0 0.0
        %3990 = vmatpush1.msra.mxu0 0.0
        %3991 = vmatprep.subr.mxu0 0.0
        %3992 = vmatpush1.msra.mxu0 0.0
        %3993 = vmatprep.subr.mxu0 0.0
        %3994 = vmatpush1.msra.mxu0 0.0
        %3995 = vmatprep.subr.mxu0 0.0
        %3996 = vmatpush1.msra.mxu0 0.0
        %3997 = vmatprep.subr.mxu0 0.0
        %3998 = vmatpush1.msra.mxu0 0.0
        %3999 = vmatprep.subr.mxu0 0.0
        %4000 = vmatpush1.msra.mxu0 0.0
        %4001 = vmatprep.subr.mxu0 0.0
        %4002 = vmatpush1.msra.mxu0 0.0
        %4003 = vmatprep.subr.mxu0 0.0
        %4004 = vmatpush1.msra.mxu0 0.0
        %4005 = vmatprep.subr.mxu0 0.0
        %4006 = vmatpush1.msra.mxu0 0.0
        %4007 = vmatprep.subr.mxu0 0.0
        %4008 = vmatpush1.msra.mxu0 0.0
        %4009 = vmatprep.subr.mxu0 0.0
        %4010 = vmatpush1.msra.mxu0 0.0
        %4011 = vmatprep.subr.mxu0 0.0
        %4012 = vmatpush1.msra.mxu0 0.0
        %4013 = vmatprep.subr.mxu0 0.0
        %4014 = vmatpush1.msra.mxu0 0.0
        %4015 = vmatprep.subr.mxu0 0.0
        %4016 = vmatpush1.msra.mxu0 0.0
        %4017 = vmatprep.subr.mxu0 0.0
        %4018 = vmatpush1.msra.mxu0 0.0
        %4019 = vmatprep.subr.mxu0 0.0
        %4020 = vmatpush1.msra.mxu0 0.0
        %4021 = vmatprep.subr.mxu0 0.0
        %4022 = vmatpush1.msra.mxu0 0.0
        %4023 = vmatprep.subr.mxu0 0.0
        %4024 = vmatpush1.msra.mxu0 0.0
        %4025 = vmatprep.subr.mxu0 0.0
        %4026 = vmatpush1.msra.mxu0 0.0
        %4027 = vmatprep.subr.mxu0 0.0
        %4028 = vmatpush1.msra.mxu0 0.0
        %4029 = vmatprep.subr.mxu0 0.0
        %4030 = vmatpush1.msra.mxu0 0.0
        %4031 = vmatprep.subr.mxu0 0.0
        %4032 = vmatpush1.msra.mxu0 0.0
        %4033 = vmatprep.subr.mxu0 0.0
        %4034 = vmatpush1.msra.mxu0 0.0
        %4035 = vmatprep.subr.mxu0 0.0
        %4036 = vmatpush1.msra.mxu0 0.0
        %4037 = vmatprep.subr.mxu0 0.0
        %4038 = vmatpush1.msra.mxu0 0.0
        %4039 = vmatprep.subr.mxu0 0.0
        %4040 = vmatpush1.msra.mxu0 0.0
        %4041 = vmatprep.mubr.f32.mxu0 0.0
        %4042 = vmatmul.mubr.f32.gmra.mrb[0].mxu0 %v3975
        %v4043 = vpop.f32.mrb[0].mxu0
        %v4044 = vadd.f32 0.0, %v4043
        %v4045 = vpop.f32.mrb[0].mxu0
        %4046 = vdwg.mxu0
        %4047 = vrot.lane.b32.xlu0 %v3551, 80
        %v4048 = vpop.permute.xlu0 %4047
        %4049 = vrot.lane.b32.xlu0 %v2574, 80
        %v4050 = vpop.permute.xlu0 %4049
        %v4051 = vsel %vm749, %v4048, 0
        %v4053 = vsel %vm749, %v4050, 0
        %4055 = vmatprep.subr.mxu0 0.0
        %4056 = vmatpush1.xpose.msra.mxu0 %v4053
        %4057 = vmatprep.subr.mxu0 0.0
        %4058 = vmatpush1.xpose.msra.mxu0 0.0
        %4059 = vmatprep.subr.mxu0 0.0
        %4060 = vmatpush1.xpose.msra.mxu0 0.0
        %4061 = vmatprep.subr.mxu0 0.0
        %4062 = vmatpush1.xpose.msra.mxu0 0.0
        %4063 = vmatprep.subr.mxu0 0.0
        %4064 = vmatpush1.xpose.msra.mxu0 0.0
        %4065 = vmatprep.subr.mxu0 0.0
        %4066 = vmatpush1.xpose.msra.mxu0 0.0
        %4067 = vmatprep.subr.mxu0 0.0
        %4068 = vmatpush1.xpose.msra.mxu0 0.0
        %4069 = vmatprep.subr.mxu0 0.0
        %4070 = vmatpush1.xpose.msra.mxu0 0.0
        %4071 = vmatprep.subr.mxu0 0.0
        %4072 = vmatpush1.xpose.msra.mxu0 0.0
        %4073 = vmatprep.subr.mxu0 0.0
        %4074 = vmatpush1.xpose.msra.mxu0 0.0
        %4075 = vmatprep.subr.mxu0 0.0
        %4076 = vmatpush1.xpose.msra.mxu0 0.0
        %4077 = vmatprep.subr.mxu0 0.0
        %4078 = vmatpush1.xpose.msra.mxu0 0.0
        %4079 = vmatprep.subr.mxu0 0.0
        %4080 = vmatpush1.xpose.msra.mxu0 0.0
        %4081 = vmatprep.subr.mxu0 0.0
        %4082 = vmatpush1.xpose.msra.mxu0 0.0
        %4083 = vmatprep.subr.mxu0 0.0
        %4084 = vmatpush1.xpose.msra.mxu0 0.0
        %4085 = vmatprep.subr.mxu0 0.0
        %4086 = vmatpush1.xpose.msra.mxu0 0.0
        %4087 = vmatprep.subr.mxu0 0.0
        %4088 = vmatpush1.xpose.msra.mxu0 0.0
        %4089 = vmatprep.subr.mxu0 0.0
        %4090 = vmatpush1.xpose.msra.mxu0 0.0
        %4091 = vmatprep.subr.mxu0 0.0
        %4092 = vmatpush1.xpose.msra.mxu0 0.0
        %4093 = vmatprep.subr.mxu0 0.0
        %4094 = vmatpush1.xpose.msra.mxu0 0.0
        %4095 = vmatprep.subr.mxu0 0.0
        %4096 = vmatpush1.xpose.msra.mxu0 0.0
        %4097 = vmatprep.subr.mxu0 0.0
        %4098 = vmatpush1.xpose.msra.mxu0 0.0
        %4099 = vmatprep.subr.mxu0 0.0
        %4100 = vmatpush1.xpose.msra.mxu0 0.0
        %4101 = vmatprep.subr.mxu0 0.0
        %4102 = vmatpush1.xpose.msra.mxu0 0.0
        %4103 = vmatprep.subr.mxu0 0.0
        %4104 = vmatpush1.xpose.msra.mxu0 0.0
        %4105 = vmatprep.subr.mxu0 0.0
        %4106 = vmatpush1.xpose.msra.mxu0 0.0
        %4107 = vmatprep.subr.mxu0 0.0
        %4108 = vmatpush1.xpose.msra.mxu0 0.0
        %4109 = vmatprep.subr.mxu0 0.0
        %4110 = vmatpush1.xpose.msra.mxu0 0.0
        %4111 = vmatprep.subr.mxu0 0.0
        %4112 = vmatpush1.xpose.msra.mxu0 0.0
        %4113 = vmatprep.subr.mxu0 0.0
        %4114 = vmatpush1.xpose.msra.mxu0 0.0
        %4115 = vmatprep.subr.mxu0 0.0
        %4116 = vmatpush1.xpose.msra.mxu0 0.0
        %4117 = vmatprep.subr.mxu0 0.0
        %4118 = vmatpush1.xpose.msra.mxu0 0.0
        %4119 = vmatprep.mubr.f32.mxu0 0.0
        %4120 = vmatmul.mubr.f32.gmra.mrb[0].mxu0 %v4051
        %v4121 = vpop.f32.mrb[0].mxu0
        %v4122 = vadd.f32 0.0, %v4121
        %v4123 = vpop.f32.mrb[0].mxu0
        %4124 = vdwg.mxu0
        %v4125 = vsel %vm824, %v4122, -inf
        %4126 = vmax.xlane.f32.xlu0 %v4125
        %v4127 = vpop.xlane.xlu0 %4126
        %v4128 = vsub.f32 %v4122, %v4127
        %v4129 = vmul.f32 %v4128, 1.442695
        %v4130 = vpow.pop %v4129
        %v4131 = vsel %vm824, %v4130, 0.0
        %4132 = vadd.xlane.f32.xlu0 %v4131
        %v4133 = vpop.xlane.xlu0 %4132
        %v4134 = vrcp.pop %v4133
        %v4135 = vmul.f32 %v4130, %v4134
        %4136 = vrot.lane.b32.xlu0 %v2574, 16
        %v4137 = vpop.permute.xlu0 %4136
        %v4140 = vsel %vm824, %v4135, 0
        %4142 = vmatprep.subr.mxu0 0.0
        %4143 = vmatpush1.msra.mxu0 %v4137
        %4144 = vmatprep.subr.mxu0 0.0
        %4145 = vmatpush1.msra.mxu0 0.0
        %4146 = vmatprep.subr.mxu0 0.0
        %4147 = vmatpush1.msra.mxu0 0.0
        %4148 = vmatprep.subr.mxu0 0.0
        %4149 = vmatpush1.msra.mxu0 0.0
        %4150 = vmatprep.subr.mxu0 0.0
        %4151 = vmatpush1.msra.mxu0 0.0
        %4152 = vmatprep.subr.mxu0 0.0
        %4153 = vmatpush1.msra.mxu0 0.0
        %4154 = vmatprep.subr.mxu0 0.0
        %4155 = vmatpush1.msra.mxu0 0.0
        %4156 = vmatprep.subr.mxu0 0.0
        %4157 = vmatpush1.msra.mxu0 0.0
        %4158 = vmatprep.subr.mxu0 0.0
        %4159 = vmatpush1.msra.mxu0 0.0
        %4160 = vmatprep.subr.mxu0 0.0
        %4161 = vmatpush1.msra.mxu0 0.0
        %4162 = vmatprep.subr.mxu0 0.0
        %4163 = vmatpush1.msra.mxu0 0.0
        %4164 = vmatprep.subr.mxu0 0.0
        %4165 = vmatpush1.msra.mxu0 0.0
        %4166 = vmatprep.subr.mxu0 0.0
        %4167 = vmatpush1.msra.mxu0 0.0
        %4168 = vmatprep.subr.mxu0 0.0
        %4169 = vmatpush1.msra.mxu0 0.0
        %4170 = vmatprep.subr.mxu0 0.0
        %4171 = vmatpush1.msra.mxu0 0.0
        %4172 = vmatprep.subr.mxu0 0.0
        %4173 = vmatpush1.msra.mxu0 0.0
        %4174 = vmatprep.subr.mxu0 0.0
        %4175 = vmatpush1.msra.mxu0 0.0
        %4176 = vmatprep.subr.mxu0 0.0
        %4177 = vmatpush1.msra.mxu0 0.0
        %4178 = vmatprep.subr.mxu0 0.0
        %4179 = vmatpush1.msra.mxu0 0.0
        %4180 = vmatprep.subr.mxu0 0.0
        %4181 = vmatpush1.msra.mxu0 0.0
        %4182 = vmatprep.subr.mxu0 0.0
        %4183 = vmatpush1.msra.mxu0 0.0
        %4184 = vmatprep.subr.mxu0 0.0
        %4185 = vmatpush1.msra.mxu0 0.0
        %4186 = vmatprep.subr.mxu0 0.0
        %4187 = vmatpush1.msra.mxu0 0.0
        %4188 = vmatprep.subr.mxu0 0.0
        %4189 = vmatpush1.msra.mxu0 0.0
        %4190 = vmatprep.subr.mxu0 0.0
        %4191 = vmatpush1.msra.mxu0 0.0
        %4192 = vmatprep.subr.mxu0 0.0
        %4193 = vmatpush1.msra.mxu0 0.0
        %4194 = vmatprep.subr.mxu0 0.0
        %4195 = vmatpush1.msra.mxu0 0.0
        %4196 = vmatprep.subr.mxu0 0.0
        %4197 = vmatpush1.msra.mxu0 0.0
        %4198 = vmatprep.subr.mxu0 0.0
        %4199 = vmatpush1.msra.mxu0 0.0
        %4200 = vmatprep.subr.mxu0 0.0
        %4201 = vmatpush1.msra.mxu0 0.0
        %4202 = vmatprep.subr.mxu0 0.0
        %4203 = vmatpush1.msra.mxu0 0.0
        %4204 = vmatprep.subr.mxu0 0.0
        %4205 = vmatpush1.msra.mxu0 0.0
        %4206 = vmatprep.mubr.f32.mxu0 0.0
        %4207 = vmatmul.mubr.f32.gmra.mrb[0].mxu0 %v4140
        %v4208 = vpop.f32.mrb[0].mxu0
        %v4209 = vadd.f32 0.0, %v4208
        %v4210 = vpop.f32.mrb[0].mxu0
        %4211 = vdwg.mxu0
        %4213 = vrot.lane.b32.xlu0 %v3879, 16
        %v4214 = vpop.permute.xlu0 %4213
        %4217 = vrot.lane.b32.xlu0 %v4044, 32
        %v4218 = vpop.permute.xlu0 %4217
        %4221 = vrot.lane.b32.xlu0 %v4209, 48
        %v4222 = vpop.permute.xlu0 %4221
        %v4224 = vsel %vm749, %v3714, %v4214
        %v4225 = vsel %vm1418, %v4224, %v4218
        %v4226 = vsel %vm1420, %v4225, %v4222
        %v4227 = vld [vmem:[%s15] sm:$0xff]
        %v4228 = vld [vmem:[%s15 + $0x8] sm:$0xff]
        %v4229 = vld [vmem:[%s15 + $0x10] sm:$0xff]
        %v4230 = vld [vmem:[%s15 + $0x18] sm:$0xff]
        %v4231 = vld [vmem:[%s15 + $0x20] sm:$0xff]
        %v4232 = vld [vmem:[%s15 + $0x28] sm:$0xff]
        %v4233 = vld [vmem:[%s15 + $0x30] sm:$0xff]
        %v4234 = vld [vmem:[%s15 + $0x38] sm:$0xff]
        %v4235 = vld [vmem:[%s16] sm:$0x1]
        %v4237 = vlaneseq
        %v4238 = vshrl.u32 %v4237, 7
        %v4239 = vsub.s32 0, %v4238
        %v4240 = vrot.slane %v4235, %v4239
        %v4243 = vsel %vm671, %v4226, 0
        %4245 = vmatprep.subr.mxu0 0.0
        %4246 = vmatpush1.msra.mxu0 %v4227
        %4247 = vmatprep.subr.mxu0 0.0
        %4248 = vmatpush1.msra.mxu0 %v4228
        %4249 = vmatprep.subr.mxu0 0.0
        %4250 = vmatpush1.msra.mxu0 %v4229
        %4251 = vmatprep.subr.mxu0 0.0
        %4252 = vmatpush1.msra.mxu0 %v4230
        %4253 = vmatprep.subr.mxu0 0.0
        %4254 = vmatpush1.msra.mxu0 %v4231
        %4255 = vmatprep.subr.mxu0 0.0
        %4256 = vmatpush1.msra.mxu0 %v4232
        %4257 = vmatprep.subr.mxu0 0.0
        %4258 = vmatpush1.msra.mxu0 %v4233
        %4259 = vmatprep.subr.mxu0 0.0
        %4260 = vmatpush1.msra.mxu0 %v4234
        %4261 = vmatprep.subr.mxu0 0.0
        %4262 = vmatpush1.msra.mxu0 0.0
        %4263 = vmatprep.subr.mxu0 0.0
        %4264 = vmatpush1.msra.mxu0 0.0
        %4265 = vmatprep.subr.mxu0 0.0
        %4266 = vmatpush1.msra.mxu0 0.0
        %4267 = vmatprep.subr.mxu0 0.0
        %4268 = vmatpush1.msra.mxu0 0.0
        %4269 = vmatprep.subr.mxu0 0.0
        %4270 = vmatpush1.msra.mxu0 0.0
        %4271 = vmatprep.subr.mxu0 0.0
        %4272 = vmatpush1.msra.mxu0 0.0
        %4273 = vmatprep.subr.mxu0 0.0
        %4274 = vmatpush1.msra.mxu0 0.0
        %4275 = vmatprep.subr.mxu0 0.0
        %4276 = vmatpush1.msra.mxu0 0.0
        %4277 = vmatprep.subr.mxu0 0.0
        %4278 = vmatpush1.msra.mxu0 0.0
        %4279 = vmatprep.subr.mxu0 0.0
        %4280 = vmatpush1.msra.mxu0 0.0
        %4281 = vmatprep.subr.mxu0 0.0
        %4282 = vmatpush1.msra.mxu0 0.0
        %4283 = vmatprep.subr.mxu0 0.0
        %4284 = vmatpush1.msra.mxu0 0.0
        %4285 = vmatprep.subr.mxu0 0.0
        %4286 = vmatpush1.msra.mxu0 0.0
        %4287 = vmatprep.subr.mxu0 0.0
        %4288 = vmatpush1.msra.mxu0 0.0
        %4289 = vmatprep.subr.mxu0 0.0
        %4290 = vmatpush1.msra.mxu0 0.0
        %4291 = vmatprep.subr.mxu0 0.0
        %4292 = vmatpush1.msra.mxu0 0.0
        %4293 = vmatprep.subr.mxu0 0.0
        %4294 = vmatpush1.msra.mxu0 0.0
        %4295 = vmatprep.subr.mxu0 0.0
        %4296 = vmatpush1.msra.mxu0 0.0
        %4297 = vmatprep.subr.mxu0 0.0
        %4298 = vmatpush1.msra.mxu0 0.0
        %4299 = vmatprep.subr.mxu0 0.0
        %4300 = vmatpush1.msra.mxu0 0.0
        %4301 = vmatprep.subr.mxu0 0.0
        %4302 = vmatpush1.msra.mxu0 0.0
        %4303 = vmatprep.subr.mxu0 0.0
        %4304 = vmatpush1.msra.mxu0 0.0
        %4305 = vmatprep.subr.mxu0 0.0
        %4306 = vmatpush1.msra.mxu0 0.0
        %4307 = vmatprep.subr.mxu0 0.0
        %4308 = vmatpush1.msra.mxu0 0.0
        %4309 = vmatprep.mubr.f32.mxu0 0.0
        %4310 = vmatmul.mubr.f32.gmra.mrb[0].mxu0 %v4243
        %v4311 = vpop.f32.mrb[0].mxu0
        %v4312 = vadd.f32 %v4240, %v4311
        %v4313 = vpop.f32.mrb[0].mxu0
        %4314 = vdwg.mxu0
        %v4315 = vadd.f32 %v4312, %v3465
        %v4316 = vsel %vm671, %v4315, 0.0
        %4317 = vadd.xlane.f32.xlu0 %v4316
        %v4318 = vpop.xlane.xlu0 %4317
        %v4319 = vmul.f32 %v4318, %v1515
        %v4320 = vsub.f32 %v4315, %v4319
        %v4321 = vmul.f32 %v4320, %v4320
        %v4322 = vsel %vm671, %v4321, 0.0
        %4323 = vadd.xlane.f32.xlu0 %v4322
        %v4324 = vpop.xlane.xlu0 %4323
        %v4325 = vmul.f32 %v4324, %v1515
        %v4326 = vadd.f32 %v4325, 1e-05
        %v4327 = vrsqrt.pop %v4326
        %v4328 = vmul.f32 %v4320, %v4327
        %v4329 = vlaneseq
        %v4330 = vshrl.u32 %v4329, 7
        %v4331 = vsub.s32 2, %v4330
        %v4332 = vrot.slane %v2579, %v4331
        %v4333 = vmul.f32 %v4328, %v4332
        %v4334 = vlaneseq
        %v4335 = vshrl.u32 %v4334, 7
        %v4336 = vsub.s32 3, %v4335
        %v4337 = vrot.slane %v2579, %v4336
        %v4338 = vadd.f32 %v4333, %v4337
        %v4339 = vadd.f32 %v4338, %v4338
        %v4340 = vsel %vm671, %v4339, 0.0
        %4341 = vadd.xlane.f32.xlu0 %v4340
        %v4342 = vpop.xlane.xlu0 %4341
        %v4343 = vmul.f32 %v4342, %v1515
        %v4344 = vsub.f32 %v4339, %v4343
        %v4345 = vmul.f32 %v4344, %v4344
        %v4346 = vsel %vm671, %v4345, 0.0
        %4347 = vadd.xlane.f32.xlu0 %v4346
        %v4348 = vpop.xlane.xlu0 %4347
        %v4349 = vmul.f32 %v4348, %v1515
        %v4350 = vadd.f32 %v4349, 1e-05
        %v4351 = vrsqrt.pop %v4350
        %v4352 = vmul.f32 %v4344, %v4351
        %v4353 = vlaneseq
        %v4354 = vshrl.u32 %v4353, 7
        %v4355 = vsub.s32 4, %v4354
        %v4356 = vrot.slane %v2579, %v4355
        %v4357 = vmul.f32 %v4352, %v4356
        %v4358 = vlaneseq
        %v4359 = vshrl.u32 %v4358, 7
        %v4360 = vsub.s32 5, %v4359
        %v4361 = vrot.slane %v2579, %v4360
        %v4362 = vadd.f32 %v4357, %v4361
        %s4363 = scalar_lea.vmem %s17, 8
        %v4364 = vld [vmem:[%s4363] sm:$0x3f]
        %s4365 = scalar_lea.vmem %s7, 128
        %v4366 = vld [vmem:[%s4365] sm:$0xff]
        %v4367 = vld [vmem:[%s4365 + $0x8] sm:$0xff]
        %v4368 = vld [vmem:[%s4365 + $0x10] sm:$0xff]
        %v4369 = vld [vmem:[%s4365 + $0x18] sm:$0xff]
        %v4370 = vld [vmem:[%s4365 + $0x20] sm:$0xff]
        %v4371 = vld [vmem:[%s4365 + $0x28] sm:$0xff]
        %v4372 = vld [vmem:[%s4365 + $0x30] sm:$0xff]
        %v4373 = vld [vmem:[%s4365 + $0x38] sm:$0xff]
        %v4374 = vld [vmem:[%s4365 + $0x40] sm:$0xff]
        %v4375 = vld [vmem:[%s4365 + $0x48] sm:$0xff]
        %v4376 = vld [vmem:[%s4365 + $0x50] sm:$0xff]
        %v4377 = vld [vmem:[%s4365 + $0x58] sm:$0xff]
        %v4378 = vld [vmem:[%s4365 + $0x60] sm:$0xff]
        %v4379 = vld [vmem:[%s4365 + $0x68] sm:$0xff]
        %v4380 = vld [vmem:[%s4365 + $0x70] sm:$0xff]
        %v4381 = vld [vmem:[%s4365 + $0x78] sm:$0xff]
        %s4382 = scalar_lea.vmem %s8, 2
        %v4383 = vld [vmem:[%s4382] sm:$0x3]
        %v4385 = vlaneseq
        %v4386 = vshrl.u32 %v4385, 7
        %v4387 = vsub.s32 0, %v4386
        %v4388 = vrot.slane %v4383, %v4387
        %v4389 = vlaneseq
        %v4390 = vshrl.u32 %v4389, 7
        %v4391 = vsub.s32 1, %v4390
        %v4392 = vrot.slane %v4383, %v4391
        %v4396 = vsel %vm671, %v4362, 0
        %4398 = vmatprep.subr.mxu0 %v4367
        %4399 = vmatpush1.msra.mxu0 %v4366
        %4400 = vmatprep.subr.mxu0 %v4369
        %4401 = vmatpush1.msra.mxu0 %v4368
        %4402 = vmatprep.subr.mxu0 %v4371
        %4403 = vmatpush1.msra.mxu0 %v4370
        %4404 = vmatprep.subr.mxu0 %v4373
        %4405 = vmatpush1.msra.mxu0 %v4372
        %4406 = vmatprep.subr.mxu0 %v4375
        %4407 = vmatpush1.msra.mxu0 %v4374
        %4408 = vmatprep.subr.mxu0 %v4377
        %4409 = vmatpush1.msra.mxu0 %v4376
        %4410 = vmatprep.subr.mxu0 %v4379
        %4411 = vmatpush1.msra.mxu0 %v4378
        %4412 = vmatprep.subr.mxu0 %v4381
        %4413 = vmatpush1.msra.mxu0 %v4380
        %4414 = vmatprep.subr.mxu0 0.0
        %4415 = vmatpush1.msra.mxu0 0.0
        %4416 = vmatprep.subr.mxu0 0.0
        %4417 = vmatpush1.msra.mxu0 0.0
        %4418 = vmatprep.subr.mxu0 0.0
        %4419 = vmatpush1.msra.mxu0 0.0
        %4420 = vmatprep.subr.mxu0 0.0
        %4421 = vmatpush1.msra.mxu0 0.0
        %4422 = vmatprep.subr.mxu0 0.0
        %4423 = vmatpush1.msra.mxu0 0.0
        %4424 = vmatprep.subr.mxu0 0.0
        %4425 = vmatpush1.msra.mxu0 0.0
        %4426 = vmatprep.subr.mxu0 0.0
        %4427 = vmatpush1.msra.mxu0 0.0
        %4428 = vmatprep.subr.mxu0 0.0
        %4429 = vmatpush1.msra.mxu0 0.0
        %4430 = vmatprep.subr.mxu0 0.0
        %4431 = vmatpush1.msra.mxu0 0.0
        %4432 = vmatprep.subr.mxu0 0.0
        %4433 = vmatpush1.msra.mxu0 0.0
        %4434 = vmatprep.subr.mxu0 0.0
        %4435 = vmatpush1.msra.mxu0 0.0
        %4436 = vmatprep.subr.mxu0 0.0
        %4437 = vmatpush1.msra.mxu0 0.0
        %4438 = vmatprep.subr.mxu0 0.0
        %4439 = vmatpush1.msra.mxu0 0.0
        %4440 = vmatprep.subr.mxu0 0.0
        %4441 = vmatpush1.msra.mxu0 0.0
        %4442 = vmatprep.subr.mxu0 0.0
        %4443 = vmatpush1.msra.mxu0 0.0
        %4444 = vmatprep.subr.mxu0 0.0
        %4445 = vmatpush1.msra.mxu0 0.0
        %4446 = vmatprep.subr.mxu0 0.0
        %4447 = vmatpush1.msra.mxu0 0.0
        %4448 = vmatprep.subr.mxu0 0.0
        %4449 = vmatpush1.msra.mxu0 0.0
        %4450 = vmatprep.subr.mxu0 0.0
        %4451 = vmatpush1.msra.mxu0 0.0
        %4452 = vmatprep.subr.mxu0 0.0
        %4453 = vmatpush1.msra.mxu0 0.0
        %4454 = vmatprep.subr.mxu0 0.0
        %4455 = vmatpush1.msra.mxu0 0.0
        %4456 = vmatprep.subr.mxu0 0.0
        %4457 = vmatpush1.msra.mxu0 0.0
        %4458 = vmatprep.subr.mxu0 0.0
        %4459 = vmatpush1.msra.mxu0 0.0
        %4460 = vmatprep.subr.mxu0 0.0
        %4461 = vmatpush1.msra.mxu0 0.0
        %4462 = vmatprep.mubr.f32.mxu0 0.0
        %4463 = vmatmul.mubr.f32.gmra.mrb[0].mxu0 %v4396
        %v4464 = vpop.f32.mrb[0].mxu0
        %v4465 = vadd.f32 %v4388, %v4464
        %v4466 = vpop.f32.mrb[0].mxu0
        %v4467 = vadd.f32 %v4392, %v4466
        %4468 = vdwg.mxu0
        %4470 = vrot.lane.b32.xlu0 %v4465, 64
        %v4471 = vpop.permute.xlu0 %4470
        %v4472 = vsel %vm749, %v4465, 0
        %v4474 = vsel %vm749, %v4471, 0
        %4476 = vmatprep.subr.mxu0 0.0
        %4477 = vmatpush1.xpose.msra.mxu0 %v4474
        %4478 = vmatprep.subr.mxu0 0.0
        %4479 = vmatpush1.xpose.msra.mxu0 0.0
        %4480 = vmatprep.subr.mxu0 0.0
        %4481 = vmatpush1.xpose.msra.mxu0 0.0
        %4482 = vmatprep.subr.mxu0 0.0
        %4483 = vmatpush1.xpose.msra.mxu0 0.0
        %4484 = vmatprep.subr.mxu0 0.0
        %4485 = vmatpush1.xpose.msra.mxu0 0.0
        %4486 = vmatprep.subr.mxu0 0.0
        %4487 = vmatpush1.xpose.msra.mxu0 0.0
        %4488 = vmatprep.subr.mxu0 0.0
        %4489 = vmatpush1.xpose.msra.mxu0 0.0
        %4490 = vmatprep.subr.mxu0 0.0
        %4491 = vmatpush1.xpose.msra.mxu0 0.0
        %4492 = vmatprep.subr.mxu0 0.0
        %4493 = vmatpush1.xpose.msra.mxu0 0.0
        %4494 = vmatprep.subr.mxu0 0.0
        %4495 = vmatpush1.xpose.msra.mxu0 0.0
        %4496 = vmatprep.subr.mxu0 0.0
        %4497 = vmatpush1.xpose.msra.mxu0 0.0
        %4498 = vmatprep.subr.mxu0 0.0
        %4499 = vmatpush1.xpose.msra.mxu0 0.0
        %4500 = vmatprep.subr.mxu0 0.0
        %4501 = vmatpush1.xpose.msra.mxu0 0.0
        %4502 = vmatprep.subr.mxu0 0.0
        %4503 = vmatpush1.xpose.msra.mxu0 0.0
        %4504 = vmatprep.subr.mxu0 0.0
        %4505 = vmatpush1.xpose.msra.mxu0 0.0
        %4506 = vmatprep.subr.mxu0 0.0
        %4507 = vmatpush1.xpose.msra.mxu0 0.0
        %4508 = vmatprep.subr.mxu0 0.0
        %4509 = vmatpush1.xpose.msra.mxu0 0.0
        %4510 = vmatprep.subr.mxu0 0.0
        %4511 = vmatpush1.xpose.msra.mxu0 0.0
        %4512 = vmatprep.subr.mxu0 0.0
        %4513 = vmatpush1.xpose.msra.mxu0 0.0
        %4514 = vmatprep.subr.mxu0 0.0
        %4515 = vmatpush1.xpose.msra.mxu0 0.0
        %4516 = vmatprep.subr.mxu0 0.0
        %4517 = vmatpush1.xpose.msra.mxu0 0.0
        %4518 = vmatprep.subr.mxu0 0.0
        %4519 = vmatpush1.xpose.msra.mxu0 0.0
        %4520 = vmatprep.subr.mxu0 0.0
        %4521 = vmatpush1.xpose.msra.mxu0 0.0
        %4522 = vmatprep.subr.mxu0 0.0
        %4523 = vmatpush1.xpose.msra.mxu0 0.0
        %4524 = vmatprep.subr.mxu0 0.0
        %4525 = vmatpush1.xpose.msra.mxu0 0.0
        %4526 = vmatprep.subr.mxu0 0.0
        %4527 = vmatpush1.xpose.msra.mxu0 0.0
        %4528 = vmatprep.subr.mxu0 0.0
        %4529 = vmatpush1.xpose.msra.mxu0 0.0
        %4530 = vmatprep.subr.mxu0 0.0
        %4531 = vmatpush1.xpose.msra.mxu0 0.0
        %4532 = vmatprep.subr.mxu0 0.0
        %4533 = vmatpush1.xpose.msra.mxu0 0.0
        %4534 = vmatprep.subr.mxu0 0.0
        %4535 = vmatpush1.xpose.msra.mxu0 0.0
        %4536 = vmatprep.subr.mxu0 0.0
        %4537 = vmatpush1.xpose.msra.mxu0 0.0
        %4538 = vmatprep.subr.mxu0 0.0
        %4539 = vmatpush1.xpose.msra.mxu0 0.0
        %4540 = vmatprep.mubr.f32.mxu0 0.0
        %4541 = vmatmul.mubr.f32.gmra.mrb[0].mxu0 %v4472
        %v4542 = vpop.f32.mrb[0].mxu0
        %v4543 = vadd.f32 0.0, %v4542
        %v4544 = vpop.f32.mrb[0].mxu0
        %4545 = vdwg.mxu0
        %v4546 = vsel %vm824, %v4543, -inf
        %4547 = vmax.xlane.f32.xlu0 %v4546
        %v4548 = vpop.xlane.xlu0 %4547
        %v4549 = vsub.f32 %v4543, %v4548
        %v4550 = vmul.f32 %v4549, 1.442695
        %v4551 = vpow.pop %v4550
        %v4552 = vsel %vm824, %v4551, 0.0
        %4553 = vadd.xlane.f32.xlu0 %v4552
        %v4554 = vpop.xlane.xlu0 %4553
        %v4555 = vrcp.pop %v4554
        %v4556 = vmul.f32 %v4551, %v4555
        %v4558 = vsel %vm824, %v4556, 0
        %4560 = vmatprep.subr.mxu0 0.0
        %4561 = vmatpush1.msra.mxu0 %v4467
        %4562 = vmatprep.subr.mxu0 0.0
        %4563 = vmatpush1.msra.mxu0 0.0
        %4564 = vmatprep.subr.mxu0 0.0
        %4565 = vmatpush1.msra.mxu0 0.0
        %4566 = vmatprep.subr.mxu0 0.0
        %4567 = vmatpush1.msra.mxu0 0.0
        %4568 = vmatprep.subr.mxu0 0.0
        %4569 = vmatpush1.msra.mxu0 0.0
        %4570 = vmatprep.subr.mxu0 0.0
        %4571 = vmatpush1.msra.mxu0 0.0
        %4572 = vmatprep.subr.mxu0 0.0
        %4573 = vmatpush1.msra.mxu0 0.0
        %4574 = vmatprep.subr.mxu0 0.0
        %4575 = vmatpush1.msra.mxu0 0.0
        %4576 = vmatprep.subr.mxu0 0.0
        %4577 = vmatpush1.msra.mxu0 0.0
        %4578 = vmatprep.subr.mxu0 0.0
        %4579 = vmatpush1.msra.mxu0 0.0
        %4580 = vmatprep.subr.mxu0 0.0
        %4581 = vmatpush1.msra.mxu0 0.0
        %4582 = vmatprep.subr.mxu0 0.0
        %4583 = vmatpush1.msra.mxu0 0.0
        %4584 = vmatprep.subr.mxu0 0.0
        %4585 = vmatpush1.msra.mxu0 0.0
        %4586 = vmatprep.subr.mxu0 0.0
        %4587 = vmatpush1.msra.mxu0 0.0
        %4588 = vmatprep.subr.mxu0 0.0
        %4589 = vmatpush1.msra.mxu0 0.0
        %4590 = vmatprep.subr.mxu0 0.0
        %4591 = vmatpush1.msra.mxu0 0.0
        %4592 = vmatprep.subr.mxu0 0.0
        %4593 = vmatpush1.msra.mxu0 0.0
        %4594 = vmatprep.subr.mxu0 0.0
        %4595 = vmatpush1.msra.mxu0 0.0
        %4596 = vmatprep.subr.mxu0 0.0
        %4597 = vmatpush1.msra.mxu0 0.0
        %4598 = vmatprep.subr.mxu0 0.0
        %4599 = vmatpush1.msra.mxu0 0.0
        %4600 = vmatprep.subr.mxu0 0.0
        %4601 = vmatpush1.msra.mxu0 0.0
        %4602 = vmatprep.subr.mxu0 0.0
        %4603 = vmatpush1.msra.mxu0 0.0
        %4604 = vmatprep.subr.mxu0 0.0
        %4605 = vmatpush1.msra.mxu0 0.0
        %4606 = vmatprep.subr.mxu0 0.0
        %4607 = vmatpush1.msra.mxu0 0.0
        %4608 = vmatprep.subr.mxu0 0.0
        %4609 = vmatpush1.msra.mxu0 0.0
        %4610 = vmatprep.subr.mxu0 0.0
        %4611 = vmatpush1.msra.mxu0 0.0
        %4612 = vmatprep.subr.mxu0 0.0
        %4613 = vmatpush1.msra.mxu0 0.0
        %4614 = vmatprep.subr.mxu0 0.0
        %4615 = vmatpush1.msra.mxu0 0.0
        %4616 = vmatprep.subr.mxu0 0.0
        %4617 = vmatpush1.msra.mxu0 0.0
        %4618 = vmatprep.subr.mxu0 0.0
        %4619 = vmatpush1.msra.mxu0 0.0
        %4620 = vmatprep.subr.mxu0 0.0
        %4621 = vmatpush1.msra.mxu0 0.0
        %4622 = vmatprep.subr.mxu0 0.0
        %4623 = vmatpush1.msra.mxu0 0.0
        %4624 = vmatprep.mubr.f32.mxu0 0.0
        %4625 = vmatmul.mubr.f32.gmra.mrb[0].mxu0 %v4558
        %v4626 = vpop.f32.mrb[0].mxu0
        %v4627 = vadd.f32 0.0, %v4626
        %v4628 = vpop.f32.mrb[0].mxu0
        %4629 = vdwg.mxu0
        %4630 = vrot.lane.b32.xlu0 %v4465, 112
        %v4631 = vpop.permute.xlu0 %4630
        %4632 = vrot.lane.b32.xlu0 %v4465, 48
        %v4633 = vpop.permute.xlu0 %4632
        %v4634 = vsel %vm749, %v4631, 0
        %v4636 = vsel %vm749, %v4633, 0
        %4638 = vmatprep.subr.mxu0 0.0
        %4639 = vmatpush1.xpose.msra.mxu0 %v4636
        %4640 = vmatprep.subr.mxu0 0.0
        %4641 = vmatpush1.xpose.msra.mxu0 0.0
        %4642 = vmatprep.subr.mxu0 0.0
        %4643 = vmatpush1.xpose.msra.mxu0 0.0
        %4644 = vmatprep.subr.mxu0 0.0
        %4645 = vmatpush1.xpose.msra.mxu0 0.0
        %4646 = vmatprep.subr.mxu0 0.0
        %4647 = vmatpush1.xpose.msra.mxu0 0.0
        %4648 = vmatprep.subr.mxu0 0.0
        %4649 = vmatpush1.xpose.msra.mxu0 0.0
        %4650 = vmatprep.subr.mxu0 0.0
        %4651 = vmatpush1.xpose.msra.mxu0 0.0
        %4652 = vmatprep.subr.mxu0 0.0
        %4653 = vmatpush1.xpose.msra.mxu0 0.0
        %4654 = vmatprep.subr.mxu0 0.0
        %4655 = vmatpush1.xpose.msra.mxu0 0.0
        %4656 = vmatprep.subr.mxu0 0.0
        %4657 = vmatpush1.xpose.msra.mxu0 0.0
        %4658 = vmatprep.subr.mxu0 0.0
        %4659 = vmatpush1.xpose.msra.mxu0 0.0
        %4660 = vmatprep.subr.mxu0 0.0
        %4661 = vmatpush1.xpose.msra.mxu0 0.0
        %4662 = vmatprep.subr.mxu0 0.0
        %4663 = vmatpush1.xpose.msra.mxu0 0.0
        %4664 = vmatprep.subr.mxu0 0.0
        %4665 = vmatpush1.xpose.msra.mxu0 0.0
        %4666 = vmatprep.subr.mxu0 0.0
        %4667 = vmatpush1.xpose.msra.mxu0 0.0
        %4668 = vmatprep.subr.mxu0 0.0
        %4669 = vmatpush1.xpose.msra.mxu0 0.0
        %4670 = vmatprep.subr.mxu0 0.0
        %4671 = vmatpush1.xpose.msra.mxu0 0.0
        %4672 = vmatprep.subr.mxu0 0.0
        %4673 = vmatpush1.xpose.msra.mxu0 0.0
        %4674 = vmatprep.subr.mxu0 0.0
        %4675 = vmatpush1.xpose.msra.mxu0 0.0
        %4676 = vmatprep.subr.mxu0 0.0
        %4677 = vmatpush1.xpose.msra.mxu0 0.0
        %4678 = vmatprep.subr.mxu0 0.0
        %4679 = vmatpush1.xpose.msra.mxu0 0.0
        %4680 = vmatprep.subr.mxu0 0.0
        %4681 = vmatpush1.xpose.msra.mxu0 0.0
        %4682 = vmatprep.subr.mxu0 0.0
        %4683 = vmatpush1.xpose.msra.mxu0 0.0
        %4684 = vmatprep.subr.mxu0 0.0
        %4685 = vmatpush1.xpose.msra.mxu0 0.0
        %4686 = vmatprep.subr.mxu0 0.0
        %4687 = vmatpush1.xpose.msra.mxu0 0.0
        %4688 = vmatprep.subr.mxu0 0.0
        %4689 = vmatpush1.xpose.msra.mxu0 0.0
        %4690 = vmatprep.subr.mxu0 0.0
        %4691 = vmatpush1.xpose.msra.mxu0 0.0
        %4692 = vmatprep.subr.mxu0 0.0
        %4693 = vmatpush1.xpose.msra.mxu0 0.0
        %4694 = vmatprep.subr.mxu0 0.0
        %4695 = vmatpush1.xpose.msra.mxu0 0.0
        %4696 = vmatprep.subr.mxu0 0.0
        %4697 = vmatpush1.xpose.msra.mxu0 0.0
        %4698 = vmatprep.subr.mxu0 0.0
        %4699 = vmatpush1.xpose.msra.mxu0 0.0
        %4700 = vmatprep.subr.mxu0 0.0
        %4701 = vmatpush1.xpose.msra.mxu0 0.0
        %4702 = vmatprep.mubr.f32.mxu0 0.0
        %4703 = vmatmul.mubr.f32.gmra.mrb[0].mxu0 %v4634
        %v4704 = vpop.f32.mrb[0].mxu0
        %v4705 = vadd.f32 0.0, %v4704
        %v4706 = vpop.f32.mrb[0].mxu0
        %4707 = vdwg.mxu0
        %v4708 = vsel %vm824, %v4705, -inf
        %4709 = vmax.xlane.f32.xlu0 %v4708
        %v4710 = vpop.xlane.xlu0 %4709
        %v4711 = vsub.f32 %v4705, %v4710
        %v4712 = vmul.f32 %v4711, 1.442695
        %v4713 = vpow.pop %v4712
        %v4714 = vsel %vm824, %v4713, 0.0
        %4715 = vadd.xlane.f32.xlu0 %v4714
        %v4716 = vpop.xlane.xlu0 %4715
        %v4717 = vrcp.pop %v4716
        %v4718 = vmul.f32 %v4713, %v4717
        %4720 = vrot.lane.b32.xlu0 %v4467, 112
        %v4721 = vpop.permute.xlu0 %4720
        %v4724 = vsel %vm824, %v4718, 0
        %4726 = vmatprep.subr.mxu0 0.0
        %4727 = vmatpush1.msra.mxu0 %v4721
        %4728 = vmatprep.subr.mxu0 0.0
        %4729 = vmatpush1.msra.mxu0 0.0
        %4730 = vmatprep.subr.mxu0 0.0
        %4731 = vmatpush1.msra.mxu0 0.0
        %4732 = vmatprep.subr.mxu0 0.0
        %4733 = vmatpush1.msra.mxu0 0.0
        %4734 = vmatprep.subr.mxu0 0.0
        %4735 = vmatpush1.msra.mxu0 0.0
        %4736 = vmatprep.subr.mxu0 0.0
        %4737 = vmatpush1.msra.mxu0 0.0
        %4738 = vmatprep.subr.mxu0 0.0
        %4739 = vmatpush1.msra.mxu0 0.0
        %4740 = vmatprep.subr.mxu0 0.0
        %4741 = vmatpush1.msra.mxu0 0.0
        %4742 = vmatprep.subr.mxu0 0.0
        %4743 = vmatpush1.msra.mxu0 0.0
        %4744 = vmatprep.subr.mxu0 0.0
        %4745 = vmatpush1.msra.mxu0 0.0
        %4746 = vmatprep.subr.mxu0 0.0
        %4747 = vmatpush1.msra.mxu0 0.0
        %4748 = vmatprep.subr.mxu0 0.0
        %4749 = vmatpush1.msra.mxu0 0.0
        %4750 = vmatprep.subr.mxu0 0.0
        %4751 = vmatpush1.msra.mxu0 0.0
        %4752 = vmatprep.subr.mxu0 0.0
        %4753 = vmatpush1.msra.mxu0 0.0
        %4754 = vmatprep.subr.mxu0 0.0
        %4755 = vmatpush1.msra.mxu0 0.0
        %4756 = vmatprep.subr.mxu0 0.0
        %4757 = vmatpush1.msra.mxu0 0.0
        %4758 = vmatprep.subr.mxu0 0.0
        %4759 = vmatpush1.msra.mxu0 0.0
        %4760 = vmatprep.subr.mxu0 0.0
        %4761 = vmatpush1.msra.mxu0 0.0
        %4762 = vmatprep.subr.mxu0 0.0
        %4763 = vmatpush1.msra.mxu0 0.0
        %4764 = vmatprep.subr.mxu0 0.0
        %4765 = vmatpush1.msra.mxu0 0.0
        %4766 = vmatprep.subr.mxu0 0.0
        %4767 = vmatpush1.msra.mxu0 0.0
        %4768 = vmatprep.subr.mxu0 0.0
        %4769 = vmatpush1.msra.mxu0 0.0
        %4770 = vmatprep.subr.mxu0 0.0
        %4771 = vmatpush1.msra.mxu0 0.0
        %4772 = vmatprep.subr.mxu0 0.0
        %4773 = vmatpush1.msra.mxu0 0.0
        %4774 = vmatprep.subr.mxu0 0.0
        %4775 = vmatpush1.msra.mxu0 0.0
        %4776 = vmatprep.subr.mxu0 0.0
        %4777 = vmatpush1.msra.mxu0 0.0
        %4778 = vmatprep.subr.mxu0 0.0
        %4779 = vmatpush1.msra.mxu0 0.0
        %4780 = vmatprep.subr.mxu0 0.0
        %4781 = vmatpush1.msra.mxu0 0.0
        %4782 = vmatprep.subr.mxu0 0.0
        %4783 = vmatpush1.msra.mxu0 0.0
        %4784 = vmatprep.subr.mxu0 0.0
        %4785 = vmatpush1.msra.mxu0 0.0
        %4786 = vmatprep.subr.mxu0 0.0
        %4787 = vmatpush1.msra.mxu0 0.0
        %4788 = vmatprep.subr.mxu0 0.0
        %4789 = vmatpush1.msra.mxu0 0.0
        %4790 = vmatprep.mubr.f32.mxu0 0.0
        %4791 = vmatmul.mubr.f32.gmra.mrb[0].mxu0 %v4724
        %v4792 = vpop.f32.mrb[0].mxu0
        %v4793 = vadd.f32 0.0, %v4792
        %v4794 = vpop.f32.mrb[0].mxu0
        %4795 = vdwg.mxu0
        %4796 = vrot.lane.b32.xlu0 %v4465, 96
        %v4797 = vpop.permute.xlu0 %4796
        %4798 = vrot.lane.b32.xlu0 %v4465, 32
        %v4799 = vpop.permute.xlu0 %4798
        %v4800 = vsel %vm749, %v4797, 0
        %v4802 = vsel %vm749, %v4799, 0
        %4804 = vmatprep.subr.mxu0 0.0
        %4805 = vmatpush1.xpose.msra.mxu0 %v4802
        %4806 = vmatprep.subr.mxu0 0.0
        %4807 = vmatpush1.xpose.msra.mxu0 0.0
        %4808 = vmatprep.subr.mxu0 0.0
        %4809 = vmatpush1.xpose.msra.mxu0 0.0
        %4810 = vmatprep.subr.mxu0 0.0
        %4811 = vmatpush1.xpose.msra.mxu0 0.0
        %4812 = vmatprep.subr.mxu0 0.0
        %4813 = vmatpush1.xpose.msra.mxu0 0.0
        %4814 = vmatprep.subr.mxu0 0.0
        %4815 = vmatpush1.xpose.msra.mxu0 0.0
        %4816 = vmatprep.subr.mxu0 0.0
        %4817 = vmatpush1.xpose.msra.mxu0 0.0
        %4818 = vmatprep.subr.mxu0 0.0
        %4819 = vmatpush1.xpose.msra.mxu0 0.0
        %4820 = vmatprep.subr.mxu0 0.0
        %4821 = vmatpush1.xpose.msra.mxu0 0.0
        %4822 = vmatprep.subr.mxu0 0.0
        %4823 = vmatpush1.xpose.msra.mxu0 0.0
        %4824 = vmatprep.subr.mxu0 0.0
        %4825 = vmatpush1.xpose.msra.mxu0 0.0
        %4826 = vmatprep.subr.mxu0 0.0
        %4827 = vmatpush1.xpose.msra.mxu0 0.0
        %4828 = vmatprep.subr.mxu0 0.0
        %4829 = vmatpush1.xpose.msra.mxu0 0.0
        %4830 = vmatprep.subr.mxu0 0.0
        %4831 = vmatpush1.xpose.msra.mxu0 0.0
        %4832 = vmatprep.subr.mxu0 0.0
        %4833 = vmatpush1.xpose.msra.mxu0 0.0
        %4834 = vmatprep.subr.mxu0 0.0
        %4835 = vmatpush1.xpose.msra.mxu0 0.0
        %4836 = vmatprep.subr.mxu0 0.0
        %4837 = vmatpush1.xpose.msra.mxu0 0.0
        %4838 = vmatprep.subr.mxu0 0.0
        %4839 = vmatpush1.xpose.msra.mxu0 0.0
        %4840 = vmatprep.subr.mxu0 0.0
        %4841 = vmatpush1.xpose.msra.mxu0 0.0
        %4842 = vmatprep.subr.mxu0 0.0
        %4843 = vmatpush1.xpose.msra.mxu0 0.0
        %4844 = vmatprep.subr.mxu0 0.0
        %4845 = vmatpush1.xpose.msra.mxu0 0.0
        %4846 = vmatprep.subr.mxu0 0.0
        %4847 = vmatpush1.xpose.msra.mxu0 0.0
        %4848 = vmatprep.subr.mxu0 0.0
        %4849 = vmatpush1.xpose.msra.mxu0 0.0
        %4850 = vmatprep.subr.mxu0 0.0
        %4851 = vmatpush1.xpose.msra.mxu0 0.0
        %4852 = vmatprep.subr.mxu0 0.0
        %4853 = vmatpush1.xpose.msra.mxu0 0.0
        %4854 = vmatprep.subr.mxu0 0.0
        %4855 = vmatpush1.xpose.msra.mxu0 0.0
        %4856 = vmatprep.subr.mxu0 0.0
        %4857 = vmatpush1.xpose.msra.mxu0 0.0
        %4858 = vmatprep.subr.mxu0 0.0
        %4859 = vmatpush1.xpose.msra.mxu0 0.0
        %4860 = vmatprep.subr.mxu0 0.0
        %4861 = vmatpush1.xpose.msra.mxu0 0.0
        %4862 = vmatprep.subr.mxu0 0.0
        %4863 = vmatpush1.xpose.msra.mxu0 0.0
        %4864 = vmatprep.subr.mxu0 0.0
        %4865 = vmatpush1.xpose.msra.mxu0 0.0
        %4866 = vmatprep.subr.mxu0 0.0
        %4867 = vmatpush1.xpose.msra.mxu0 0.0
        %4868 = vmatprep.mubr.f32.mxu0 0.0
        %4869 = vmatmul.mubr.f32.gmra.mrb[0].mxu0 %v4800
        %v4870 = vpop.f32.mrb[0].mxu0
        %v4871 = vadd.f32 0.0, %v4870
        %v4872 = vpop.f32.mrb[0].mxu0
        %4873 = vdwg.mxu0
        %v4874 = vsel %vm824, %v4871, -inf
        %4875 = vmax.xlane.f32.xlu0 %v4874
        %v4876 = vpop.xlane.xlu0 %4875
        %v4877 = vsub.f32 %v4871, %v4876
        %v4878 = vmul.f32 %v4877, 1.442695
        %v4879 = vpow.pop %v4878
        %v4880 = vsel %vm824, %v4879, 0.0
        %4881 = vadd.xlane.f32.xlu0 %v4880
        %v4882 = vpop.xlane.xlu0 %4881
        %v4883 = vrcp.pop %v4882
        %v4884 = vmul.f32 %v4879, %v4883
        %4885 = vrot.lane.b32.xlu0 %v4467, 96
        %v4886 = vpop.permute.xlu0 %4885
        %v4889 = vsel %vm824, %v4884, 0
        %4891 = vmatprep.subr.mxu0 0.0
        %4892 = vmatpush1.msra.mxu0 %v4886
        %4893 = vmatprep.subr.mxu0 0.0
        %4894 = vmatpush1.msra.mxu0 0.0
        %4895 = vmatprep.subr.mxu0 0.0
        %4896 = vmatpush1.msra.mxu0 0.0
        %4897 = vmatprep.subr.mxu0 0.0
        %4898 = vmatpush1.msra.mxu0 0.0
        %4899 = vmatprep.subr.mxu0 0.0
        %4900 = vmatpush1.msra.mxu0 0.0
        %4901 = vmatprep.subr.mxu0 0.0
        %4902 = vmatpush1.msra.mxu0 0.0
        %4903 = vmatprep.subr.mxu0 0.0
        %4904 = vmatpush1.msra.mxu0 0.0
        %4905 = vmatprep.subr.mxu0 0.0
        %4906 = vmatpush1.msra.mxu0 0.0
        %4907 = vmatprep.subr.mxu0 0.0
        %4908 = vmatpush1.msra.mxu0 0.0
        %4909 = vmatprep.subr.mxu0 0.0
        %4910 = vmatpush1.msra.mxu0 0.0
        %4911 = vmatprep.subr.mxu0 0.0
        %4912 = vmatpush1.msra.mxu0 0.0
        %4913 = vmatprep.subr.mxu0 0.0
        %4914 = vmatpush1.msra.mxu0 0.0
        %4915 = vmatprep.subr.mxu0 0.0
        %4916 = vmatpush1.msra.mxu0 0.0
        %4917 = vmatprep.subr.mxu0 0.0
        %4918 = vmatpush1.msra.mxu0 0.0
        %4919 = vmatprep.subr.mxu0 0.0
        %4920 = vmatpush1.msra.mxu0 0.0
        %4921 = vmatprep.subr.mxu0 0.0
        %4922 = vmatpush1.msra.mxu0 0.0
        %4923 = vmatprep.subr.mxu0 0.0
        %4924 = vmatpush1.msra.mxu0 0.0
        %4925 = vmatprep.subr.mxu0 0.0
        %4926 = vmatpush1.msra.mxu0 0.0
        %4927 = vmatprep.subr.mxu0 0.0
        %4928 = vmatpush1.msra.mxu0 0.0
        %4929 = vmatprep.subr.mxu0 0.0
        %4930 = vmatpush1.msra.mxu0 0.0
        %4931 = vmatprep.subr.mxu0 0.0
        %4932 = vmatpush1.msra.mxu0 0.0
        %4933 = vmatprep.subr.mxu0 0.0
        %4934 = vmatpush1.msra.mxu0 0.0
        %4935 = vmatprep.subr.mxu0 0.0
        %4936 = vmatpush1.msra.mxu0 0.0
        %4937 = vmatprep.subr.mxu0 0.0
        %4938 = vmatpush1.msra.mxu0 0.0
        %4939 = vmatprep.subr.mxu0 0.0
        %4940 = vmatpush1.msra.mxu0 0.0
        %4941 = vmatprep.subr.mxu0 0.0
        %4942 = vmatpush1.msra.mxu0 0.0
        %4943 = vmatprep.subr.mxu0 0.0
        %4944 = vmatpush1.msra.mxu0 0.0
        %4945 = vmatprep.subr.mxu0 0.0
        %4946 = vmatpush1.msra.mxu0 0.0
        %4947 = vmatprep.subr.mxu0 0.0
        %4948 = vmatpush1.msra.mxu0 0.0
        %4949 = vmatprep.subr.mxu0 0.0
        %4950 = vmatpush1.msra.mxu0 0.0
        %4951 = vmatprep.subr.mxu0 0.0
        %4952 = vmatpush1.msra.mxu0 0.0
        %4953 = vmatprep.subr.mxu0 0.0
        %4954 = vmatpush1.msra.mxu0 0.0
        %4955 = vmatprep.mubr.f32.mxu0 0.0
        %4956 = vmatmul.mubr.f32.gmra.mrb[0].mxu0 %v4889
        %v4957 = vpop.f32.mrb[0].mxu0
        %v4958 = vadd.f32 0.0, %v4957
        %v4959 = vpop.f32.mrb[0].mxu0
        %4960 = vdwg.mxu0
        %4961 = vrot.lane.b32.xlu0 %v4465, 80
        %v4962 = vpop.permute.xlu0 %4961
        %4963 = vrot.lane.b32.xlu0 %v4465, 16
        %v4964 = vpop.permute.xlu0 %4963
        %v4965 = vsel %vm749, %v4962, 0
        %v4967 = vsel %vm749, %v4964, 0
        %4969 = vmatprep.subr.mxu0 0.0
        %4970 = vmatpush1.xpose.msra.mxu0 %v4967
        %4971 = vmatprep.subr.mxu0 0.0
        %4972 = vmatpush1.xpose.msra.mxu0 0.0
        %4973 = vmatprep.subr.mxu0 0.0
        %4974 = vmatpush1.xpose.msra.mxu0 0.0
        %4975 = vmatprep.subr.mxu0 0.0
        %4976 = vmatpush1.xpose.msra.mxu0 0.0
        %4977 = vmatprep.subr.mxu0 0.0
        %4978 = vmatpush1.xpose.msra.mxu0 0.0
        %4979 = vmatprep.subr.mxu0 0.0
        %4980 = vmatpush1.xpose.msra.mxu0 0.0
        %4981 = vmatprep.subr.mxu0 0.0
        %4982 = vmatpush1.xpose.msra.mxu0 0.0
        %4983 = vmatprep.subr.mxu0 0.0
        %4984 = vmatpush1.xpose.msra.mxu0 0.0
        %4985 = vmatprep.subr.mxu0 0.0
        %4986 = vmatpush1.xpose.msra.mxu0 0.0
        %4987 = vmatprep.subr.mxu0 0.0
        %4988 = vmatpush1.xpose.msra.mxu0 0.0
        %4989 = vmatprep.subr.mxu0 0.0
        %4990 = vmatpush1.xpose.msra.mxu0 0.0
        %4991 = vmatprep.subr.mxu0 0.0
        %4992 = vmatpush1.xpose.msra.mxu0 0.0
        %4993 = vmatprep.subr.mxu0 0.0
        %4994 = vmatpush1.xpose.msra.mxu0 0.0
        %4995 = vmatprep.subr.mxu0 0.0
        %4996 = vmatpush1.xpose.msra.mxu0 0.0
        %4997 = vmatprep.subr.mxu0 0.0
        %4998 = vmatpush1.xpose.msra.mxu0 0.0
        %4999 = vmatprep.subr.mxu0 0.0
        %5000 = vmatpush1.xpose.msra.mxu0 0.0
        %5001 = vmatprep.subr.mxu0 0.0
        %5002 = vmatpush1.xpose.msra.mxu0 0.0
        %5003 = vmatprep.subr.mxu0 0.0
        %5004 = vmatpush1.xpose.msra.mxu0 0.0
        %5005 = vmatprep.subr.mxu0 0.0
        %5006 = vmatpush1.xpose.msra.mxu0 0.0
        %5007 = vmatprep.subr.mxu0 0.0
        %5008 = vmatpush1.xpose.msra.mxu0 0.0
        %5009 = vmatprep.subr.mxu0 0.0
        %5010 = vmatpush1.xpose.msra.mxu0 0.0
        %5011 = vmatprep.subr.mxu0 0.0
        %5012 = vmatpush1.xpose.msra.mxu0 0.0
        %5013 = vmatprep.subr.mxu0 0.0
        %5014 = vmatpush1.xpose.msra.mxu0 0.0
        %5015 = vmatprep.subr.mxu0 0.0
        %5016 = vmatpush1.xpose.msra.mxu0 0.0
        %5017 = vmatprep.subr.mxu0 0.0
        %5018 = vmatpush1.xpose.msra.mxu0 0.0
        %5019 = vmatprep.subr.mxu0 0.0
        %5020 = vmatpush1.xpose.msra.mxu0 0.0
        %5021 = vmatprep.subr.mxu0 0.0
        %5022 = vmatpush1.xpose.msra.mxu0 0.0
        %5023 = vmatprep.subr.mxu0 0.0
        %5024 = vmatpush1.xpose.msra.mxu0 0.0
        %5025 = vmatprep.subr.mxu0 0.0
        %5026 = vmatpush1.xpose.msra.mxu0 0.0
        %5027 = vmatprep.subr.mxu0 0.0
        %5028 = vmatpush1.xpose.msra.mxu0 0.0
        %5029 = vmatprep.subr.mxu0 0.0
        %5030 = vmatpush1.xpose.msra.mxu0 0.0
        %5031 = vmatprep.subr.mxu0 0.0
        %5032 = vmatpush1.xpose.msra.mxu0 0.0
        %5033 = vmatprep.mubr.f32.mxu0 0.0
        %5034 = vmatmul.mubr.f32.gmra.mrb[0].mxu0 %v4965
        %v5035 = vpop.f32.mrb[0].mxu0
        %v5036 = vadd.f32 0.0, %v5035
        %v5037 = vpop.f32.mrb[0].mxu0
        %5038 = vdwg.mxu0
        %v5039 = vsel %vm824, %v5036, -inf
        %5040 = vmax.xlane.f32.xlu0 %v5039
        %v5041 = vpop.xlane.xlu0 %5040
        %v5042 = vsub.f32 %v5036, %v5041
        %v5043 = vmul.f32 %v5042, 1.442695
        %v5044 = vpow.pop %v5043
        %v5045 = vsel %vm824, %v5044, 0.0
        %5046 = vadd.xlane.f32.xlu0 %v5045
        %v5047 = vpop.xlane.xlu0 %5046
        %v5048 = vrcp.pop %v5047
        %v5049 = vmul.f32 %v5044, %v5048
        %5050 = vrot.lane.b32.xlu0 %v4467, 80
        %v5051 = vpop.permute.xlu0 %5050
        %v5054 = vsel %vm824, %v5049, 0
        %5056 = vmatprep.subr.mxu0 0.0
        %5057 = vmatpush1.msra.mxu0 %v5051
        %5058 = vmatprep.subr.mxu0 0.0
        %5059 = vmatpush1.msra.mxu0 0.0
        %5060 = vmatprep.subr.mxu0 0.0
        %5061 = vmatpush1.msra.mxu0 0.0
        %5062 = vmatprep.subr.mxu0 0.0
        %5063 = vmatpush1.msra.mxu0 0.0
        %5064 = vmatprep.subr.mxu0 0.0
        %5065 = vmatpush1.msra.mxu0 0.0
        %5066 = vmatprep.subr.mxu0 0.0
        %5067 = vmatpush1.msra.mxu0 0.0
        %5068 = vmatprep.subr.mxu0 0.0
        %5069 = vmatpush1.msra.mxu0 0.0
        %5070 = vmatprep.subr.mxu0 0.0
        %5071 = vmatpush1.msra.mxu0 0.0
        %5072 = vmatprep.subr.mxu0 0.0
        %5073 = vmatpush1.msra.mxu0 0.0
        %5074 = vmatprep.subr.mxu0 0.0
        %5075 = vmatpush1.msra.mxu0 0.0
        %5076 = vmatprep.subr.mxu0 0.0
        %5077 = vmatpush1.msra.mxu0 0.0
        %5078 = vmatprep.subr.mxu0 0.0
        %5079 = vmatpush1.msra.mxu0 0.0
        %5080 = vmatprep.subr.mxu0 0.0
        %5081 = vmatpush1.msra.mxu0 0.0
        %5082 = vmatprep.subr.mxu0 0.0
        %5083 = vmatpush1.msra.mxu0 0.0
        %5084 = vmatprep.subr.mxu0 0.0
        %5085 = vmatpush1.msra.mxu0 0.0
        %5086 = vmatprep.subr.mxu0 0.0
        %5087 = vmatpush1.msra.mxu0 0.0
        %5088 = vmatprep.subr.mxu0 0.0
        %5089 = vmatpush1.msra.mxu0 0.0
        %5090 = vmatprep.subr.mxu0 0.0
        %5091 = vmatpush1.msra.mxu0 0.0
        %5092 = vmatprep.subr.mxu0 0.0
        %5093 = vmatpush1.msra.mxu0 0.0
        %5094 = vmatprep.subr.mxu0 0.0
        %5095 = vmatpush1.msra.mxu0 0.0
        %5096 = vmatprep.subr.mxu0 0.0
        %5097 = vmatpush1.msra.mxu0 0.0
        %5098 = vmatprep.subr.mxu0 0.0
        %5099 = vmatpush1.msra.mxu0 0.0
        %5100 = vmatprep.subr.mxu0 0.0
        %5101 = vmatpush1.msra.mxu0 0.0
        %5102 = vmatprep.subr.mxu0 0.0
        %5103 = vmatpush1.msra.mxu0 0.0
        %5104 = vmatprep.subr.mxu0 0.0
        %5105 = vmatpush1.msra.mxu0 0.0
        %5106 = vmatprep.subr.mxu0 0.0
        %5107 = vmatpush1.msra.mxu0 0.0
        %5108 = vmatprep.subr.mxu0 0.0
        %5109 = vmatpush1.msra.mxu0 0.0
        %5110 = vmatprep.subr.mxu0 0.0
        %5111 = vmatpush1.msra.mxu0 0.0
        %5112 = vmatprep.subr.mxu0 0.0
        %5113 = vmatpush1.msra.mxu0 0.0
        %5114 = vmatprep.subr.mxu0 0.0
        %5115 = vmatpush1.msra.mxu0 0.0
        %5116 = vmatprep.subr.mxu0 0.0
        %5117 = vmatpush1.msra.mxu0 0.0
        %5118 = vmatprep.subr.mxu0 0.0
        %5119 = vmatpush1.msra.mxu0 0.0
        %5120 = vmatprep.mubr.f32.mxu0 0.0
        %5121 = vmatmul.mubr.f32.gmra.mrb[0].mxu0 %v5054
        %v5122 = vpop.f32.mrb[0].mxu0
        %v5123 = vadd.f32 0.0, %v5122
        %v5124 = vpop.f32.mrb[0].mxu0
        %5125 = vdwg.mxu0
        %5127 = vrot.lane.b32.xlu0 %v4793, 16
        %v5128 = vpop.permute.xlu0 %5127
        %5131 = vrot.lane.b32.xlu0 %v4958, 32
        %v5132 = vpop.permute.xlu0 %5131
        %5135 = vrot.lane.b32.xlu0 %v5123, 48
        %v5136 = vpop.permute.xlu0 %5135
        %v5138 = vsel %vm749, %v4627, %v5128
        %v5139 = vsel %vm1418, %v5138, %v5132
        %v5140 = vsel %vm1420, %v5139, %v5136
        %s5141 = scalar_lea.vmem %s9, 64
        %v5142 = vld [vmem:[%s5141] sm:$0xff]
        %v5143 = vld [vmem:[%s5141 + $0x8] sm:$0xff]
        %v5144 = vld [vmem:[%s5141 + $0x10] sm:$0xff]
        %v5145 = vld [vmem:[%s5141 + $0x18] sm:$0xff]
        %v5146 = vld [vmem:[%s5141 + $0x20] sm:$0xff]
        %v5147 = vld [vmem:[%s5141 + $0x28] sm:$0xff]
        %v5148 = vld [vmem:[%s5141 + $0x30] sm:$0xff]
        %v5149 = vld [vmem:[%s5141 + $0x38] sm:$0xff]
        %s5150 = scalar_lea.vmem %s10, 1
        %v5151 = vld [vmem:[%s5150] sm:$0x1]
        %v5153 = vlaneseq
        %v5154 = vshrl.u32 %v5153, 7
        %v5155 = vsub.s32 0, %v5154
        %v5156 = vrot.slane %v5151, %v5155
        %v5159 = vsel %vm671, %v5140, 0
        %5161 = vmatprep.subr.mxu0 0.0
        %5162 = vmatpush1.msra.mxu0 %v5142
        %5163 = vmatprep.subr.mxu0 0.0
        %5164 = vmatpush1.msra.mxu0 %v5143
        %5165 = vmatprep.subr.mxu0 0.0
        %5166 = vmatpush1.msra.mxu0 %v5144
        %5167 = vmatprep.subr.mxu0 0.0
        %5168 = vmatpush1.msra.mxu0 %v5145
        %5169 = vmatprep.subr.mxu0 0.0
        %5170 = vmatpush1.msra.mxu0 %v5146
        %5171 = vmatprep.subr.mxu0 0.0
        %5172 = vmatpush1.msra.mxu0 %v5147
        %5173 = vmatprep.subr.mxu0 0.0
        %5174 = vmatpush1.msra.mxu0 %v5148
        %5175 = vmatprep.subr.mxu0 0.0
        %5176 = vmatpush1.msra.mxu0 %v5149
        %5177 = vmatprep.subr.mxu0 0.0
        %5178 = vmatpush1.msra.mxu0 0.0
        %5179 = vmatprep.subr.mxu0 0.0
        %5180 = vmatpush1.msra.mxu0 0.0
        %5181 = vmatprep.subr.mxu0 0.0
        %5182 = vmatpush1.msra.mxu0 0.0
        %5183 = vmatprep.subr.mxu0 0.0
        %5184 = vmatpush1.msra.mxu0 0.0
        %5185 = vmatprep.subr.mxu0 0.0
        %5186 = vmatpush1.msra.mxu0 0.0
        %5187 = vmatprep.subr.mxu0 0.0
        %5188 = vmatpush1.msra.mxu0 0.0
        %5189 = vmatprep.subr.mxu0 0.0
        %5190 = vmatpush1.msra.mxu0 0.0
        %5191 = vmatprep.subr.mxu0 0.0
        %5192 = vmatpush1.msra.mxu0 0.0
        %5193 = vmatprep.subr.mxu0 0.0
        %5194 = vmatpush1.msra.mxu0 0.0
        %5195 = vmatprep.subr.mxu0 0.0
        %5196 = vmatpush1.msra.mxu0 0.0
        %5197 = vmatprep.subr.mxu0 0.0
        %5198 = vmatpush1.msra.mxu0 0.0
        %5199 = vmatprep.subr.mxu0 0.0
        %5200 = vmatpush1.msra.mxu0 0.0
        %5201 = vmatprep.subr.mxu0 0.0
        %5202 = vmatpush1.msra.mxu0 0.0
        %5203 = vmatprep.subr.mxu0 0.0
        %5204 = vmatpush1.msra.mxu0 0.0
        %5205 = vmatprep.subr.mxu0 0.0
        %5206 = vmatpush1.msra.mxu0 0.0
        %5207 = vmatprep.subr.mxu0 0.0
        %5208 = vmatpush1.msra.mxu0 0.0
        %5209 = vmatprep.subr.mxu0 0.0
        %5210 = vmatpush1.msra.mxu0 0.0
        %5211 = vmatprep.subr.mxu0 0.0
        %5212 = vmatpush1.msra.mxu0 0.0
        %5213 = vmatprep.subr.mxu0 0.0
        %5214 = vmatpush1.msra.mxu0 0.0
        %5215 = vmatprep.subr.mxu0 0.0
        %5216 = vmatpush1.msra.mxu0 0.0
        %5217 = vmatprep.subr.mxu0 0.0
        %5218 = vmatpush1.msra.mxu0 0.0
        %5219 = vmatprep.subr.mxu0 0.0
        %5220 = vmatpush1.msra.mxu0 0.0
        %5221 = vmatprep.subr.mxu0 0.0
        %5222 = vmatpush1.msra.mxu0 0.0
        %5223 = vmatprep.subr.mxu0 0.0
        %5224 = vmatpush1.msra.mxu0 0.0
        %5225 = vmatprep.mubr.f32.mxu0 0.0
        %5226 = vmatmul.mubr.f32.gmra.mrb[0].mxu0 %v5159
        %v5227 = vpop.f32.mrb[0].mxu0
        %v5228 = vadd.f32 %v5156, %v5227
        %v5229 = vpop.f32.mrb[0].mxu0
        %5230 = vdwg.mxu0
        %v5231 = vadd.f32 %v5228, %v4362
        %v5232 = vsel %vm671, %v5231, 0.0
        %5233 = vadd.xlane.f32.xlu0 %v5232
        %v5234 = vpop.xlane.xlu0 %5233
        %v5235 = vmul.f32 %v5234, %v1515
        %v5236 = vsub.f32 %v5231, %v5235
        %v5237 = vmul.f32 %v5236, %v5236
        %v5238 = vsel %vm671, %v5237, 0.0
        %5239 = vadd.xlane.f32.xlu0 %v5238
        %v5240 = vpop.xlane.xlu0 %5239
        %v5241 = vmul.f32 %v5240, %v1515
        %v5242 = vadd.f32 %v5241, 1e-05
        %v5243 = vrsqrt.pop %v5242
        %v5244 = vmul.f32 %v5236, %v5243
        %v5245 = vlaneseq
        %v5246 = vshrl.u32 %v5245, 7
        %v5247 = vsub.s32 0, %v5246
        %v5248 = vrot.slane %v4364, %v5247
        %v5249 = vmul.f32 %v5244, %v5248
        %v5250 = vlaneseq
        %v5251 = vshrl.u32 %v5250, 7
        %v5252 = vsub.s32 1, %v5251
        %v5253 = vrot.slane %v4364, %v5252
        %v5254 = vadd.f32 %v5249, %v5253
        %s5255 = scalar_lea.vmem %s11, 64
        %v5256 = vld [vmem:[%s5255] sm:$0xff]
        %v5257 = vld [vmem:[%s5255 + $0x8] sm:$0xff]
        %v5258 = vld [vmem:[%s5255 + $0x10] sm:$0xff]
        %v5259 = vld [vmem:[%s5255 + $0x18] sm:$0xff]
        %v5260 = vld [vmem:[%s5255 + $0x20] sm:$0xff]
        %v5261 = vld [vmem:[%s5255 + $0x28] sm:$0xff]
        %v5262 = vld [vmem:[%s5255 + $0x30] sm:$0xff]
        %v5263 = vld [vmem:[%s5255 + $0x38] sm:$0xff]
        %s5264 = scalar_lea.vmem %s12, 1
        %v5265 = vld [vmem:[%s5264] sm:$0x1]
        %v5267 = vlaneseq
        %v5268 = vshrl.u32 %v5267, 7
        %v5269 = vsub.s32 0, %v5268
        %v5270 = vrot.slane %v5265, %v5269
        %v5273 = vsel %vm671, %v5254, 0
        %5275 = vmatprep.subr.mxu0 0.0
        %5276 = vmatpush1.msra.mxu0 %v5256
        %5277 = vmatprep.subr.mxu0 0.0
        %5278 = vmatpush1.msra.mxu0 %v5257
        %5279 = vmatprep.subr.mxu0 0.0
        %5280 = vmatpush1.msra.mxu0 %v5258
        %5281 = vmatprep.subr.mxu0 0.0
        %5282 = vmatpush1.msra.mxu0 %v5259
        %5283 = vmatprep.subr.mxu0 0.0
        %5284 = vmatpush1.msra.mxu0 %v5260
        %5285 = vmatprep.subr.mxu0 0.0
        %5286 = vmatpush1.msra.mxu0 %v5261
        %5287 = vmatprep.subr.mxu0 0.0
        %5288 = vmatpush1.msra.mxu0 %v5262
        %5289 = vmatprep.subr.mxu0 0.0
        %5290 = vmatpush1.msra.mxu0 %v5263
        %5291 = vmatprep.subr.mxu0 0.0
        %5292 = vmatpush1.msra.mxu0 0.0
        %5293 = vmatprep.subr.mxu0 0.0
        %5294 = vmatpush1.msra.mxu0 0.0
        %5295 = vmatprep.subr.mxu0 0.0
        %5296 = vmatpush1.msra.mxu0 0.0
        %5297 = vmatprep.subr.mxu0 0.0
        %5298 = vmatpush1.msra.mxu0 0.0
        %5299 = vmatprep.subr.mxu0 0.0
        %5300 = vmatpush1.msra.mxu0 0.0
        %5301 = vmatprep.subr.mxu0 0.0
        %5302 = vmatpush1.msra.mxu0 0.0
        %5303 = vmatprep.subr.mxu0 0.0
        %5304 = vmatpush1.msra.mxu0 0.0
        %5305 = vmatprep.subr.mxu0 0.0
        %5306 = vmatpush1.msra.mxu0 0.0
        %5307 = vmatprep.subr.mxu0 0.0
        %5308 = vmatpush1.msra.mxu0 0.0
        %5309 = vmatprep.subr.mxu0 0.0
        %5310 = vmatpush1.msra.mxu0 0.0
        %5311 = vmatprep.subr.mxu0 0.0
        %5312 = vmatpush1.msra.mxu0 0.0
        %5313 = vmatprep.subr.mxu0 0.0
        %5314 = vmatpush1.msra.mxu0 0.0
        %5315 = vmatprep.subr.mxu0 0.0
        %5316 = vmatpush1.msra.mxu0 0.0
        %5317 = vmatprep.subr.mxu0 0.0
        %5318 = vmatpush1.msra.mxu0 0.0
        %5319 = vmatprep.subr.mxu0 0.0
        %5320 = vmatpush1.msra.mxu0 0.0
        %5321 = vmatprep.subr.mxu0 0.0
        %5322 = vmatpush1.msra.mxu0 0.0
        %5323 = vmatprep.subr.mxu0 0.0
        %5324 = vmatpush1.msra.mxu0 0.0
        %5325 = vmatprep.subr.mxu0 0.0
        %5326 = vmatpush1.msra.mxu0 0.0
        %5327 = vmatprep.subr.mxu0 0.0
        %5328 = vmatpush1.msra.mxu0 0.0
        %5329 = vmatprep.subr.mxu0 0.0
        %5330 = vmatpush1.msra.mxu0 0.0
        %5331 = vmatprep.subr.mxu0 0.0
        %5332 = vmatpush1.msra.mxu0 0.0
        %5333 = vmatprep.subr.mxu0 0.0
        %5334 = vmatpush1.msra.mxu0 0.0
        %5335 = vmatprep.subr.mxu0 0.0
        %5336 = vmatpush1.msra.mxu0 0.0
        %5337 = vmatprep.subr.mxu0 0.0
        %5338 = vmatpush1.msra.mxu0 0.0
        %5339 = vmatprep.mubr.f32.mxu0 0.0
        %5340 = vmatmul.mubr.f32.gmra.mrb[0].mxu0 %v5273
        %v5341 = vpop.f32.mrb[0].mxu0
        %v5342 = vadd.f32 %v5270, %v5341
        %v5343 = vpop.f32.mrb[0].mxu0
        %5344 = vdwg.mxu0
        %v5346 = vsel %vm749, %v5342, 0
        %v5349 = vsel %vm749, %v2576, 0
        %5351 = vmatprep.subr.mxu0 0.0
        %5352 = vmatpush1.xpose.msra.mxu0 %v5349
        %5353 = vmatprep.subr.mxu0 0.0
        %5354 = vmatpush1.xpose.msra.mxu0 0.0
        %5355 = vmatprep.subr.mxu0 0.0
        %5356 = vmatpush1.xpose.msra.mxu0 0.0
        %5357 = vmatprep.subr.mxu0 0.0
        %5358 = vmatpush1.xpose.msra.mxu0 0.0
        %5359 = vmatprep.subr.mxu0 0.0
        %5360 = vmatpush1.xpose.msra.mxu0 0.0
        %5361 = vmatprep.subr.mxu0 0.0
        %5362 = vmatpush1.xpose.msra.mxu0 0.0
        %5363 = vmatprep.subr.mxu0 0.0
        %5364 = vmatpush1.xpose.msra.mxu0 0.0
        %5365 = vmatprep.subr.mxu0 0.0
        %5366 = vmatpush1.xpose.msra.mxu0 0.0
        %5367 = vmatprep.subr.mxu0 0.0
        %5368 = vmatpush1.xpose.msra.mxu0 0.0
        %5369 = vmatprep.subr.mxu0 0.0
        %5370 = vmatpush1.xpose.msra.mxu0 0.0
        %5371 = vmatprep.subr.mxu0 0.0
        %5372 = vmatpush1.xpose.msra.mxu0 0.0
        %5373 = vmatprep.subr.mxu0 0.0
        %5374 = vmatpush1.xpose.msra.mxu0 0.0
        %5375 = vmatprep.subr.mxu0 0.0
        %5376 = vmatpush1.xpose.msra.mxu0 0.0
        %5377 = vmatprep.subr.mxu0 0.0
        %5378 = vmatpush1.xpose.msra.mxu0 0.0
        %5379 = vmatprep.subr.mxu0 0.0
        %5380 = vmatpush1.xpose.msra.mxu0 0.0
        %5381 = vmatprep.subr.mxu0 0.0
        %5382 = vmatpush1.xpose.msra.mxu0 0.0
        %5383 = vmatprep.subr.mxu0 0.0
        %5384 = vmatpush1.xpose.msra.mxu0 0.0
        %5385 = vmatprep.subr.mxu0 0.0
        %5386 = vmatpush1.xpose.msra.mxu0 0.0
        %5387 = vmatprep.subr.mxu0 0.0
        %5388 = vmatpush1.xpose.msra.mxu0 0.0
        %5389 = vmatprep.subr.mxu0 0.0
        %5390 = vmatpush1.xpose.msra.mxu0 0.0
        %5391 = vmatprep.subr.mxu0 0.0
        %5392 = vmatpush1.xpose.msra.mxu0 0.0
        %5393 = vmatprep.subr.mxu0 0.0
        %5394 = vmatpush1.xpose.msra.mxu0 0.0
        %5395 = vmatprep.subr.mxu0 0.0
        %5396 = vmatpush1.xpose.msra.mxu0 0.0
        %5397 = vmatprep.subr.mxu0 0.0
        %5398 = vmatpush1.xpose.msra.mxu0 0.0
        %5399 = vmatprep.subr.mxu0 0.0
        %5400 = vmatpush1.xpose.msra.mxu0 0.0
        %5401 = vmatprep.subr.mxu0 0.0
        %5402 = vmatpush1.xpose.msra.mxu0 0.0
        %5403 = vmatprep.subr.mxu0 0.0
        %5404 = vmatpush1.xpose.msra.mxu0 0.0
        %5405 = vmatprep.subr.mxu0 0.0
        %5406 = vmatpush1.xpose.msra.mxu0 0.0
        %5407 = vmatprep.subr.mxu0 0.0
        %5408 = vmatpush1.xpose.msra.mxu0 0.0
        %5409 = vmatprep.subr.mxu0 0.0
        %5410 = vmatpush1.xpose.msra.mxu0 0.0
        %5411 = vmatprep.subr.mxu0 0.0
        %5412 = vmatpush1.xpose.msra.mxu0 0.0
        %5413 = vmatprep.subr.mxu0 0.0
        %5414 = vmatpush1.xpose.msra.mxu0 0.0
        %5415 = vmatprep.mubr.f32.mxu0 0.0
        %5416 = vmatmul.mubr.f32.gmra.mrb[0].mxu0 %v5346
        %v5417 = vpop.f32.mrb[0].mxu0
        %v5418 = vadd.f32 0.0, %v5417
        %v5419 = vpop.f32.mrb[0].mxu0
        %5420 = vdwg.mxu0
        %v5421 = vsel %vm824, %v5418, -inf
        %5422 = vmax.xlane.f32.xlu0 %v5421
        %v5423 = vpop.xlane.xlu0 %5422
        %v5424 = vsub.f32 %v5418, %v5423
        %v5425 = vmul.f32 %v5424, 1.442695
        %v5426 = vpow.pop %v5425
        %v5427 = vsel %vm824, %v5426, 0.0
        %5428 = vadd.xlane.f32.xlu0 %v5427
        %v5429 = vpop.xlane.xlu0 %5428
        %v5430 = vrcp.pop %v5429
        %v5431 = vmul.f32 %v5426, %v5430
        %5432 = vrot.lane.b32.xlu0 %v2576, 64
        %v5433 = vpop.permute.xlu0 %5432
        %v5436 = vsel %vm824, %v5431, 0
        %5438 = vmatprep.subr.mxu0 0.0
        %5439 = vmatpush1.msra.mxu0 %v5433
        %5440 = vmatprep.subr.mxu0 0.0
        %5441 = vmatpush1.msra.mxu0 0.0
        %5442 = vmatprep.subr.mxu0 0.0
        %5443 = vmatpush1.msra.mxu0 0.0
        %5444 = vmatprep.subr.mxu0 0.0
        %5445 = vmatpush1.msra.mxu0 0.0
        %5446 = vmatprep.subr.mxu0 0.0
        %5447 = vmatpush1.msra.mxu0 0.0
        %5448 = vmatprep.subr.mxu0 0.0
        %5449 = vmatpush1.msra.mxu0 0.0
        %5450 = vmatprep.subr.mxu0 0.0
        %5451 = vmatpush1.msra.mxu0 0.0
        %5452 = vmatprep.subr.mxu0 0.0
        %5453 = vmatpush1.msra.mxu0 0.0
        %5454 = vmatprep.subr.mxu0 0.0
        %5455 = vmatpush1.msra.mxu0 0.0
        %5456 = vmatprep.subr.mxu0 0.0
        %5457 = vmatpush1.msra.mxu0 0.0
        %5458 = vmatprep.subr.mxu0 0.0
        %5459 = vmatpush1.msra.mxu0 0.0
        %5460 = vmatprep.subr.mxu0 0.0
        %5461 = vmatpush1.msra.mxu0 0.0
        %5462 = vmatprep.subr.mxu0 0.0
        %5463 = vmatpush1.msra.mxu0 0.0
        %5464 = vmatprep.subr.mxu0 0.0
        %5465 = vmatpush1.msra.mxu0 0.0
        %5466 = vmatprep.subr.mxu0 0.0
        %5467 = vmatpush1.msra.mxu0 0.0
        %5468 = vmatprep.subr.mxu0 0.0
        %5469 = vmatpush1.msra.mxu0 0.0
        %5470 = vmatprep.subr.mxu0 0.0
        %5471 = vmatpush1.msra.mxu0 0.0
        %5472 = vmatprep.subr.mxu0 0.0
        %5473 = vmatpush1.msra.mxu0 0.0
        %5474 = vmatprep.subr.mxu0 0.0
        %5475 = vmatpush1.msra.mxu0 0.0
        %5476 = vmatprep.subr.mxu0 0.0
        %5477 = vmatpush1.msra.mxu0 0.0
        %5478 = vmatprep.subr.mxu0 0.0
        %5479 = vmatpush1.msra.mxu0 0.0
        %5480 = vmatprep.subr.mxu0 0.0
        %5481 = vmatpush1.msra.mxu0 0.0
        %5482 = vmatprep.subr.mxu0 0.0
        %5483 = vmatpush1.msra.mxu0 0.0
        %5484 = vmatprep.subr.mxu0 0.0
        %5485 = vmatpush1.msra.mxu0 0.0
        %5486 = vmatprep.subr.mxu0 0.0
        %5487 = vmatpush1.msra.mxu0 0.0
        %5488 = vmatprep.subr.mxu0 0.0
        %5489 = vmatpush1.msra.mxu0 0.0
        %5490 = vmatprep.subr.mxu0 0.0
        %5491 = vmatpush1.msra.mxu0 0.0
        %5492 = vmatprep.subr.mxu0 0.0
        %5493 = vmatpush1.msra.mxu0 0.0
        %5494 = vmatprep.subr.mxu0 0.0
        %5495 = vmatpush1.msra.mxu0 0.0
        %5496 = vmatprep.subr.mxu0 0.0
        %5497 = vmatpush1.msra.mxu0 0.0
        %5498 = vmatprep.subr.mxu0 0.0
        %5499 = vmatpush1.msra.mxu0 0.0
        %5500 = vmatprep.subr.mxu0 0.0
        %5501 = vmatpush1.msra.mxu0 0.0
        %5502 = vmatprep.mubr.f32.mxu0 0.0
        %5503 = vmatmul.mubr.f32.gmra.mrb[0].mxu0 %v5436
        %v5504 = vpop.f32.mrb[0].mxu0
        %v5505 = vadd.f32 0.0, %v5504
        %v5506 = vpop.f32.mrb[0].mxu0
        %5507 = vdwg.mxu0
        %5508 = vrot.lane.b32.xlu0 %v5342, 112
        %v5509 = vpop.permute.xlu0 %5508
        %5510 = vrot.lane.b32.xlu0 %v2576, 112
        %v5511 = vpop.permute.xlu0 %5510
        %v5512 = vsel %vm749, %v5509, 0
        %v5514 = vsel %vm749, %v5511, 0
        %5516 = vmatprep.subr.mxu0 0.0
        %5517 = vmatpush1.xpose.msra.mxu0 %v5514
        %5518 = vmatprep.subr.mxu0 0.0
        %5519 = vmatpush1.xpose.msra.mxu0 0.0
        %5520 = vmatprep.subr.mxu0 0.0
        %5521 = vmatpush1.xpose.msra.mxu0 0.0
        %5522 = vmatprep.subr.mxu0 0.0
        %5523 = vmatpush1.xpose.msra.mxu0 0.0
        %5524 = vmatprep.subr.mxu0 0.0
        %5525 = vmatpush1.xpose.msra.mxu0 0.0
        %5526 = vmatprep.subr.mxu0 0.0
        %5527 = vmatpush1.xpose.msra.mxu0 0.0
        %5528 = vmatprep.subr.mxu0 0.0
        %5529 = vmatpush1.xpose.msra.mxu0 0.0
        %5530 = vmatprep.subr.mxu0 0.0
        %5531 = vmatpush1.xpose.msra.mxu0 0.0
        %5532 = vmatprep.subr.mxu0 0.0
        %5533 = vmatpush1.xpose.msra.mxu0 0.0
        %5534 = vmatprep.subr.mxu0 0.0
        %5535 = vmatpush1.xpose.msra.mxu0 0.0
        %5536 = vmatprep.subr.mxu0 0.0
        %5537 = vmatpush1.xpose.msra.mxu0 0.0
        %5538 = vmatprep.subr.mxu0 0.0
        %5539 = vmatpush1.xpose.msra.mxu0 0.0
        %5540 = vmatprep.subr.mxu0 0.0
        %5541 = vmatpush1.xpose.msra.mxu0 0.0
        %5542 = vmatprep.subr.mxu0 0.0
        %5543 = vmatpush1.xpose.msra.mxu0 0.0
        %5544 = vmatprep.subr.mxu0 0.0
        %5545 = vmatpush1.xpose.msra.mxu0 0.0
        %5546 = vmatprep.subr.mxu0 0.0
        %5547 = vmatpush1.xpose.msra.mxu0 0.0
        %5548 = vmatprep.subr.mxu0 0.0
        %5549 = vmatpush1.xpose.msra.mxu0 0.0
        %5550 = vmatprep.subr.mxu0 0.0
        %5551 = vmatpush1.xpose.msra.mxu0 0.0
        %5552 = vmatprep.subr.mxu0 0.0
        %5553 = vmatpush1.xpose.msra.mxu0 0.0
        %5554 = vmatprep.subr.mxu0 0.0
        %5555 = vmatpush1.xpose.msra.mxu0 0.0
        %5556 = vmatprep.subr.mxu0 0.0
        %5557 = vmatpush1.xpose.msra.mxu0 0.0
        %5558 = vmatprep.subr.mxu0 0.0
        %5559 = vmatpush1.xpose.msra.mxu0 0.0
        %5560 = vmatprep.subr.mxu0 0.0
        %5561 = vmatpush1.xpose.msra.mxu0 0.0
        %5562 = vmatprep.subr.mxu0 0.0
        %5563 = vmatpush1.xpose.msra.mxu0 0.0
        %5564 = vmatprep.subr.mxu0 0.0
        %5565 = vmatpush1.xpose.msra.mxu0 0.0
        %5566 = vmatprep.subr.mxu0 0.0
        %5567 = vmatpush1.xpose.msra.mxu0 0.0
        %5568 = vmatprep.subr.mxu0 0.0
        %5569 = vmatpush1.xpose.msra.mxu0 0.0
        %5570 = vmatprep.subr.mxu0 0.0
        %5571 = vmatpush1.xpose.msra.mxu0 0.0
        %5572 = vmatprep.subr.mxu0 0.0
        %5573 = vmatpush1.xpose.msra.mxu0 0.0
        %5574 = vmatprep.subr.mxu0 0.0
        %5575 = vmatpush1.xpose.msra.mxu0 0.0
        %5576 = vmatprep.subr.mxu0 0.0
        %5577 = vmatpush1.xpose.msra.mxu0 0.0
        %5578 = vmatprep.subr.mxu0 0.0
        %5579 = vmatpush1.xpose.msra.mxu0 0.0
        %5580 = vmatprep.mubr.f32.mxu0 0.0
        %5581 = vmatmul.mubr.f32.gmra.mrb[0].mxu0 %v5512
        %v5582 = vpop.f32.mrb[0].mxu0
        %v5583 = vadd.f32 0.0, %v5582
        %v5584 = vpop.f32.mrb[0].mxu0
        %5585 = vdwg.mxu0
        %v5586 = vsel %vm824, %v5583, -inf
        %5587 = vmax.xlane.f32.xlu0 %v5586
        %v5588 = vpop.xlane.xlu0 %5587
        %v5589 = vsub.f32 %v5583, %v5588
        %v5590 = vmul.f32 %v5589, 1.442695
        %v5591 = vpow.pop %v5590
        %v5592 = vsel %vm824, %v5591, 0.0
        %5593 = vadd.xlane.f32.xlu0 %v5592
        %v5594 = vpop.xlane.xlu0 %5593
        %v5595 = vrcp.pop %v5594
        %v5596 = vmul.f32 %v5591, %v5595
        %5597 = vrot.lane.b32.xlu0 %v2576, 48
        %v5598 = vpop.permute.xlu0 %5597
        %v5601 = vsel %vm824, %v5596, 0
        %5603 = vmatprep.subr.mxu0 0.0
        %5604 = vmatpush1.msra.mxu0 %v5598
        %5605 = vmatprep.subr.mxu0 0.0
        %5606 = vmatpush1.msra.mxu0 0.0
        %5607 = vmatprep.subr.mxu0 0.0
        %5608 = vmatpush1.msra.mxu0 0.0
        %5609 = vmatprep.subr.mxu0 0.0
        %5610 = vmatpush1.msra.mxu0 0.0
        %5611 = vmatprep.subr.mxu0 0.0
        %5612 = vmatpush1.msra.mxu0 0.0
        %5613 = vmatprep.subr.mxu0 0.0
        %5614 = vmatpush1.msra.mxu0 0.0
        %5615 = vmatprep.subr.mxu0 0.0
        %5616 = vmatpush1.msra.mxu0 0.0
        %5617 = vmatprep.subr.mxu0 0.0
        %5618 = vmatpush1.msra.mxu0 0.0
        %5619 = vmatprep.subr.mxu0 0.0
        %5620 = vmatpush1.msra.mxu0 0.0
        %5621 = vmatprep.subr.mxu0 0.0
        %5622 = vmatpush1.msra.mxu0 0.0
        %5623 = vmatprep.subr.mxu0 0.0
        %5624 = vmatpush1.msra.mxu0 0.0
        %5625 = vmatprep.subr.mxu0 0.0
        %5626 = vmatpush1.msra.mxu0 0.0
        %5627 = vmatprep.subr.mxu0 0.0
        %5628 = vmatpush1.msra.mxu0 0.0
        %5629 = vmatprep.subr.mxu0 0.0
        %5630 = vmatpush1.msra.mxu0 0.0
        %5631 = vmatprep.subr.mxu0 0.0
        %5632 = vmatpush1.msra.mxu0 0.0
        %5633 = vmatprep.subr.mxu0 0.0
        %5634 = vmatpush1.msra.mxu0 0.0
        %5635 = vmatprep.subr.mxu0 0.0
        %5636 = vmatpush1.msra.mxu0 0.0
        %5637 = vmatprep.subr.mxu0 0.0
        %5638 = vmatpush1.msra.mxu0 0.0
        %5639 = vmatprep.subr.mxu0 0.0
        %5640 = vmatpush1.msra.mxu0 0.0
        %5641 = vmatprep.subr.mxu0 0.0
        %5642 = vmatpush1.msra.mxu0 0.0
        %5643 = vmatprep.subr.mxu0 0.0
        %5644 = vmatpush1.msra.mxu0 0.0
        %5645 = vmatprep.subr.mxu0 0.0
        %5646 = vmatpush1.msra.mxu0 0.0
        %5647 = vmatprep.subr.mxu0 0.0
        %5648 = vmatpush1.msra.mxu0 0.0
        %5649 = vmatprep.subr.mxu0 0.0
        %5650 = vmatpush1.msra.mxu0 0.0
        %5651 = vmatprep.subr.mxu0 0.0
        %5652 = vmatpush1.msra.mxu0 0.0
        %5653 = vmatprep.subr.mxu0 0.0
        %5654 = vmatpush1.msra.mxu0 0.0
        %5655 = vmatprep.subr.mxu0 0.0
        %5656 = vmatpush1.msra.mxu0 0.0
        %5657 = vmatprep.subr.mxu0 0.0
        %5658 = vmatpush1.msra.mxu0 0.0
        %5659 = vmatprep.subr.mxu0 0.0
        %5660 = vmatpush1.msra.mxu0 0.0
        %5661 = vmatprep.subr.mxu0 0.0
        %5662 = vmatpush1.msra.mxu0 0.0
        %5663 = vmatprep.subr.mxu0 0.0
        %5664 = vmatpush1.msra.mxu0 0.0
        %5665 = vmatprep.subr.mxu0 0.0
        %5666 = vmatpush1.msra.mxu0 0.0
        %5667 = vmatprep.mubr.f32.mxu0 0.0
        %5668 = vmatmul.mubr.f32.gmra.mrb[0].mxu0 %v5601
        %v5669 = vpop.f32.mrb[0].mxu0
        %v5670 = vadd.f32 0.0, %v5669
        %v5671 = vpop.f32.mrb[0].mxu0
        %5672 = vdwg.mxu0
        %5673 = vrot.lane.b32.xlu0 %v5342, 96
        %v5674 = vpop.permute.xlu0 %5673
        %5675 = vrot.lane.b32.xlu0 %v2576, 96
        %v5676 = vpop.permute.xlu0 %5675
        %v5677 = vsel %vm749, %v5674, 0
        %v5679 = vsel %vm749, %v5676, 0
        %5681 = vmatprep.subr.mxu0 0.0
        %5682 = vmatpush1.xpose.msra.mxu0 %v5679
        %5683 = vmatprep.subr.mxu0 0.0
        %5684 = vmatpush1.xpose.msra.mxu0 0.0
        %5685 = vmatprep.subr.mxu0 0.0
        %5686 = vmatpush1.xpose.msra.mxu0 0.0
        %5687 = vmatprep.subr.mxu0 0.0
        %5688 = vmatpush1.xpose.msra.mxu0 0.0
        %5689 = vmatprep.subr.mxu0 0.0
        %5690 = vmatpush1.xpose.msra.mxu0 0.0
        %5691 = vmatprep.subr.mxu0 0.0
        %5692 = vmatpush1.xpose.msra.mxu0 0.0
        %5693 = vmatprep.subr.mxu0 0.0
        %5694 = vmatpush1.xpose.msra.mxu0 0.0
        %5695 = vmatprep.subr.mxu0 0.0
        %5696 = vmatpush1.xpose.msra.mxu0 0.0
        %5697 = vmatprep.subr.mxu0 0.0
        %5698 = vmatpush1.xpose.msra.mxu0 0.0
        %5699 = vmatprep.subr.mxu0 0.0
        %5700 = vmatpush1.xpose.msra.mxu0 0.0
        %5701 = vmatprep.subr.mxu0 0.0
        %5702 = vmatpush1.xpose.msra.mxu0 0.0
        %5703 = vmatprep.subr.mxu0 0.0
        %5704 = vmatpush1.xpose.msra.mxu0 0.0
        %5705 = vmatprep.subr.mxu0 0.0
        %5706 = vmatpush1.xpose.msra.mxu0 0.0
        %5707 = vmatprep.subr.mxu0 0.0
        %5708 = vmatpush1.xpose.msra.mxu0 0.0
        %5709 = vmatprep.subr.mxu0 0.0
        %5710 = vmatpush1.xpose.msra.mxu0 0.0
        %5711 = vmatprep.subr.mxu0 0.0
        %5712 = vmatpush1.xpose.msra.mxu0 0.0
        %5713 = vmatprep.subr.mxu0 0.0
        %5714 = vmatpush1.xpose.msra.mxu0 0.0
        %5715 = vmatprep.subr.mxu0 0.0
        %5716 = vmatpush1.xpose.msra.mxu0 0.0
        %5717 = vmatprep.subr.mxu0 0.0
        %5718 = vmatpush1.xpose.msra.mxu0 0.0
        %5719 = vmatprep.subr.mxu0 0.0
        %5720 = vmatpush1.xpose.msra.mxu0 0.0
        %5721 = vmatprep.subr.mxu0 0.0
        %5722 = vmatpush1.xpose.msra.mxu0 0.0
        %5723 = vmatprep.subr.mxu0 0.0
        %5724 = vmatpush1.xpose.msra.mxu0 0.0
        %5725 = vmatprep.subr.mxu0 0.0
        %5726 = vmatpush1.xpose.msra.mxu0 0.0
        %5727 = vmatprep.subr.mxu0 0.0
        %5728 = vmatpush1.xpose.msra.mxu0 0.0
        %5729 = vmatprep.subr.mxu0 0.0
        %5730 = vmatpush1.xpose.msra.mxu0 0.0
        %5731 = vmatprep.subr.mxu0 0.0
        %5732 = vmatpush1.xpose.msra.mxu0 0.0
        %5733 = vmatprep.subr.mxu0 0.0
        %5734 = vmatpush1.xpose.msra.mxu0 0.0
        %5735 = vmatprep.subr.mxu0 0.0
        %5736 = vmatpush1.xpose.msra.mxu0 0.0
        %5737 = vmatprep.subr.mxu0 0.0
        %5738 = vmatpush1.xpose.msra.mxu0 0.0
        %5739 = vmatprep.subr.mxu0 0.0
        %5740 = vmatpush1.xpose.msra.mxu0 0.0
        %5741 = vmatprep.subr.mxu0 0.0
        %5742 = vmatpush1.xpose.msra.mxu0 0.0
        %5743 = vmatprep.subr.mxu0 0.0
        %5744 = vmatpush1.xpose.msra.mxu0 0.0
        %5745 = vmatprep.mubr.f32.mxu0 0.0
        %5746 = vmatmul.mubr.f32.gmra.mrb[0].mxu0 %v5677
        %v5747 = vpop.f32.mrb[0].mxu0
        %v5748 = vadd.f32 0.0, %v5747
        %v5749 = vpop.f32.mrb[0].mxu0
        %5750 = vdwg.mxu0
        %v5751 = vsel %vm824, %v5748, -inf
        %5752 = vmax.xlane.f32.xlu0 %v5751
        %v5753 = vpop.xlane.xlu0 %5752
        %v5754 = vsub.f32 %v5748, %v5753
        %v5755 = vmul.f32 %v5754, 1.442695
        %v5756 = vpow.pop %v5755
        %v5757 = vsel %vm824, %v5756, 0.0
        %5758 = vadd.xlane.f32.xlu0 %v5757
        %v5759 = vpop.xlane.xlu0 %5758
        %v5760 = vrcp.pop %v5759
        %v5761 = vmul.f32 %v5756, %v5760
        %5762 = vrot.lane.b32.xlu0 %v2576, 32
        %v5763 = vpop.permute.xlu0 %5762
        %v5766 = vsel %vm824, %v5761, 0
        %5768 = vmatprep.subr.mxu0 0.0
        %5769 = vmatpush1.msra.mxu0 %v5763
        %5770 = vmatprep.subr.mxu0 0.0
        %5771 = vmatpush1.msra.mxu0 0.0
        %5772 = vmatprep.subr.mxu0 0.0
        %5773 = vmatpush1.msra.mxu0 0.0
        %5774 = vmatprep.subr.mxu0 0.0
        %5775 = vmatpush1.msra.mxu0 0.0
        %5776 = vmatprep.subr.mxu0 0.0
        %5777 = vmatpush1.msra.mxu0 0.0
        %5778 = vmatprep.subr.mxu0 0.0
        %5779 = vmatpush1.msra.mxu0 0.0
        %5780 = vmatprep.subr.mxu0 0.0
        %5781 = vmatpush1.msra.mxu0 0.0
        %5782 = vmatprep.subr.mxu0 0.0
        %5783 = vmatpush1.msra.mxu0 0.0
        %5784 = vmatprep.subr.mxu0 0.0
        %5785 = vmatpush1.msra.mxu0 0.0
        %5786 = vmatprep.subr.mxu0 0.0
        %5787 = vmatpush1.msra.mxu0 0.0
        %5788 = vmatprep.subr.mxu0 0.0
        %5789 = vmatpush1.msra.mxu0 0.0
        %5790 = vmatprep.subr.mxu0 0.0
        %5791 = vmatpush1.msra.mxu0 0.0
        %5792 = vmatprep.subr.mxu0 0.0
        %5793 = vmatpush1.msra.mxu0 0.0
        %5794 = vmatprep.subr.mxu0 0.0
        %5795 = vmatpush1.msra.mxu0 0.0
        %5796 = vmatprep.subr.mxu0 0.0
        %5797 = vmatpush1.msra.mxu0 0.0
        %5798 = vmatprep.subr.mxu0 0.0
        %5799 = vmatpush1.msra.mxu0 0.0
        %5800 = vmatprep.subr.mxu0 0.0
        %5801 = vmatpush1.msra.mxu0 0.0
        %5802 = vmatprep.subr.mxu0 0.0
        %5803 = vmatpush1.msra.mxu0 0.0
        %5804 = vmatprep.subr.mxu0 0.0
        %5805 = vmatpush1.msra.mxu0 0.0
        %5806 = vmatprep.subr.mxu0 0.0
        %5807 = vmatpush1.msra.mxu0 0.0
        %5808 = vmatprep.subr.mxu0 0.0
        %5809 = vmatpush1.msra.mxu0 0.0
        %5810 = vmatprep.subr.mxu0 0.0
        %5811 = vmatpush1.msra.mxu0 0.0
        %5812 = vmatprep.subr.mxu0 0.0
        %5813 = vmatpush1.msra.mxu0 0.0
        %5814 = vmatprep.subr.mxu0 0.0
        %5815 = vmatpush1.msra.mxu0 0.0
        %5816 = vmatprep.subr.mxu0 0.0
        %5817 = vmatpush1.msra.mxu0 0.0
        %5818 = vmatprep.subr.mxu0 0.0
        %5819 = vmatpush1.msra.mxu0 0.0
        %5820 = vmatprep.subr.mxu0 0.0
        %5821 = vmatpush1.msra.mxu0 0.0
        %5822 = vmatprep.subr.mxu0 0.0
        %5823 = vmatpush1.msra.mxu0 0.0
        %5824 = vmatprep.subr.mxu0 0.0
        %5825 = vmatpush1.msra.mxu0 0.0
        %5826 = vmatprep.subr.mxu0 0.0
        %5827 = vmatpush1.msra.mxu0 0.0
        %5828 = vmatprep.subr.mxu0 0.0
        %5829 = vmatpush1.msra.mxu0 0.0
        %5830 = vmatprep.subr.mxu0 0.0
        %5831 = vmatpush1.msra.mxu0 0.0
        %5832 = vmatprep.mubr.f32.mxu0 0.0
        %5833 = vmatmul.mubr.f32.gmra.mrb[0].mxu0 %v5766
        %v5834 = vpop.f32.mrb[0].mxu0
        %v5835 = vadd.f32 0.0, %v5834
        %v5836 = vpop.f32.mrb[0].mxu0
        %5837 = vdwg.mxu0
        %5838 = vrot.lane.b32.xlu0 %v5342, 80
        %v5839 = vpop.permute.xlu0 %5838
        %5840 = vrot.lane.b32.xlu0 %v2576, 80
        %v5841 = vpop.permute.xlu0 %5840
        %v5842 = vsel %vm749, %v5839, 0
        %v5844 = vsel %vm749, %v5841, 0
        %5846 = vmatprep.subr.mxu0 0.0
        %5847 = vmatpush1.xpose.msra.mxu0 %v5844
        %5848 = vmatprep.subr.mxu0 0.0
        %5849 = vmatpush1.xpose.msra.mxu0 0.0
        %5850 = vmatprep.subr.mxu0 0.0
        %5851 = vmatpush1.xpose.msra.mxu0 0.0
        %5852 = vmatprep.subr.mxu0 0.0
        %5853 = vmatpush1.xpose.msra.mxu0 0.0
        %5854 = vmatprep.subr.mxu0 0.0
        %5855 = vmatpush1.xpose.msra.mxu0 0.0
        %5856 = vmatprep.subr.mxu0 0.0
        %5857 = vmatpush1.xpose.msra.mxu0 0.0
        %5858 = vmatprep.subr.mxu0 0.0
        %5859 = vmatpush1.xpose.msra.mxu0 0.0
        %5860 = vmatprep.subr.mxu0 0.0
        %5861 = vmatpush1.xpose.msra.mxu0 0.0
        %5862 = vmatprep.subr.mxu0 0.0
        %5863 = vmatpush1.xpose.msra.mxu0 0.0
        %5864 = vmatprep.subr.mxu0 0.0
        %5865 = vmatpush1.xpose.msra.mxu0 0.0
        %5866 = vmatprep.subr.mxu0 0.0
        %5867 = vmatpush1.xpose.msra.mxu0 0.0
        %5868 = vmatprep.subr.mxu0 0.0
        %5869 = vmatpush1.xpose.msra.mxu0 0.0
        %5870 = vmatprep.subr.mxu0 0.0
        %5871 = vmatpush1.xpose.msra.mxu0 0.0
        %5872 = vmatprep.subr.mxu0 0.0
        %5873 = vmatpush1.xpose.msra.mxu0 0.0
        %5874 = vmatprep.subr.mxu0 0.0
        %5875 = vmatpush1.xpose.msra.mxu0 0.0
        %5876 = vmatprep.subr.mxu0 0.0
        %5877 = vmatpush1.xpose.msra.mxu0 0.0
        %5878 = vmatprep.subr.mxu0 0.0
        %5879 = vmatpush1.xpose.msra.mxu0 0.0
        %5880 = vmatprep.subr.mxu0 0.0
        %5881 = vmatpush1.xpose.msra.mxu0 0.0
        %5882 = vmatprep.subr.mxu0 0.0
        %5883 = vmatpush1.xpose.msra.mxu0 0.0
        %5884 = vmatprep.subr.mxu0 0.0
        %5885 = vmatpush1.xpose.msra.mxu0 0.0
        %5886 = vmatprep.subr.mxu0 0.0
        %5887 = vmatpush1.xpose.msra.mxu0 0.0
        %5888 = vmatprep.subr.mxu0 0.0
        %5889 = vmatpush1.xpose.msra.mxu0 0.0
        %5890 = vmatprep.subr.mxu0 0.0
        %5891 = vmatpush1.xpose.msra.mxu0 0.0
        %5892 = vmatprep.subr.mxu0 0.0
        %5893 = vmatpush1.xpose.msra.mxu0 0.0
        %5894 = vmatprep.subr.mxu0 0.0
        %5895 = vmatpush1.xpose.msra.mxu0 0.0
        %5896 = vmatprep.subr.mxu0 0.0
        %5897 = vmatpush1.xpose.msra.mxu0 0.0
        %5898 = vmatprep.subr.mxu0 0.0
        %5899 = vmatpush1.xpose.msra.mxu0 0.0
        %5900 = vmatprep.subr.mxu0 0.0
        %5901 = vmatpush1.xpose.msra.mxu0 0.0
        %5902 = vmatprep.subr.mxu0 0.0
        %5903 = vmatpush1.xpose.msra.mxu0 0.0
        %5904 = vmatprep.subr.mxu0 0.0
        %5905 = vmatpush1.xpose.msra.mxu0 0.0
        %5906 = vmatprep.subr.mxu0 0.0
        %5907 = vmatpush1.xpose.msra.mxu0 0.0
        %5908 = vmatprep.subr.mxu0 0.0
        %5909 = vmatpush1.xpose.msra.mxu0 0.0
        %5910 = vmatprep.mubr.f32.mxu0 0.0
        %5911 = vmatmul.mubr.f32.gmra.mrb[0].mxu0 %v5842
        %v5912 = vpop.f32.mrb[0].mxu0
        %v5913 = vadd.f32 0.0, %v5912
        %v5914 = vpop.f32.mrb[0].mxu0
        %5915 = vdwg.mxu0
        %v5916 = vsel %vm824, %v5913, -inf
        %5917 = vmax.xlane.f32.xlu0 %v5916
        %v5918 = vpop.xlane.xlu0 %5917
        %v5919 = vsub.f32 %v5913, %v5918
        %v5920 = vmul.f32 %v5919, 1.442695
        %v5921 = vpow.pop %v5920
        %v5922 = vsel %vm824, %v5921, 0.0
        %5923 = vadd.xlane.f32.xlu0 %v5922
        %v5924 = vpop.xlane.xlu0 %5923
        %v5925 = vrcp.pop %v5924
        %v5926 = vmul.f32 %v5921, %v5925
        %5927 = vrot.lane.b32.xlu0 %v2576, 16
        %v5928 = vpop.permute.xlu0 %5927
        %v5931 = vsel %vm824, %v5926, 0
        %5933 = vmatprep.subr.mxu0 0.0
        %5934 = vmatpush1.msra.mxu0 %v5928
        %5935 = vmatprep.subr.mxu0 0.0
        %5936 = vmatpush1.msra.mxu0 0.0
        %5937 = vmatprep.subr.mxu0 0.0
        %5938 = vmatpush1.msra.mxu0 0.0
        %5939 = vmatprep.subr.mxu0 0.0
        %5940 = vmatpush1.msra.mxu0 0.0
        %5941 = vmatprep.subr.mxu0 0.0
        %5942 = vmatpush1.msra.mxu0 0.0
        %5943 = vmatprep.subr.mxu0 0.0
        %5944 = vmatpush1.msra.mxu0 0.0
        %5945 = vmatprep.subr.mxu0 0.0
        %5946 = vmatpush1.msra.mxu0 0.0
        %5947 = vmatprep.subr.mxu0 0.0
        %5948 = vmatpush1.msra.mxu0 0.0
        %5949 = vmatprep.subr.mxu0 0.0
        %5950 = vmatpush1.msra.mxu0 0.0
        %5951 = vmatprep.subr.mxu0 0.0
        %5952 = vmatpush1.msra.mxu0 0.0
        %5953 = vmatprep.subr.mxu0 0.0
        %5954 = vmatpush1.msra.mxu0 0.0
        %5955 = vmatprep.subr.mxu0 0.0
        %5956 = vmatpush1.msra.mxu0 0.0
        %5957 = vmatprep.subr.mxu0 0.0
        %5958 = vmatpush1.msra.mxu0 0.0
        %5959 = vmatprep.subr.mxu0 0.0
        %5960 = vmatpush1.msra.mxu0 0.0
        %5961 = vmatprep.subr.mxu0 0.0
        %5962 = vmatpush1.msra.mxu0 0.0
        %5963 = vmatprep.subr.mxu0 0.0
        %5964 = vmatpush1.msra.mxu0 0.0
        %5965 = vmatprep.subr.mxu0 0.0
        %5966 = vmatpush1.msra.mxu0 0.0
        %5967 = vmatprep.subr.mxu0 0.0
        %5968 = vmatpush1.msra.mxu0 0.0
        %5969 = vmatprep.subr.mxu0 0.0
        %5970 = vmatpush1.msra.mxu0 0.0
        %5971 = vmatprep.subr.mxu0 0.0
        %5972 = vmatpush1.msra.mxu0 0.0
        %5973 = vmatprep.subr.mxu0 0.0
        %5974 = vmatpush1.msra.mxu0 0.0
        %5975 = vmatprep.subr.mxu0 0.0
        %5976 = vmatpush1.msra.mxu0 0.0
        %5977 = vmatprep.subr.mxu0 0.0
        %5978 = vmatpush1.msra.mxu0 0.0
        %5979 = vmatprep.subr.mxu0 0.0
        %5980 = vmatpush1.msra.mxu0 0.0
        %5981 = vmatprep.subr.mxu0 0.0
        %5982 = vmatpush1.msra.mxu0 0.0
        %5983 = vmatprep.subr.mxu0 0.0
        %5984 = vmatpush1.msra.mxu0 0.0
        %5985 = vmatprep.subr.mxu0 0.0
        %5986 = vmatpush1.msra.mxu0 0.0
        %5987 = vmatprep.subr.mxu0 0.0
        %5988 = vmatpush1.msra.mxu0 0.0
        %5989 = vmatprep.subr.mxu0 0.0
        %5990 = vmatpush1.msra.mxu0 0.0
        %5991 = vmatprep.subr.mxu0 0.0
        %5992 = vmatpush1.msra.mxu0 0.0
        %5993 = vmatprep.subr.mxu0 0.0
        %5994 = vmatpush1.msra.mxu0 0.0
        %5995 = vmatprep.subr.mxu0 0.0
        %5996 = vmatpush1.msra.mxu0 0.0
        %5997 = vmatprep.mubr.f32.mxu0 0.0
        %5998 = vmatmul.mubr.f32.gmra.mrb[0].mxu0 %v5931
        %v5999 = vpop.f32.mrb[0].mxu0
        %v6000 = vadd.f32 0.0, %v5999
        %v6001 = vpop.f32.mrb[0].mxu0
        %6002 = vdwg.mxu0
        %6004 = vrot.lane.b32.xlu0 %v5670, 16
        %v6005 = vpop.permute.xlu0 %6004
        %6008 = vrot.lane.b32.xlu0 %v5835, 32
        %v6009 = vpop.permute.xlu0 %6008
        %6012 = vrot.lane.b32.xlu0 %v6000, 48
        %v6013 = vpop.permute.xlu0 %6012
        %v6015 = vsel %vm749, %v5505, %v6005
        %v6016 = vsel %vm1418, %v6015, %v6009
        %v6017 = vsel %vm1420, %v6016, %v6013
        %s6018 = scalar_lea.vmem %s15, 64
        %v6019 = vld [vmem:[%s6018] sm:$0xff]
        %v6020 = vld [vmem:[%s6018 + $0x8] sm:$0xff]
        %v6021 = vld [vmem:[%s6018 + $0x10] sm:$0xff]
        %v6022 = vld [vmem:[%s6018 + $0x18] sm:$0xff]
        %v6023 = vld [vmem:[%s6018 + $0x20] sm:$0xff]
        %v6024 = vld [vmem:[%s6018 + $0x28] sm:$0xff]
        %v6025 = vld [vmem:[%s6018 + $0x30] sm:$0xff]
        %v6026 = vld [vmem:[%s6018 + $0x38] sm:$0xff]
        %s6027 = scalar_lea.vmem %s16, 1
        %v6028 = vld [vmem:[%s6027] sm:$0x1]
        %v6030 = vlaneseq
        %v6031 = vshrl.u32 %v6030, 7
        %v6032 = vsub.s32 0, %v6031
        %v6033 = vrot.slane %v6028, %v6032
        %v6036 = vsel %vm671, %v6017, 0
        %6038 = vmatprep.subr.mxu0 0.0
        %6039 = vmatpush1.msra.mxu0 %v6019
        %6040 = vmatprep.subr.mxu0 0.0
        %6041 = vmatpush1.msra.mxu0 %v6020
        %6042 = vmatprep.subr.mxu0 0.0
        %6043 = vmatpush1.msra.mxu0 %v6021
        %6044 = vmatprep.subr.mxu0 0.0
        %6045 = vmatpush1.msra.mxu0 %v6022
        %6046 = vmatprep.subr.mxu0 0.0
        %6047 = vmatpush1.msra.mxu0 %v6023
        %6048 = vmatprep.subr.mxu0 0.0
        %6049 = vmatpush1.msra.mxu0 %v6024
        %6050 = vmatprep.subr.mxu0 0.0
        %6051 = vmatpush1.msra.mxu0 %v6025
        %6052 = vmatprep.subr.mxu0 0.0
        %6053 = vmatpush1.msra.mxu0 %v6026
        %6054 = vmatprep.subr.mxu0 0.0
        %6055 = vmatpush1.msra.mxu0 0.0
        %6056 = vmatprep.subr.mxu0 0.0
        %6057 = vmatpush1.msra.mxu0 0.0
        %6058 = vmatprep.subr.mxu0 0.0
        %6059 = vmatpush1.msra.mxu0 0.0
        %6060 = vmatprep.subr.mxu0 0.0
        %6061 = vmatpush1.msra.mxu0 0.0
        %6062 = vmatprep.subr.mxu0 0.0
        %6063 = vmatpush1.msra.mxu0 0.0
        %6064 = vmatprep.subr.mxu0 0.0
        %6065 = vmatpush1.msra.mxu0 0.0
        %6066 = vmatprep.subr.mxu0 0.0
        %6067 = vmatpush1.msra.mxu0 0.0
        %6068 = vmatprep.subr.mxu0 0.0
        %6069 = vmatpush1.msra.mxu0 0.0
        %6070 = vmatprep.subr.mxu0 0.0
        %6071 = vmatpush1.msra.mxu0 0.0
        %6072 = vmatprep.subr.mxu0 0.0
        %6073 = vmatpush1.msra.mxu0 0.0
        %6074 = vmatprep.subr.mxu0 0.0
        %6075 = vmatpush1.msra.mxu0 0.0
        %6076 = vmatprep.subr.mxu0 0.0
        %6077 = vmatpush1.msra.mxu0 0.0
        %6078 = vmatprep.subr.mxu0 0.0
        %6079 = vmatpush1.msra.mxu0 0.0
        %6080 = vmatprep.subr.mxu0 0.0
        %6081 = vmatpush1.msra.mxu0 0.0
        %6082 = vmatprep.subr.mxu0 0.0
        %6083 = vmatpush1.msra.mxu0 0.0
        %6084 = vmatprep.subr.mxu0 0.0
        %6085 = vmatpush1.msra.mxu0 0.0
        %6086 = vmatprep.subr.mxu0 0.0
        %6087 = vmatpush1.msra.mxu0 0.0
        %6088 = vmatprep.subr.mxu0 0.0
        %6089 = vmatpush1.msra.mxu0 0.0
        %6090 = vmatprep.subr.mxu0 0.0
        %6091 = vmatpush1.msra.mxu0 0.0
        %6092 = vmatprep.subr.mxu0 0.0
        %6093 = vmatpush1.msra.mxu0 0.0
        %6094 = vmatprep.subr.mxu0 0.0
        %6095 = vmatpush1.msra.mxu0 0.0
        %6096 = vmatprep.subr.mxu0 0.0
        %6097 = vmatpush1.msra.mxu0 0.0
        %6098 = vmatprep.subr.mxu0 0.0
        %6099 = vmatpush1.msra.mxu0 0.0
        %6100 = vmatprep.subr.mxu0 0.0
        %6101 = vmatpush1.msra.mxu0 0.0
        %6102 = vmatprep.mubr.f32.mxu0 0.0
        %6103 = vmatmul.mubr.f32.gmra.mrb[0].mxu0 %v6036
        %v6104 = vpop.f32.mrb[0].mxu0
        %v6105 = vadd.f32 %v6033, %v6104
        %v6106 = vpop.f32.mrb[0].mxu0
        %6107 = vdwg.mxu0
        %v6108 = vadd.f32 %v6105, %v5254
        %v6109 = vsel %vm671, %v6108, 0.0
        %6110 = vadd.xlane.f32.xlu0 %v6109
        %v6111 = vpop.xlane.xlu0 %6110
        %v6112 = vmul.f32 %v6111, %v1515
        %v6113 = vsub.f32 %v6108, %v6112
        %v6114 = vmul.f32 %v6113, %v6113
        %v6115 = vsel %vm671, %v6114, 0.0
        %6116 = vadd.xlane.f32.xlu0 %v6115
        %v6117 = vpop.xlane.xlu0 %6116
        %v6118 = vmul.f32 %v6117, %v1515
        %v6119 = vadd.f32 %v6118, 1e-05
        %v6120 = vrsqrt.pop %v6119
        %v6121 = vmul.f32 %v6113, %v6120
        %v6122 = vlaneseq
        %v6123 = vshrl.u32 %v6122, 7
        %v6124 = vsub.s32 2, %v6123
        %v6125 = vrot.slane %v4364, %v6124
        %v6126 = vmul.f32 %v6121, %v6125
        %v6127 = vlaneseq
        %v6128 = vshrl.u32 %v6127, 7
        %v6129 = vsub.s32 3, %v6128
        %v6130 = vrot.slane %v4364, %v6129
        %v6131 = vadd.f32 %v6126, %v6130
        %v6132 = vadd.f32 %v6131, %v6131
        %v6133 = vsel %vm671, %v6132, 0.0
        %6134 = vadd.xlane.f32.xlu0 %v6133
        %v6135 = vpop.xlane.xlu0 %6134
        %v6136 = vmul.f32 %v6135, %v1515
        %v6137 = vsub.f32 %v6132, %v6136
        %v6138 = vmul.f32 %v6137, %v6137
        %v6139 = vsel %vm671, %v6138, 0.0
        %6140 = vadd.xlane.f32.xlu0 %v6139
        %v6141 = vpop.xlane.xlu0 %6140
        %v6142 = vmul.f32 %v6141, %v1515
        %v6143 = vadd.f32 %v6142, 1e-05
        %v6144 = vrsqrt.pop %v6143
        %v6145 = vmul.f32 %v6137, %v6144
        %v6146 = vlaneseq
        %v6147 = vshrl.u32 %v6146, 7
        %v6148 = vsub.s32 4, %v6147
        %v6149 = vrot.slane %v4364, %v6148
        %v6150 = vmul.f32 %v6145, %v6149
        %v6151 = vlaneseq
        %v6152 = vshrl.u32 %v6151, 7
        %v6153 = vsub.s32 5, %v6152
        %v6154 = vrot.slane %v4364, %v6153
        %v6155 = vadd.f32 %v6150, %v6154
        %v6156 = vld [vmem:[%s18] sm:$0xff]
        %v6157 = vld [vmem:[%s18 + $0x8] sm:$0xff]
        %v6158 = vld [vmem:[%s18 + $0x10] sm:$0xff]
        %v6159 = vld [vmem:[%s18 + $0x18] sm:$0xff]
        %v6160 = vld [vmem:[%s18 + $0x20] sm:$0xff]
        %v6161 = vld [vmem:[%s18 + $0x28] sm:$0xff]
        %v6162 = vld [vmem:[%s18 + $0x30] sm:$0xff]
        %v6163 = vld [vmem:[%s18 + $0x38] sm:$0xff]
        %v6164 = vld [vmem:[%s19] sm:$0x1]
        %v6166 = vlaneseq
        %v6167 = vshrl.u32 %v6166, 7
        %v6168 = vsub.s32 0, %v6167
        %v6169 = vrot.slane %v6164, %v6168
        %v6172 = vsel %vm671, %v6155, 0
        %6174 = vmatprep.subr.mxu0 0.0
        %6175 = vmatpush1.msra.mxu0 %v6156
        %6176 = vmatprep.subr.mxu0 0.0
        %6177 = vmatpush1.msra.mxu0 %v6157
        %6178 = vmatprep.subr.mxu0 0.0
        %6179 = vmatpush1.msra.mxu0 %v6158
        %6180 = vmatprep.subr.mxu0 0.0
        %6181 = vmatpush1.msra.mxu0 %v6159
        %6182 = vmatprep.subr.mxu0 0.0
        %6183 = vmatpush1.msra.mxu0 %v6160
        %6184 = vmatprep.subr.mxu0 0.0
        %6185 = vmatpush1.msra.mxu0 %v6161
        %6186 = vmatprep.subr.mxu0 0.0
        %6187 = vmatpush1.msra.mxu0 %v6162
        %6188 = vmatprep.subr.mxu0 0.0
        %6189 = vmatpush1.msra.mxu0 %v6163
        %6190 = vmatprep.subr.mxu0 0.0
        %6191 = vmatpush1.msra.mxu0 0.0
        %6192 = vmatprep.subr.mxu0 0.0
        %6193 = vmatpush1.msra.mxu0 0.0
        %6194 = vmatprep.subr.mxu0 0.0
        %6195 = vmatpush1.msra.mxu0 0.0
        %6196 = vmatprep.subr.mxu0 0.0
        %6197 = vmatpush1.msra.mxu0 0.0
        %6198 = vmatprep.subr.mxu0 0.0
        %6199 = vmatpush1.msra.mxu0 0.0
        %6200 = vmatprep.subr.mxu0 0.0
        %6201 = vmatpush1.msra.mxu0 0.0
        %6202 = vmatprep.subr.mxu0 0.0
        %6203 = vmatpush1.msra.mxu0 0.0
        %6204 = vmatprep.subr.mxu0 0.0
        %6205 = vmatpush1.msra.mxu0 0.0
        %6206 = vmatprep.subr.mxu0 0.0
        %6207 = vmatpush1.msra.mxu0 0.0
        %6208 = vmatprep.subr.mxu0 0.0
        %6209 = vmatpush1.msra.mxu0 0.0
        %6210 = vmatprep.subr.mxu0 0.0
        %6211 = vmatpush1.msra.mxu0 0.0
        %6212 = vmatprep.subr.mxu0 0.0
        %6213 = vmatpush1.msra.mxu0 0.0
        %6214 = vmatprep.subr.mxu0 0.0
        %6215 = vmatpush1.msra.mxu0 0.0
        %6216 = vmatprep.subr.mxu0 0.0
        %6217 = vmatpush1.msra.mxu0 0.0
        %6218 = vmatprep.subr.mxu0 0.0
        %6219 = vmatpush1.msra.mxu0 0.0
        %6220 = vmatprep.subr.mxu0 0.0
        %6221 = vmatpush1.msra.mxu0 0.0
        %6222 = vmatprep.subr.mxu0 0.0
        %6223 = vmatpush1.msra.mxu0 0.0
        %6224 = vmatprep.subr.mxu0 0.0
        %6225 = vmatpush1.msra.mxu0 0.0
        %6226 = vmatprep.subr.mxu0 0.0
        %6227 = vmatpush1.msra.mxu0 0.0
        %6228 = vmatprep.subr.mxu0 0.0
        %6229 = vmatpush1.msra.mxu0 0.0
        %6230 = vmatprep.subr.mxu0 0.0
        %6231 = vmatpush1.msra.mxu0 0.0
        %6232 = vmatprep.subr.mxu0 0.0
        %6233 = vmatpush1.msra.mxu0 0.0
        %6234 = vmatprep.subr.mxu0 0.0
        %6235 = vmatpush1.msra.mxu0 0.0
        %6236 = vmatprep.subr.mxu0 0.0
        %6237 = vmatpush1.msra.mxu0 0.0
        %6238 = vmatprep.mubr.f32.mxu0 0.0
        %6239 = vmatmul.mubr.f32.gmra.mrb[0].mxu0 %v6172
        %v6240 = vpop.f32.mrb[0].mxu0
        %v6241 = vadd.f32 %v6169, %v6240
        %v6242 = vpop.f32.mrb[0].mxu0
        %6243 = vdwg.mxu0
        %6244 = vst [vmem:[%s633] sm:$0xff] %v6241
        %s6245 = sand.u32 %s472, 1
        %s6246 = scalar_lea.sflag [#allocation3], %s6245
        %s6247 = sand.u32 %s472, 1
        %s6248 = smul.addr %s6247, 8
        %s6249 = scalar_lea.vmem [#allocation2], %s6248
        // Predicated region
        $region101: #{transformer_forward.1} parent=99 // pred_check
          %p6250 = pneg %p482
        $region102: #{transformer_forward.1} parent=99 // pred_check_branch
          %6252 = sbr.rel (%p6250) target = $region104
        $region103: #{transformer_forward.1} parent=99 // pred_region
          %s6254 = ssub.s32 128, 128
          %6255 = vsyncadd %s6246, %s6254
          %s6256 = smul.addr %s34, 128
          %s6257 = scalar_lea.hbm %s20, %s6256
          %s6259 = sshll.u32 %s6249, 4
          %s6260 = int_to_ptr.vmem [resolvable:$true] %s6259
          %6262 = dma.vmem_to_hbm [thread:$0]  %s6260, 128, %s6257, %s6246
        $region104: #{transformer_forward.1} parent=99 // pred_fallthru
          _
      $region100: #{transformer_forward.1} parent=5 // pred_fallthru
        _
      %p6263 = scmp.le.s32.totalorder 2, %s29
      // Predicated region
      $region105: #{transformer_forward.1} parent=5 // pred_check
        %p6264 = pneg %p6263
      $region106: #{transformer_forward.1} parent=5 // pred_check_branch
        %6266 = sbr.rel (%p6264) target = $region108
      $region107: #{transformer_forward.1} parent=5 // pred_region
        %s6267 = ssub.s32 %s29, 2
        // Predicated region
        $region109: #{transformer_forward.1} parent=107 // pred_check
          %p6268 = pneg %p488
        $region110: #{transformer_forward.1} parent=107 // pred_check_branch
          %6270 = sbr.rel (%p6268) target = $region112
        $region111: #{transformer_forward.1} parent=107 // pred_region
          %s6271 = sand.u32 %s473, 1
          %s6272 = scalar_lea.sflag [#allocation3], %s6271
          %s6273 = sand.u32 %s473, 1
          %s6274 = smul.addr %s6273, 8
          %s6275 = scalar_lea.vmem [#allocation2], %s6274
          %6276 = dma.done %s6272, 128
        $region112: #{transformer_forward.1} parent=107 // pred_fallthru
          _
      $region108: #{transformer_forward.1} parent=5 // pred_fallthru
        _
    $region6: #{transformer_forward.1} parent=1 // loop_footer
      %s33 = sadd.s32 1, %s29
    $region7: #{transformer_forward.1} parent=1 // loop_footer_branch
      %28 = sbr.rel target = $region3
    $region8: #{transformer_forward.1} parent=1 // loop_exit
      _
    %6277 = vsyncpa [#allocation3], 1
    %s6278 = scalar_lea.sflag [#allocation3], 1
    %6279 = vsyncpa %s6278, 1

</llo_original>
